<compile_context>
chip_gen: v7x
topology: tpu7x:2x2x1
jax: 0.10.0
libtpu: 0.0.40
codegen_flags: <defaults>
</compile_context>

<pallas_src>
import jax
import jax.numpy as jnp
from jax import lax
from jax.experimental import pallas as pl
from jax.experimental.pallas import tpu as pltpu

MASK = -10.0          # python float (kernels must not capture jnp-array consts)
POOL_TEMP = 0.1       # LSEPooling temperature
NUM_NEW_PATCH = 16
NUM_MAX_TOKENS = 34


# --------------------------------------------------------------------------
# Pallas kernels
# --------------------------------------------------------------------------
def _make_linear_kernel(normalize):
    """y = x @ w + b (optionally F.normalize(dim=-1)), K-tiled with f32 acc."""
    def kernel(x_ref, w_ref, b_ref, o_ref, acc_ref):
        @pl.when(pl.program_id(1) == 0)
        def _():
            acc_ref[...] = jnp.zeros_like(acc_ref)
        acc_ref[...] += jnp.dot(x_ref[...], w_ref[...],
                                preferred_element_type=jnp.float32)

        @pl.when(pl.program_id(1) == pl.num_programs(1) - 1)
        def _():
            y = acc_ref[...] + b_ref[...]
            if normalize:
                # F.normalize: y * rsqrt(max(sum(y^2), 1e-24))
                ss = jnp.sum(y * y, axis=-1, keepdims=True)
                y = y * lax.rsqrt(jnp.maximum(ss, 1e-24))
            o_ref[...] = y.astype(o_ref.dtype)
    return kernel


def linear(x, w, b, normalize=False, out_dtype=jnp.float32,
           block_n=256, block_k=None):
    """y = x @ w + b, w is (K, M) (transposed vs torch nn.Linear.weight).

    bf16 MXU operands / f32 accumulation.  N is zero-padded to a multiple of
    block_n (row-parallel grid, megacore-shardable).  K is tiled with an f32
    VMEM accumulator when block_k divides K (e.g. the Dv*16-wide conv im2col)."""
    N, K = x.shape
    M = w.shape[1]
    nn = -(-N // block_n)
    n_pad = nn * block_n
    if block_k is None or K % block_k != 0:
        block_k = K
    nk = K // block_k
    xp = x if n_pad == N else jnp.pad(x, ((0, n_pad - N), (0, 0)))

    out = pl.pallas_call(
        _make_linear_kernel(normalize),
        out_shape=jax.ShapeDtypeStruct((n_pad, M), out_dtype),
        grid=(nn, nk),
        in_specs=[pl.BlockSpec((block_n, block_k), lambda i, k: (i, k)),
                  pl.BlockSpec((block_k, M), lambda i, k: (k, 0)),
                  pl.BlockSpec((1, M), lambda i, k: (0, 0))],
        out_specs=pl.BlockSpec((block_n, M), lambda i, k: (i, 0)),
        scratch_shapes=[pltpu.VMEM((block_n, M), jnp.float32)],
        compiler_params=pltpu.CompilerParams(
            dimension_semantics=("parallel", "arbitrary")),
    )(xp.astype(jnp.bfloat16), w.astype(jnp.bfloat16),
      b.reshape(1, M).astype(jnp.float32))
    return out[:N]


def _make_score_kernel(Bi, Pp, W, T, w_chunk):
    """get_score() + LSEPooling body for one caption tile of width T."""
    BiP = Bi * Pp
    inv_t = 1.0 / POOL_TEMP

    def kernel(imgs_ref, caps_ref, bias_ref, colany_ref, rowv_ref, out_ref):
        imgs = imgs_ref[...]                                   # (BiP, D) bf16, resident
        m = jnp.full((BiP, T), MASK, jnp.float32)              # masked_fill(MASK) floor
        # Masked max over caption tokens w.  Scores are streamed in chunks of
        # `w_chunk` tokens (f32 intermediate <= (BiP, w_chunk*T)); the token
        # mask is a single additive {0, -1e4} column bias (valid scores are
        # dots of normalized vectors in [-1, 1], so the bias never wins a max
        # and the init-to-MASK floor covers the all-masked case exactly).
        for w0 in range(0, W, w_chunk):
            wc = min(w_chunk, W - w0)
            sc = jnp.dot(imgs, caps_ref[:, w0 * T:(w0 + wc) * T],
                         preferred_element_type=jnp.float32)
            sc = sc + bias_ref[0, :, w0 * T:(w0 + wc) * T]
            for j in range(wc):
                m = jnp.maximum(m, sc[:, j * T:(j + 1) * T])   # lane-dense slices

        # Vectorized masked LSE pooling over the Pp query tokens.
        m3 = m.reshape(Bi, Pp, T)
        valid = (rowv_ref[...][:, :, None] > 0.5) & (colany_ref[0] > 0.5)  # (Bi,Pp,T)
        mx = jnp.max(jnp.where(valid, m3, -jnp.inf), axis=1)              # (Bi, T)
        e = jnp.where(valid, jnp.exp((m3 - mx[:, None, :]) * inv_t), 0.0)
        lse = mx + POOL_TEMP * jnp.log(jnp.sum(e, axis=1))
        # Guard: keep fully-masked rows/columns finite (reference would emit -inf).
        out_ref[...] = jnp.maximum(lse, -1e30)                 # one lane-dense store
    return kernel


def pack_caps(caps, tile_bc):
    """(Bc, W, D) -> kernel-ready (D, NT, W, TILE) bf16 (caption-minor per tile)."""
    Bc, W, D = caps.shape
    nt = -(-Bc // tile_bc)
    pad = nt * tile_bc - Bc
    c = jnp.pad(caps, ((0, pad), (0, 0), (0, 0)))
    c = c.reshape(nt, tile_bc, W, D).transpose(3, 0, 2, 1)
    return c.astype(jnp.bfloat16)


def fg_score(imgs, caps_packed, col_lens, row_valid=None, w_chunk=8):
    """Fine-grained LSE-pooled similarity.

    imgs        : (Bi, P, D) query token features (bf16 preferred).
    caps_packed : (D, NT, W, TILE) bf16 kernel-ready caption tiles.
    col_lens    : (NT*TILE,) int32 valid-token count per packed caption slot.
    row_valid   : (Bi, P) float, 1 for valid query tokens (None = all valid).
    Returns (Bi, NT*TILE) f32; caller selects the relevant caption columns."""
    Bi, P, D = imgs.shape
    D2, NT, W, T = caps_packed.shape
    assert D == D2

    Pp = -(-P // 8) * 8                       # (8,128)-aligned query-token axis
    if row_valid is None:
        row_valid = jnp.ones((Bi, P), jnp.float32)
    if Pp != P:
        imgs = jnp.pad(imgs, ((0, 0), (0, Pp - P), (0, 0)))
        row_valid = jnp.pad(row_valid, ((0, 0), (0, Pp - P)))
    imgs_flat = imgs.reshape(Bi * Pp, D).astype(jnp.bfloat16)

    lens = col_lens.reshape(NT, 1, T).astype(jnp.int32)
    tok = jnp.arange(W, dtype=jnp.int32).reshape(1, W, 1)
    colbias = jnp.where(tok < lens, 0.0, -1e4).astype(jnp.float32)
    colbias = colbias.reshape(NT, 1, W * T)                      # additive token mask
    colany = (lens > 0).astype(jnp.float32)                      # (NT, 1, T)
    caps_flat = caps_packed.reshape(D, NT * W * T)               # free (no relayout)

    return pl.pallas_call(
        _make_score_kernel(Bi, Pp, W, T, w_chunk),
        out_shape=jax.ShapeDtypeStruct((Bi, NT * T), jnp.float32),
        grid=(NT,),
        in_specs=[pl.BlockSpec((Bi * Pp, D), lambda c: (0, 0)),
                  pl.BlockSpec((D, W * T), lambda c: (0, c)),
                  pl.BlockSpec((1, 1, W * T), lambda c: (c, 0, 0)),
                  pl.BlockSpec((1, 1, T), lambda c: (c, 0, 0)),
                  pl.BlockSpec((Bi, Pp), lambda c: (0, 0))],
        out_specs=pl.BlockSpec((Bi, T), lambda c: (0, c)),
        compiler_params=pltpu.CompilerParams(dimension_semantics=("parallel",)),
    )(imgs_flat, caps_flat, colbias, colany, row_valid.astype(jnp.float32))


def _soft_ce(logits, targets):
    # -sum(log_softmax(logits) * targets, -1): tiny reduction, left to XLA.
    logp = jax.nn.log_softmax(logits, axis=-1)
    return -jnp.sum(logp * targets, axis=-1)


# --------------------------------------------------------------------------
# BLIP_Retrieval forward (JAX glue around the Pallas kernels)
# --------------------------------------------------------------------------
def blip_retrieval_forward(params, buffers, image_embeds, text_cls, phrase_padded,
                           cap_lens, idx, vl_cls_states, alpha, rng):
    B, _, Dv = image_embeds.shape
    Dt = text_cls.shape[-1]
    E = params['vision_proj_w'].shape[1]
    temp = params['temp']
    T = buffers['image_queue'].shape[-1]          # caption tile width of the stored queue
    Q = buffers['image_queue'].shape[1] * T       # queue size (multiple of T)

    # ---- image branch: conv_patch via im2col matmul + fused, bf16 vision_proj ----
    patches = image_embeds[:, 1:, :].reshape(B, 16, 16, Dv)                  # [b,h,w,ci]
    xcol = patches.reshape(B, 4, 4, 4, 4, Dv)                                # [b,oh,kh,ow,kw,ci]
    xcol = xcol.transpose(0, 1, 3, 5, 2, 4).reshape(B * 16, Dv * 16)         # cols=(ci,kh,kw)
    conv_wf = params['conv_w'].reshape(Dv, Dv * 16).T                        # (Dv*16, Dv)
    image_emb_conv = linear(xcol, conv_wf, params['conv_b'],
                            out_dtype=jnp.bfloat16, block_k=512)             # K-tiled

    vis_in = jnp.concatenate([image_embeds[:, 0, :].astype(jnp.bfloat16),
                              image_emb_conv], axis=0)
    vis_out = linear(vis_in, params['vision_proj_w'], params['vision_proj_b'],
                     normalize=True, out_dtype=jnp.bfloat16)                 # (B+B*16, E)
    image_feat = vis_out[:B]
    image_patch_feat = vis_out[B:].reshape(B, NUM_NEW_PATCH, E)

    # ---- text branch (BERT CLS / phrase reps supplied): fused, bf16 text_proj ----
    txt_in = jnp.concatenate(
        [text_cls, phrase_padded.reshape(B * NUM_MAX_TOKENS, Dt)], axis=0)
    txt_out = linear(txt_in, params['text_proj_w'], params['text_proj_b'],
                     normalize=True, out_dtype=jnp.bfloat16)                 # (B+B*34, E)
    text_feat = txt_out[:B]
    text_token_feat = txt_out[B:].reshape(B, NUM_MAX_TOKENS, E)

    # ---- momentum branch: right after copy_params + first momentum update the
    # momentum params equal the online params, so momentum features coincide. ----
    image_patch_feat_m = lax.stop_gradient(image_patch_feat)
    text_token_feat_m = lax.stop_gradient(text_token_feat)

    # Pack only the B new captions into kernel layout (tiny); the queue is
    # already stored kernel-ready and is passed to fg_score without any copy.
    new_text_packed = pack_caps(text_token_feat_m, T)            # (E, nbt, 34, T)
    new_img_packed = pack_caps(image_patch_feat_m, T)            # (E, nbt, 16, T)
    nbt_t = new_text_packed.shape[1] * T
    nbi_t = new_img_packed.shape[1] * T
    new_text_lens = jnp.pad(cap_lens.astype(jnp.int32), (0, nbt_t - B))
    new_img_lens = jnp.pad(jnp.full((B,), NUM_NEW_PATCH, jnp.int32), (0, nbi_t - B))
    q_text_lens = buffers['len_queue'].astype(jnp.int32)
    q_img_lens = jnp.full((Q,), NUM_NEW_PATCH, jnp.int32)

    # i2t: image patches (all rows valid) vs new + queued text phrase tokens
    sim_i2t = jnp.concatenate(
        [fg_score(image_patch_feat, new_text_packed, new_text_lens)[:, :B],
         fg_score(image_patch_feat, buffers['text_queue'], q_text_lens)],
        axis=1) / temp
    # t2i: text phrase tokens (rows masked by cap_lens) vs new + queued image patches
    row_t2i = (jnp.arange(NUM_MAX_TOKENS, dtype=jnp.int32)[None, :]
               < cap_lens.astype(jnp.int32)[:, None]).astype(jnp.float32)
    sim_t2i = jnp.concatenate(
        [fg_score(text_token_feat, new_img_packed, new_img_lens, row_valid=row_t2i)[:, :B],
         fg_score(text_token_feat, buffers['image_queue'], q_img_lens, row_valid=row_t2i)],
        axis=1) / temp

    idx_col = idx.reshape(-1, 1)
    idx_all = jnp.concatenate([idx.reshape(1, -1),
                               buffers['idx_queue'].reshape(1, -1)], axis=1)  # (1, B+Q)
    pos_idx = (idx_col == idx_all).astype(jnp.float32)
    sim_targets = pos_idx / jnp.sum(pos_idx, axis=1, keepdims=True)
    # NOTE: the reference module's alpha-weighted soft targets are commented out
    # ("Uncomment for using loss from soft targets"), so `alpha` is unused here too.
    del alpha

    loss_i2t = jnp.mean(_soft_ce(sim_i2t, sim_targets))
    loss_t2i = jnp.mean(_soft_ce(sim_t2i, sim_targets))

    # ---- _dequeue_and_enqueue (single worker, ptr=0): transpose/insert ONLY the
    # B new caption columns into the kernel-ready queue (no whole-queue relayout).
    new_img_block = jnp.transpose(image_patch_feat_m, (2, 1, 0)).astype(jnp.bfloat16)[:, None]
    new_txt_block = jnp.transpose(text_token_feat_m, (2, 1, 0)).astype(jnp.bfloat16)[:, None]
    new_image_queue = lax.dynamic_update_slice(buffers['image_queue'], new_img_block, (0, 0, 0, 0))
    new_text_queue = lax.dynamic_update_slice(buffers['text_queue'], new_txt_block, (0, 0, 0, 0))
    new_idx_queue = lax.dynamic_update_slice(
        buffers['idx_queue'], idx.astype(buffers['idx_queue'].dtype), (0,))
    new_len_queue = lax.dynamic_update_slice(
        buffers['len_queue'], cap_lens.astype(buffers['len_queue'].dtype), (0,))

    # ---- hard-negative mining weights (no-grad branch of the original forward) ----
    same = idx_col == idx_col.T
    sim_t2i_cls = jnp.dot(text_feat, image_feat.T,
                          preferred_element_type=jnp.float32) / temp
    weights_t2i = jnp.where(same, 0.0, jax.nn.softmax(sim_t2i_cls, axis=1))
    # torch.multinomial over softmax(weights_t2i[b]) == categorical with those logits.
    neg_idx = jax.random.categorical(rng, weights_t2i, axis=1)
    _ = image_embeds[neg_idx]
    # TODO(synk): the sampled negatives feed the external multimodal BERT
    # cross-encoder (output_pos / output_neg); its CLS states are supplied as
    # `vl_cls_states` below.

    # ---- ITM head: tiny (3B, Dt) @ (Dt, 2) left to XLA (2-lane output) ----
    vl_output = jnp.dot(vl_cls_states, params['itm_w'],
                        preferred_element_type=jnp.float32) + params['itm_b']
    itm_labels = jnp.concatenate([jnp.ones((B,), jnp.int32), jnp.zeros((2 * B,), jnp.int32)])
    loss_itm = jnp.mean(_soft_ce(vl_output, jax.nn.one_hot(itm_labels, 2, dtype=jnp.float32)))

    return loss_i2t, loss_t2i, loss_itm, (new_image_queue, new_text_queue,
                                          new_idx_queue, new_len_queue)


# --------------------------------------------------------------------------
if __name__ == "__main__":
    key = jax.random.PRNGKey(0)
    B, Dv, Dt, E = 2, 128, 128, 128
    TILE = 128                      # caption tile width (use 256 on v6e for bigger blocks)
    Q = 128                         # queue size (multiple of TILE, like 57600 = 450*128)
    ks = jax.random.split(key, 16)

    params = dict(
        vision_proj_w=0.02 * jax.random.normal(ks[0], (Dv, E), jnp.float32),
        vision_proj_b=jnp.zeros((E,), jnp.float32),
        text_proj_w=0.02 * jax.random.normal(ks[1], (Dt, E), jnp.float32),
        text_proj_b=jnp.zeros((E,), jnp.float32),
        itm_w=0.02 * jax.random.normal(ks[2], (Dt, 2), jnp.float32),
        itm_b=jnp.zeros((2,), jnp.float32),
        conv_w=0.02 * jax.random.normal(ks[3], (Dv, Dv, 4, 4), jnp.float32),
        conv_b=0.01 * jax.random.normal(ks[4], (Dv,), jnp.float32),
        temp=jnp.float32(0.07),
    )

    # Momentum queues, stored directly in the kernel-ready bf16 packed layout.
    img_q = jax.random.normal(ks[5], (Q, NUM_NEW_PATCH, E), jnp.float32)
    img_q = img_q / jnp.linalg.norm(img_q, axis=-1, keepdims=True)
    txt_q = jax.random.normal(ks[6], (Q, NUM_MAX_TOKENS, E), jnp.float32)
    txt_q = txt_q / jnp.linalg.norm(txt_q, axis=-1, keepdims=True)
    buffers = dict(
        image_queue=pack_caps(img_q, TILE),      # (E, Q//TILE, 16, TILE) bf16
        text_queue=pack_caps(txt_q, TILE),       # (E, Q//TILE, 34, TILE) bf16
        len_queue=jnp.full((Q,), NUM_MAX_TOKENS, jnp.int32),
        idx_queue=jnp.full((Q,), -100, jnp.int32),
    )

    # Synthetic encoder outputs (ViT / BERT / tokenizer / spacy are external models).
    image_embeds = jax.random.normal(ks[8], (B, 257, Dv), jnp.float32)   # ViT output (CLS + 16x16 patches)
    text_cls = jax.random.normal(ks[9], (B, Dt), jnp.float32)            # BERT CLS of captions
    cap_lens = jnp.array([3, 5], jnp.int32)                              # noun-phrase counts per caption
    phrase_padded = jax.random.normal(ks[10], (B, NUM_MAX_TOKENS, Dt), jnp.float32)
    phrase_padded = phrase_padded * (jnp.arange(NUM_MAX_TOKENS)[None, :] < cap_lens[:, None])[:, :, None]
    idx = jnp.array([11, 42], jnp.int32)
    vl_cls_states = jax.random.normal(ks[11], (3 * B, Dt), jnp.float32)  # pos + 2x neg ITM CLS states
    alpha = 0.4
    rng = ks[12]

    fwd = jax.jit(blip_retrieval_forward)
    loss_i2t, loss_t2i, loss_itm, new_bufs = fwd(params, buffers, image_embeds, text_cls,
                                                 phrase_padded, cap_lens, idx,
                                                 vl_cls_states, alpha, rng)
    jax.block_until_ready((loss_i2t, loss_t2i, loss_itm, new_bufs))
    assert bool(jnp.isfinite(loss_i2t)) and bool(jnp.isfinite(loss_t2i)) and bool(jnp.isfinite(loss_itm))
    print("KERNEL_OK")
</pallas_src>

<mosaic_0001>
module attributes {stable_mosaic.version = 11 : i64} {
  func.func @kernel(%arg0: i32, %arg1: i32, %arg2: memref<256x512xbf16, #tpu.memory_space<vmem>>, %arg3: memref<512x128xbf16, #tpu.memory_space<vmem>>, %arg4: memref<1x128xf32, #tpu.memory_space<vmem>>, %arg5: memref<256x128xbf16, #tpu.memory_space<vmem>>, %arg6: memref<256x128xf32, #tpu.memory_space<vmem>>) attributes {dimension_semantics = [#tpu.dimension_semantics<parallel>, #tpu.dimension_semantics<arbitrary>], iteration_bounds = array<i64: 1, 4>, scalar_prefetch = 0 : i64, scratch_operands = 1 : i64, tpu.core_type = #tpu.core_type<tc>, window_params = [{transform_indices = @transform_0, window_bounds = array<i64: 256, 512>}, {transform_indices = @transform_1, window_bounds = array<i64: 512, 128>}, {pipeline_mode = #tpu.pipeline_mode<synchronous>, transform_indices = @transform_2, window_bounds = array<i64: 1, 128>}, {transform_indices = @transform_3, window_bounds = array<i64: 256, 128>}]} {
    %c0_i32 = arith.constant 0 : i32
    %0 = arith.cmpi eq, %arg1, %c0_i32 : i32
    %1 = arith.extui %0 : i1 to i32
    %c0_i32_0 = arith.constant 0 : i32
    %2 = arith.cmpi ne, %1, %c0_i32_0 : i32
    scf.if %2 {
      %cst_9 = arith.constant 0.000000e+00 : f32
      %12 = vector.broadcast %cst_9 : f32 to vector<256x128xf32>
      %c0_10 = arith.constant 0 : index
      %c0_11 = arith.constant 0 : index
      %13 = vector.load %arg6[%c0_10, %c0_11] : memref<256x128xf32, #tpu.memory_space<vmem>>, vector<256x128xf32>
      tpu.vector_store %arg6[%c0_10, %c0_11], %12 {strides = array<i32>} : memref<256x128xf32, #tpu.memory_space<vmem>>, vector<256x128xf32>,
    } else {
    }
    %c0 = arith.constant 0 : index
    %c0_1 = arith.constant 0 : index
    %3 = vector.load %arg6[%c0, %c0_1] : memref<256x128xf32, #tpu.memory_space<vmem>>, vector<256x128xf32>
    %c0_2 = arith.constant 0 : index
    %c0_3 = arith.constant 0 : index
    %4 = vector.load %arg2[%c0_2, %c0_3] : memref<256x512xbf16, #tpu.memory_space<vmem>>, vector<256x512xbf16>
    %c0_4 = arith.constant 0 : index
    %c0_5 = arith.constant 0 : index
    %5 = vector.load %arg3[%c0_4, %c0_5] : memref<512x128xbf16, #tpu.memory_space<vmem>>, vector<512x128xbf16>
    %cst = arith.constant dense<0.000000e+00> : vector<256x128xf32>
    %6 = tpu.matmul %4, %5, %cst {dimension_numbers = #tpu.dot_dimension_numbers<[1], [0], [0], [1], [0, 0, 1, 1], [], []>} : vector<256x512xbf16>, vector<512x128xbf16>, vector<256x128xf32> -> vector<256x128xf32>
    %7 = arith.addf %3, %6 : vector<256x128xf32>
    %c0_6 = arith.constant 0 : index
    %c0_7 = arith.constant 0 : index
    %8 = vector.load %arg6[%c0_6, %c0_7] : memref<256x128xf32, #tpu.memory_space<vmem>>, vector<256x128xf32>
    tpu.vector_store %arg6[%c0_6, %c0_7], %7 {strides = array<i32>} : memref<256x128xf32, #tpu.memory_space<vmem>>, vector<256x128xf32>,
    %c3_i32 = arith.constant 3 : i32
    %9 = arith.cmpi eq, %arg1, %c3_i32 : i32
    %10 = arith.extui %9 : i1 to i32
    %c0_i32_8 = arith.constant 0 : i32
    %11 = arith.cmpi ne, %10, %c0_i32_8 : i32
    scf.if %11 {
      %c0_9 = arith.constant 0 : index
      %c0_10 = arith.constant 0 : index
      %12 = vector.load %arg6[%c0_9, %c0_10] : memref<256x128xf32, #tpu.memory_space<vmem>>, vector<256x128xf32>
      %c0_11 = arith.constant 0 : index
      %c0_12 = arith.constant 0 : index
      %13 = vector.load %arg4[%c0_11, %c0_12] : memref<1x128xf32, #tpu.memory_space<vmem>>, vector<1x128xf32>
      %14 = vector.broadcast %13 : vector<1x128xf32> to vector<256x128xf32>
      %15 = arith.addf %12, %14 : vector<256x128xf32>
      %16 = arith.truncf %15 : vector<256x128xf32> to vector<256x128xbf16>
      %c0_13 = arith.constant 0 : index
      %c0_14 = arith.constant 0 : index
      %17 = vector.load %arg5[%c0_13, %c0_14] : memref<256x128xbf16, #tpu.memory_space<vmem>>, vector<256x128xbf16>
      tpu.vector_store %arg5[%c0_13, %c0_14], %16 {strides = array<i32>} : memref<256x128xbf16, #tpu.memory_space<vmem>>, vector<256x128xbf16>,
    } else {
    }
    return
  }
  func.func @transform_0(%arg0: i32, %arg1: i32) -> (i32, i32) {
    %c0_i32 = arith.constant 0 : i32
    return %arg0, %arg1 : i32, i32
  }
  func.func @transform_1(%arg0: i32, %arg1: i32) -> (i32, i32) {
    %c0_i32 = arith.constant 0 : i32
    %c0_i32_0 = arith.constant 0 : i32
    return %arg1, %c0_i32 : i32, i32
  }
  func.func @transform_2(%arg0: i32, %arg1: i32) -> (i32, i32) {
    %c0_i32 = arith.constant 0 : i32
    %c0_i32_0 = arith.constant 0 : i32
    %c0_i32_1 = arith.constant 0 : i32
    return %c0_i32, %c0_i32_0 : i32, i32
  }
  func.func @transform_3(%arg0: i32, %arg1: i32) -> (i32, i32) {
    %c0_i32 = arith.constant 0 : i32
    %c0_i32_0 = arith.constant 0 : i32
    return %arg0, %c0_i32 : i32, i32
  }
}

module attributes {stable_mosaic.version = 11 : i64} {
  func.func @kernel(%arg0: i32, %arg1: i32, %arg2: memref<256x128xbf16, #tpu.memory_space<vmem>>, %arg3: memref<128x128xbf16, #tpu.memory_space<vmem>>, %arg4: memref<1x128xf32, #tpu.memory_space<vmem>>, %arg5: memref<256x128xbf16, #tpu.memory_space<vmem>>, %arg6: memref<256x128xf32, #tpu.memory_space<vmem>>) attributes {dimension_semantics = [#tpu.dimension_semantics<parallel>, #tpu.dimension_semantics<arbitrary>], iteration_bounds = array<i64: 1, 1>, scalar_prefetch = 0 : i64, scratch_operands = 1 : i64, tpu.core_type = #tpu.core_type<tc>, window_params = [{transform_indices = @transform_0, window_bounds = array<i64: 256, 128>}, {transform_indices = @transform_1, window_bounds = array<i64: 128, 128>}, {pipeline_mode = #tpu.pipeline_mode<synchronous>, transform_indices = @transform_2, window_bounds = array<i64: 1, 128>}, {transform_indices = @transform_3, window_bounds = array<i64: 256, 128>}]} {
    %c0_i32 = arith.constant 0 : i32
    %0 = arith.cmpi eq, %arg1, %c0_i32 : i32
    %1 = arith.extui %0 : i1 to i32
    %c0_i32_0 = arith.constant 0 : i32
    %2 = arith.cmpi ne, %1, %c0_i32_0 : i32
    scf.if %2 {
      %cst_10 = arith.constant 0.000000e+00 : f32
      %12 = vector.broadcast %cst_10 : f32 to vector<256x128xf32>
      %c0_11 = arith.constant 0 : index
      %c0_12 = arith.constant 0 : index
      %13 = vector.load %arg6[%c0_11, %c0_12] : memref<256x128xf32, #tpu.memory_space<vmem>>, vector<256x128xf32>
      tpu.vector_store %arg6[%c0_11, %c0_12], %12 {strides = array<i32>} : memref<256x128xf32, #tpu.memory_space<vmem>>, vector<256x128xf32>,
    } else {
    }
    %c0 = arith.constant 0 : index
    %c0_1 = arith.constant 0 : index
    %3 = vector.load %arg6[%c0, %c0_1] : memref<256x128xf32, #tpu.memory_space<vmem>>, vector<256x128xf32>
    %c0_2 = arith.constant 0 : index
    %c0_3 = arith.constant 0 : index
    %4 = vector.load %arg2[%c0_2, %c0_3] : memref<256x128xbf16, #tpu.memory_space<vmem>>, vector<256x128xbf16>
    %c0_4 = arith.constant 0 : index
    %c0_5 = arith.constant 0 : index
    %5 = vector.load %arg3[%c0_4, %c0_5] : memref<128x128xbf16, #tpu.memory_space<vmem>>, vector<128x128xbf16>
    %cst = arith.constant dense<0.000000e+00> : vector<256x128xf32>
    %6 = tpu.matmul %4, %5, %cst {dimension_numbers = #tpu.dot_dimension_numbers<[1], [0], [0], [1], [0, 0, 1, 1], [], []>} : vector<256x128xbf16>, vector<128x128xbf16>, vector<256x128xf32> -> vector<256x128xf32>
    %7 = arith.addf %3, %6 : vector<256x128xf32>
    %c0_6 = arith.constant 0 : index
    %c0_7 = arith.constant 0 : index
    %8 = vector.load %arg6[%c0_6, %c0_7] : memref<256x128xf32, #tpu.memory_space<vmem>>, vector<256x128xf32>
    tpu.vector_store %arg6[%c0_6, %c0_7], %7 {strides = array<i32>} : memref<256x128xf32, #tpu.memory_space<vmem>>, vector<256x128xf32>,
    %c0_i32_8 = arith.constant 0 : i32
    %9 = arith.cmpi eq, %arg1, %c0_i32_8 : i32
    %10 = arith.extui %9 : i1 to i32
    %c0_i32_9 = arith.constant 0 : i32
    %11 = arith.cmpi ne, %10, %c0_i32_9 : i32
    scf.if %11 {
      %c0_10 = arith.constant 0 : index
      %c0_11 = arith.constant 0 : index
      %12 = vector.load %arg6[%c0_10, %c0_11] : memref<256x128xf32, #tpu.memory_space<vmem>>, vector<256x128xf32>
      %c0_12 = arith.constant 0 : index
      %c0_13 = arith.constant 0 : index
      %13 = vector.load %arg4[%c0_12, %c0_13] : memref<1x128xf32, #tpu.memory_space<vmem>>, vector<1x128xf32>
      %14 = vector.broadcast %13 : vector<1x128xf32> to vector<256x128xf32>
      %15 = arith.addf %12, %14 : vector<256x128xf32>
      %16 = arith.mulf %15, %15 : vector<256x128xf32>
      %cst_14 = arith.constant dense<0.000000e+00> : vector<256xf32>
      %17 = vector.multi_reduction <add>, %16, %cst_14 [1] : vector<256x128xf32> to vector<256xf32>
      %18 = vector.shape_cast %17 : vector<256xf32> to vector<256x1xf32>
      %cst_15 = arith.constant 1.000000e-24 : f32
      %19 = vector.broadcast %cst_15 : f32 to vector<256x1xf32>
      %20 = arith.maximumf %18, %19 : vector<256x1xf32>
      %21 = math.rsqrt %20 : vector<256x1xf32>
      %22 = vector.broadcast %21 : vector<256x1xf32> to vector<256x128xf32>
      %23 = arith.mulf %15, %22 : vector<256x128xf32>
      %24 = arith.truncf %23 : vector<256x128xf32> to vector<256x128xbf16>
      %c0_16 = arith.constant 0 : index
      %c0_17 = arith.constant 0 : index
      %25 = vector.load %arg5[%c0_16, %c0_17] : memref<256x128xbf16, #tpu.memory_space<vmem>>, vector<256x128xbf16>
      tpu.vector_store %arg5[%c0_16, %c0_17], %24 {strides = array<i32>} : memref<256x128xbf16, #tpu.memory_space<vmem>>, vector<256x128xbf16>,
    } else {
    }
    return
  }
  func.func @transform_0(%arg0: i32, %arg1: i32) -> (i32, i32) {
    %c0_i32 = arith.constant 0 : i32
    return %arg0, %arg1 : i32, i32
  }
  func.func @transform_1(%arg0: i32, %arg1: i32) -> (i32, i32) {
    %c0_i32 = arith.constant 0 : i32
    %c0_i32_0 = arith.constant 0 : i32
    return %arg1, %c0_i32 : i32, i32
  }
  func.func @transform_2(%arg0: i32, %arg1: i32) -> (i32, i32) {
    %c0_i32 = arith.constant 0 : i32
    %c0_i32_0 = arith.constant 0 : i32
    %c0_i32_1 = arith.constant 0 : i32
    return %c0_i32, %c0_i32_0 : i32, i32
  }
  func.func @transform_3(%arg0: i32, %arg1: i32) -> (i32, i32) {
    %c0_i32 = arith.constant 0 : i32
    %c0_i32_0 = arith.constant 0 : i32
    return %arg0, %c0_i32 : i32, i32
  }
}

module attributes {stable_mosaic.version = 11 : i64} {
  func.func @kernel(%arg0: i32, %arg1: memref<32x128xbf16, #tpu.memory_space<vmem>>, %arg2: memref<128x4352xbf16, #tpu.memory_space<vmem>>, %arg3: memref<1x1x4352xf32, #tpu.memory_space<vmem>>, %arg4: memref<1x1x128xf32, #tpu.memory_space<vmem>>, %arg5: memref<2x16xf32, #tpu.memory_space<vmem>>, %arg6: memref<2x128xf32, #tpu.memory_space<vmem>>) attributes {dimension_semantics = [#tpu.dimension_semantics<parallel>], iteration_bounds = array<i64: 1>, scalar_prefetch = 0 : i64, scratch_operands = 0 : i64, tpu.core_type = #tpu.core_type<tc>, window_params = [{pipeline_mode = #tpu.pipeline_mode<synchronous>, transform_indices = @transform_0, window_bounds = array<i64: 32, 128>}, {transform_indices = @transform_1, window_bounds = array<i64: 128, 4352>}, {transform_indices = @transform_2, window_bounds = array<i64: 1, 1, 4352>}, {transform_indices = @transform_3, window_bounds = array<i64: 1, 1, 128>}, {pipeline_mode = #tpu.pipeline_mode<synchronous>, transform_indices = @transform_4, window_bounds = array<i64: 2, 16>}, {transform_indices = @transform_5, window_bounds = array<i64: 2, 128>}]} {
    %c0 = arith.constant 0 : index
    %c0_0 = arith.constant 0 : index
    %0 = vector.load %arg1[%c0, %c0_0] : memref<32x128xbf16, #tpu.memory_space<vmem>>, vector<32x128xbf16>
    %cst = arith.constant -1.000000e+01 : f32
    %1 = vector.broadcast %cst : f32 to vector<32x128xf32>
    %c0_1 = arith.constant 0 : index
    %c0_2 = arith.constant 0 : index
    %2 = vector.load %arg2[%c0_1, %c0_2] : memref<128x4352xbf16, #tpu.memory_space<vmem>>, vector<128x1024xbf16>
    %cst_3 = arith.constant dense<0.000000e+00> : vector<32x1024xf32>
    %3 = tpu.matmul %0, %2, %cst_3 {dimension_numbers = #tpu.dot_dimension_numbers<[1], [0], [0], [1], [0, 0, 1, 1], [], []>} : vector<32x128xbf16>, vector<128x1024xbf16>, vector<32x1024xf32> -> vector<32x1024xf32>
    %c0_4 = arith.constant 0 : index
    %c0_5 = arith.constant 0 : index
    %c0_6 = arith.constant 0 : index
    %4 = vector.load %arg3[%c0_4, %c0_5, %c0_6] : memref<1x1x4352xf32, #tpu.memory_space<vmem>>, vector<1x1x1024xf32>
    %5 = vector.shape_cast %4 : vector<1x1x1024xf32> to vector<1x1024xf32>
    %6 = vector.broadcast %5 : vector<1x1024xf32> to vector<32x1024xf32>
    %7 = arith.addf %3, %6 : vector<32x1024xf32>
    %8 = vector.extract_strided_slice %7 {offsets = [0, 0], sizes = [32, 128], strides = [1, 1]} : vector<32x1024xf32> to vector<32x128xf32>
    %9 = arith.maximumf %1, %8 : vector<32x128xf32>
    %10 = vector.extract_strided_slice %7 {offsets = [0, 128], sizes = [32, 128], strides = [1, 1]} : vector<32x1024xf32> to vector<32x128xf32>
    %11 = arith.maximumf %9, %10 : vector<32x128xf32>
    %12 = vector.extract_strided_slice %7 {offsets = [0, 256], sizes = [32, 128], strides = [1, 1]} : vector<32x1024xf32> to vector<32x128xf32>
    %13 = arith.maximumf %11, %12 : vector<32x128xf32>
    %14 = vector.extract_strided_slice %7 {offsets = [0, 384], sizes = [32, 128], strides = [1, 1]} : vector<32x1024xf32> to vector<32x128xf32>
    %15 = arith.maximumf %13, %14 : vector<32x128xf32>
    %16 = vector.extract_strided_slice %7 {offsets = [0, 512], sizes = [32, 128], strides = [1, 1]} : vector<32x1024xf32> to vector<32x128xf32>
    %17 = arith.maximumf %15, %16 : vector<32x128xf32>
    %18 = vector.extract_strided_slice %7 {offsets = [0, 640], sizes = [32, 128], strides = [1, 1]} : vector<32x1024xf32> to vector<32x128xf32>
    %19 = arith.maximumf %17, %18 : vector<32x128xf32>
    %20 = vector.extract_strided_slice %7 {offsets = [0, 768], sizes = [32, 128], strides = [1, 1]} : vector<32x1024xf32> to vector<32x128xf32>
    %21 = arith.maximumf %19, %20 : vector<32x128xf32>
    %22 = vector.extract_strided_slice %7 {offsets = [0, 896], sizes = [32, 128], strides = [1, 1]} : vector<32x1024xf32> to vector<32x128xf32>
    %23 = arith.maximumf %21, %22 : vector<32x128xf32>
    %c0_7 = arith.constant 0 : index
    %c1024 = arith.constant 1024 : index
    %24 = vector.load %arg2[%c0_7, %c1024] : memref<128x4352xbf16, #tpu.memory_space<vmem>>, vector<128x1024xbf16>
    %cst_8 = arith.constant dense<0.000000e+00> : vector<32x1024xf32>
    %25 = tpu.matmul %0, %24, %cst_8 {dimension_numbers = #tpu.dot_dimension_numbers<[1], [0], [0], [1], [0, 0, 1, 1], [], []>} : vector<32x128xbf16>, vector<128x1024xbf16>, vector<32x1024xf32> -> vector<32x1024xf32>
    %c0_9 = arith.constant 0 : index
    %c0_10 = arith.constant 0 : index
    %c1024_11 = arith.constant 1024 : index
    %26 = vector.load %arg3[%c0_9, %c0_10, %c1024_11] : memref<1x1x4352xf32, #tpu.memory_space<vmem>>, vector<1x1x1024xf32>
    %27 = vector.shape_cast %26 : vector<1x1x1024xf32> to vector<1x1024xf32>
    %28 = vector.broadcast %27 : vector<1x1024xf32> to vector<32x1024xf32>
    %29 = arith.addf %25, %28 : vector<32x1024xf32>
    %30 = vector.extract_strided_slice %29 {offsets = [0, 0], sizes = [32, 128], strides = [1, 1]} : vector<32x1024xf32> to vector<32x128xf32>
    %31 = arith.maximumf %23, %30 : vector<32x128xf32>
    %32 = vector.extract_strided_slice %29 {offsets = [0, 128], sizes = [32, 128], strides = [1, 1]} : vector<32x1024xf32> to vector<32x128xf32>
    %33 = arith.maximumf %31, %32 : vector<32x128xf32>
    %34 = vector.extract_strided_slice %29 {offsets = [0, 256], sizes = [32, 128], strides = [1, 1]} : vector<32x1024xf32> to vector<32x128xf32>
    %35 = arith.maximumf %33, %34 : vector<32x128xf32>
    %36 = vector.extract_strided_slice %29 {offsets = [0, 384], sizes = [32, 128], strides = [1, 1]} : vector<32x1024xf32> to vector<32x128xf32>
    %37 = arith.maximumf %35, %36 : vector<32x128xf32>
    %38 = vector.extract_strided_slice %29 {offsets = [0, 512], sizes = [32, 128], strides = [1, 1]} : vector<32x1024xf32> to vector<32x128xf32>
    %39 = arith.maximumf %37, %38 : vector<32x128xf32>
    %40 = vector.extract_strided_slice %29 {offsets = [0, 640], sizes = [32, 128], strides = [1, 1]} : vector<32x1024xf32> to vector<32x128xf32>
    %41 = arith.maximumf %39, %40 : vector<32x128xf32>
    %42 = vector.extract_strided_slice %29 {offsets = [0, 768], sizes = [32, 128], strides = [1, 1]} : vector<32x1024xf32> to vector<32x128xf32>
    %43 = arith.maximumf %41, %42 : vector<32x128xf32>
    %44 = vector.extract_strided_slice %29 {offsets = [0, 896], sizes = [32, 128], strides = [1, 1]} : vector<32x1024xf32> to vector<32x128xf32>
    %45 = arith.maximumf %43, %44 : vector<32x128xf32>
    %c0_12 = arith.constant 0 : index
    %c2048 = arith.constant 2048 : index
    %46 = vector.load %arg2[%c0_12, %c2048] : memref<128x4352xbf16, #tpu.memory_space<vmem>>, vector<128x1024xbf16>
    %cst_13 = arith.constant dense<0.000000e+00> : vector<32x1024xf32>
    %47 = tpu.matmul %0, %46, %cst_13 {dimension_numbers = #tpu.dot_dimension_numbers<[1], [0], [0], [1], [0, 0, 1, 1], [], []>} : vector<32x128xbf16>, vector<128x1024xbf16>, vector<32x1024xf32> -> vector<32x1024xf32>
    %c0_14 = arith.constant 0 : index
    %c0_15 = arith.constant 0 : index
    %c2048_16 = arith.constant 2048 : index
    %48 = vector.load %arg3[%c0_14, %c0_15, %c2048_16] : memref<1x1x4352xf32, #tpu.memory_space<vmem>>, vector<1x1x1024xf32>
    %49 = vector.shape_cast %48 : vector<1x1x1024xf32> to vector<1x1024xf32>
    %50 = vector.broadcast %49 : vector<1x1024xf32> to vector<32x1024xf32>
    %51 = arith.addf %47, %50 : vector<32x1024xf32>
    %52 = vector.extract_strided_slice %51 {offsets = [0, 0], sizes = [32, 128], strides = [1, 1]} : vector<32x1024xf32> to vector<32x128xf32>
    %53 = arith.maximumf %45, %52 : vector<32x128xf32>
    %54 = vector.extract_strided_slice %51 {offsets = [0, 128], sizes = [32, 128], strides = [1, 1]} : vector<32x1024xf32> to vector<32x128xf32>
    %55 = arith.maximumf %53, %54 : vector<32x128xf32>
    %56 = vector.extract_strided_slice %51 {offsets = [0, 256], sizes = [32, 128], strides = [1, 1]} : vector<32x1024xf32> to vector<32x128xf32>
    %57 = arith.maximumf %55, %56 : vector<32x128xf32>
    %58 = vector.extract_strided_slice %51 {offsets = [0, 384], sizes = [32, 128], strides = [1, 1]} : vector<32x1024xf32> to vector<32x128xf32>
    %59 = arith.maximumf %57, %58 : vector<32x128xf32>
    %60 = vector.extract_strided_slice %51 {offsets = [0, 512], sizes = [32, 128], strides = [1, 1]} : vector<32x1024xf32> to vector<32x128xf32>
    %61 = arith.maximumf %59, %60 : vector<32x128xf32>
    %62 = vector.extract_strided_slice %51 {offsets = [0, 640], sizes = [32, 128], strides = [1, 1]} : vector<32x1024xf32> to vector<32x128xf32>
    %63 = arith.maximumf %61, %62 : vector<32x128xf32>
    %64 = vector.extract_strided_slice %51 {offsets = [0, 768], sizes = [32, 128], strides = [1, 1]} : vector<32x1024xf32> to vector<32x128xf32>
    %65 = arith.maximumf %63, %64 : vector<32x128xf32>
    %66 = vector.extract_strided_slice %51 {offsets = [0, 896], sizes = [32, 128], strides = [1, 1]} : vector<32x1024xf32> to vector<32x128xf32>
    %67 = arith.maximumf %65, %66 : vector<32x128xf32>
    %c0_17 = arith.constant 0 : index
    %c3072 = arith.constant 3072 : index
    %68 = vector.load %arg2[%c0_17, %c3072] : memref<128x4352xbf16, #tpu.memory_space<vmem>>, vector<128x1024xbf16>
    %cst_18 = arith.constant dense<0.000000e+00> : vector<32x1024xf32>
    %69 = tpu.matmul %0, %68, %cst_18 {dimension_numbers = #tpu.dot_dimension_numbers<[1], [0], [0], [1], [0, 0, 1, 1], [], []>} : vector<32x128xbf16>, vector<128x1024xbf16>, vector<32x1024xf32> -> vector<32x1024xf32>
    %c0_19 = arith.constant 0 : index
    %c0_20 = arith.constant 0 : index
    %c3072_21 = arith.constant 3072 : index
    %70 = vector.load %arg3[%c0_19, %c0_20, %c3072_21] : memref<1x1x4352xf32, #tpu.memory_space<vmem>>, vector<1x1x1024xf32>
    %71 = vector.shape_cast %70 : vector<1x1x1024xf32> to vector<1x1024xf32>
    %72 = vector.broadcast %71 : vector<1x1024xf32> to vector<32x1024xf32>
    %73 = arith.addf %69, %72 : vector<32x1024xf32>
    %74 = vector.extract_strided_slice %73 {offsets = [0, 0], sizes = [32, 128], strides = [1, 1]} : vector<32x1024xf32> to vector<32x128xf32>
    %75 = arith.maximumf %67, %74 : vector<32x128xf32>
    %76 = vector.extract_strided_slice %73 {offsets = [0, 128], sizes = [32, 128], strides = [1, 1]} : vector<32x1024xf32> to vector<32x128xf32>
    %77 = arith.maximumf %75, %76 : vector<32x128xf32>
    %78 = vector.extract_strided_slice %73 {offsets = [0, 256], sizes = [32, 128], strides = [1, 1]} : vector<32x1024xf32> to vector<32x128xf32>
    %79 = arith.maximumf %77, %78 : vector<32x128xf32>
    %80 = vector.extract_strided_slice %73 {offsets = [0, 384], sizes = [32, 128], strides = [1, 1]} : vector<32x1024xf32> to vector<32x128xf32>
    %81 = arith.maximumf %79, %80 : vector<32x128xf32>
    %82 = vector.extract_strided_slice %73 {offsets = [0, 512], sizes = [32, 128], strides = [1, 1]} : vector<32x1024xf32> to vector<32x128xf32>
    %83 = arith.maximumf %81, %82 : vector<32x128xf32>
    %84 = vector.extract_strided_slice %73 {offsets = [0, 640], sizes = [32, 128], strides = [1, 1]} : vector<32x1024xf32> to vector<32x128xf32>
    %85 = arith.maximumf %83, %84 : vector<32x128xf32>
    %86 = vector.extract_strided_slice %73 {offsets = [0, 768], sizes = [32, 128], strides = [1, 1]} : vector<32x1024xf32> to vector<32x128xf32>
    %87 = arith.maximumf %85, %86 : vector<32x128xf32>
    %88 = vector.extract_strided_slice %73 {offsets = [0, 896], sizes = [32, 128], strides = [1, 1]} : vector<32x1024xf32> to vector<32x128xf32>
    %89 = arith.maximumf %87, %88 : vector<32x128xf32>
    %c0_22 = arith.constant 0 : index
    %c4096 = arith.constant 4096 : index
    %90 = vector.load %arg2[%c0_22, %c4096] : memref<128x4352xbf16, #tpu.memory_space<vmem>>, vector<128x256xbf16>
    %cst_23 = arith.constant dense<0.000000e+00> : vector<32x256xf32>
    %91 = tpu.matmul %0, %90, %cst_23 {dimension_numbers = #tpu.dot_dimension_numbers<[1], [0], [0], [1], [0, 0, 1, 1], [], []>} : vector<32x128xbf16>, vector<128x256xbf16>, vector<32x256xf32> -> vector<32x256xf32>
    %c0_24 = arith.constant 0 : index
    %c0_25 = arith.constant 0 : index
    %c4096_26 = arith.constant 4096 : index
    %92 = vector.load %arg3[%c0_24, %c0_25, %c4096_26] : memref<1x1x4352xf32, #tpu.memory_space<vmem>>, vector<1x1x256xf32>
    %93 = vector.shape_cast %92 : vector<1x1x256xf32> to vector<1x256xf32>
    %94 = vector.broadcast %93 : vector<1x256xf32> to vector<32x256xf32>
    %95 = arith.addf %91, %94 : vector<32x256xf32>
    %96 = vector.extract_strided_slice %95 {offsets = [0, 0], sizes = [32, 128], strides = [1, 1]} : vector<32x256xf32> to vector<32x128xf32>
    %97 = arith.maximumf %89, %96 : vector<32x128xf32>
    %98 = vector.extract_strided_slice %95 {offsets = [0, 128], sizes = [32, 128], strides = [1, 1]} : vector<32x256xf32> to vector<32x128xf32>
    %99 = arith.maximumf %97, %98 : vector<32x128xf32>
    %100 = vector.shape_cast %99 : vector<32x128xf32> to vector<2x16x128xf32>
    %c0_27 = arith.constant 0 : index
    %c0_28 = arith.constant 0 : index
    %101 = vector.load %arg5[%c0_27, %c0_28] : memref<2x16xf32, #tpu.memory_space<vmem>>, vector<2x16xf32>
    %102 = vector.shape_cast %101 : vector<2x16xf32> to vector<2x16x1xf32>
    %cst_29 = arith.constant 5.000000e-01 : f32
    %103 = vector.broadcast %cst_29 : f32 to vector<2x16x1xf32>
    %104 = arith.cmpf ogt, %102, %103 : vector<2x16x1xf32>
    %c0_30 = arith.constant 0 : index
    %c0_31 = arith.constant 0 : index
    %c0_32 = arith.constant 0 : index
    %105 = vector.load %arg4[%c0_30, %c0_31, %c0_32] : memref<1x1x128xf32, #tpu.memory_space<vmem>>, vector<1x1x128xf32>
    %106 = vector.shape_cast %105 : vector<1x1x128xf32> to vector<1x128xf32>
    %cst_33 = arith.constant 5.000000e-01 : f32
    %107 = vector.broadcast %cst_33 : f32 to vector<1x128xf32>
    %108 = arith.cmpf ogt, %106, %107 : vector<1x128xf32>
    %109 = vector.shape_cast %108 : vector<1x128xi1> to vector<1x1x128xi1>
    %110 = vector.broadcast %104 : vector<2x16x1xi1> to vector<2x16x128xi1>
    %111 = vector.broadcast %109 : vector<1x1x128xi1> to vector<2x16x128xi1>
    %112 = arith.andi %110, %111 : vector<2x16x128xi1>
    %cst_34 = arith.constant 0xFF800000 : f32
    %113 = vector.broadcast %cst_34 : f32 to vector<2x16x128xf32>
    %114 = arith.select %112, %100, %113 : vector<2x16x128xi1>, vector<2x16x128xf32>
    %cst_35 = arith.constant dense<0xFF800000> : vector<2x128xf32>
    %115 = vector.multi_reduction <maximumf>, %114, %cst_35 [1] : vector<2x16x128xf32> to vector<2x128xf32>
    %116 = vector.shape_cast %115 : vector<2x128xf32> to vector<2x1x128xf32>
    %117 = vector.broadcast %116 : vector<2x1x128xf32> to vector<2x16x128xf32>
    %118 = arith.subf %100, %117 : vector<2x16x128xf32>
    %cst_36 = arith.constant 1.000000e+01 : f32
    %119 = vector.broadcast %cst_36 : f32 to vector<2x16x128xf32>
    %120 = arith.mulf %118, %119 : vector<2x16x128xf32>
    %121 = math.exp %120 : vector<2x16x128xf32>
    %cst_37 = arith.constant 0.000000e+00 : f32
    %122 = vector.broadcast %cst_37 : f32 to vector<2x16x128xf32>
    %123 = arith.select %112, %121, %122 : vector<2x16x128xi1>, vector<2x16x128xf32>
    %cst_38 = arith.constant dense<0.000000e+00> : vector<2x128xf32>
    %124 = vector.multi_reduction <add>, %123, %cst_38 [1] : vector<2x16x128xf32> to vector<2x128xf32>
    %125 = math.log %124 : vector<2x128xf32>
    %cst_39 = arith.constant 1.000000e-01 : f32
    %126 = vector.broadcast %cst_39 : f32 to vector<2x128xf32>
    %127 = arith.mulf %126, %125 : vector<2x128xf32>
    %128 = arith.addf %115, %127 : vector<2x128xf32>
    %cst_40 = arith.constant -1.000000e+30 : f32
    %129 = vector.broadcast %cst_40 : f32 to vector<2x128xf32>
    %130 = arith.maximumf %128, %129 : vector<2x128xf32>
    %c0_41 = arith.constant 0 : index
    %c0_42 = arith.constant 0 : index
    %131 = vector.load %arg6[%c0_41, %c0_42] : memref<2x128xf32, #tpu.memory_space<vmem>>, vector<2x128xf32>
    tpu.vector_store %arg6[%c0_41, %c0_42], %130 {strides = array<i32>} : memref<2x128xf32, #tpu.memory_space<vmem>>, vector<2x128xf32>,
    return
  }
  func.func @transform_0(%arg0: i32) -> (i32, i32) {
    %c0_i32 = arith.constant 0 : i32
    %c0_i32_0 = arith.constant 0 : i32
    %c0_i32_1 = arith.constant 0 : i32
    return %c0_i32, %c0_i32_0 : i32, i32
  }
  func.func @transform_1(%arg0: i32) -> (i32, i32) {
    %c0_i32 = arith.constant 0 : i32
    %c0_i32_0 = arith.constant 0 : i32
    return %c0_i32, %arg0 : i32, i32
  }
  func.func @transform_2(%arg0: i32) -> (i32, i32, i32) {
    %c0_i32 = arith.constant 0 : i32
    %c0_i32_0 = arith.constant 0 : i32
    %c0_i32_1 = arith.constant 0 : i32
    return %arg0, %c0_i32, %c0_i32_0 : i32, i32, i32
  }
  func.func @transform_3(%arg0: i32) -> (i32, i32, i32) {
    %c0_i32 = arith.constant 0 : i32
    %c0_i32_0 = arith.constant 0 : i32
    %c0_i32_1 = arith.constant 0 : i32
    return %arg0, %c0_i32, %c0_i32_0 : i32, i32, i32
  }
  func.func @transform_4(%arg0: i32) -> (i32, i32) {
    %c0_i32 = arith.constant 0 : i32
    %c0_i32_0 = arith.constant 0 : i32
    %c0_i32_1 = arith.constant 0 : i32
    return %c0_i32, %c0_i32_0 : i32, i32
  }
  func.func @transform_5(%arg0: i32) -> (i32, i32) {
    %c0_i32 = arith.constant 0 : i32
    %c0_i32_0 = arith.constant 0 : i32
    return %c0_i32, %arg0 : i32, i32
  }
}

module attributes {stable_mosaic.version = 11 : i64} {
  func.func @kernel(%arg0: i32, %arg1: memref<80x128xbf16, #tpu.memory_space<vmem>>, %arg2: memref<128x2048xbf16, #tpu.memory_space<vmem>>, %arg3: memref<1x1x2048xf32, #tpu.memory_space<vmem>>, %arg4: memref<1x1x128xf32, #tpu.memory_space<vmem>>, %arg5: memref<2x40xf32, #tpu.memory_space<vmem>>, %arg6: memref<2x128xf32, #tpu.memory_space<vmem>>) attributes {dimension_semantics = [#tpu.dimension_semantics<parallel>], iteration_bounds = array<i64: 1>, scalar_prefetch = 0 : i64, scratch_operands = 0 : i64, tpu.core_type = #tpu.core_type<tc>, window_params = [{pipeline_mode = #tpu.pipeline_mode<synchronous>, transform_indices = @transform_0, window_bounds = array<i64: 80, 128>}, {transform_indices = @transform_1, window_bounds = array<i64: 128, 2048>}, {transform_indices = @transform_2, window_bounds = array<i64: 1, 1, 2048>}, {transform_indices = @transform_3, window_bounds = array<i64: 1, 1, 128>}, {pipeline_mode = #tpu.pipeline_mode<synchronous>, transform_indices = @transform_4, window_bounds = array<i64: 2, 40>}, {transform_indices = @transform_5, window_bounds = array<i64: 2, 128>}]} {
    %c0 = arith.constant 0 : index
    %c0_0 = arith.constant 0 : index
    %0 = vector.load %arg1[%c0, %c0_0] : memref<80x128xbf16, #tpu.memory_space<vmem>>, vector<80x128xbf16>
    %cst = arith.constant -1.000000e+01 : f32
    %1 = vector.broadcast %cst : f32 to vector<80x128xf32>
    %c0_1 = arith.constant 0 : index
    %c0_2 = arith.constant 0 : index
    %2 = vector.load %arg2[%c0_1, %c0_2] : memref<128x2048xbf16, #tpu.memory_space<vmem>>, vector<128x1024xbf16>
    %cst_3 = arith.constant dense<0.000000e+00> : vector<80x1024xf32>
    %3 = tpu.matmul %0, %2, %cst_3 {dimension_numbers = #tpu.dot_dimension_numbers<[1], [0], [0], [1], [0, 0, 1, 1], [], []>} : vector<80x128xbf16>, vector<128x1024xbf16>, vector<80x1024xf32> -> vector<80x1024xf32>
    %c0_4 = arith.constant 0 : index
    %c0_5 = arith.constant 0 : index
    %c0_6 = arith.constant 0 : index
    %4 = vector.load %arg3[%c0_4, %c0_5, %c0_6] : memref<1x1x2048xf32, #tpu.memory_space<vmem>>, vector<1x1x1024xf32>
    %5 = vector.shape_cast %4 : vector<1x1x1024xf32> to vector<1x1024xf32>
    %6 = vector.broadcast %5 : vector<1x1024xf32> to vector<80x1024xf32>
    %7 = arith.addf %3, %6 : vector<80x1024xf32>
    %8 = vector.extract_strided_slice %7 {offsets = [0, 0], sizes = [80, 128], strides = [1, 1]} : vector<80x1024xf32> to vector<80x128xf32>
    %9 = arith.maximumf %1, %8 : vector<80x128xf32>
    %10 = vector.extract_strided_slice %7 {offsets = [0, 128], sizes = [80, 128], strides = [1, 1]} : vector<80x1024xf32> to vector<80x128xf32>
    %11 = arith.maximumf %9, %10 : vector<80x128xf32>
    %12 = vector.extract_strided_slice %7 {offsets = [0, 256], sizes = [80, 128], strides = [1, 1]} : vector<80x1024xf32> to vector<80x128xf32>
    %13 = arith.maximumf %11, %12 : vector<80x128xf32>
    %14 = vector.extract_strided_slice %7 {offsets = [0, 384], sizes = [80, 128], strides = [1, 1]} : vector<80x1024xf32> to vector<80x128xf32>
    %15 = arith.maximumf %13, %14 : vector<80x128xf32>
    %16 = vector.extract_strided_slice %7 {offsets = [0, 512], sizes = [80, 128], strides = [1, 1]} : vector<80x1024xf32> to vector<80x128xf32>
    %17 = arith.maximumf %15, %16 : vector<80x128xf32>
    %18 = vector.extract_strided_slice %7 {offsets = [0, 640], sizes = [80, 128], strides = [1, 1]} : vector<80x1024xf32> to vector<80x128xf32>
    %19 = arith.maximumf %17, %18 : vector<80x128xf32>
    %20 = vector.extract_strided_slice %7 {offsets = [0, 768], sizes = [80, 128], strides = [1, 1]} : vector<80x1024xf32> to vector<80x128xf32>
    %21 = arith.maximumf %19, %20 : vector<80x128xf32>
    %22 = vector.extract_strided_slice %7 {offsets = [0, 896], sizes = [80, 128], strides = [1, 1]} : vector<80x1024xf32> to vector<80x128xf32>
    %23 = arith.maximumf %21, %22 : vector<80x128xf32>
    %c0_7 = arith.constant 0 : index
    %c1024 = arith.constant 1024 : index
    %24 = vector.load %arg2[%c0_7, %c1024] : memref<128x2048xbf16, #tpu.memory_space<vmem>>, vector<128x1024xbf16>
    %cst_8 = arith.constant dense<0.000000e+00> : vector<80x1024xf32>
    %25 = tpu.matmul %0, %24, %cst_8 {dimension_numbers = #tpu.dot_dimension_numbers<[1], [0], [0], [1], [0, 0, 1, 1], [], []>} : vector<80x128xbf16>, vector<128x1024xbf16>, vector<80x1024xf32> -> vector<80x1024xf32>
    %c0_9 = arith.constant 0 : index
    %c0_10 = arith.constant 0 : index
    %c1024_11 = arith.constant 1024 : index
    %26 = vector.load %arg3[%c0_9, %c0_10, %c1024_11] : memref<1x1x2048xf32, #tpu.memory_space<vmem>>, vector<1x1x1024xf32>
    %27 = vector.shape_cast %26 : vector<1x1x1024xf32> to vector<1x1024xf32>
    %28 = vector.broadcast %27 : vector<1x1024xf32> to vector<80x1024xf32>
    %29 = arith.addf %25, %28 : vector<80x1024xf32>
    %30 = vector.extract_strided_slice %29 {offsets = [0, 0], sizes = [80, 128], strides = [1, 1]} : vector<80x1024xf32> to vector<80x128xf32>
    %31 = arith.maximumf %23, %30 : vector<80x128xf32>
    %32 = vector.extract_strided_slice %29 {offsets = [0, 128], sizes = [80, 128], strides = [1, 1]} : vector<80x1024xf32> to vector<80x128xf32>
    %33 = arith.maximumf %31, %32 : vector<80x128xf32>
    %34 = vector.extract_strided_slice %29 {offsets = [0, 256], sizes = [80, 128], strides = [1, 1]} : vector<80x1024xf32> to vector<80x128xf32>
    %35 = arith.maximumf %33, %34 : vector<80x128xf32>
    %36 = vector.extract_strided_slice %29 {offsets = [0, 384], sizes = [80, 128], strides = [1, 1]} : vector<80x1024xf32> to vector<80x128xf32>
    %37 = arith.maximumf %35, %36 : vector<80x128xf32>
    %38 = vector.extract_strided_slice %29 {offsets = [0, 512], sizes = [80, 128], strides = [1, 1]} : vector<80x1024xf32> to vector<80x128xf32>
    %39 = arith.maximumf %37, %38 : vector<80x128xf32>
    %40 = vector.extract_strided_slice %29 {offsets = [0, 640], sizes = [80, 128], strides = [1, 1]} : vector<80x1024xf32> to vector<80x128xf32>
    %41 = arith.maximumf %39, %40 : vector<80x128xf32>
    %42 = vector.extract_strided_slice %29 {offsets = [0, 768], sizes = [80, 128], strides = [1, 1]} : vector<80x1024xf32> to vector<80x128xf32>
    %43 = arith.maximumf %41, %42 : vector<80x128xf32>
    %44 = vector.extract_strided_slice %29 {offsets = [0, 896], sizes = [80, 128], strides = [1, 1]} : vector<80x1024xf32> to vector<80x128xf32>
    %45 = arith.maximumf %43, %44 : vector<80x128xf32>
    %46 = vector.shape_cast %45 : vector<80x128xf32> to vector<2x40x128xf32>
    %c0_12 = arith.constant 0 : index
    %c0_13 = arith.constant 0 : index
    %47 = vector.load %arg5[%c0_12, %c0_13] : memref<2x40xf32, #tpu.memory_space<vmem>>, vector<2x40xf32>
    %48 = vector.shape_cast %47 : vector<2x40xf32> to vector<2x40x1xf32>
    %cst_14 = arith.constant 5.000000e-01 : f32
    %49 = vector.broadcast %cst_14 : f32 to vector<2x40x1xf32>
    %50 = arith.cmpf ogt, %48, %49 : vector<2x40x1xf32>
    %c0_15 = arith.constant 0 : index
    %c0_16 = arith.constant 0 : index
    %c0_17 = arith.constant 0 : index
    %51 = vector.load %arg4[%c0_15, %c0_16, %c0_17] : memref<1x1x128xf32, #tpu.memory_space<vmem>>, vector<1x1x128xf32>
    %52 = vector.shape_cast %51 : vector<1x1x128xf32> to vector<1x128xf32>
    %cst_18 = arith.constant 5.000000e-01 : f32
    %53 = vector.broadcast %cst_18 : f32 to vector<1x128xf32>
    %54 = arith.cmpf ogt, %52, %53 : vector<1x128xf32>
    %55 = vector.shape_cast %54 : vector<1x128xi1> to vector<1x1x128xi1>
    %56 = vector.broadcast %50 : vector<2x40x1xi1> to vector<2x40x128xi1>
    %57 = vector.broadcast %55 : vector<1x1x128xi1> to vector<2x40x128xi1>
    %58 = arith.andi %56, %57 : vector<2x40x128xi1>
    %cst_19 = arith.constant 0xFF800000 : f32
    %59 = vector.broadcast %cst_19 : f32 to vector<2x40x128xf32>
    %60 = arith.select %58, %46, %59 : vector<2x40x128xi1>, vector<2x40x128xf32>
    %cst_20 = arith.constant dense<0xFF800000> : vector<2x128xf32>
    %61 = vector.multi_reduction <maximumf>, %60, %cst_20 [1] : vector<2x40x128xf32> to vector<2x128xf32>
    %62 = vector.shape_cast %61 : vector<2x128xf32> to vector<2x1x128xf32>
    %63 = vector.broadcast %62 : vector<2x1x128xf32> to vector<2x40x128xf32>
    %64 = arith.subf %46, %63 : vector<2x40x128xf32>
    %cst_21 = arith.constant 1.000000e+01 : f32
    %65 = vector.broadcast %cst_21 : f32 to vector<2x40x128xf32>
    %66 = arith.mulf %64, %65 : vector<2x40x128xf32>
    %67 = math.exp %66 : vector<2x40x128xf32>
    %cst_22 = arith.constant 0.000000e+00 : f32
    %68 = vector.broadcast %cst_22 : f32 to vector<2x40x128xf32>
    %69 = arith.select %58, %67, %68 : vector<2x40x128xi1>, vector<2x40x128xf32>
    %cst_23 = arith.constant dense<0.000000e+00> : vector<2x128xf32>
    %70 = vector.multi_reduction <add>, %69, %cst_23 [1] : vector<2x40x128xf32> to vector<2x128xf32>
    %71 = math.log %70 : vector<2x128xf32>
    %cst_24 = arith.constant 1.000000e-01 : f32
    %72 = vector.broadcast %cst_24 : f32 to vector<2x128xf32>
    %73 = arith.mulf %72, %71 : vector<2x128xf32>
    %74 = arith.addf %61, %73 : vector<2x128xf32>
    %cst_25 = arith.constant -1.000000e+30 : f32
    %75 = vector.broadcast %cst_25 : f32 to vector<2x128xf32>
    %76 = arith.maximumf %74, %75 : vector<2x128xf32>
    %c0_26 = arith.constant 0 : index
    %c0_27 = arith.constant 0 : index
    %77 = vector.load %arg6[%c0_26, %c0_27] : memref<2x128xf32, #tpu.memory_space<vmem>>, vector<2x128xf32>
    tpu.vector_store %arg6[%c0_26, %c0_27], %76 {strides = array<i32>} : memref<2x128xf32, #tpu.memory_space<vmem>>, vector<2x128xf32>,
    return
  }
  func.func @transform_0(%arg0: i32) -> (i32, i32) {
    %c0_i32 = arith.constant 0 : i32
    %c0_i32_0 = arith.constant 0 : i32
    %c0_i32_1 = arith.constant 0 : i32
    return %c0_i32, %c0_i32_0 : i32, i32
  }
  func.func @transform_1(%arg0: i32) -> (i32, i32) {
    %c0_i32 = arith.constant 0 : i32
    %c0_i32_0 = arith.constant 0 : i32
    return %c0_i32, %arg0 : i32, i32
  }
  func.func @transform_2(%arg0: i32) -> (i32, i32, i32) {
    %c0_i32 = arith.constant 0 : i32
    %c0_i32_0 = arith.constant 0 : i32
    %c0_i32_1 = arith.constant 0 : i32
    return %arg0, %c0_i32, %c0_i32_0 : i32, i32, i32
  }
  func.func @transform_3(%arg0: i32) -> (i32, i32, i32) {
    %c0_i32 = arith.constant 0 : i32
    %c0_i32_0 = arith.constant 0 : i32
    %c0_i32_1 = arith.constant 0 : i32
    return %arg0, %c0_i32, %c0_i32_0 : i32, i32, i32
  }
  func.func @transform_4(%arg0: i32) -> (i32, i32) {
    %c0_i32 = arith.constant 0 : i32
    %c0_i32_0 = arith.constant 0 : i32
    %c0_i32_1 = arith.constant 0 : i32
    return %c0_i32, %c0_i32_0 : i32, i32
  }
  func.func @transform_5(%arg0: i32) -> (i32, i32) {
    %c0_i32 = arith.constant 0 : i32
    %c0_i32_0 = arith.constant 0 : i32
    return %c0_i32, %arg0 : i32, i32
  }
}

</mosaic_0001>

<llo_original>
// kernel: blip_retrieval_forward.7
$region0: #{blip_retrieval_forward.7}
  #allocation0 [shape = 'u32[]', space=smem, size = 0x4, offset = 0x4, fixed_abs, tag = 'smem constant byte address 0x4 - core index']
  #allocation1 [shape = 'u32[144,128]{1,0:T(1,128)}', space=vmem, size = 0x12000, scoped, tag = 'internal scratch']
  #allocation2 [shape = 'f32[256,128]{1,0:T(8,128)}', space=vmem, size = 0x20000, scoped, tag = 'scratch operand']
  %s0 = inlined_call_operand.vmem [shape: bf16[256,2048], index: 0, kind: input, shape index: {}]
  %s1 = inlined_call_operand.vmem [shape: bf16[2048,128], index: 1, kind: input, shape index: {}]
  %s2 = inlined_call_operand.vmem [shape: f32[1,128], index: 2, kind: input, shape index: {}]
  %s3 = inlined_call_operand.vmem [shape: bf16[256,128], index: 3, kind: output, shape index: {}]
  %s4 = sld [smem:[#allocation0]]
  $region76: #{blip_retrieval_forward.7} parent=0
    _
  %s6 = ssub.s32 1, %s4
  %s7 = scalar_select 0, %s6, %s4
  $region1: #{blip_retrieval_forward.7} parent=0
    #allocation3 [shape = 'u8[524288]{0}', space=vmem, size = 0x80000, scoped, tag = 'input window, operand 0']
    loop: start=0, step=1, limit=6
    $region2: #{blip_retrieval_forward.7} parent=1 // loop_pre_header
      _
    $region3: #{blip_retrieval_forward.7} parent=1 // loop_header
      %s9 = sphi 0, %s13
      %p10 = scmp.ge.s32.totalorder %s9, 6
      %s16 = sphi 0, %s28
      %s17 = sphi 0, %s24
      %s18 = sphi 0, %s16
      %s19 = sphi 0, %s17
      %s20 = sphi 0, %s18
      %s21 = sphi 0, %s19
      %s33 = sphi 0, %s35
      %s36 = sphi 0, %s33
      %s37 = sphi 0, %s36
      %s53 = sphi 0, %s37
      %s59 = sphi 0, %s61
      %s62 = sphi 0, %s59
      %s63 = sphi 0, %s62
      %s79 = sphi 0, %s63
      %s83 = sphi 0, %s83
      %s85 = sphi 0, %s83
      %s86 = sphi 0, %s85
      %s100 = sphi 0, %s86
      %s106 = sphi 0, %s108
      %s109 = sphi 0, %s106
      %s110 = sphi 0, %s109
      %s126 = sphi 0, %s110
    $region4: #{blip_retrieval_forward.7} parent=1 // loop_header_branch
      %12 = sbr.rel (%p10) target = $region8
    $region5: #{blip_retrieval_forward.7} parent=1 // loop_body
      %s14 = ssub.s32 %s9, 1
      %s15 = ssub.s32 %s9, 2
      %s22 = sadd.s32 1, %s17
      %p23 = scmp.ge.s32.totalorder %s22, 4
      %s24 = scalar_select %p23, 0, %s22
      %s25 = sadd.s32 1, %s16
      %s26 = scalar_select %p23, %s25, %s16
      %p27 = scmp.ge.s32.totalorder %s26, 1
      %s28 = scalar_select %p27, 0, %s26
      %s29 = ssub.s32 %s16, %s28
      %s30 = ssub.s32 %s17, %s24
      %s31 = sor.u32 %s29, %s30
      %p32 = scmp.eq.s32.totalorder %s31, 0
      %s34 = sadd.s32 %s33, 1
      %s35 = scalar_select %p32, %s33, %s34
      %p38 = pneg %p32
      %p39 = scmp.eq.s32.totalorder %s9, 3
      %p40 = por %p38, %p39
      %p41 = scmp.ne.s32.totalorder %s33, %s36
      %p42 = scmp.eq.s32.totalorder %s9, 0
      %p43 = por %p41, %p42
      %p44 = scmp.ne.s32.totalorder %s33, %s36
      %p45 = scmp.eq.s32.totalorder %s14, 3
      %p46 = por %p44, %p45
      %p47 = scmp.ne.s32.totalorder %s36, %s37
      %p48 = scmp.eq.s32.totalorder %s14, 0
      %p49 = por %p47, %p48
      %p50 = scmp.ne.s32.totalorder %s36, %s37
      %p51 = scmp.eq.s32.totalorder %s15, 3
      %p52 = por %p50, %p51
      %p54 = scmp.ne.s32.totalorder %s37, %s53
      %p55 = scmp.eq.s32.totalorder %s15, 0
      %p56 = por %p54, %p55
      %s57 = ssub.s32 %s17, %s24
      %p58 = scmp.eq.s32.totalorder %s57, 0
      %s60 = sadd.s32 %s59, 1
      %s61 = scalar_select %p58, %s59, %s60
      %p64 = pneg %p58
      %p65 = scmp.eq.s32.totalorder %s9, 3
      %p66 = por %p64, %p65
      %p67 = scmp.ne.s32.totalorder %s59, %s62
      %p68 = scmp.eq.s32.totalorder %s9, 0
      %p69 = por %p67, %p68
      %p70 = scmp.ne.s32.totalorder %s59, %s62
      %p71 = scmp.eq.s32.totalorder %s14, 3
      %p72 = por %p70, %p71
      %p73 = scmp.ne.s32.totalorder %s62, %s63
      %p74 = scmp.eq.s32.totalorder %s14, 0
      %p75 = por %p73, %p74
      %p76 = scmp.ne.s32.totalorder %s62, %s63
      %p77 = scmp.eq.s32.totalorder %s15, 3
      %p78 = por %p76, %p77
      %p80 = scmp.ne.s32.totalorder %s63, %s79
      %p81 = scmp.eq.s32.totalorder %s15, 0
      %p82 = por %p80, %p81
      %s84 = sadd.s32 %s83, 1
      %p87 = scmp.eq.s32.totalorder %s9, 3
      %p88 = scmp.ne.s32.totalorder %s83, %s85
      %p89 = scmp.eq.s32.totalorder %s9, 0
      %p90 = por %p88, %p89
      %p91 = scmp.ne.s32.totalorder %s83, %s85
      %p92 = scmp.eq.s32.totalorder %s14, 3
      %p93 = por %p91, %p92
      %p94 = scmp.ne.s32.totalorder %s85, %s86
      %p95 = scmp.eq.s32.totalorder %s14, 0
      %p96 = por %p94, %p95
      %p97 = scmp.ne.s32.totalorder %s85, %s86
      %p98 = scmp.eq.s32.totalorder %s15, 3
      %p99 = por %p97, %p98
      %p101 = scmp.ne.s32.totalorder %s86, %s100
      %p102 = scmp.eq.s32.totalorder %s15, 0
      %p103 = por %p101, %p102
      %s104 = ssub.s32 %s16, %s28
      %p105 = scmp.eq.s32.totalorder %s104, 0
      %s107 = sadd.s32 %s106, 1
      %s108 = scalar_select %p105, %s106, %s107
      %p111 = pneg %p105
      %p112 = scmp.eq.s32.totalorder %s9, 3
      %p113 = por %p111, %p112
      %p114 = scmp.ne.s32.totalorder %s106, %s109
      %p115 = scmp.eq.s32.totalorder %s9, 0
      %p116 = por %p114, %p115
      %p117 = scmp.ne.s32.totalorder %s106, %s109
      %p118 = scmp.eq.s32.totalorder %s14, 3
      %p119 = por %p117, %p118
      %p120 = scmp.ne.s32.totalorder %s109, %s110
      %p121 = scmp.eq.s32.totalorder %s14, 0
      %p122 = por %p120, %p121
      %p123 = scmp.ne.s32.totalorder %s109, %s110
      %p124 = scmp.eq.s32.totalorder %s15, 3
      %p125 = por %p123, %p124
      %p127 = scmp.ne.s32.totalorder %s110, %s126
      %p128 = scmp.eq.s32.totalorder %s15, 0
      %p129 = por %p127, %p128
      %p130 = scmp.le.s32.totalorder 1, %s9
      %p131 = scmp.lt.s32.totalorder %s9, 5
      %p132 = pnand %p130, %p131
      %p133 = pneg %p132
      // Predicated region
      $region9: #{blip_retrieval_forward.7} parent=5 // pred_check
        _
      $region10: #{blip_retrieval_forward.7} parent=5 // pred_check_branch
        %135 = sbr.rel (%p132) target = $region12
      $region11: #{blip_retrieval_forward.7} parent=5 // pred_region
        %s136 = ssub.s32 %s9, 1
        // Predicated region
        $region13: #{blip_retrieval_forward.7} parent=11 // pred_check
          %p137 = pneg %p96
        $region14: #{blip_retrieval_forward.7} parent=11 // pred_check_branch
          %139 = sbr.rel (%p137) target = $region16
        $region15: #{blip_retrieval_forward.7} parent=11 // pred_region
          _
        $region16: #{blip_retrieval_forward.7} parent=11 // pred_fallthru
          _
      $region12: #{blip_retrieval_forward.7} parent=5 // pred_fallthru
        _
      %p140 = scmp.lt.s32.totalorder %s9, 4
      // Predicated region
      $region17: #{blip_retrieval_forward.7} parent=5 // pred_check
        %p141 = pneg %p140
      $region18: #{blip_retrieval_forward.7} parent=5 // pred_check_branch
        %143 = sbr.rel (%p141) target = $region20
      $region19: #{blip_retrieval_forward.7} parent=5 // pred_region
        // Predicated region
        $region21: #{blip_retrieval_forward.7} parent=19 // pred_check
          %p144 = pneg %p43
        $region22: #{blip_retrieval_forward.7} parent=19 // pred_check_branch
          %146 = sbr.rel (%p144) target = $region24
        $region23: #{blip_retrieval_forward.7} parent=19 // pred_region
          %s147 = sand.u32 %s33, 1
          %s148 = sand.u32 %s33, 1
          %s149 = smul.addr %s148, 512
          %s150 = scalar_lea.vmem [#allocation3], %s149
          %s151 = smul.u32 32, %s16
          %s152 = smul.u32 4, %s17
          %s153 = smul.addr %s151, 16
          %s154 = sadd.s32 %s152, %s153
          %s155 = smul.addr %s154, 4
          %s156 = scalar_lea.vmem %s0, %s155
          // Predicated region
          $region25: #{blip_retrieval_forward.7} parent=23 // pred_check
            _
          $region26: #{blip_retrieval_forward.7} parent=23 // pred_check_branch
            %158 = sbr.rel (0) target = $region28
          $region27: #{blip_retrieval_forward.7} parent=23 // pred_region
            // Predicated region
            $region29: #{blip_retrieval_forward.7} parent=27 // pred_check
              _
            $region30: #{blip_retrieval_forward.7} parent=27 // pred_check_branch
              %160 = sbr.rel (0) target = $region32
            $region31: #{blip_retrieval_forward.7} parent=27 // pred_region
              loop: start=0, step=1, limit=1
              $region33: #{blip_retrieval_forward.7} parent=31 // loop_pre_header
                _
              $region34: #{blip_retrieval_forward.7} parent=31 // loop_header
                %s162 = sphi 0, %s166
                %p163 = scmp.ge.s32.totalorder %s162, 1
                %s167 = sphi %s156, %s156
                %s168 = sphi %s150, %s150
              $region35: #{blip_retrieval_forward.7} parent=31 // loop_header_branch
                %165 = sbr.rel (%p163) target = $region39
              $region36: #{blip_retrieval_forward.7} parent=31 // loop_body
                %v169 = vld [vmem:[%s167] sm:$0xff]
                %170 = vst [vmem:[%s168] sm:$0xff] %v169
                %v171 = vld [vmem:[%s167 + $0x8] sm:$0xff]
                %172 = vst [vmem:[%s168 + $0x8] sm:$0xff] %v171
                %v173 = vld [vmem:[%s167 + $0x40] sm:$0xff]
                %174 = vst [vmem:[%s168 + $0x10] sm:$0xff] %v173
                %v175 = vld [vmem:[%s167 + $0x48] sm:$0xff]
                %176 = vst [vmem:[%s168 + $0x18] sm:$0xff] %v175
                %v177 = vld [vmem:[%s167 + $0x80] sm:$0xff]
                %178 = vst [vmem:[%s168 + $0x20] sm:$0xff] %v177
                %v179 = vld [vmem:[%s167 + $0x88] sm:$0xff]
                %180 = vst [vmem:[%s168 + $0x28] sm:$0xff] %v179
                %v181 = vld [vmem:[%s167 + $0xc0] sm:$0xff]
                %182 = vst [vmem:[%s168 + $0x30] sm:$0xff] %v181
                %v183 = vld [vmem:[%s167 + $0xc8] sm:$0xff]
                %184 = vst [vmem:[%s168 + $0x38] sm:$0xff] %v183
                %v185 = vld [vmem:[%s167 + $0x100] sm:$0xff]
                %186 = vst [vmem:[%s168 + $0x40] sm:$0xff] %v185
                %v187 = vld [vmem:[%s167 + $0x108] sm:$0xff]
                %188 = vst [vmem:[%s168 + $0x48] sm:$0xff] %v187
                %v189 = vld [vmem:[%s167 + $0x140] sm:$0xff]
                %190 = vst [vmem:[%s168 + $0x50] sm:$0xff] %v189
                %v191 = vld [vmem:[%s167 + $0x148] sm:$0xff]
                %192 = vst [vmem:[%s168 + $0x58] sm:$0xff] %v191
                %v193 = vld [vmem:[%s167 + $0x180] sm:$0xff]
                %194 = vst [vmem:[%s168 + $0x60] sm:$0xff] %v193
                %v195 = vld [vmem:[%s167 + $0x188] sm:$0xff]
                %196 = vst [vmem:[%s168 + $0x68] sm:$0xff] %v195
                %v197 = vld [vmem:[%s167 + $0x1c0] sm:$0xff]
                %198 = vst [vmem:[%s168 + $0x70] sm:$0xff] %v197
                %v199 = vld [vmem:[%s167 + $0x1c8] sm:$0xff]
                %200 = vst [vmem:[%s168 + $0x78] sm:$0xff] %v199
                %v201 = vld [vmem:[%s167 + $0x200] sm:$0xff]
                %202 = vst [vmem:[%s168 + $0x80] sm:$0xff] %v201
                %v203 = vld [vmem:[%s167 + $0x208] sm:$0xff]
                %204 = vst [vmem:[%s168 + $0x88] sm:$0xff] %v203
                %v205 = vld [vmem:[%s167 + $0x240] sm:$0xff]
                %206 = vst [vmem:[%s168 + $0x90] sm:$0xff] %v205
                %v207 = vld [vmem:[%s167 + $0x248] sm:$0xff]
                %208 = vst [vmem:[%s168 + $0x98] sm:$0xff] %v207
                %v209 = vld [vmem:[%s167 + $0x280] sm:$0xff]
                %210 = vst [vmem:[%s168 + $0xa0] sm:$0xff] %v209
                %v211 = vld [vmem:[%s167 + $0x288] sm:$0xff]
                %212 = vst [vmem:[%s168 + $0xa8] sm:$0xff] %v211
                %v213 = vld [vmem:[%s167 + $0x2c0] sm:$0xff]
                %214 = vst [vmem:[%s168 + $0xb0] sm:$0xff] %v213
                %v215 = vld [vmem:[%s167 + $0x2c8] sm:$0xff]
                %216 = vst [vmem:[%s168 + $0xb8] sm:$0xff] %v215
                %v217 = vld [vmem:[%s167 + $0x300] sm:$0xff]
                %218 = vst [vmem:[%s168 + $0xc0] sm:$0xff] %v217
                %v219 = vld [vmem:[%s167 + $0x308] sm:$0xff]
                %220 = vst [vmem:[%s168 + $0xc8] sm:$0xff] %v219
                %v221 = vld [vmem:[%s167 + $0x340] sm:$0xff]
                %222 = vst [vmem:[%s168 + $0xd0] sm:$0xff] %v221
                %v223 = vld [vmem:[%s167 + $0x348] sm:$0xff]
                %224 = vst [vmem:[%s168 + $0xd8] sm:$0xff] %v223
                %v225 = vld [vmem:[%s167 + $0x380] sm:$0xff]
                %226 = vst [vmem:[%s168 + $0xe0] sm:$0xff] %v225
                %v227 = vld [vmem:[%s167 + $0x388] sm:$0xff]
                %228 = vst [vmem:[%s168 + $0xe8] sm:$0xff] %v227
                %v229 = vld [vmem:[%s167 + $0x3c0] sm:$0xff]
                %230 = vst [vmem:[%s168 + $0xf0] sm:$0xff] %v229
                %v231 = vld [vmem:[%s167 + $0x3c8] sm:$0xff]
                %232 = vst [vmem:[%s168 + $0xf8] sm:$0xff] %v231
                %v233 = vld [vmem:[%s167 + $0x400] sm:$0xff]
                %234 = vst [vmem:[%s168 + $0x100] sm:$0xff] %v233
                %v235 = vld [vmem:[%s167 + $0x408] sm:$0xff]
                %236 = vst [vmem:[%s168 + $0x108] sm:$0xff] %v235
                %v237 = vld [vmem:[%s167 + $0x440] sm:$0xff]
                %238 = vst [vmem:[%s168 + $0x110] sm:$0xff] %v237
                %v239 = vld [vmem:[%s167 + $0x448] sm:$0xff]
                %240 = vst [vmem:[%s168 + $0x118] sm:$0xff] %v239
                %v241 = vld [vmem:[%s167 + $0x480] sm:$0xff]
                %242 = vst [vmem:[%s168 + $0x120] sm:$0xff] %v241
                %v243 = vld [vmem:[%s167 + $0x488] sm:$0xff]
                %244 = vst [vmem:[%s168 + $0x128] sm:$0xff] %v243
                %v245 = vld [vmem:[%s167 + $0x4c0] sm:$0xff]
                %246 = vst [vmem:[%s168 + $0x130] sm:$0xff] %v245
                %v247 = vld [vmem:[%s167 + $0x4c8] sm:$0xff]
                %248 = vst [vmem:[%s168 + $0x138] sm:$0xff] %v247
                %v249 = vld [vmem:[%s167 + $0x500] sm:$0xff]
                %250 = vst [vmem:[%s168 + $0x140] sm:$0xff] %v249
                %v251 = vld [vmem:[%s167 + $0x508] sm:$0xff]
                %252 = vst [vmem:[%s168 + $0x148] sm:$0xff] %v251
                %v253 = vld [vmem:[%s167 + $0x540] sm:$0xff]
                %254 = vst [vmem:[%s168 + $0x150] sm:$0xff] %v253
                %v255 = vld [vmem:[%s167 + $0x548] sm:$0xff]
                %256 = vst [vmem:[%s168 + $0x158] sm:$0xff] %v255
                %v257 = vld [vmem:[%s167 + $0x580] sm:$0xff]
                %258 = vst [vmem:[%s168 + $0x160] sm:$0xff] %v257
                %v259 = vld [vmem:[%s167 + $0x588] sm:$0xff]
                %260 = vst [vmem:[%s168 + $0x168] sm:$0xff] %v259
                %v261 = vld [vmem:[%s167 + $0x5c0] sm:$0xff]
                %262 = vst [vmem:[%s168 + $0x170] sm:$0xff] %v261
                %v263 = vld [vmem:[%s167 + $0x5c8] sm:$0xff]
                %264 = vst [vmem:[%s168 + $0x178] sm:$0xff] %v263
                %v265 = vld [vmem:[%s167 + $0x600] sm:$0xff]
                %266 = vst [vmem:[%s168 + $0x180] sm:$0xff] %v265
                %v267 = vld [vmem:[%s167 + $0x608] sm:$0xff]
                %268 = vst [vmem:[%s168 + $0x188] sm:$0xff] %v267
                %v269 = vld [vmem:[%s167 + $0x640] sm:$0xff]
                %270 = vst [vmem:[%s168 + $0x190] sm:$0xff] %v269
                %v271 = vld [vmem:[%s167 + $0x648] sm:$0xff]
                %272 = vst [vmem:[%s168 + $0x198] sm:$0xff] %v271
                %v273 = vld [vmem:[%s167 + $0x680] sm:$0xff]
                %274 = vst [vmem:[%s168 + $0x1a0] sm:$0xff] %v273
                %v275 = vld [vmem:[%s167 + $0x688] sm:$0xff]
                %276 = vst [vmem:[%s168 + $0x1a8] sm:$0xff] %v275
                %v277 = vld [vmem:[%s167 + $0x6c0] sm:$0xff]
                %278 = vst [vmem:[%s168 + $0x1b0] sm:$0xff] %v277
                %v279 = vld [vmem:[%s167 + $0x6c8] sm:$0xff]
                %280 = vst [vmem:[%s168 + $0x1b8] sm:$0xff] %v279
                %v281 = vld [vmem:[%s167 + $0x700] sm:$0xff]
                %282 = vst [vmem:[%s168 + $0x1c0] sm:$0xff] %v281
                %v283 = vld [vmem:[%s167 + $0x708] sm:$0xff]
                %284 = vst [vmem:[%s168 + $0x1c8] sm:$0xff] %v283
                %v285 = vld [vmem:[%s167 + $0x740] sm:$0xff]
                %286 = vst [vmem:[%s168 + $0x1d0] sm:$0xff] %v285
                %v287 = vld [vmem:[%s167 + $0x748] sm:$0xff]
                %288 = vst [vmem:[%s168 + $0x1d8] sm:$0xff] %v287
                %v289 = vld [vmem:[%s167 + $0x780] sm:$0xff]
                %290 = vst [vmem:[%s168 + $0x1e0] sm:$0xff] %v289
                %v291 = vld [vmem:[%s167 + $0x788] sm:$0xff]
                %292 = vst [vmem:[%s168 + $0x1e8] sm:$0xff] %v291
                %v293 = vld [vmem:[%s167 + $0x7c0] sm:$0xff]
                %294 = vst [vmem:[%s168 + $0x1f0] sm:$0xff] %v293
                %v295 = vld [vmem:[%s167 + $0x7c8] sm:$0xff]
                %296 = vst [vmem:[%s168 + $0x1f8] sm:$0xff] %v295
              $region37: #{blip_retrieval_forward.7} parent=31 // loop_footer
                %s166 = sadd.s32 1, %s162
              $region38: #{blip_retrieval_forward.7} parent=31 // loop_footer_branch
                %161 = sbr.rel target = $region34
              $region39: #{blip_retrieval_forward.7} parent=31 // loop_exit
                _
            $region32: #{blip_retrieval_forward.7} parent=27 // pred_fallthru
              _
            // Predicated region
            $region40: #{blip_retrieval_forward.7} parent=27 // pred_check
              _
            $region41: #{blip_retrieval_forward.7} parent=27 // pred_check_branch
              %298 = sbr.rel target = $region43
            $region42: #{blip_retrieval_forward.7} parent=27 // pred_region
              _
            $region43: #{blip_retrieval_forward.7} parent=27 // pred_fallthru
              _
          $region28: #{blip_retrieval_forward.7} parent=23 // pred_fallthru
            _
          %299 = vnop
        $region24: #{blip_retrieval_forward.7} parent=19 // pred_fallthru
          _
        // Predicated region
        $region44: #{blip_retrieval_forward.7} parent=19 // pred_check
          %p300 = pneg %p69
        $region45: #{blip_retrieval_forward.7} parent=19 // pred_check_branch
          %302 = sbr.rel (%p300) target = $region47
        $region46: #{blip_retrieval_forward.7} parent=19 // pred_region
          %s303 = smul.u32 64, %s17
          %p304 = scmp.lt.s32.totalorder %s303, 255
          %s305 = scalar_select %p304, %s303, 255
          %s306 = smul.addr %s305, 4
          %s307 = scalar_lea.vmem %s1, %s306
          %s308 = smul.u32 64, %s17
        $region47: #{blip_retrieval_forward.7} parent=19 // pred_fallthru
          _
      $region20: #{blip_retrieval_forward.7} parent=5 // pred_fallthru
        _
      %p309 = scmp.le.s32.totalorder 1, %s9
      %p310 = scmp.lt.s32.totalorder %s9, 5
      %p311 = pnand %p309, %p310
      %p312 = pneg %p311
      // Predicated region
      $region48: #{blip_retrieval_forward.7} parent=5 // pred_check
        _
      $region49: #{blip_retrieval_forward.7} parent=5 // pred_check_branch
        %314 = sbr.rel (%p311) target = $region51
      $region50: #{blip_retrieval_forward.7} parent=5 // pred_region
        %s315 = ssub.s32 %s9, 1
        %s316 = sand.u32 %s36, 1
        %s317 = sand.u32 %s36, 1
        %s318 = smul.addr %s317, 512
        %s319 = scalar_lea.vmem [#allocation3], %s318
        // Predicated region
        $region52: #{blip_retrieval_forward.7} parent=50 // pred_check
          %p320 = pneg %p49
        $region53: #{blip_retrieval_forward.7} parent=50 // pred_check_branch
          %322 = sbr.rel (%p320) target = $region55
        $region54: #{blip_retrieval_forward.7} parent=50 // pred_region
          _
        $region55: #{blip_retrieval_forward.7} parent=50 // pred_fallthru
          _
        %s323 = sand.u32 %s36, 1
        %s324 = sand.u32 %s36, 1
        %s325 = smul.addr %s324, 512
        %s326 = scalar_lea.vmem [#allocation3], %s325
        %p327 = pneg %p49
        %p328 = pneg %p46
        %s329 = smul.u32 64, %s19
        %p330 = scmp.lt.s32.totalorder %s329, 255
        %s331 = scalar_select %p330, %s329, 255
        %s332 = smul.addr %s331, 4
        %s333 = scalar_lea.vmem %s1, %s332
        %p334 = pneg %p75
        %p335 = pneg %p72
        %p336 = pneg %p96
        %p337 = pneg %p93
        %p338 = pneg %p122
        %p339 = pneg %p119
        %s340 = smul.u32 32, %s18
        %p341 = scmp.lt.s32.totalorder %s340, 31
        %s342 = scalar_select %p341, %s340, 31
        %s343 = smul.addr %s342, 4
        %s344 = scalar_lea.vmem %s3, %s343
        %s345 = smul.u32 32, %s18
        %s346 = smul.u32 4, %s19
        %s347 = smul.u32 64, %s19
        %p348 = scmp.lt.s32.totalorder %s347, 255
        %s349 = scalar_select %p348, %s347, 255
        %s350 = smul.addr %s349, 4
        %s351 = scalar_lea.vmem %s1, %s350
        %s352 = smul.u32 64, %s19
        %s353 = smul.u32 32, %s18
        %p354 = scmp.lt.s32.totalorder %s353, 31
        %s355 = scalar_select %p354, %s353, 31
        %s356 = smul.addr %s355, 4
        %s357 = scalar_lea.vmem %s3, %s356
        %s358 = smul.u32 32, %s18
        %p360 = scmp.eq.s32.totalorder %s19, 0
        // Predicated region
        $region56: #{blip_retrieval_forward.7} parent=50 // pred_check
          %p361 = pneg %p360
        $region57: #{blip_retrieval_forward.7} parent=50 // pred_check_branch
          %363 = sbr.rel (%p361) target = $region59
        $region58: #{blip_retrieval_forward.7} parent=50 // pred_region
          %364 = vst [vmem:[#allocation2] sm:$0xff] 0.0
          %365 = vst [vmem:[#allocation2 + $0x8] sm:$0xff] 0.0
          %366 = vst [vmem:[#allocation2 + $0x10] sm:$0xff] 0.0
          %367 = vst [vmem:[#allocation2 + $0x18] sm:$0xff] 0.0
          %368 = vst [vmem:[#allocation2 + $0x20] sm:$0xff] 0.0
          %369 = vst [vmem:[#allocation2 + $0x28] sm:$0xff] 0.0
          %370 = vst [vmem:[#allocation2 + $0x30] sm:$0xff] 0.0
          %371 = vst [vmem:[#allocation2 + $0x38] sm:$0xff] 0.0
          %372 = vst [vmem:[#allocation2 + $0x40] sm:$0xff] 0.0
          %373 = vst [vmem:[#allocation2 + $0x48] sm:$0xff] 0.0
          %374 = vst [vmem:[#allocation2 + $0x50] sm:$0xff] 0.0
          %375 = vst [vmem:[#allocation2 + $0x58] sm:$0xff] 0.0
          %376 = vst [vmem:[#allocation2 + $0x60] sm:$0xff] 0.0
          %377 = vst [vmem:[#allocation2 + $0x68] sm:$0xff] 0.0
          %378 = vst [vmem:[#allocation2 + $0x70] sm:$0xff] 0.0
          %379 = vst [vmem:[#allocation2 + $0x78] sm:$0xff] 0.0
          %380 = vst [vmem:[#allocation2 + $0x80] sm:$0xff] 0.0
          %381 = vst [vmem:[#allocation2 + $0x88] sm:$0xff] 0.0
          %382 = vst [vmem:[#allocation2 + $0x90] sm:$0xff] 0.0
          %383 = vst [vmem:[#allocation2 + $0x98] sm:$0xff] 0.0
          %384 = vst [vmem:[#allocation2 + $0xa0] sm:$0xff] 0.0
          %385 = vst [vmem:[#allocation2 + $0xa8] sm:$0xff] 0.0
          %386 = vst [vmem:[#allocation2 + $0xb0] sm:$0xff] 0.0
          %387 = vst [vmem:[#allocation2 + $0xb8] sm:$0xff] 0.0
          %388 = vst [vmem:[#allocation2 + $0xc0] sm:$0xff] 0.0
          %389 = vst [vmem:[#allocation2 + $0xc8] sm:$0xff] 0.0
          %390 = vst [vmem:[#allocation2 + $0xd0] sm:$0xff] 0.0
          %391 = vst [vmem:[#allocation2 + $0xd8] sm:$0xff] 0.0
          %392 = vst [vmem:[#allocation2 + $0xe0] sm:$0xff] 0.0
          %393 = vst [vmem:[#allocation2 + $0xe8] sm:$0xff] 0.0
          %394 = vst [vmem:[#allocation2 + $0xf0] sm:$0xff] 0.0
          %395 = vst [vmem:[#allocation2 + $0xf8] sm:$0xff] 0.0
        $region59: #{blip_retrieval_forward.7} parent=50 // pred_fallthru
          _
        %v396 = vld [vmem:[#allocation2] sm:$0xff]
        %v397 = vld [vmem:[#allocation2 + $0x8] sm:$0xff]
        %v398 = vld [vmem:[#allocation2 + $0x10] sm:$0xff]
        %v399 = vld [vmem:[#allocation2 + $0x18] sm:$0xff]
        %v400 = vld [vmem:[#allocation2 + $0x20] sm:$0xff]
        %v401 = vld [vmem:[#allocation2 + $0x28] sm:$0xff]
        %v402 = vld [vmem:[#allocation2 + $0x30] sm:$0xff]
        %v403 = vld [vmem:[#allocation2 + $0x38] sm:$0xff]
        %v404 = vld [vmem:[#allocation2 + $0x40] sm:$0xff]
        %v405 = vld [vmem:[#allocation2 + $0x48] sm:$0xff]
        %v406 = vld [vmem:[#allocation2 + $0x50] sm:$0xff]
        %v407 = vld [vmem:[#allocation2 + $0x58] sm:$0xff]
        %v408 = vld [vmem:[#allocation2 + $0x60] sm:$0xff]
        %v409 = vld [vmem:[#allocation2 + $0x68] sm:$0xff]
        %v410 = vld [vmem:[#allocation2 + $0x70] sm:$0xff]
        %v411 = vld [vmem:[#allocation2 + $0x78] sm:$0xff]
        %v412 = vld [vmem:[#allocation2 + $0x80] sm:$0xff]
        %v413 = vld [vmem:[#allocation2 + $0x88] sm:$0xff]
        %v414 = vld [vmem:[#allocation2 + $0x90] sm:$0xff]
        %v415 = vld [vmem:[#allocation2 + $0x98] sm:$0xff]
        %v416 = vld [vmem:[#allocation2 + $0xa0] sm:$0xff]
        %v417 = vld [vmem:[#allocation2 + $0xa8] sm:$0xff]
        %v418 = vld [vmem:[#allocation2 + $0xb0] sm:$0xff]
        %v419 = vld [vmem:[#allocation2 + $0xb8] sm:$0xff]
        %v420 = vld [vmem:[#allocation2 + $0xc0] sm:$0xff]
        %v421 = vld [vmem:[#allocation2 + $0xc8] sm:$0xff]
        %v422 = vld [vmem:[#allocation2 + $0xd0] sm:$0xff]
        %v423 = vld [vmem:[#allocation2 + $0xd8] sm:$0xff]
        %v424 = vld [vmem:[#allocation2 + $0xe0] sm:$0xff]
        %v425 = vld [vmem:[#allocation2 + $0xe8] sm:$0xff]
        %v426 = vld [vmem:[#allocation2 + $0xf0] sm:$0xff]
        %v427 = vld [vmem:[#allocation2 + $0xf8] sm:$0xff]
        %v428 = vld [vmem:[%s319] sm:$0xff]
        %v429 = vld [vmem:[%s319 + $0x8] sm:$0xff]
        %v430 = vld [vmem:[%s319 + $0x10] sm:$0xff]
        %v431 = vld [vmem:[%s319 + $0x18] sm:$0xff]
        %v432 = vld [vmem:[%s319 + $0x20] sm:$0xff]
        %v433 = vld [vmem:[%s319 + $0x28] sm:$0xff]
        %v434 = vld [vmem:[%s319 + $0x30] sm:$0xff]
        %v435 = vld [vmem:[%s319 + $0x38] sm:$0xff]
        %v436 = vld [vmem:[%s319 + $0x40] sm:$0xff]
        %v437 = vld [vmem:[%s319 + $0x48] sm:$0xff]
        %v438 = vld [vmem:[%s319 + $0x50] sm:$0xff]
        %v439 = vld [vmem:[%s319 + $0x58] sm:$0xff]
        %v440 = vld [vmem:[%s319 + $0x60] sm:$0xff]
        %v441 = vld [vmem:[%s319 + $0x68] sm:$0xff]
        %v442 = vld [vmem:[%s319 + $0x70] sm:$0xff]
        %v443 = vld [vmem:[%s319 + $0x78] sm:$0xff]
        %v444 = vld [vmem:[%s319 + $0x80] sm:$0xff]
        %v445 = vld [vmem:[%s319 + $0x88] sm:$0xff]
        %v446 = vld [vmem:[%s319 + $0x90] sm:$0xff]
        %v447 = vld [vmem:[%s319 + $0x98] sm:$0xff]
        %v448 = vld [vmem:[%s319 + $0xa0] sm:$0xff]
        %v449 = vld [vmem:[%s319 + $0xa8] sm:$0xff]
        %v450 = vld [vmem:[%s319 + $0xb0] sm:$0xff]
        %v451 = vld [vmem:[%s319 + $0xb8] sm:$0xff]
        %v452 = vld [vmem:[%s319 + $0xc0] sm:$0xff]
        %v453 = vld [vmem:[%s319 + $0xc8] sm:$0xff]
        %v454 = vld [vmem:[%s319 + $0xd0] sm:$0xff]
        %v455 = vld [vmem:[%s319 + $0xd8] sm:$0xff]
        %v456 = vld [vmem:[%s319 + $0xe0] sm:$0xff]
        %v457 = vld [vmem:[%s319 + $0xe8] sm:$0xff]
        %v458 = vld [vmem:[%s319 + $0xf0] sm:$0xff]
        %v459 = vld [vmem:[%s319 + $0xf8] sm:$0xff]
        %v460 = vld [vmem:[%s319 + $0x100] sm:$0xff]
        %v461 = vld [vmem:[%s319 + $0x108] sm:$0xff]
        %v462 = vld [vmem:[%s319 + $0x110] sm:$0xff]
        %v463 = vld [vmem:[%s319 + $0x118] sm:$0xff]
        %v464 = vld [vmem:[%s319 + $0x120] sm:$0xff]
        %v465 = vld [vmem:[%s319 + $0x128] sm:$0xff]
        %v466 = vld [vmem:[%s319 + $0x130] sm:$0xff]
        %v467 = vld [vmem:[%s319 + $0x138] sm:$0xff]
        %v468 = vld [vmem:[%s319 + $0x140] sm:$0xff]
        %v469 = vld [vmem:[%s319 + $0x148] sm:$0xff]
        %v470 = vld [vmem:[%s319 + $0x150] sm:$0xff]
        %v471 = vld [vmem:[%s319 + $0x158] sm:$0xff]
        %v472 = vld [vmem:[%s319 + $0x160] sm:$0xff]
        %v473 = vld [vmem:[%s319 + $0x168] sm:$0xff]
        %v474 = vld [vmem:[%s319 + $0x170] sm:$0xff]
        %v475 = vld [vmem:[%s319 + $0x178] sm:$0xff]
        %v476 = vld [vmem:[%s319 + $0x180] sm:$0xff]
        %v477 = vld [vmem:[%s319 + $0x188] sm:$0xff]
        %v478 = vld [vmem:[%s319 + $0x190] sm:$0xff]
        %v479 = vld [vmem:[%s319 + $0x198] sm:$0xff]
        %v480 = vld [vmem:[%s319 + $0x1a0] sm:$0xff]
        %v481 = vld [vmem:[%s319 + $0x1a8] sm:$0xff]
        %v482 = vld [vmem:[%s319 + $0x1b0] sm:$0xff]
        %v483 = vld [vmem:[%s319 + $0x1b8] sm:$0xff]
        %v484 = vld [vmem:[%s319 + $0x1c0] sm:$0xff]
        %v485 = vld [vmem:[%s319 + $0x1c8] sm:$0xff]
        %v486 = vld [vmem:[%s319 + $0x1d0] sm:$0xff]
        %v487 = vld [vmem:[%s319 + $0x1d8] sm:$0xff]
        %v488 = vld [vmem:[%s319 + $0x1e0] sm:$0xff]
        %v489 = vld [vmem:[%s319 + $0x1e8] sm:$0xff]
        %v490 = vld [vmem:[%s319 + $0x1f0] sm:$0xff]
        %v491 = vld [vmem:[%s319 + $0x1f8] sm:$0xff]
        %v492 = vld [vmem:[%s351] sm:$0xf]
        %v493 = vld [vmem:[%s351 + $0x4] sm:$0xf]
        %v494 = vld [vmem:[%s351 + $0x8] sm:$0xf]
        %v495 = vld [vmem:[%s351 + $0xc] sm:$0xf]
        %v496 = vld [vmem:[%s351 + $0x10] sm:$0xf]
        %v497 = vld [vmem:[%s351 + $0x14] sm:$0xf]
        %v498 = vld [vmem:[%s351 + $0x18] sm:$0xf]
        %v499 = vld [vmem:[%s351 + $0x1c] sm:$0xf]
        %v500 = vld [vmem:[%s351 + $0x20] sm:$0xf]
        %v501 = vld [vmem:[%s351 + $0x24] sm:$0xf]
        %v502 = vld [vmem:[%s351 + $0x28] sm:$0xf]
        %v503 = vld [vmem:[%s351 + $0x2c] sm:$0xf]
        %v504 = vld [vmem:[%s351 + $0x30] sm:$0xf]
        %v505 = vld [vmem:[%s351 + $0x34] sm:$0xf]
        %v506 = vld [vmem:[%s351 + $0x38] sm:$0xf]
        %v507 = vld [vmem:[%s351 + $0x3c] sm:$0xf]
        %v508 = vld [vmem:[%s351 + $0x40] sm:$0xf]
        %v509 = vld [vmem:[%s351 + $0x44] sm:$0xf]
        %v510 = vld [vmem:[%s351 + $0x48] sm:$0xf]
        %v511 = vld [vmem:[%s351 + $0x4c] sm:$0xf]
        %v512 = vld [vmem:[%s351 + $0x50] sm:$0xf]
        %v513 = vld [vmem:[%s351 + $0x54] sm:$0xf]
        %v514 = vld [vmem:[%s351 + $0x58] sm:$0xf]
        %v515 = vld [vmem:[%s351 + $0x5c] sm:$0xf]
        %v516 = vld [vmem:[%s351 + $0x60] sm:$0xf]
        %v517 = vld [vmem:[%s351 + $0x64] sm:$0xf]
        %v518 = vld [vmem:[%s351 + $0x68] sm:$0xf]
        %v519 = vld [vmem:[%s351 + $0x6c] sm:$0xf]
        %v520 = vld [vmem:[%s351 + $0x70] sm:$0xf]
        %v521 = vld [vmem:[%s351 + $0x74] sm:$0xf]
        %v522 = vld [vmem:[%s351 + $0x78] sm:$0xf]
        %v523 = vld [vmem:[%s351 + $0x7c] sm:$0xf]
        %v524 = vld [vmem:[%s351 + $0x80] sm:$0xf]
        %v525 = vld [vmem:[%s351 + $0x84] sm:$0xf]
        %v526 = vld [vmem:[%s351 + $0x88] sm:$0xf]
        %v527 = vld [vmem:[%s351 + $0x8c] sm:$0xf]
        %v528 = vld [vmem:[%s351 + $0x90] sm:$0xf]
        %v529 = vld [vmem:[%s351 + $0x94] sm:$0xf]
        %v530 = vld [vmem:[%s351 + $0x98] sm:$0xf]
        %v531 = vld [vmem:[%s351 + $0x9c] sm:$0xf]
        %v532 = vld [vmem:[%s351 + $0xa0] sm:$0xf]
        %v533 = vld [vmem:[%s351 + $0xa4] sm:$0xf]
        %v534 = vld [vmem:[%s351 + $0xa8] sm:$0xf]
        %v535 = vld [vmem:[%s351 + $0xac] sm:$0xf]
        %v536 = vld [vmem:[%s351 + $0xb0] sm:$0xf]
        %v537 = vld [vmem:[%s351 + $0xb4] sm:$0xf]
        %v538 = vld [vmem:[%s351 + $0xb8] sm:$0xf]
        %v539 = vld [vmem:[%s351 + $0xbc] sm:$0xf]
        %v540 = vld [vmem:[%s351 + $0xc0] sm:$0xf]
        %v541 = vld [vmem:[%s351 + $0xc4] sm:$0xf]
        %v542 = vld [vmem:[%s351 + $0xc8] sm:$0xf]
        %v543 = vld [vmem:[%s351 + $0xcc] sm:$0xf]
        %v544 = vld [vmem:[%s351 + $0xd0] sm:$0xf]
        %v545 = vld [vmem:[%s351 + $0xd4] sm:$0xf]
        %v546 = vld [vmem:[%s351 + $0xd8] sm:$0xf]
        %v547 = vld [vmem:[%s351 + $0xdc] sm:$0xf]
        %v548 = vld [vmem:[%s351 + $0xe0] sm:$0xf]
        %v549 = vld [vmem:[%s351 + $0xe4] sm:$0xf]
        %v550 = vld [vmem:[%s351 + $0xe8] sm:$0xf]
        %v551 = vld [vmem:[%s351 + $0xec] sm:$0xf]
        %v552 = vld [vmem:[%s351 + $0xf0] sm:$0xf]
        %v553 = vld [vmem:[%s351 + $0xf4] sm:$0xf]
        %v554 = vld [vmem:[%s351 + $0xf8] sm:$0xf]
        %v555 = vld [vmem:[%s351 + $0xfc] sm:$0xf]
        %v620 = vunpack.c.l.b16 %v428
        %v621 = vunpack.c.h.b16 %v428
        %v622 = vunpack.c.l.b16 %v429
        %v623 = vunpack.c.h.b16 %v429
        %v624 = vunpack.c.l.b16 %v430
        %v625 = vunpack.c.h.b16 %v430
        %v626 = vunpack.c.l.b16 %v431
        %v627 = vunpack.c.h.b16 %v431
        %v628 = vunpack.c.l.b16 %v432
        %v629 = vunpack.c.h.b16 %v432
        %v630 = vunpack.c.l.b16 %v433
        %v631 = vunpack.c.h.b16 %v433
        %v632 = vunpack.c.l.b16 %v434
        %v633 = vunpack.c.h.b16 %v434
        %v634 = vunpack.c.l.b16 %v435
        %v635 = vunpack.c.h.b16 %v435
        %v636 = vunpack.c.l.b16 %v436
        %v637 = vunpack.c.h.b16 %v436
        %v638 = vunpack.c.l.b16 %v437
        %v639 = vunpack.c.h.b16 %v437
        %v640 = vunpack.c.l.b16 %v438
        %v641 = vunpack.c.h.b16 %v438
        %v642 = vunpack.c.l.b16 %v439
        %v643 = vunpack.c.h.b16 %v439
        %v644 = vunpack.c.l.b16 %v440
        %v645 = vunpack.c.h.b16 %v440
        %v646 = vunpack.c.l.b16 %v441
        %v647 = vunpack.c.h.b16 %v441
        %v648 = vunpack.c.l.b16 %v442
        %v649 = vunpack.c.h.b16 %v442
        %v650 = vunpack.c.l.b16 %v443
        %v651 = vunpack.c.h.b16 %v443
        %v652 = vunpack.c.l.b16 %v444
        %v653 = vunpack.c.h.b16 %v444
        %v654 = vunpack.c.l.b16 %v445
        %v655 = vunpack.c.h.b16 %v445
        %v656 = vunpack.c.l.b16 %v446
        %v657 = vunpack.c.h.b16 %v446
        %v658 = vunpack.c.l.b16 %v447
        %v659 = vunpack.c.h.b16 %v447
        %v660 = vunpack.c.l.b16 %v448
        %v661 = vunpack.c.h.b16 %v448
        %v662 = vunpack.c.l.b16 %v449
        %v663 = vunpack.c.h.b16 %v449
        %v664 = vunpack.c.l.b16 %v450
        %v665 = vunpack.c.h.b16 %v450
        %v666 = vunpack.c.l.b16 %v451
        %v667 = vunpack.c.h.b16 %v451
        %v668 = vunpack.c.l.b16 %v452
        %v669 = vunpack.c.h.b16 %v452
        %v670 = vunpack.c.l.b16 %v453
        %v671 = vunpack.c.h.b16 %v453
        %v672 = vunpack.c.l.b16 %v454
        %v673 = vunpack.c.h.b16 %v454
        %v674 = vunpack.c.l.b16 %v455
        %v675 = vunpack.c.h.b16 %v455
        %v676 = vunpack.c.l.b16 %v456
        %v677 = vunpack.c.h.b16 %v456
        %v678 = vunpack.c.l.b16 %v457
        %v679 = vunpack.c.h.b16 %v457
        %v680 = vunpack.c.l.b16 %v458
        %v681 = vunpack.c.h.b16 %v458
        %v682 = vunpack.c.l.b16 %v459
        %v683 = vunpack.c.h.b16 %v459
        %v684 = vunpack.c.l.b16 %v460
        %v685 = vunpack.c.h.b16 %v460
        %v686 = vunpack.c.l.b16 %v461
        %v687 = vunpack.c.h.b16 %v461
        %v688 = vunpack.c.l.b16 %v462
        %v689 = vunpack.c.h.b16 %v462
        %v690 = vunpack.c.l.b16 %v463
        %v691 = vunpack.c.h.b16 %v463
        %v692 = vunpack.c.l.b16 %v464
        %v693 = vunpack.c.h.b16 %v464
        %v694 = vunpack.c.l.b16 %v465
        %v695 = vunpack.c.h.b16 %v465
        %v696 = vunpack.c.l.b16 %v466
        %v697 = vunpack.c.h.b16 %v466
        %v698 = vunpack.c.l.b16 %v467
        %v699 = vunpack.c.h.b16 %v467
        %v700 = vunpack.c.l.b16 %v468
        %v701 = vunpack.c.h.b16 %v468
        %v702 = vunpack.c.l.b16 %v469
        %v703 = vunpack.c.h.b16 %v469
        %v704 = vunpack.c.l.b16 %v470
        %v705 = vunpack.c.h.b16 %v470
        %v706 = vunpack.c.l.b16 %v471
        %v707 = vunpack.c.h.b16 %v471
        %v708 = vunpack.c.l.b16 %v472
        %v709 = vunpack.c.h.b16 %v472
        %v710 = vunpack.c.l.b16 %v473
        %v711 = vunpack.c.h.b16 %v473
        %v712 = vunpack.c.l.b16 %v474
        %v713 = vunpack.c.h.b16 %v474
        %v714 = vunpack.c.l.b16 %v475
        %v715 = vunpack.c.h.b16 %v475
        %v716 = vunpack.c.l.b16 %v476
        %v717 = vunpack.c.h.b16 %v476
        %v718 = vunpack.c.l.b16 %v477
        %v719 = vunpack.c.h.b16 %v477
        %v720 = vunpack.c.l.b16 %v478
        %v721 = vunpack.c.h.b16 %v478
        %v722 = vunpack.c.l.b16 %v479
        %v723 = vunpack.c.h.b16 %v479
        %v724 = vunpack.c.l.b16 %v480
        %v725 = vunpack.c.h.b16 %v480
        %v726 = vunpack.c.l.b16 %v481
        %v727 = vunpack.c.h.b16 %v481
        %v728 = vunpack.c.l.b16 %v482
        %v729 = vunpack.c.h.b16 %v482
        %v730 = vunpack.c.l.b16 %v483
        %v731 = vunpack.c.h.b16 %v483
        %v732 = vunpack.c.l.b16 %v484
        %v733 = vunpack.c.h.b16 %v484
        %v734 = vunpack.c.l.b16 %v485
        %v735 = vunpack.c.h.b16 %v485
        %v736 = vunpack.c.l.b16 %v486
        %v737 = vunpack.c.h.b16 %v486
        %v738 = vunpack.c.l.b16 %v487
        %v739 = vunpack.c.h.b16 %v487
        %v740 = vunpack.c.l.b16 %v488
        %v741 = vunpack.c.h.b16 %v488
        %v742 = vunpack.c.l.b16 %v489
        %v743 = vunpack.c.h.b16 %v489
        %v744 = vunpack.c.l.b16 %v490
        %v745 = vunpack.c.h.b16 %v490
        %v746 = vunpack.c.l.b16 %v491
        %v747 = vunpack.c.h.b16 %v491
        %v748 = vpack.c.b16 %v624, %v620
        %v749 = vpack.c.b16 %v625, %v621
        %v750 = vpack.c.b16 %v626, %v622
        %v751 = vpack.c.b16 %v627, %v623
        %v752 = vpack.c.b16 %v632, %v628
        %v753 = vpack.c.b16 %v633, %v629
        %v754 = vpack.c.b16 %v634, %v630
        %v755 = vpack.c.b16 %v635, %v631
        %v756 = vpack.c.b16 %v640, %v636
        %v757 = vpack.c.b16 %v641, %v637
        %v758 = vpack.c.b16 %v642, %v638
        %v759 = vpack.c.b16 %v643, %v639
        %v760 = vpack.c.b16 %v648, %v644
        %v761 = vpack.c.b16 %v649, %v645
        %v762 = vpack.c.b16 %v650, %v646
        %v763 = vpack.c.b16 %v651, %v647
        %v764 = vpack.c.b16 %v656, %v652
        %v765 = vpack.c.b16 %v657, %v653
        %v766 = vpack.c.b16 %v658, %v654
        %v767 = vpack.c.b16 %v659, %v655
        %v768 = vpack.c.b16 %v664, %v660
        %v769 = vpack.c.b16 %v665, %v661
        %v770 = vpack.c.b16 %v666, %v662
        %v771 = vpack.c.b16 %v667, %v663
        %v772 = vpack.c.b16 %v672, %v668
        %v773 = vpack.c.b16 %v673, %v669
        %v774 = vpack.c.b16 %v674, %v670
        %v775 = vpack.c.b16 %v675, %v671
        %v776 = vpack.c.b16 %v680, %v676
        %v777 = vpack.c.b16 %v681, %v677
        %v778 = vpack.c.b16 %v682, %v678
        %v779 = vpack.c.b16 %v683, %v679
        %v780 = vpack.c.b16 %v688, %v684
        %v781 = vpack.c.b16 %v689, %v685
        %v782 = vpack.c.b16 %v690, %v686
        %v783 = vpack.c.b16 %v691, %v687
        %v784 = vpack.c.b16 %v696, %v692
        %v785 = vpack.c.b16 %v697, %v693
        %v786 = vpack.c.b16 %v698, %v694
        %v787 = vpack.c.b16 %v699, %v695
        %v788 = vpack.c.b16 %v704, %v700
        %v789 = vpack.c.b16 %v705, %v701
        %v790 = vpack.c.b16 %v706, %v702
        %v791 = vpack.c.b16 %v707, %v703
        %v792 = vpack.c.b16 %v712, %v708
        %v793 = vpack.c.b16 %v713, %v709
        %v794 = vpack.c.b16 %v714, %v710
        %v795 = vpack.c.b16 %v715, %v711
        %v796 = vpack.c.b16 %v720, %v716
        %v797 = vpack.c.b16 %v721, %v717
        %v798 = vpack.c.b16 %v722, %v718
        %v799 = vpack.c.b16 %v723, %v719
        %v800 = vpack.c.b16 %v728, %v724
        %v801 = vpack.c.b16 %v729, %v725
        %v802 = vpack.c.b16 %v730, %v726
        %v803 = vpack.c.b16 %v731, %v727
        %v804 = vpack.c.b16 %v736, %v732
        %v805 = vpack.c.b16 %v737, %v733
        %v806 = vpack.c.b16 %v738, %v734
        %v807 = vpack.c.b16 %v739, %v735
        %v808 = vpack.c.b16 %v744, %v740
        %v809 = vpack.c.b16 %v745, %v741
        %v810 = vpack.c.b16 %v746, %v742
        %v811 = vpack.c.b16 %v747, %v743
        %v940 = vunpack.c.l.b16 %v492
        %v941 = vunpack.c.l.b16 %v493
        %v942 = vunpack.c.l.b16 %v494
        %v943 = vunpack.c.l.b16 %v495
        %v944 = vunpack.c.l.b16 %v496
        %v945 = vunpack.c.l.b16 %v497
        %v946 = vunpack.c.l.b16 %v498
        %v947 = vunpack.c.l.b16 %v499
        %v948 = vunpack.c.l.b16 %v500
        %v949 = vunpack.c.l.b16 %v501
        %v950 = vunpack.c.l.b16 %v502
        %v951 = vunpack.c.l.b16 %v503
        %v952 = vunpack.c.l.b16 %v504
        %v953 = vunpack.c.l.b16 %v505
        %v954 = vunpack.c.l.b16 %v506
        %v955 = vunpack.c.l.b16 %v507
        %v956 = vunpack.c.l.b16 %v508
        %v957 = vunpack.c.l.b16 %v509
        %v958 = vunpack.c.l.b16 %v510
        %v959 = vunpack.c.l.b16 %v511
        %v960 = vunpack.c.l.b16 %v512
        %v961 = vunpack.c.l.b16 %v513
        %v962 = vunpack.c.l.b16 %v514
        %v963 = vunpack.c.l.b16 %v515
        %v964 = vunpack.c.l.b16 %v516
        %v965 = vunpack.c.l.b16 %v517
        %v966 = vunpack.c.l.b16 %v518
        %v967 = vunpack.c.l.b16 %v519
        %v968 = vunpack.c.l.b16 %v520
        %v969 = vunpack.c.l.b16 %v521
        %v970 = vunpack.c.l.b16 %v522
        %v971 = vunpack.c.l.b16 %v523
        %v972 = vunpack.c.l.b16 %v524
        %v973 = vunpack.c.l.b16 %v525
        %v974 = vunpack.c.l.b16 %v526
        %v975 = vunpack.c.l.b16 %v527
        %v976 = vunpack.c.l.b16 %v528
        %v977 = vunpack.c.l.b16 %v529
        %v978 = vunpack.c.l.b16 %v530
        %v979 = vunpack.c.l.b16 %v531
        %v980 = vunpack.c.l.b16 %v532
        %v981 = vunpack.c.l.b16 %v533
        %v982 = vunpack.c.l.b16 %v534
        %v983 = vunpack.c.l.b16 %v535
        %v984 = vunpack.c.l.b16 %v536
        %v985 = vunpack.c.l.b16 %v537
        %v986 = vunpack.c.l.b16 %v538
        %v987 = vunpack.c.l.b16 %v539
        %v988 = vunpack.c.l.b16 %v540
        %v989 = vunpack.c.l.b16 %v541
        %v990 = vunpack.c.l.b16 %v542
        %v991 = vunpack.c.l.b16 %v543
        %v992 = vunpack.c.l.b16 %v544
        %v993 = vunpack.c.l.b16 %v545
        %v994 = vunpack.c.l.b16 %v546
        %v995 = vunpack.c.l.b16 %v547
        %v996 = vunpack.c.l.b16 %v548
        %v997 = vunpack.c.l.b16 %v549
        %v998 = vunpack.c.l.b16 %v550
        %v999 = vunpack.c.l.b16 %v551
        %v1000 = vunpack.c.l.b16 %v552
        %v1001 = vunpack.c.l.b16 %v553
        %v1002 = vunpack.c.l.b16 %v554
        %v1003 = vunpack.c.l.b16 %v555
        %v1004 = vpack.c.b16 %v941, %v940
        %v1005 = vpack.c.b16 %v943, %v942
        %v1006 = vpack.c.b16 %v945, %v944
        %v1007 = vpack.c.b16 %v947, %v946
        %v1008 = vpack.c.b16 %v949, %v948
        %v1009 = vpack.c.b16 %v951, %v950
        %v1010 = vpack.c.b16 %v953, %v952
        %v1011 = vpack.c.b16 %v955, %v954
        %v1012 = vpack.c.b16 %v957, %v956
        %v1013 = vpack.c.b16 %v959, %v958
        %v1014 = vpack.c.b16 %v961, %v960
        %v1015 = vpack.c.b16 %v963, %v962
        %v1016 = vpack.c.b16 %v965, %v964
        %v1017 = vpack.c.b16 %v967, %v966
        %v1018 = vpack.c.b16 %v969, %v968
        %v1019 = vpack.c.b16 %v971, %v970
        %v1020 = vpack.c.b16 %v973, %v972
        %v1021 = vpack.c.b16 %v975, %v974
        %v1022 = vpack.c.b16 %v977, %v976
        %v1023 = vpack.c.b16 %v979, %v978
        %v1024 = vpack.c.b16 %v981, %v980
        %v1025 = vpack.c.b16 %v983, %v982
        %v1026 = vpack.c.b16 %v985, %v984
        %v1027 = vpack.c.b16 %v987, %v986
        %v1028 = vpack.c.b16 %v989, %v988
        %v1029 = vpack.c.b16 %v991, %v990
        %v1030 = vpack.c.b16 %v993, %v992
        %v1031 = vpack.c.b16 %v995, %v994
        %v1032 = vpack.c.b16 %v997, %v996
        %v1033 = vpack.c.b16 %v999, %v998
        %v1034 = vpack.c.b16 %v1001, %v1000
        %v1035 = vpack.c.b16 %v1003, %v1002
        %1068 = vmatprep.subr.bf16.mxu0 0
        %1069 = vmatpush1.bf16.msra.mxu0 %v1004
        %1070 = vmatprep.subr.bf16.mxu0 0
        %1071 = vmatpush1.bf16.msra.mxu0 %v1005
        %1072 = vmatprep.subr.bf16.mxu0 0
        %1073 = vmatpush1.bf16.msra.mxu0 %v1006
        %1074 = vmatprep.subr.bf16.mxu0 0
        %1075 = vmatpush1.bf16.msra.mxu0 %v1007
        %1076 = vmatprep.subr.bf16.mxu0 0
        %1077 = vmatpush1.bf16.msra.mxu0 %v1008
        %1078 = vmatprep.subr.bf16.mxu0 0
        %1079 = vmatpush1.bf16.msra.mxu0 %v1009
        %1080 = vmatprep.subr.bf16.mxu0 0
        %1081 = vmatpush1.bf16.msra.mxu0 %v1010
        %1082 = vmatprep.subr.bf16.mxu0 0
        %1083 = vmatpush1.bf16.msra.mxu0 %v1011
        %1084 = vmatprep.subr.bf16.mxu0 0
        %1085 = vmatpush1.bf16.msra.mxu0 %v1012
        %1086 = vmatprep.subr.bf16.mxu0 0
        %1087 = vmatpush1.bf16.msra.mxu0 %v1013
        %1088 = vmatprep.subr.bf16.mxu0 0
        %1089 = vmatpush1.bf16.msra.mxu0 %v1014
        %1090 = vmatprep.subr.bf16.mxu0 0
        %1091 = vmatpush1.bf16.msra.mxu0 %v1015
        %1092 = vmatprep.subr.bf16.mxu0 0
        %1093 = vmatpush1.bf16.msra.mxu0 %v1016
        %1094 = vmatprep.subr.bf16.mxu0 0
        %1095 = vmatpush1.bf16.msra.mxu0 %v1017
        %1096 = vmatprep.subr.bf16.mxu0 0
        %1097 = vmatpush1.bf16.msra.mxu0 %v1018
        %1098 = vmatprep.subr.bf16.mxu0 0
        %1099 = vmatpush1.bf16.msra.mxu0 %v1019
        %1100 = vmatprep.mubr.bf16.mxu0 %v749
        %1101 = vmatmul.mubr.bf16.gmra.mrb[0].mxu0 %v748
        %v1102 = vpop.f32.mrb[0].mxu0
        %v1103 = vadd.f32 0.0, %v1102
        %v1104 = vpop.f32.mrb[0].mxu0
        %v1105 = vpop.f32.mrb[0].mxu0
        %v1106 = vadd.f32 0.0, %v1105
        %v1107 = vpop.f32.mrb[0].mxu0
        %1108 = vmatprep.mubr.bf16.mxu0 %v753
        %1109 = vmatmul.mubr.bf16.gmra.mrb[0].mxu0 %v752
        %v1110 = vpop.f32.mrb[0].mxu0
        %v1111 = vadd.f32 0.0, %v1110
        %v1112 = vpop.f32.mrb[0].mxu0
        %v1113 = vpop.f32.mrb[0].mxu0
        %v1114 = vadd.f32 0.0, %v1113
        %v1115 = vpop.f32.mrb[0].mxu0
        %1116 = vmatprep.mubr.bf16.mxu0 %v757
        %1117 = vmatmul.mubr.bf16.gmra.mrb[0].mxu0 %v756
        %v1118 = vpop.f32.mrb[0].mxu0
        %v1119 = vadd.f32 0.0, %v1118
        %v1120 = vpop.f32.mrb[0].mxu0
        %v1121 = vpop.f32.mrb[0].mxu0
        %v1122 = vadd.f32 0.0, %v1121
        %v1123 = vpop.f32.mrb[0].mxu0
        %1124 = vmatprep.mubr.bf16.mxu0 %v761
        %1125 = vmatmul.mubr.bf16.gmra.mrb[0].mxu0 %v760
        %v1126 = vpop.f32.mrb[0].mxu0
        %v1127 = vadd.f32 0.0, %v1126
        %v1128 = vpop.f32.mrb[0].mxu0
        %v1129 = vpop.f32.mrb[0].mxu0
        %v1130 = vadd.f32 0.0, %v1129
        %v1131 = vpop.f32.mrb[0].mxu0
        %1132 = vmatprep.mubr.bf16.mxu0 %v765
        %1133 = vmatmul.mubr.bf16.gmra.mrb[0].mxu0 %v764
        %v1134 = vpop.f32.mrb[0].mxu0
        %v1135 = vadd.f32 0.0, %v1134
        %v1136 = vpop.f32.mrb[0].mxu0
        %v1137 = vpop.f32.mrb[0].mxu0
        %v1138 = vadd.f32 0.0, %v1137
        %v1139 = vpop.f32.mrb[0].mxu0
        %1140 = vmatprep.mubr.bf16.mxu0 %v769
        %1141 = vmatmul.mubr.bf16.gmra.mrb[0].mxu0 %v768
        %v1142 = vpop.f32.mrb[0].mxu0
        %v1143 = vadd.f32 0.0, %v1142
        %v1144 = vpop.f32.mrb[0].mxu0
        %v1145 = vpop.f32.mrb[0].mxu0
        %v1146 = vadd.f32 0.0, %v1145
        %v1147 = vpop.f32.mrb[0].mxu0
        %1148 = vmatprep.mubr.bf16.mxu0 %v773
        %1149 = vmatmul.mubr.bf16.gmra.mrb[0].mxu0 %v772
        %v1150 = vpop.f32.mrb[0].mxu0
        %v1151 = vadd.f32 0.0, %v1150
        %v1152 = vpop.f32.mrb[0].mxu0
        %v1153 = vpop.f32.mrb[0].mxu0
        %v1154 = vadd.f32 0.0, %v1153
        %v1155 = vpop.f32.mrb[0].mxu0
        %1156 = vmatprep.mubr.bf16.mxu0 %v777
        %1157 = vmatmul.mubr.bf16.gmra.mrb[0].mxu0 %v776
        %v1158 = vpop.f32.mrb[0].mxu0
        %v1159 = vadd.f32 0.0, %v1158
        %v1160 = vpop.f32.mrb[0].mxu0
        %v1161 = vpop.f32.mrb[0].mxu0
        %v1162 = vadd.f32 0.0, %v1161
        %v1163 = vpop.f32.mrb[0].mxu0
        %1164 = vmatprep.mubr.bf16.mxu0 %v781
        %1165 = vmatmul.mubr.bf16.gmra.mrb[0].mxu0 %v780
        %v1166 = vpop.f32.mrb[0].mxu0
        %v1167 = vadd.f32 0.0, %v1166
        %v1168 = vpop.f32.mrb[0].mxu0
        %v1169 = vpop.f32.mrb[0].mxu0
        %v1170 = vadd.f32 0.0, %v1169
        %v1171 = vpop.f32.mrb[0].mxu0
        %1172 = vmatprep.mubr.bf16.mxu0 %v785
        %1173 = vmatmul.mubr.bf16.gmra.mrb[0].mxu0 %v784
        %v1174 = vpop.f32.mrb[0].mxu0
        %v1175 = vadd.f32 0.0, %v1174
        %v1176 = vpop.f32.mrb[0].mxu0
        %v1177 = vpop.f32.mrb[0].mxu0
        %v1178 = vadd.f32 0.0, %v1177
        %v1179 = vpop.f32.mrb[0].mxu0
        %1180 = vmatprep.mubr.bf16.mxu0 %v789
        %1181 = vmatmul.mubr.bf16.gmra.mrb[0].mxu0 %v788
        %v1182 = vpop.f32.mrb[0].mxu0
        %v1183 = vadd.f32 0.0, %v1182
        %v1184 = vpop.f32.mrb[0].mxu0
        %v1185 = vpop.f32.mrb[0].mxu0
        %v1186 = vadd.f32 0.0, %v1185
        %v1187 = vpop.f32.mrb[0].mxu0
        %1188 = vmatprep.mubr.bf16.mxu0 %v793
        %1189 = vmatmul.mubr.bf16.gmra.mrb[0].mxu0 %v792
        %v1190 = vpop.f32.mrb[0].mxu0
        %v1191 = vadd.f32 0.0, %v1190
        %v1192 = vpop.f32.mrb[0].mxu0
        %v1193 = vpop.f32.mrb[0].mxu0
        %v1194 = vadd.f32 0.0, %v1193
        %v1195 = vpop.f32.mrb[0].mxu0
        %1196 = vmatprep.mubr.bf16.mxu0 %v797
        %1197 = vmatmul.mubr.bf16.gmra.mrb[0].mxu0 %v796
        %v1198 = vpop.f32.mrb[0].mxu0
        %v1199 = vadd.f32 0.0, %v1198
        %v1200 = vpop.f32.mrb[0].mxu0
        %v1201 = vpop.f32.mrb[0].mxu0
        %v1202 = vadd.f32 0.0, %v1201
        %v1203 = vpop.f32.mrb[0].mxu0
        %1204 = vmatprep.mubr.bf16.mxu0 %v801
        %1205 = vmatmul.mubr.bf16.gmra.mrb[0].mxu0 %v800
        %v1206 = vpop.f32.mrb[0].mxu0
        %v1207 = vadd.f32 0.0, %v1206
        %v1208 = vpop.f32.mrb[0].mxu0
        %v1209 = vpop.f32.mrb[0].mxu0
        %v1210 = vadd.f32 0.0, %v1209
        %v1211 = vpop.f32.mrb[0].mxu0
        %1212 = vmatprep.mubr.bf16.mxu0 %v805
        %1213 = vmatmul.mubr.bf16.gmra.mrb[0].mxu0 %v804
        %v1214 = vpop.f32.mrb[0].mxu0
        %v1215 = vadd.f32 0.0, %v1214
        %v1216 = vpop.f32.mrb[0].mxu0
        %v1217 = vpop.f32.mrb[0].mxu0
        %v1218 = vadd.f32 0.0, %v1217
        %v1219 = vpop.f32.mrb[0].mxu0
        %1220 = vmatprep.mubr.bf16.mxu0 %v809
        %1221 = vmatmul.mubr.bf16.gmra.mrb[0].mxu0 %v808
        %v1222 = vpop.f32.mrb[0].mxu0
        %v1223 = vadd.f32 0.0, %v1222
        %v1224 = vpop.f32.mrb[0].mxu0
        %v1225 = vpop.f32.mrb[0].mxu0
        %v1226 = vadd.f32 0.0, %v1225
        %v1227 = vpop.f32.mrb[0].mxu0
        %1228 = vdwg.mxu0
        %1229 = vmatprep.subr.bf16.mxu0 0
        %1230 = vmatpush1.bf16.msra.mxu0 %v1020
        %1231 = vmatprep.subr.bf16.mxu0 0
        %1232 = vmatpush1.bf16.msra.mxu0 %v1021
        %1233 = vmatprep.subr.bf16.mxu0 0
        %1234 = vmatpush1.bf16.msra.mxu0 %v1022
        %1235 = vmatprep.subr.bf16.mxu0 0
        %1236 = vmatpush1.bf16.msra.mxu0 %v1023
        %1237 = vmatprep.subr.bf16.mxu0 0
        %1238 = vmatpush1.bf16.msra.mxu0 %v1024
        %1239 = vmatprep.subr.bf16.mxu0 0
        %1240 = vmatpush1.bf16.msra.mxu0 %v1025
        %1241 = vmatprep.subr.bf16.mxu0 0
        %1242 = vmatpush1.bf16.msra.mxu0 %v1026
        %1243 = vmatprep.subr.bf16.mxu0 0
        %1244 = vmatpush1.bf16.msra.mxu0 %v1027
        %1245 = vmatprep.subr.bf16.mxu0 0
        %1246 = vmatpush1.bf16.msra.mxu0 %v1028
        %1247 = vmatprep.subr.bf16.mxu0 0
        %1248 = vmatpush1.bf16.msra.mxu0 %v1029
        %1249 = vmatprep.subr.bf16.mxu0 0
        %1250 = vmatpush1.bf16.msra.mxu0 %v1030
        %1251 = vmatprep.subr.bf16.mxu0 0
        %1252 = vmatpush1.bf16.msra.mxu0 %v1031
        %1253 = vmatprep.subr.bf16.mxu0 0
        %1254 = vmatpush1.bf16.msra.mxu0 %v1032
        %1255 = vmatprep.subr.bf16.mxu0 0
        %1256 = vmatpush1.bf16.msra.mxu0 %v1033
        %1257 = vmatprep.subr.bf16.mxu0 0
        %1258 = vmatpush1.bf16.msra.mxu0 %v1034
        %1259 = vmatprep.subr.bf16.mxu0 0
        %1260 = vmatpush1.bf16.msra.mxu0 %v1035
        %1261 = vmatprep.mubr.bf16.mxu0 %v751
        %1262 = vmatmul.mubr.bf16.gmra.mrb[0].mxu0 %v750
        %v1263 = vpop.f32.mrb[0].mxu0
        %v1264 = vadd.f32 %v1103, %v1263
        %v1265 = vpop.f32.mrb[0].mxu0
        %v1266 = vpop.f32.mrb[0].mxu0
        %v1267 = vadd.f32 %v1106, %v1266
        %v1268 = vpop.f32.mrb[0].mxu0
        %1269 = vmatprep.mubr.bf16.mxu0 %v755
        %1270 = vmatmul.mubr.bf16.gmra.mrb[0].mxu0 %v754
        %v1271 = vpop.f32.mrb[0].mxu0
        %v1272 = vadd.f32 %v1111, %v1271
        %v1273 = vpop.f32.mrb[0].mxu0
        %v1274 = vpop.f32.mrb[0].mxu0
        %v1275 = vadd.f32 %v1114, %v1274
        %v1276 = vpop.f32.mrb[0].mxu0
        %1277 = vmatprep.mubr.bf16.mxu0 %v759
        %1278 = vmatmul.mubr.bf16.gmra.mrb[0].mxu0 %v758
        %v1279 = vpop.f32.mrb[0].mxu0
        %v1280 = vadd.f32 %v1119, %v1279
        %v1281 = vpop.f32.mrb[0].mxu0
        %v1282 = vpop.f32.mrb[0].mxu0
        %v1283 = vadd.f32 %v1122, %v1282
        %v1284 = vpop.f32.mrb[0].mxu0
        %1285 = vmatprep.mubr.bf16.mxu0 %v763
        %1286 = vmatmul.mubr.bf16.gmra.mrb[0].mxu0 %v762
        %v1287 = vpop.f32.mrb[0].mxu0
        %v1288 = vadd.f32 %v1127, %v1287
        %v1289 = vpop.f32.mrb[0].mxu0
        %v1290 = vpop.f32.mrb[0].mxu0
        %v1291 = vadd.f32 %v1130, %v1290
        %v1292 = vpop.f32.mrb[0].mxu0
        %1293 = vmatprep.mubr.bf16.mxu0 %v767
        %1294 = vmatmul.mubr.bf16.gmra.mrb[0].mxu0 %v766
        %v1295 = vpop.f32.mrb[0].mxu0
        %v1296 = vadd.f32 %v1135, %v1295
        %v1297 = vpop.f32.mrb[0].mxu0
        %v1298 = vpop.f32.mrb[0].mxu0
        %v1299 = vadd.f32 %v1138, %v1298
        %v1300 = vpop.f32.mrb[0].mxu0
        %1301 = vmatprep.mubr.bf16.mxu0 %v771
        %1302 = vmatmul.mubr.bf16.gmra.mrb[0].mxu0 %v770
        %v1303 = vpop.f32.mrb[0].mxu0
        %v1304 = vadd.f32 %v1143, %v1303
        %v1305 = vpop.f32.mrb[0].mxu0
        %v1306 = vpop.f32.mrb[0].mxu0
        %v1307 = vadd.f32 %v1146, %v1306
        %v1308 = vpop.f32.mrb[0].mxu0
        %1309 = vmatprep.mubr.bf16.mxu0 %v775
        %1310 = vmatmul.mubr.bf16.gmra.mrb[0].mxu0 %v774
        %v1311 = vpop.f32.mrb[0].mxu0
        %v1312 = vadd.f32 %v1151, %v1311
        %v1313 = vpop.f32.mrb[0].mxu0
        %v1314 = vpop.f32.mrb[0].mxu0
        %v1315 = vadd.f32 %v1154, %v1314
        %v1316 = vpop.f32.mrb[0].mxu0
        %1317 = vmatprep.mubr.bf16.mxu0 %v779
        %1318 = vmatmul.mubr.bf16.gmra.mrb[0].mxu0 %v778
        %v1319 = vpop.f32.mrb[0].mxu0
        %v1320 = vadd.f32 %v1159, %v1319
        %v1321 = vpop.f32.mrb[0].mxu0
        %v1322 = vpop.f32.mrb[0].mxu0
        %v1323 = vadd.f32 %v1162, %v1322
        %v1324 = vpop.f32.mrb[0].mxu0
        %1325 = vmatprep.mubr.bf16.mxu0 %v783
        %1326 = vmatmul.mubr.bf16.gmra.mrb[0].mxu0 %v782
        %v1327 = vpop.f32.mrb[0].mxu0
        %v1328 = vadd.f32 %v1167, %v1327
        %v1329 = vpop.f32.mrb[0].mxu0
        %v1330 = vpop.f32.mrb[0].mxu0
        %v1331 = vadd.f32 %v1170, %v1330
        %v1332 = vpop.f32.mrb[0].mxu0
        %1333 = vmatprep.mubr.bf16.mxu0 %v787
        %1334 = vmatmul.mubr.bf16.gmra.mrb[0].mxu0 %v786
        %v1335 = vpop.f32.mrb[0].mxu0
        %v1336 = vadd.f32 %v1175, %v1335
        %v1337 = vpop.f32.mrb[0].mxu0
        %v1338 = vpop.f32.mrb[0].mxu0
        %v1339 = vadd.f32 %v1178, %v1338
        %v1340 = vpop.f32.mrb[0].mxu0
        %1341 = vmatprep.mubr.bf16.mxu0 %v791
        %1342 = vmatmul.mubr.bf16.gmra.mrb[0].mxu0 %v790
        %v1343 = vpop.f32.mrb[0].mxu0
        %v1344 = vadd.f32 %v1183, %v1343
        %v1345 = vpop.f32.mrb[0].mxu0
        %v1346 = vpop.f32.mrb[0].mxu0
        %v1347 = vadd.f32 %v1186, %v1346
        %v1348 = vpop.f32.mrb[0].mxu0
        %1349 = vmatprep.mubr.bf16.mxu0 %v795
        %1350 = vmatmul.mubr.bf16.gmra.mrb[0].mxu0 %v794
        %v1351 = vpop.f32.mrb[0].mxu0
        %v1352 = vadd.f32 %v1191, %v1351
        %v1353 = vpop.f32.mrb[0].mxu0
        %v1354 = vpop.f32.mrb[0].mxu0
        %v1355 = vadd.f32 %v1194, %v1354
        %v1356 = vpop.f32.mrb[0].mxu0
        %1357 = vmatprep.mubr.bf16.mxu0 %v799
        %1358 = vmatmul.mubr.bf16.gmra.mrb[0].mxu0 %v798
        %v1359 = vpop.f32.mrb[0].mxu0
        %v1360 = vadd.f32 %v1199, %v1359
        %v1361 = vpop.f32.mrb[0].mxu0
        %v1362 = vpop.f32.mrb[0].mxu0
        %v1363 = vadd.f32 %v1202, %v1362
        %v1364 = vpop.f32.mrb[0].mxu0
        %1365 = vmatprep.mubr.bf16.mxu0 %v803
        %1366 = vmatmul.mubr.bf16.gmra.mrb[0].mxu0 %v802
        %v1367 = vpop.f32.mrb[0].mxu0
        %v1368 = vadd.f32 %v1207, %v1367
        %v1369 = vpop.f32.mrb[0].mxu0
        %v1370 = vpop.f32.mrb[0].mxu0
        %v1371 = vadd.f32 %v1210, %v1370
        %v1372 = vpop.f32.mrb[0].mxu0
        %1373 = vmatprep.mubr.bf16.mxu0 %v807
        %1374 = vmatmul.mubr.bf16.gmra.mrb[0].mxu0 %v806
        %v1375 = vpop.f32.mrb[0].mxu0
        %v1376 = vadd.f32 %v1215, %v1375
        %v1377 = vpop.f32.mrb[0].mxu0
        %v1378 = vpop.f32.mrb[0].mxu0
        %v1379 = vadd.f32 %v1218, %v1378
        %v1380 = vpop.f32.mrb[0].mxu0
        %1381 = vmatprep.mubr.bf16.mxu0 %v811
        %1382 = vmatmul.mubr.bf16.gmra.mrb[0].mxu0 %v810
        %v1383 = vpop.f32.mrb[0].mxu0
        %v1384 = vadd.f32 %v1223, %v1383
        %v1385 = vpop.f32.mrb[0].mxu0
        %v1386 = vpop.f32.mrb[0].mxu0
        %v1387 = vadd.f32 %v1226, %v1386
        %v1388 = vpop.f32.mrb[0].mxu0
        %1389 = vdwg.mxu0
        %v1390 = vadd.f32 %v396, %v1264
        %v1391 = vadd.f32 %v397, %v1267
        %v1392 = vadd.f32 %v398, %v1272
        %v1393 = vadd.f32 %v399, %v1275
        %v1394 = vadd.f32 %v400, %v1280
        %v1395 = vadd.f32 %v401, %v1283
        %v1396 = vadd.f32 %v402, %v1288
        %v1397 = vadd.f32 %v403, %v1291
        %v1398 = vadd.f32 %v404, %v1296
        %v1399 = vadd.f32 %v405, %v1299
        %v1400 = vadd.f32 %v406, %v1304
        %v1401 = vadd.f32 %v407, %v1307
        %v1402 = vadd.f32 %v408, %v1312
        %v1403 = vadd.f32 %v409, %v1315
        %v1404 = vadd.f32 %v410, %v1320
        %v1405 = vadd.f32 %v411, %v1323
        %v1406 = vadd.f32 %v412, %v1328
        %v1407 = vadd.f32 %v413, %v1331
        %v1408 = vadd.f32 %v414, %v1336
        %v1409 = vadd.f32 %v415, %v1339
        %v1410 = vadd.f32 %v416, %v1344
        %v1411 = vadd.f32 %v417, %v1347
        %v1412 = vadd.f32 %v418, %v1352
        %v1413 = vadd.f32 %v419, %v1355
        %v1414 = vadd.f32 %v420, %v1360
        %v1415 = vadd.f32 %v421, %v1363
        %v1416 = vadd.f32 %v422, %v1368
        %v1417 = vadd.f32 %v423, %v1371
        %v1418 = vadd.f32 %v424, %v1376
        %v1419 = vadd.f32 %v425, %v1379
        %v1420 = vadd.f32 %v426, %v1384
        %v1421 = vadd.f32 %v427, %v1387
        %1422 = vst [vmem:[#allocation2] sm:$0xff] %v1390
        %1423 = vst [vmem:[#allocation2 + $0x8] sm:$0xff] %v1391
        %1424 = vst [vmem:[#allocation2 + $0x10] sm:$0xff] %v1392
        %1425 = vst [vmem:[#allocation2 + $0x18] sm:$0xff] %v1393
        %1426 = vst [vmem:[#allocation2 + $0x20] sm:$0xff] %v1394
        %1427 = vst [vmem:[#allocation2 + $0x28] sm:$0xff] %v1395
        %1428 = vst [vmem:[#allocation2 + $0x30] sm:$0xff] %v1396
        %1429 = vst [vmem:[#allocation2 + $0x38] sm:$0xff] %v1397
        %1430 = vst [vmem:[#allocation2 + $0x40] sm:$0xff] %v1398
        %1431 = vst [vmem:[#allocation2 + $0x48] sm:$0xff] %v1399
        %1432 = vst [vmem:[#allocation2 + $0x50] sm:$0xff] %v1400
        %1433 = vst [vmem:[#allocation2 + $0x58] sm:$0xff] %v1401
        %1434 = vst [vmem:[#allocation2 + $0x60] sm:$0xff] %v1402
        %1435 = vst [vmem:[#allocation2 + $0x68] sm:$0xff] %v1403
        %1436 = vst [vmem:[#allocation2 + $0x70] sm:$0xff] %v1404
        %1437 = vst [vmem:[#allocation2 + $0x78] sm:$0xff] %v1405
        %1438 = vst [vmem:[#allocation2 + $0x80] sm:$0xff] %v1406
        %1439 = vst [vmem:[#allocation2 + $0x88] sm:$0xff] %v1407
        %1440 = vst [vmem:[#allocation2 + $0x90] sm:$0xff] %v1408
        %1441 = vst [vmem:[#allocation2 + $0x98] sm:$0xff] %v1409
        %1442 = vst [vmem:[#allocation2 + $0xa0] sm:$0xff] %v1410
        %1443 = vst [vmem:[#allocation2 + $0xa8] sm:$0xff] %v1411
        %1444 = vst [vmem:[#allocation2 + $0xb0] sm:$0xff] %v1412
        %1445 = vst [vmem:[#allocation2 + $0xb8] sm:$0xff] %v1413
        %1446 = vst [vmem:[#allocation2 + $0xc0] sm:$0xff] %v1414
        %1447 = vst [vmem:[#allocation2 + $0xc8] sm:$0xff] %v1415
        %1448 = vst [vmem:[#allocation2 + $0xd0] sm:$0xff] %v1416
        %1449 = vst [vmem:[#allocation2 + $0xd8] sm:$0xff] %v1417
        %1450 = vst [vmem:[#allocation2 + $0xe0] sm:$0xff] %v1418
        %1451 = vst [vmem:[#allocation2 + $0xe8] sm:$0xff] %v1419
        %1452 = vst [vmem:[#allocation2 + $0xf0] sm:$0xff] %v1420
        %1453 = vst [vmem:[#allocation2 + $0xf8] sm:$0xff] %v1421
        %p1454 = scmp.eq.s32.totalorder %s19, 3
        // Predicated region
        $region60: #{blip_retrieval_forward.7} parent=50 // pred_check
          %p1455 = pneg %p1454
        $region61: #{blip_retrieval_forward.7} parent=50 // pred_check_branch
          %1457 = sbr.rel (%p1455) target = $region63
        $region62: #{blip_retrieval_forward.7} parent=50 // pred_region
          %v1458 = vld [vmem:[#allocation2] sm:$0xff]
          %v1459 = vld [vmem:[#allocation2 + $0x8] sm:$0xff]
          %v1460 = vld [vmem:[#allocation2 + $0x10] sm:$0xff]
          %v1461 = vld [vmem:[#allocation2 + $0x18] sm:$0xff]
          %v1462 = vld [vmem:[#allocation2 + $0x20] sm:$0xff]
          %v1463 = vld [vmem:[#allocation2 + $0x28] sm:$0xff]
          %v1464 = vld [vmem:[#allocation2 + $0x30] sm:$0xff]
          %v1465 = vld [vmem:[#allocation2 + $0x38] sm:$0xff]
          %v1466 = vld [vmem:[#allocation2 + $0x40] sm:$0xff]
          %v1467 = vld [vmem:[#allocation2 + $0x48] sm:$0xff]
          %v1468 = vld [vmem:[#allocation2 + $0x50] sm:$0xff]
          %v1469 = vld [vmem:[#allocation2 + $0x58] sm:$0xff]
          %v1470 = vld [vmem:[#allocation2 + $0x60] sm:$0xff]
          %v1471 = vld [vmem:[#allocation2 + $0x68] sm:$0xff]
          %v1472 = vld [vmem:[#allocation2 + $0x70] sm:$0xff]
          %v1473 = vld [vmem:[#allocation2 + $0x78] sm:$0xff]
          %v1474 = vld [vmem:[#allocation2 + $0x80] sm:$0xff]
          %v1475 = vld [vmem:[#allocation2 + $0x88] sm:$0xff]
          %v1476 = vld [vmem:[#allocation2 + $0x90] sm:$0xff]
          %v1477 = vld [vmem:[#allocation2 + $0x98] sm:$0xff]
          %v1478 = vld [vmem:[#allocation2 + $0xa0] sm:$0xff]
          %v1479 = vld [vmem:[#allocation2 + $0xa8] sm:$0xff]
          %v1480 = vld [vmem:[#allocation2 + $0xb0] sm:$0xff]
          %v1481 = vld [vmem:[#allocation2 + $0xb8] sm:$0xff]
          %v1482 = vld [vmem:[#allocation2 + $0xc0] sm:$0xff]
          %v1483 = vld [vmem:[#allocation2 + $0xc8] sm:$0xff]
          %v1484 = vld [vmem:[#allocation2 + $0xd0] sm:$0xff]
          %v1485 = vld [vmem:[#allocation2 + $0xd8] sm:$0xff]
          %v1486 = vld [vmem:[#allocation2 + $0xe0] sm:$0xff]
          %v1487 = vld [vmem:[#allocation2 + $0xe8] sm:$0xff]
          %v1488 = vld [vmem:[#allocation2 + $0xf0] sm:$0xff]
          %v1489 = vld [vmem:[#allocation2 + $0xf8] sm:$0xff]
          %v1490 = vld [vmem:[%s2] sm:$0x1]
          %v1492 = vlaneseq
          %v1493 = vshrl.u32 %v1492, 7
          %v1494 = vsub.s32 0, %v1493
          %v1495 = vrot.slane %v1490, %v1494
          %v1497 = vadd.f32 %v1458, %v1495
          %v1498 = vadd.f32 %v1459, %v1495
          %v1499 = vadd.f32 %v1460, %v1495
          %v1500 = vadd.f32 %v1461, %v1495
          %v1501 = vadd.f32 %v1462, %v1495
          %v1502 = vadd.f32 %v1463, %v1495
          %v1503 = vadd.f32 %v1464, %v1495
          %v1504 = vadd.f32 %v1465, %v1495
          %v1505 = vadd.f32 %v1466, %v1495
          %v1506 = vadd.f32 %v1467, %v1495
          %v1507 = vadd.f32 %v1468, %v1495
          %v1508 = vadd.f32 %v1469, %v1495
          %v1509 = vadd.f32 %v1470, %v1495
          %v1510 = vadd.f32 %v1471, %v1495
          %v1511 = vadd.f32 %v1472, %v1495
          %v1512 = vadd.f32 %v1473, %v1495
          %v1513 = vadd.f32 %v1474, %v1495
          %v1514 = vadd.f32 %v1475, %v1495
          %v1515 = vadd.f32 %v1476, %v1495
          %v1516 = vadd.f32 %v1477, %v1495
          %v1517 = vadd.f32 %v1478, %v1495
          %v1518 = vadd.f32 %v1479, %v1495
          %v1519 = vadd.f32 %v1480, %v1495
          %v1520 = vadd.f32 %v1481, %v1495
          %v1521 = vadd.f32 %v1482, %v1495
          %v1522 = vadd.f32 %v1483, %v1495
          %v1523 = vadd.f32 %v1484, %v1495
          %v1524 = vadd.f32 %v1485, %v1495
          %v1525 = vadd.f32 %v1486, %v1495
          %v1526 = vadd.f32 %v1487, %v1495
          %v1527 = vadd.f32 %v1488, %v1495
          %v1528 = vadd.f32 %v1489, %v1495
          %v1529 = vpack.c.bf16 %v1498, %v1497
          %v1530 = vpack.c.bf16 %v1500, %v1499
          %v1531 = vpack.c.bf16 %v1502, %v1501
          %v1532 = vpack.c.bf16 %v1504, %v1503
          %v1533 = vpack.c.bf16 %v1506, %v1505
          %v1534 = vpack.c.bf16 %v1508, %v1507
          %v1535 = vpack.c.bf16 %v1510, %v1509
          %v1536 = vpack.c.bf16 %v1512, %v1511
          %v1537 = vpack.c.bf16 %v1514, %v1513
          %v1538 = vpack.c.bf16 %v1516, %v1515
          %v1539 = vpack.c.bf16 %v1518, %v1517
          %v1540 = vpack.c.bf16 %v1520, %v1519
          %v1541 = vpack.c.bf16 %v1522, %v1521
          %v1542 = vpack.c.bf16 %v1524, %v1523
          %v1543 = vpack.c.bf16 %v1526, %v1525
          %v1544 = vpack.c.bf16 %v1528, %v1527
          %v1561 = vunpack.c.l.b16 %v1529
          %v1562 = vunpack.c.h.b16 %v1529
          %v1563 = vunpack.c.l.b16 %v1530
          %v1564 = vunpack.c.h.b16 %v1530
          %v1565 = vunpack.c.l.b16 %v1531
          %v1566 = vunpack.c.h.b16 %v1531
          %v1567 = vunpack.c.l.b16 %v1532
          %v1568 = vunpack.c.h.b16 %v1532
          %v1569 = vunpack.c.l.b16 %v1533
          %v1570 = vunpack.c.h.b16 %v1533
          %v1571 = vunpack.c.l.b16 %v1534
          %v1572 = vunpack.c.h.b16 %v1534
          %v1573 = vunpack.c.l.b16 %v1535
          %v1574 = vunpack.c.h.b16 %v1535
          %v1575 = vunpack.c.l.b16 %v1536
          %v1576 = vunpack.c.h.b16 %v1536
          %v1577 = vunpack.c.l.b16 %v1537
          %v1578 = vunpack.c.h.b16 %v1537
          %v1579 = vunpack.c.l.b16 %v1538
          %v1580 = vunpack.c.h.b16 %v1538
          %v1581 = vunpack.c.l.b16 %v1539
          %v1582 = vunpack.c.h.b16 %v1539
          %v1583 = vunpack.c.l.b16 %v1540
          %v1584 = vunpack.c.h.b16 %v1540
          %v1585 = vunpack.c.l.b16 %v1541
          %v1586 = vunpack.c.h.b16 %v1541
          %v1587 = vunpack.c.l.b16 %v1542
          %v1588 = vunpack.c.h.b16 %v1542
          %v1589 = vunpack.c.l.b16 %v1543
          %v1590 = vunpack.c.h.b16 %v1543
          %v1591 = vunpack.c.l.b16 %v1544
          %v1592 = vunpack.c.h.b16 %v1544
          %v1593 = vpack.c.b16 %v1561, %v1561
          %v1594 = vpack.c.b16 %v1562, %v1562
          %v1595 = vpack.c.b16 %v1563, %v1563
          %v1596 = vpack.c.b16 %v1564, %v1564
          %v1597 = vpack.c.b16 %v1565, %v1565
          %v1598 = vpack.c.b16 %v1566, %v1566
          %v1599 = vpack.c.b16 %v1567, %v1567
          %v1600 = vpack.c.b16 %v1568, %v1568
          %v1601 = vpack.c.b16 %v1569, %v1569
          %v1602 = vpack.c.b16 %v1570, %v1570
          %v1603 = vpack.c.b16 %v1571, %v1571
          %v1604 = vpack.c.b16 %v1572, %v1572
          %v1605 = vpack.c.b16 %v1573, %v1573
          %v1606 = vpack.c.b16 %v1574, %v1574
          %v1607 = vpack.c.b16 %v1575, %v1575
          %v1608 = vpack.c.b16 %v1576, %v1576
          %v1609 = vpack.c.b16 %v1577, %v1577
          %v1610 = vpack.c.b16 %v1578, %v1578
          %v1611 = vpack.c.b16 %v1579, %v1579
          %v1612 = vpack.c.b16 %v1580, %v1580
          %v1613 = vpack.c.b16 %v1581, %v1581
          %v1614 = vpack.c.b16 %v1582, %v1582
          %v1615 = vpack.c.b16 %v1583, %v1583
          %v1616 = vpack.c.b16 %v1584, %v1584
          %v1617 = vpack.c.b16 %v1585, %v1585
          %v1618 = vpack.c.b16 %v1586, %v1586
          %v1619 = vpack.c.b16 %v1587, %v1587
          %v1620 = vpack.c.b16 %v1588, %v1588
          %v1621 = vpack.c.b16 %v1589, %v1589
          %v1622 = vpack.c.b16 %v1590, %v1590
          %v1623 = vpack.c.b16 %v1591, %v1591
          %v1624 = vpack.c.b16 %v1592, %v1592
          %1657 = vst [vmem:[%s357] sm:$0xf] %v1593
          %1658 = vst [vmem:[%s357 + $0x4] sm:$0xf] %v1594
          %1659 = vst [vmem:[%s357 + $0x8] sm:$0xf] %v1595
          %1660 = vst [vmem:[%s357 + $0xc] sm:$0xf] %v1596
          %1661 = vst [vmem:[%s357 + $0x10] sm:$0xf] %v1597
          %1662 = vst [vmem:[%s357 + $0x14] sm:$0xf] %v1598
          %1663 = vst [vmem:[%s357 + $0x18] sm:$0xf] %v1599
          %1664 = vst [vmem:[%s357 + $0x1c] sm:$0xf] %v1600
          %1665 = vst [vmem:[%s357 + $0x20] sm:$0xf] %v1601
          %1666 = vst [vmem:[%s357 + $0x24] sm:$0xf] %v1602
          %1667 = vst [vmem:[%s357 + $0x28] sm:$0xf] %v1603
          %1668 = vst [vmem:[%s357 + $0x2c] sm:$0xf] %v1604
          %1669 = vst [vmem:[%s357 + $0x30] sm:$0xf] %v1605
          %1670 = vst [vmem:[%s357 + $0x34] sm:$0xf] %v1606
          %1671 = vst [vmem:[%s357 + $0x38] sm:$0xf] %v1607
          %1672 = vst [vmem:[%s357 + $0x3c] sm:$0xf] %v1608
          %1673 = vst [vmem:[%s357 + $0x40] sm:$0xf] %v1609
          %1674 = vst [vmem:[%s357 + $0x44] sm:$0xf] %v1610
          %1675 = vst [vmem:[%s357 + $0x48] sm:$0xf] %v1611
          %1676 = vst [vmem:[%s357 + $0x4c] sm:$0xf] %v1612
          %1677 = vst [vmem:[%s357 + $0x50] sm:$0xf] %v1613
          %1678 = vst [vmem:[%s357 + $0x54] sm:$0xf] %v1614
          %1679 = vst [vmem:[%s357 + $0x58] sm:$0xf] %v1615
          %1680 = vst [vmem:[%s357 + $0x5c] sm:$0xf] %v1616
          %1681 = vst [vmem:[%s357 + $0x60] sm:$0xf] %v1617
          %1682 = vst [vmem:[%s357 + $0x64] sm:$0xf] %v1618
          %1683 = vst [vmem:[%s357 + $0x68] sm:$0xf] %v1619
          %1684 = vst [vmem:[%s357 + $0x6c] sm:$0xf] %v1620
          %1685 = vst [vmem:[%s357 + $0x70] sm:$0xf] %v1621
          %1686 = vst [vmem:[%s357 + $0x74] sm:$0xf] %v1622
          %1687 = vst [vmem:[%s357 + $0x78] sm:$0xf] %v1623
          %1688 = vst [vmem:[%s357 + $0x7c] sm:$0xf] %v1624
        $region63: #{blip_retrieval_forward.7} parent=50 // pred_fallthru
          _
        %s1689 = smul.u32 32, %s18
        %p1690 = scmp.lt.s32.totalorder %s1689, 31
        %s1691 = scalar_select %p1690, %s1689, 31
        %s1692 = smul.addr %s1691, 4
        %s1693 = scalar_lea.vmem %s3, %s1692
        // Predicated region
        $region64: #{blip_retrieval_forward.7} parent=50 // pred_check
          %p1694 = pneg %p119
        $region65: #{blip_retrieval_forward.7} parent=50 // pred_check_branch
          %1696 = sbr.rel (%p1694) target = $region67
        $region66: #{blip_retrieval_forward.7} parent=50 // pred_region
          %s1697 = smul.u32 32, %s18
        $region67: #{blip_retrieval_forward.7} parent=50 // pred_fallthru
          _
        // Predicated region
        $region68: #{blip_retrieval_forward.7} parent=50 // pred_check
          %p1698 = pneg %p119
        $region69: #{blip_retrieval_forward.7} parent=50 // pred_check_branch
          %1700 = sbr.rel (%p1698) target = $region71
        $region70: #{blip_retrieval_forward.7} parent=50 // pred_region
          %s1701 = smul.u32 32, %s18
          %p1702 = scmp.lt.s32.totalorder %s1701, 31
          %s1703 = scalar_select %p1702, %s1701, 31
          %s1704 = smul.addr %s1703, 4
          %s1705 = scalar_lea.vmem %s3, %s1704
        $region71: #{blip_retrieval_forward.7} parent=50 // pred_fallthru
          _
      $region51: #{blip_retrieval_forward.7} parent=5 // pred_fallthru
        _
      %p1706 = scmp.le.s32.totalorder 2, %s9
      // Predicated region
      $region72: #{blip_retrieval_forward.7} parent=5 // pred_check
        %p1707 = pneg %p1706
      $region73: #{blip_retrieval_forward.7} parent=5 // pred_check_branch
        %1709 = sbr.rel (%p1707) target = $region75
      $region74: #{blip_retrieval_forward.7} parent=5 // pred_region
        %s1710 = ssub.s32 %s9, 2
      $region75: #{blip_retrieval_forward.7} parent=5 // pred_fallthru
        _
    $region6: #{blip_retrieval_forward.7} parent=1 // loop_footer
      %s13 = sadd.s32 1, %s9
    $region7: #{blip_retrieval_forward.7} parent=1 // loop_footer_branch
      %8 = sbr.rel target = $region3
    $region8: #{blip_retrieval_forward.7} parent=1 // loop_exit
      _

// kernel: blip_retrieval_forward.8
$region0: #{blip_retrieval_forward.8}
  #allocation0 [shape = 'u32[]', space=smem, size = 0x4, offset = 0x4, fixed_abs, tag = 'smem constant byte address 0x4 - core index']
  #allocation1 [shape = 'u32[144,128]{1,0:T(1,128)}', space=vmem, size = 0x12000, scoped, tag = 'internal scratch']
  #allocation2 [shape = 'f32[256,128]{1,0:T(8,128)}', space=vmem, size = 0x20000, scoped, tag = 'scratch operand']
  %s0 = inlined_call_operand.vmem [shape: bf16[256,128], index: 0, kind: input, shape index: {}]
  %s1 = inlined_call_operand.vmem [shape: bf16[128,128], index: 1, kind: input, shape index: {}]
  %s2 = inlined_call_operand.vmem [shape: f32[1,128], index: 2, kind: input, shape index: {}]
  %s3 = inlined_call_operand.vmem [shape: bf16[256,128], index: 3, kind: output, shape index: {}]
  %s4 = sld [smem:[#allocation0]]
  $region30: #{blip_retrieval_forward.8} parent=0
    _
  %s6 = ssub.s32 1, %s4
  %s7 = scalar_select 0, %s6, %s4
  // Predicated region
  $region2: #{blip_retrieval_forward.8} parent=0 // pred_check
    _
  $region3: #{blip_retrieval_forward.8} parent=0 // pred_check_branch
    %9 = sbr.rel (0) target = $region5
  $region4: #{blip_retrieval_forward.8} parent=0 // pred_region
    _
  $region5: #{blip_retrieval_forward.8} parent=0 // pred_fallthru
    _
  // Predicated region
  $region6: #{blip_retrieval_forward.8} parent=0 // pred_check
    _
  $region7: #{blip_retrieval_forward.8} parent=0 // pred_check_branch
    %11 = sbr.rel (0) target = $region9
  $region8: #{blip_retrieval_forward.8} parent=0 // pred_region
    _
  $region9: #{blip_retrieval_forward.8} parent=0 // pred_fallthru
    _
  // Predicated region
  $region10: #{blip_retrieval_forward.8} parent=0 // pred_check
    _
  $region11: #{blip_retrieval_forward.8} parent=0 // pred_check_branch
    %13 = sbr.rel (0) target = $region13
  $region12: #{blip_retrieval_forward.8} parent=0 // pred_region
    _
  $region13: #{blip_retrieval_forward.8} parent=0 // pred_fallthru
    _
  %p15 = scmp.eq.s32.totalorder 0, 0
  // Predicated region
  $region14: #{blip_retrieval_forward.8} parent=0 // pred_check
    %p16 = pneg %p15
  $region15: #{blip_retrieval_forward.8} parent=0 // pred_check_branch
    %18 = sbr.rel (%p16) target = $region17
  $region16: #{blip_retrieval_forward.8} parent=0 // pred_region
    %19 = vst [vmem:[#allocation2] sm:$0xff] 0.0
    %20 = vst [vmem:[#allocation2 + $0x8] sm:$0xff] 0.0
    %21 = vst [vmem:[#allocation2 + $0x10] sm:$0xff] 0.0
    %22 = vst [vmem:[#allocation2 + $0x18] sm:$0xff] 0.0
    %23 = vst [vmem:[#allocation2 + $0x20] sm:$0xff] 0.0
    %24 = vst [vmem:[#allocation2 + $0x28] sm:$0xff] 0.0
    %25 = vst [vmem:[#allocation2 + $0x30] sm:$0xff] 0.0
    %26 = vst [vmem:[#allocation2 + $0x38] sm:$0xff] 0.0
    %27 = vst [vmem:[#allocation2 + $0x40] sm:$0xff] 0.0
    %28 = vst [vmem:[#allocation2 + $0x48] sm:$0xff] 0.0
    %29 = vst [vmem:[#allocation2 + $0x50] sm:$0xff] 0.0
    %30 = vst [vmem:[#allocation2 + $0x58] sm:$0xff] 0.0
    %31 = vst [vmem:[#allocation2 + $0x60] sm:$0xff] 0.0
    %32 = vst [vmem:[#allocation2 + $0x68] sm:$0xff] 0.0
    %33 = vst [vmem:[#allocation2 + $0x70] sm:$0xff] 0.0
    %34 = vst [vmem:[#allocation2 + $0x78] sm:$0xff] 0.0
    %35 = vst [vmem:[#allocation2 + $0x80] sm:$0xff] 0.0
    %36 = vst [vmem:[#allocation2 + $0x88] sm:$0xff] 0.0
    %37 = vst [vmem:[#allocation2 + $0x90] sm:$0xff] 0.0
    %38 = vst [vmem:[#allocation2 + $0x98] sm:$0xff] 0.0
    %39 = vst [vmem:[#allocation2 + $0xa0] sm:$0xff] 0.0
    %40 = vst [vmem:[#allocation2 + $0xa8] sm:$0xff] 0.0
    %41 = vst [vmem:[#allocation2 + $0xb0] sm:$0xff] 0.0
    %42 = vst [vmem:[#allocation2 + $0xb8] sm:$0xff] 0.0
    %43 = vst [vmem:[#allocation2 + $0xc0] sm:$0xff] 0.0
    %44 = vst [vmem:[#allocation2 + $0xc8] sm:$0xff] 0.0
    %45 = vst [vmem:[#allocation2 + $0xd0] sm:$0xff] 0.0
    %46 = vst [vmem:[#allocation2 + $0xd8] sm:$0xff] 0.0
    %47 = vst [vmem:[#allocation2 + $0xe0] sm:$0xff] 0.0
    %48 = vst [vmem:[#allocation2 + $0xe8] sm:$0xff] 0.0
    %49 = vst [vmem:[#allocation2 + $0xf0] sm:$0xff] 0.0
    %50 = vst [vmem:[#allocation2 + $0xf8] sm:$0xff] 0.0
  $region17: #{blip_retrieval_forward.8} parent=0 // pred_fallthru
    _
  %v51 = vld [vmem:[#allocation2] sm:$0xff]
  %v52 = vld [vmem:[#allocation2 + $0x8] sm:$0xff]
  %v53 = vld [vmem:[#allocation2 + $0x10] sm:$0xff]
  %v54 = vld [vmem:[#allocation2 + $0x18] sm:$0xff]
  %v55 = vld [vmem:[#allocation2 + $0x20] sm:$0xff]
  %v56 = vld [vmem:[#allocation2 + $0x28] sm:$0xff]
  %v57 = vld [vmem:[#allocation2 + $0x30] sm:$0xff]
  %v58 = vld [vmem:[#allocation2 + $0x38] sm:$0xff]
  %v59 = vld [vmem:[#allocation2 + $0x40] sm:$0xff]
  %v60 = vld [vmem:[#allocation2 + $0x48] sm:$0xff]
  %v61 = vld [vmem:[#allocation2 + $0x50] sm:$0xff]
  %v62 = vld [vmem:[#allocation2 + $0x58] sm:$0xff]
  %v63 = vld [vmem:[#allocation2 + $0x60] sm:$0xff]
  %v64 = vld [vmem:[#allocation2 + $0x68] sm:$0xff]
  %v65 = vld [vmem:[#allocation2 + $0x70] sm:$0xff]
  %v66 = vld [vmem:[#allocation2 + $0x78] sm:$0xff]
  %v67 = vld [vmem:[#allocation2 + $0x80] sm:$0xff]
  %v68 = vld [vmem:[#allocation2 + $0x88] sm:$0xff]
  %v69 = vld [vmem:[#allocation2 + $0x90] sm:$0xff]
  %v70 = vld [vmem:[#allocation2 + $0x98] sm:$0xff]
  %v71 = vld [vmem:[#allocation2 + $0xa0] sm:$0xff]
  %v72 = vld [vmem:[#allocation2 + $0xa8] sm:$0xff]
  %v73 = vld [vmem:[#allocation2 + $0xb0] sm:$0xff]
  %v74 = vld [vmem:[#allocation2 + $0xb8] sm:$0xff]
  %v75 = vld [vmem:[#allocation2 + $0xc0] sm:$0xff]
  %v76 = vld [vmem:[#allocation2 + $0xc8] sm:$0xff]
  %v77 = vld [vmem:[#allocation2 + $0xd0] sm:$0xff]
  %v78 = vld [vmem:[#allocation2 + $0xd8] sm:$0xff]
  %v79 = vld [vmem:[#allocation2 + $0xe0] sm:$0xff]
  %v80 = vld [vmem:[#allocation2 + $0xe8] sm:$0xff]
  %v81 = vld [vmem:[#allocation2 + $0xf0] sm:$0xff]
  %v82 = vld [vmem:[#allocation2 + $0xf8] sm:$0xff]
  %v83 = vld [vmem:[%s0] sm:$0xf]
  %v84 = vld [vmem:[%s0 + $0x4] sm:$0xf]
  %v85 = vld [vmem:[%s0 + $0x8] sm:$0xf]
  %v86 = vld [vmem:[%s0 + $0xc] sm:$0xf]
  %v87 = vld [vmem:[%s0 + $0x10] sm:$0xf]
  %v88 = vld [vmem:[%s0 + $0x14] sm:$0xf]
  %v89 = vld [vmem:[%s0 + $0x18] sm:$0xf]
  %v90 = vld [vmem:[%s0 + $0x1c] sm:$0xf]
  %v91 = vld [vmem:[%s0 + $0x20] sm:$0xf]
  %v92 = vld [vmem:[%s0 + $0x24] sm:$0xf]
  %v93 = vld [vmem:[%s0 + $0x28] sm:$0xf]
  %v94 = vld [vmem:[%s0 + $0x2c] sm:$0xf]
  %v95 = vld [vmem:[%s0 + $0x30] sm:$0xf]
  %v96 = vld [vmem:[%s0 + $0x34] sm:$0xf]
  %v97 = vld [vmem:[%s0 + $0x38] sm:$0xf]
  %v98 = vld [vmem:[%s0 + $0x3c] sm:$0xf]
  %v99 = vld [vmem:[%s0 + $0x40] sm:$0xf]
  %v100 = vld [vmem:[%s0 + $0x44] sm:$0xf]
  %v101 = vld [vmem:[%s0 + $0x48] sm:$0xf]
  %v102 = vld [vmem:[%s0 + $0x4c] sm:$0xf]
  %v103 = vld [vmem:[%s0 + $0x50] sm:$0xf]
  %v104 = vld [vmem:[%s0 + $0x54] sm:$0xf]
  %v105 = vld [vmem:[%s0 + $0x58] sm:$0xf]
  %v106 = vld [vmem:[%s0 + $0x5c] sm:$0xf]
  %v107 = vld [vmem:[%s0 + $0x60] sm:$0xf]
  %v108 = vld [vmem:[%s0 + $0x64] sm:$0xf]
  %v109 = vld [vmem:[%s0 + $0x68] sm:$0xf]
  %v110 = vld [vmem:[%s0 + $0x6c] sm:$0xf]
  %v111 = vld [vmem:[%s0 + $0x70] sm:$0xf]
  %v112 = vld [vmem:[%s0 + $0x74] sm:$0xf]
  %v113 = vld [vmem:[%s0 + $0x78] sm:$0xf]
  %v114 = vld [vmem:[%s0 + $0x7c] sm:$0xf]
  %v115 = vld [vmem:[%s1] sm:$0xf]
  %v116 = vld [vmem:[%s1 + $0x4] sm:$0xf]
  %v117 = vld [vmem:[%s1 + $0x8] sm:$0xf]
  %v118 = vld [vmem:[%s1 + $0xc] sm:$0xf]
  %v119 = vld [vmem:[%s1 + $0x10] sm:$0xf]
  %v120 = vld [vmem:[%s1 + $0x14] sm:$0xf]
  %v121 = vld [vmem:[%s1 + $0x18] sm:$0xf]
  %v122 = vld [vmem:[%s1 + $0x1c] sm:$0xf]
  %v123 = vld [vmem:[%s1 + $0x20] sm:$0xf]
  %v124 = vld [vmem:[%s1 + $0x24] sm:$0xf]
  %v125 = vld [vmem:[%s1 + $0x28] sm:$0xf]
  %v126 = vld [vmem:[%s1 + $0x2c] sm:$0xf]
  %v127 = vld [vmem:[%s1 + $0x30] sm:$0xf]
  %v128 = vld [vmem:[%s1 + $0x34] sm:$0xf]
  %v129 = vld [vmem:[%s1 + $0x38] sm:$0xf]
  %v130 = vld [vmem:[%s1 + $0x3c] sm:$0xf]
  %v163 = vunpack.c.l.b16 %v83
  %v164 = vunpack.c.l.b16 %v84
  %v165 = vunpack.c.l.b16 %v85
  %v166 = vunpack.c.l.b16 %v86
  %v167 = vunpack.c.l.b16 %v87
  %v168 = vunpack.c.l.b16 %v88
  %v169 = vunpack.c.l.b16 %v89
  %v170 = vunpack.c.l.b16 %v90
  %v171 = vunpack.c.l.b16 %v91
  %v172 = vunpack.c.l.b16 %v92
  %v173 = vunpack.c.l.b16 %v93
  %v174 = vunpack.c.l.b16 %v94
  %v175 = vunpack.c.l.b16 %v95
  %v176 = vunpack.c.l.b16 %v96
  %v177 = vunpack.c.l.b16 %v97
  %v178 = vunpack.c.l.b16 %v98
  %v179 = vunpack.c.l.b16 %v99
  %v180 = vunpack.c.l.b16 %v100
  %v181 = vunpack.c.l.b16 %v101
  %v182 = vunpack.c.l.b16 %v102
  %v183 = vunpack.c.l.b16 %v103
  %v184 = vunpack.c.l.b16 %v104
  %v185 = vunpack.c.l.b16 %v105
  %v186 = vunpack.c.l.b16 %v106
  %v187 = vunpack.c.l.b16 %v107
  %v188 = vunpack.c.l.b16 %v108
  %v189 = vunpack.c.l.b16 %v109
  %v190 = vunpack.c.l.b16 %v110
  %v191 = vunpack.c.l.b16 %v111
  %v192 = vunpack.c.l.b16 %v112
  %v193 = vunpack.c.l.b16 %v113
  %v194 = vunpack.c.l.b16 %v114
  %v195 = vpack.c.b16 %v164, %v163
  %v196 = vpack.c.b16 %v166, %v165
  %v197 = vpack.c.b16 %v168, %v167
  %v198 = vpack.c.b16 %v170, %v169
  %v199 = vpack.c.b16 %v172, %v171
  %v200 = vpack.c.b16 %v174, %v173
  %v201 = vpack.c.b16 %v176, %v175
  %v202 = vpack.c.b16 %v178, %v177
  %v203 = vpack.c.b16 %v180, %v179
  %v204 = vpack.c.b16 %v182, %v181
  %v205 = vpack.c.b16 %v184, %v183
  %v206 = vpack.c.b16 %v186, %v185
  %v207 = vpack.c.b16 %v188, %v187
  %v208 = vpack.c.b16 %v190, %v189
  %v209 = vpack.c.b16 %v192, %v191
  %v210 = vpack.c.b16 %v194, %v193
  %v243 = vunpack.c.l.b16 %v115
  %v244 = vunpack.c.l.b16 %v116
  %v245 = vunpack.c.l.b16 %v117
  %v246 = vunpack.c.l.b16 %v118
  %v247 = vunpack.c.l.b16 %v119
  %v248 = vunpack.c.l.b16 %v120
  %v249 = vunpack.c.l.b16 %v121
  %v250 = vunpack.c.l.b16 %v122
  %v251 = vunpack.c.l.b16 %v123
  %v252 = vunpack.c.l.b16 %v124
  %v253 = vunpack.c.l.b16 %v125
  %v254 = vunpack.c.l.b16 %v126
  %v255 = vunpack.c.l.b16 %v127
  %v256 = vunpack.c.l.b16 %v128
  %v257 = vunpack.c.l.b16 %v129
  %v258 = vunpack.c.l.b16 %v130
  %v259 = vpack.c.b16 %v244, %v243
  %v260 = vpack.c.b16 %v246, %v245
  %v261 = vpack.c.b16 %v248, %v247
  %v262 = vpack.c.b16 %v250, %v249
  %v263 = vpack.c.b16 %v252, %v251
  %v264 = vpack.c.b16 %v254, %v253
  %v265 = vpack.c.b16 %v256, %v255
  %v266 = vpack.c.b16 %v258, %v257
  %275 = vmatprep.subr.bf16.mxu0 0
  %276 = vmatpush1.bf16.msra.mxu0 %v259
  %277 = vmatprep.subr.bf16.mxu0 0
  %278 = vmatpush1.bf16.msra.mxu0 %v260
  %279 = vmatprep.subr.bf16.mxu0 0
  %280 = vmatpush1.bf16.msra.mxu0 %v261
  %281 = vmatprep.subr.bf16.mxu0 0
  %282 = vmatpush1.bf16.msra.mxu0 %v262
  %283 = vmatprep.subr.bf16.mxu0 0
  %284 = vmatpush1.bf16.msra.mxu0 %v263
  %285 = vmatprep.subr.bf16.mxu0 0
  %286 = vmatpush1.bf16.msra.mxu0 %v264
  %287 = vmatprep.subr.bf16.mxu0 0
  %288 = vmatpush1.bf16.msra.mxu0 %v265
  %289 = vmatprep.subr.bf16.mxu0 0
  %290 = vmatpush1.bf16.msra.mxu0 %v266
  %291 = vmatprep.subr.bf16.mxu0 0
  %292 = vmatpush1.bf16.msra.mxu0 0
  %293 = vmatprep.subr.bf16.mxu0 0
  %294 = vmatpush1.bf16.msra.mxu0 0
  %295 = vmatprep.subr.bf16.mxu0 0
  %296 = vmatpush1.bf16.msra.mxu0 0
  %297 = vmatprep.subr.bf16.mxu0 0
  %298 = vmatpush1.bf16.msra.mxu0 0
  %299 = vmatprep.subr.bf16.mxu0 0
  %300 = vmatpush1.bf16.msra.mxu0 0
  %301 = vmatprep.subr.bf16.mxu0 0
  %302 = vmatpush1.bf16.msra.mxu0 0
  %303 = vmatprep.subr.bf16.mxu0 0
  %304 = vmatpush1.bf16.msra.mxu0 0
  %305 = vmatprep.subr.bf16.mxu0 0
  %306 = vmatpush1.bf16.msra.mxu0 0
  %307 = vmatprep.mubr.bf16.mxu0 0
  %308 = vmatmul.mubr.bf16.gmra.mrb[0].mxu0 %v195
  %v309 = vpop.f32.mrb[0].mxu0
  %v310 = vadd.f32 0.0, %v309
  %v311 = vpop.f32.mrb[0].mxu0
  %v312 = vpop.f32.mrb[0].mxu0
  %v313 = vadd.f32 0.0, %v312
  %v314 = vpop.f32.mrb[0].mxu0
  %315 = vmatprep.mubr.bf16.mxu0 0
  %316 = vmatmul.mubr.bf16.gmra.mrb[0].mxu0 %v196
  %v317 = vpop.f32.mrb[0].mxu0
  %v318 = vadd.f32 0.0, %v317
  %v319 = vpop.f32.mrb[0].mxu0
  %v320 = vpop.f32.mrb[0].mxu0
  %v321 = vadd.f32 0.0, %v320
  %v322 = vpop.f32.mrb[0].mxu0
  %323 = vmatprep.mubr.bf16.mxu0 0
  %324 = vmatmul.mubr.bf16.gmra.mrb[0].mxu0 %v197
  %v325 = vpop.f32.mrb[0].mxu0
  %v326 = vadd.f32 0.0, %v325
  %v327 = vpop.f32.mrb[0].mxu0
  %v328 = vpop.f32.mrb[0].mxu0
  %v329 = vadd.f32 0.0, %v328
  %v330 = vpop.f32.mrb[0].mxu0
  %331 = vmatprep.mubr.bf16.mxu0 0
  %332 = vmatmul.mubr.bf16.gmra.mrb[0].mxu0 %v198
  %v333 = vpop.f32.mrb[0].mxu0
  %v334 = vadd.f32 0.0, %v333
  %v335 = vpop.f32.mrb[0].mxu0
  %v336 = vpop.f32.mrb[0].mxu0
  %v337 = vadd.f32 0.0, %v336
  %v338 = vpop.f32.mrb[0].mxu0
  %339 = vmatprep.mubr.bf16.mxu0 0
  %340 = vmatmul.mubr.bf16.gmra.mrb[0].mxu0 %v199
  %v341 = vpop.f32.mrb[0].mxu0
  %v342 = vadd.f32 0.0, %v341
  %v343 = vpop.f32.mrb[0].mxu0
  %v344 = vpop.f32.mrb[0].mxu0
  %v345 = vadd.f32 0.0, %v344
  %v346 = vpop.f32.mrb[0].mxu0
  %347 = vmatprep.mubr.bf16.mxu0 0
  %348 = vmatmul.mubr.bf16.gmra.mrb[0].mxu0 %v200
  %v349 = vpop.f32.mrb[0].mxu0
  %v350 = vadd.f32 0.0, %v349
  %v351 = vpop.f32.mrb[0].mxu0
  %v352 = vpop.f32.mrb[0].mxu0
  %v353 = vadd.f32 0.0, %v352
  %v354 = vpop.f32.mrb[0].mxu0
  %355 = vmatprep.mubr.bf16.mxu0 0
  %356 = vmatmul.mubr.bf16.gmra.mrb[0].mxu0 %v201
  %v357 = vpop.f32.mrb[0].mxu0
  %v358 = vadd.f32 0.0, %v357
  %v359 = vpop.f32.mrb[0].mxu0
  %v360 = vpop.f32.mrb[0].mxu0
  %v361 = vadd.f32 0.0, %v360
  %v362 = vpop.f32.mrb[0].mxu0
  %363 = vmatprep.mubr.bf16.mxu0 0
  %364 = vmatmul.mubr.bf16.gmra.mrb[0].mxu0 %v202
  %v365 = vpop.f32.mrb[0].mxu0
  %v366 = vadd.f32 0.0, %v365
  %v367 = vpop.f32.mrb[0].mxu0
  %v368 = vpop.f32.mrb[0].mxu0
  %v369 = vadd.f32 0.0, %v368
  %v370 = vpop.f32.mrb[0].mxu0
  %371 = vmatprep.mubr.bf16.mxu0 0
  %372 = vmatmul.mubr.bf16.gmra.mrb[0].mxu0 %v203
  %v373 = vpop.f32.mrb[0].mxu0
  %v374 = vadd.f32 0.0, %v373
  %v375 = vpop.f32.mrb[0].mxu0
  %v376 = vpop.f32.mrb[0].mxu0
  %v377 = vadd.f32 0.0, %v376
  %v378 = vpop.f32.mrb[0].mxu0
  %379 = vmatprep.mubr.bf16.mxu0 0
  %380 = vmatmul.mubr.bf16.gmra.mrb[0].mxu0 %v204
  %v381 = vpop.f32.mrb[0].mxu0
  %v382 = vadd.f32 0.0, %v381
  %v383 = vpop.f32.mrb[0].mxu0
  %v384 = vpop.f32.mrb[0].mxu0
  %v385 = vadd.f32 0.0, %v384
  %v386 = vpop.f32.mrb[0].mxu0
  %387 = vmatprep.mubr.bf16.mxu0 0
  %388 = vmatmul.mubr.bf16.gmra.mrb[0].mxu0 %v205
  %v389 = vpop.f32.mrb[0].mxu0
  %v390 = vadd.f32 0.0, %v389
  %v391 = vpop.f32.mrb[0].mxu0
  %v392 = vpop.f32.mrb[0].mxu0
  %v393 = vadd.f32 0.0, %v392
  %v394 = vpop.f32.mrb[0].mxu0
  %395 = vmatprep.mubr.bf16.mxu0 0
  %396 = vmatmul.mubr.bf16.gmra.mrb[0].mxu0 %v206
  %v397 = vpop.f32.mrb[0].mxu0
  %v398 = vadd.f32 0.0, %v397
  %v399 = vpop.f32.mrb[0].mxu0
  %v400 = vpop.f32.mrb[0].mxu0
  %v401 = vadd.f32 0.0, %v400
  %v402 = vpop.f32.mrb[0].mxu0
  %403 = vmatprep.mubr.bf16.mxu0 0
  %404 = vmatmul.mubr.bf16.gmra.mrb[0].mxu0 %v207
  %v405 = vpop.f32.mrb[0].mxu0
  %v406 = vadd.f32 0.0, %v405
  %v407 = vpop.f32.mrb[0].mxu0
  %v408 = vpop.f32.mrb[0].mxu0
  %v409 = vadd.f32 0.0, %v408
  %v410 = vpop.f32.mrb[0].mxu0
  %411 = vmatprep.mubr.bf16.mxu0 0
  %412 = vmatmul.mubr.bf16.gmra.mrb[0].mxu0 %v208
  %v413 = vpop.f32.mrb[0].mxu0
  %v414 = vadd.f32 0.0, %v413
  %v415 = vpop.f32.mrb[0].mxu0
  %v416 = vpop.f32.mrb[0].mxu0
  %v417 = vadd.f32 0.0, %v416
  %v418 = vpop.f32.mrb[0].mxu0
  %419 = vmatprep.mubr.bf16.mxu0 0
  %420 = vmatmul.mubr.bf16.gmra.mrb[0].mxu0 %v209
  %v421 = vpop.f32.mrb[0].mxu0
  %v422 = vadd.f32 0.0, %v421
  %v423 = vpop.f32.mrb[0].mxu0
  %v424 = vpop.f32.mrb[0].mxu0
  %v425 = vadd.f32 0.0, %v424
  %v426 = vpop.f32.mrb[0].mxu0
  %427 = vmatprep.mubr.bf16.mxu0 0
  %428 = vmatmul.mubr.bf16.gmra.mrb[0].mxu0 %v210
  %v429 = vpop.f32.mrb[0].mxu0
  %v430 = vadd.f32 0.0, %v429
  %v431 = vpop.f32.mrb[0].mxu0
  %v432 = vpop.f32.mrb[0].mxu0
  %v433 = vadd.f32 0.0, %v432
  %v434 = vpop.f32.mrb[0].mxu0
  %435 = vdwg.mxu0
  %v436 = vadd.f32 %v51, %v310
  %v437 = vadd.f32 %v52, %v313
  %v438 = vadd.f32 %v53, %v318
  %v439 = vadd.f32 %v54, %v321
  %v440 = vadd.f32 %v55, %v326
  %v441 = vadd.f32 %v56, %v329
  %v442 = vadd.f32 %v57, %v334
  %v443 = vadd.f32 %v58, %v337
  %v444 = vadd.f32 %v59, %v342
  %v445 = vadd.f32 %v60, %v345
  %v446 = vadd.f32 %v61, %v350
  %v447 = vadd.f32 %v62, %v353
  %v448 = vadd.f32 %v63, %v358
  %v449 = vadd.f32 %v64, %v361
  %v450 = vadd.f32 %v65, %v366
  %v451 = vadd.f32 %v66, %v369
  %v452 = vadd.f32 %v67, %v374
  %v453 = vadd.f32 %v68, %v377
  %v454 = vadd.f32 %v69, %v382
  %v455 = vadd.f32 %v70, %v385
  %v456 = vadd.f32 %v71, %v390
  %v457 = vadd.f32 %v72, %v393
  %v458 = vadd.f32 %v73, %v398
  %v459 = vadd.f32 %v74, %v401
  %v460 = vadd.f32 %v75, %v406
  %v461 = vadd.f32 %v76, %v409
  %v462 = vadd.f32 %v77, %v414
  %v463 = vadd.f32 %v78, %v417
  %v464 = vadd.f32 %v79, %v422
  %v465 = vadd.f32 %v80, %v425
  %v466 = vadd.f32 %v81, %v430
  %v467 = vadd.f32 %v82, %v433
  %468 = vst [vmem:[#allocation2] sm:$0xff] %v436
  %469 = vst [vmem:[#allocation2 + $0x8] sm:$0xff] %v437
  %470 = vst [vmem:[#allocation2 + $0x10] sm:$0xff] %v438
  %471 = vst [vmem:[#allocation2 + $0x18] sm:$0xff] %v439
  %472 = vst [vmem:[#allocation2 + $0x20] sm:$0xff] %v440
  %473 = vst [vmem:[#allocation2 + $0x28] sm:$0xff] %v441
  %474 = vst [vmem:[#allocation2 + $0x30] sm:$0xff] %v442
  %475 = vst [vmem:[#allocation2 + $0x38] sm:$0xff] %v443
  %476 = vst [vmem:[#allocation2 + $0x40] sm:$0xff] %v444
  %477 = vst [vmem:[#allocation2 + $0x48] sm:$0xff] %v445
  %478 = vst [vmem:[#allocation2 + $0x50] sm:$0xff] %v446
  %479 = vst [vmem:[#allocation2 + $0x58] sm:$0xff] %v447
  %480 = vst [vmem:[#allocation2 + $0x60] sm:$0xff] %v448
  %481 = vst [vmem:[#allocation2 + $0x68] sm:$0xff] %v449
  %482 = vst [vmem:[#allocation2 + $0x70] sm:$0xff] %v450
  %483 = vst [vmem:[#allocation2 + $0x78] sm:$0xff] %v451
  %484 = vst [vmem:[#allocation2 + $0x80] sm:$0xff] %v452
  %485 = vst [vmem:[#allocation2 + $0x88] sm:$0xff] %v453
  %486 = vst [vmem:[#allocation2 + $0x90] sm:$0xff] %v454
  %487 = vst [vmem:[#allocation2 + $0x98] sm:$0xff] %v455
  %488 = vst [vmem:[#allocation2 + $0xa0] sm:$0xff] %v456
  %489 = vst [vmem:[#allocation2 + $0xa8] sm:$0xff] %v457
  %490 = vst [vmem:[#allocation2 + $0xb0] sm:$0xff] %v458
  %491 = vst [vmem:[#allocation2 + $0xb8] sm:$0xff] %v459
  %492 = vst [vmem:[#allocation2 + $0xc0] sm:$0xff] %v460
  %493 = vst [vmem:[#allocation2 + $0xc8] sm:$0xff] %v461
  %494 = vst [vmem:[#allocation2 + $0xd0] sm:$0xff] %v462
  %495 = vst [vmem:[#allocation2 + $0xd8] sm:$0xff] %v463
  %496 = vst [vmem:[#allocation2 + $0xe0] sm:$0xff] %v464
  %497 = vst [vmem:[#allocation2 + $0xe8] sm:$0xff] %v465
  %498 = vst [vmem:[#allocation2 + $0xf0] sm:$0xff] %v466
  %499 = vst [vmem:[#allocation2 + $0xf8] sm:$0xff] %v467
  // Predicated region
  $region18: #{blip_retrieval_forward.8} parent=0 // pred_check
    %p500 = pneg %p15
  $region19: #{blip_retrieval_forward.8} parent=0 // pred_check_branch
    %502 = sbr.rel (%p500) target = $region21
  $region20: #{blip_retrieval_forward.8} parent=0 // pred_region
    %v503 = vld [vmem:[#allocation2] sm:$0xff]
    %v504 = vld [vmem:[#allocation2 + $0x8] sm:$0xff]
    %v505 = vld [vmem:[#allocation2 + $0x10] sm:$0xff]
    %v506 = vld [vmem:[#allocation2 + $0x18] sm:$0xff]
    %v507 = vld [vmem:[#allocation2 + $0x20] sm:$0xff]
    %v508 = vld [vmem:[#allocation2 + $0x28] sm:$0xff]
    %v509 = vld [vmem:[#allocation2 + $0x30] sm:$0xff]
    %v510 = vld [vmem:[#allocation2 + $0x38] sm:$0xff]
    %v511 = vld [vmem:[#allocation2 + $0x40] sm:$0xff]
    %v512 = vld [vmem:[#allocation2 + $0x48] sm:$0xff]
    %v513 = vld [vmem:[#allocation2 + $0x50] sm:$0xff]
    %v514 = vld [vmem:[#allocation2 + $0x58] sm:$0xff]
    %v515 = vld [vmem:[#allocation2 + $0x60] sm:$0xff]
    %v516 = vld [vmem:[#allocation2 + $0x68] sm:$0xff]
    %v517 = vld [vmem:[#allocation2 + $0x70] sm:$0xff]
    %v518 = vld [vmem:[#allocation2 + $0x78] sm:$0xff]
    %v519 = vld [vmem:[#allocation2 + $0x80] sm:$0xff]
    %v520 = vld [vmem:[#allocation2 + $0x88] sm:$0xff]
    %v521 = vld [vmem:[#allocation2 + $0x90] sm:$0xff]
    %v522 = vld [vmem:[#allocation2 + $0x98] sm:$0xff]
    %v523 = vld [vmem:[#allocation2 + $0xa0] sm:$0xff]
    %v524 = vld [vmem:[#allocation2 + $0xa8] sm:$0xff]
    %v525 = vld [vmem:[#allocation2 + $0xb0] sm:$0xff]
    %v526 = vld [vmem:[#allocation2 + $0xb8] sm:$0xff]
    %v527 = vld [vmem:[#allocation2 + $0xc0] sm:$0xff]
    %v528 = vld [vmem:[#allocation2 + $0xc8] sm:$0xff]
    %v529 = vld [vmem:[#allocation2 + $0xd0] sm:$0xff]
    %v530 = vld [vmem:[#allocation2 + $0xd8] sm:$0xff]
    %v531 = vld [vmem:[#allocation2 + $0xe0] sm:$0xff]
    %v532 = vld [vmem:[#allocation2 + $0xe8] sm:$0xff]
    %v533 = vld [vmem:[#allocation2 + $0xf0] sm:$0xff]
    %v534 = vld [vmem:[#allocation2 + $0xf8] sm:$0xff]
    %v535 = vld [vmem:[%s2] sm:$0x1]
    %v537 = vlaneseq
    %v538 = vshrl.u32 %v537, 7
    %v539 = vsub.s32 0, %v538
    %v540 = vrot.slane %v535, %v539
    %v542 = vadd.f32 %v503, %v540
    %v543 = vadd.f32 %v504, %v540
    %v544 = vadd.f32 %v505, %v540
    %v545 = vadd.f32 %v506, %v540
    %v546 = vadd.f32 %v507, %v540
    %v547 = vadd.f32 %v508, %v540
    %v548 = vadd.f32 %v509, %v540
    %v549 = vadd.f32 %v510, %v540
    %v550 = vadd.f32 %v511, %v540
    %v551 = vadd.f32 %v512, %v540
    %v552 = vadd.f32 %v513, %v540
    %v553 = vadd.f32 %v514, %v540
    %v554 = vadd.f32 %v515, %v540
    %v555 = vadd.f32 %v516, %v540
    %v556 = vadd.f32 %v517, %v540
    %v557 = vadd.f32 %v518, %v540
    %v558 = vadd.f32 %v519, %v540
    %v559 = vadd.f32 %v520, %v540
    %v560 = vadd.f32 %v521, %v540
    %v561 = vadd.f32 %v522, %v540
    %v562 = vadd.f32 %v523, %v540
    %v563 = vadd.f32 %v524, %v540
    %v564 = vadd.f32 %v525, %v540
    %v565 = vadd.f32 %v526, %v540
    %v566 = vadd.f32 %v527, %v540
    %v567 = vadd.f32 %v528, %v540
    %v568 = vadd.f32 %v529, %v540
    %v569 = vadd.f32 %v530, %v540
    %v570 = vadd.f32 %v531, %v540
    %v571 = vadd.f32 %v532, %v540
    %v572 = vadd.f32 %v533, %v540
    %v573 = vadd.f32 %v534, %v540
    %v574 = vmul.f32 %v542, %v542
    %v575 = vmul.f32 %v543, %v543
    %v576 = vmul.f32 %v544, %v544
    %v577 = vmul.f32 %v545, %v545
    %v578 = vmul.f32 %v546, %v546
    %v579 = vmul.f32 %v547, %v547
    %v580 = vmul.f32 %v548, %v548
    %v581 = vmul.f32 %v549, %v549
    %v582 = vmul.f32 %v550, %v550
    %v583 = vmul.f32 %v551, %v551
    %v584 = vmul.f32 %v552, %v552
    %v585 = vmul.f32 %v553, %v553
    %v586 = vmul.f32 %v554, %v554
    %v587 = vmul.f32 %v555, %v555
    %v588 = vmul.f32 %v556, %v556
    %v589 = vmul.f32 %v557, %v557
    %v590 = vmul.f32 %v558, %v558
    %v591 = vmul.f32 %v559, %v559
    %v592 = vmul.f32 %v560, %v560
    %v593 = vmul.f32 %v561, %v561
    %v594 = vmul.f32 %v562, %v562
    %v595 = vmul.f32 %v563, %v563
    %v596 = vmul.f32 %v564, %v564
    %v597 = vmul.f32 %v565, %v565
    %v598 = vmul.f32 %v566, %v566
    %v599 = vmul.f32 %v567, %v567
    %v600 = vmul.f32 %v568, %v568
    %v601 = vmul.f32 %v569, %v569
    %v602 = vmul.f32 %v570, %v570
    %v603 = vmul.f32 %v571, %v571
    %v604 = vmul.f32 %v572, %v572
    %v605 = vmul.f32 %v573, %v573
    %606 = vadd.xlane.f32.xlu0 %v574
    %v607 = vpop.xlane.xlu0 %606
    %608 = vadd.xlane.f32.xlu0 %v575
    %v609 = vpop.xlane.xlu0 %608
    %610 = vadd.xlane.f32.xlu0 %v576
    %v611 = vpop.xlane.xlu0 %610
    %612 = vadd.xlane.f32.xlu0 %v577
    %v613 = vpop.xlane.xlu0 %612
    %614 = vadd.xlane.f32.xlu0 %v578
    %v615 = vpop.xlane.xlu0 %614
    %616 = vadd.xlane.f32.xlu0 %v579
    %v617 = vpop.xlane.xlu0 %616
    %618 = vadd.xlane.f32.xlu0 %v580
    %v619 = vpop.xlane.xlu0 %618
    %620 = vadd.xlane.f32.xlu0 %v581
    %v621 = vpop.xlane.xlu0 %620
    %622 = vadd.xlane.f32.xlu0 %v582
    %v623 = vpop.xlane.xlu0 %622
    %624 = vadd.xlane.f32.xlu0 %v583
    %v625 = vpop.xlane.xlu0 %624
    %626 = vadd.xlane.f32.xlu0 %v584
    %v627 = vpop.xlane.xlu0 %626
    %628 = vadd.xlane.f32.xlu0 %v585
    %v629 = vpop.xlane.xlu0 %628
    %630 = vadd.xlane.f32.xlu0 %v586
    %v631 = vpop.xlane.xlu0 %630
    %632 = vadd.xlane.f32.xlu0 %v587
    %v633 = vpop.xlane.xlu0 %632
    %634 = vadd.xlane.f32.xlu0 %v588
    %v635 = vpop.xlane.xlu0 %634
    %636 = vadd.xlane.f32.xlu0 %v589
    %v637 = vpop.xlane.xlu0 %636
    %638 = vadd.xlane.f32.xlu0 %v590
    %v639 = vpop.xlane.xlu0 %638
    %640 = vadd.xlane.f32.xlu0 %v591
    %v641 = vpop.xlane.xlu0 %640
    %642 = vadd.xlane.f32.xlu0 %v592
    %v643 = vpop.xlane.xlu0 %642
    %644 = vadd.xlane.f32.xlu0 %v593
    %v645 = vpop.xlane.xlu0 %644
    %646 = vadd.xlane.f32.xlu0 %v594
    %v647 = vpop.xlane.xlu0 %646
    %648 = vadd.xlane.f32.xlu0 %v595
    %v649 = vpop.xlane.xlu0 %648
    %650 = vadd.xlane.f32.xlu0 %v596
    %v651 = vpop.xlane.xlu0 %650
    %652 = vadd.xlane.f32.xlu0 %v597
    %v653 = vpop.xlane.xlu0 %652
    %654 = vadd.xlane.f32.xlu0 %v598
    %v655 = vpop.xlane.xlu0 %654
    %656 = vadd.xlane.f32.xlu0 %v599
    %v657 = vpop.xlane.xlu0 %656
    %658 = vadd.xlane.f32.xlu0 %v600
    %v659 = vpop.xlane.xlu0 %658
    %660 = vadd.xlane.f32.xlu0 %v601
    %v661 = vpop.xlane.xlu0 %660
    %662 = vadd.xlane.f32.xlu0 %v602
    %v663 = vpop.xlane.xlu0 %662
    %664 = vadd.xlane.f32.xlu0 %v603
    %v665 = vpop.xlane.xlu0 %664
    %666 = vadd.xlane.f32.xlu0 %v604
    %v667 = vpop.xlane.xlu0 %666
    %668 = vadd.xlane.f32.xlu0 %v605
    %v669 = vpop.xlane.xlu0 %668
    %v670 = vmax.f32 %v607, 1e-24
    %v671 = vmax.f32 %v609, 1e-24
    %v672 = vmax.f32 %v611, 1e-24
    %v673 = vmax.f32 %v613, 1e-24
    %v674 = vmax.f32 %v615, 1e-24
    %v675 = vmax.f32 %v617, 1e-24
    %v676 = vmax.f32 %v619, 1e-24
    %v677 = vmax.f32 %v621, 1e-24
    %v678 = vmax.f32 %v623, 1e-24
    %v679 = vmax.f32 %v625, 1e-24
    %v680 = vmax.f32 %v627, 1e-24
    %v681 = vmax.f32 %v629, 1e-24
    %v682 = vmax.f32 %v631, 1e-24
    %v683 = vmax.f32 %v633, 1e-24
    %v684 = vmax.f32 %v635, 1e-24
    %v685 = vmax.f32 %v637, 1e-24
    %v686 = vmax.f32 %v639, 1e-24
    %v687 = vmax.f32 %v641, 1e-24
    %v688 = vmax.f32 %v643, 1e-24
    %v689 = vmax.f32 %v645, 1e-24
    %v690 = vmax.f32 %v647, 1e-24
    %v691 = vmax.f32 %v649, 1e-24
    %v692 = vmax.f32 %v651, 1e-24
    %v693 = vmax.f32 %v653, 1e-24
    %v694 = vmax.f32 %v655, 1e-24
    %v695 = vmax.f32 %v657, 1e-24
    %v696 = vmax.f32 %v659, 1e-24
    %v697 = vmax.f32 %v661, 1e-24
    %v698 = vmax.f32 %v663, 1e-24
    %v699 = vmax.f32 %v665, 1e-24
    %v700 = vmax.f32 %v667, 1e-24
    %v701 = vmax.f32 %v669, 1e-24
    %v702 = vrsqrt.pop %v670
    %v703 = vrsqrt.pop %v671
    %v704 = vrsqrt.pop %v672
    %v705 = vrsqrt.pop %v673
    %v706 = vrsqrt.pop %v674
    %v707 = vrsqrt.pop %v675
    %v708 = vrsqrt.pop %v676
    %v709 = vrsqrt.pop %v677
    %v710 = vrsqrt.pop %v678
    %v711 = vrsqrt.pop %v679
    %v712 = vrsqrt.pop %v680
    %v713 = vrsqrt.pop %v681
    %v714 = vrsqrt.pop %v682
    %v715 = vrsqrt.pop %v683
    %v716 = vrsqrt.pop %v684
    %v717 = vrsqrt.pop %v685
    %v718 = vrsqrt.pop %v686
    %v719 = vrsqrt.pop %v687
    %v720 = vrsqrt.pop %v688
    %v721 = vrsqrt.pop %v689
    %v722 = vrsqrt.pop %v690
    %v723 = vrsqrt.pop %v691
    %v724 = vrsqrt.pop %v692
    %v725 = vrsqrt.pop %v693
    %v726 = vrsqrt.pop %v694
    %v727 = vrsqrt.pop %v695
    %v728 = vrsqrt.pop %v696
    %v729 = vrsqrt.pop %v697
    %v730 = vrsqrt.pop %v698
    %v731 = vrsqrt.pop %v699
    %v732 = vrsqrt.pop %v700
    %v733 = vrsqrt.pop %v701
    %v734 = vmul.f32 %v542, %v702
    %v735 = vmul.f32 %v543, %v703
    %v736 = vmul.f32 %v544, %v704
    %v737 = vmul.f32 %v545, %v705
    %v738 = vmul.f32 %v546, %v706
    %v739 = vmul.f32 %v547, %v707
    %v740 = vmul.f32 %v548, %v708
    %v741 = vmul.f32 %v549, %v709
    %v742 = vmul.f32 %v550, %v710
    %v743 = vmul.f32 %v551, %v711
    %v744 = vmul.f32 %v552, %v712
    %v745 = vmul.f32 %v553, %v713
    %v746 = vmul.f32 %v554, %v714
    %v747 = vmul.f32 %v555, %v715
    %v748 = vmul.f32 %v556, %v716
    %v749 = vmul.f32 %v557, %v717
    %v750 = vmul.f32 %v558, %v718
    %v751 = vmul.f32 %v559, %v719
    %v752 = vmul.f32 %v560, %v720
    %v753 = vmul.f32 %v561, %v721
    %v754 = vmul.f32 %v562, %v722
    %v755 = vmul.f32 %v563, %v723
    %v756 = vmul.f32 %v564, %v724
    %v757 = vmul.f32 %v565, %v725
    %v758 = vmul.f32 %v566, %v726
    %v759 = vmul.f32 %v567, %v727
    %v760 = vmul.f32 %v568, %v728
    %v761 = vmul.f32 %v569, %v729
    %v762 = vmul.f32 %v570, %v730
    %v763 = vmul.f32 %v571, %v731
    %v764 = vmul.f32 %v572, %v732
    %v765 = vmul.f32 %v573, %v733
    %v766 = vpack.c.bf16 %v735, %v734
    %v767 = vpack.c.bf16 %v737, %v736
    %v768 = vpack.c.bf16 %v739, %v738
    %v769 = vpack.c.bf16 %v741, %v740
    %v770 = vpack.c.bf16 %v743, %v742
    %v771 = vpack.c.bf16 %v745, %v744
    %v772 = vpack.c.bf16 %v747, %v746
    %v773 = vpack.c.bf16 %v749, %v748
    %v774 = vpack.c.bf16 %v751, %v750
    %v775 = vpack.c.bf16 %v753, %v752
    %v776 = vpack.c.bf16 %v755, %v754
    %v777 = vpack.c.bf16 %v757, %v756
    %v778 = vpack.c.bf16 %v759, %v758
    %v779 = vpack.c.bf16 %v761, %v760
    %v780 = vpack.c.bf16 %v763, %v762
    %v781 = vpack.c.bf16 %v765, %v764
    %v798 = vunpack.c.l.b16 %v766
    %v799 = vunpack.c.h.b16 %v766
    %v800 = vunpack.c.l.b16 %v767
    %v801 = vunpack.c.h.b16 %v767
    %v802 = vunpack.c.l.b16 %v768
    %v803 = vunpack.c.h.b16 %v768
    %v804 = vunpack.c.l.b16 %v769
    %v805 = vunpack.c.h.b16 %v769
    %v806 = vunpack.c.l.b16 %v770
    %v807 = vunpack.c.h.b16 %v770
    %v808 = vunpack.c.l.b16 %v771
    %v809 = vunpack.c.h.b16 %v771
    %v810 = vunpack.c.l.b16 %v772
    %v811 = vunpack.c.h.b16 %v772
    %v812 = vunpack.c.l.b16 %v773
    %v813 = vunpack.c.h.b16 %v773
    %v814 = vunpack.c.l.b16 %v774
    %v815 = vunpack.c.h.b16 %v774
    %v816 = vunpack.c.l.b16 %v775
    %v817 = vunpack.c.h.b16 %v775
    %v818 = vunpack.c.l.b16 %v776
    %v819 = vunpack.c.h.b16 %v776
    %v820 = vunpack.c.l.b16 %v777
    %v821 = vunpack.c.h.b16 %v777
    %v822 = vunpack.c.l.b16 %v778
    %v823 = vunpack.c.h.b16 %v778
    %v824 = vunpack.c.l.b16 %v779
    %v825 = vunpack.c.h.b16 %v779
    %v826 = vunpack.c.l.b16 %v780
    %v827 = vunpack.c.h.b16 %v780
    %v828 = vunpack.c.l.b16 %v781
    %v829 = vunpack.c.h.b16 %v781
    %v830 = vpack.c.b16 %v798, %v798
    %v831 = vpack.c.b16 %v799, %v799
    %v832 = vpack.c.b16 %v800, %v800
    %v833 = vpack.c.b16 %v801, %v801
    %v834 = vpack.c.b16 %v802, %v802
    %v835 = vpack.c.b16 %v803, %v803
    %v836 = vpack.c.b16 %v804, %v804
    %v837 = vpack.c.b16 %v805, %v805
    %v838 = vpack.c.b16 %v806, %v806
    %v839 = vpack.c.b16 %v807, %v807
    %v840 = vpack.c.b16 %v808, %v808
    %v841 = vpack.c.b16 %v809, %v809
    %v842 = vpack.c.b16 %v810, %v810
    %v843 = vpack.c.b16 %v811, %v811
    %v844 = vpack.c.b16 %v812, %v812
    %v845 = vpack.c.b16 %v813, %v813
    %v846 = vpack.c.b16 %v814, %v814
    %v847 = vpack.c.b16 %v815, %v815
    %v848 = vpack.c.b16 %v816, %v816
    %v849 = vpack.c.b16 %v817, %v817
    %v850 = vpack.c.b16 %v818, %v818
    %v851 = vpack.c.b16 %v819, %v819
    %v852 = vpack.c.b16 %v820, %v820
    %v853 = vpack.c.b16 %v821, %v821
    %v854 = vpack.c.b16 %v822, %v822
    %v855 = vpack.c.b16 %v823, %v823
    %v856 = vpack.c.b16 %v824, %v824
    %v857 = vpack.c.b16 %v825, %v825
    %v858 = vpack.c.b16 %v826, %v826
    %v859 = vpack.c.b16 %v827, %v827
    %v860 = vpack.c.b16 %v828, %v828
    %v861 = vpack.c.b16 %v829, %v829
    %894 = vst [vmem:[%s3] sm:$0xf] %v830
    %895 = vst [vmem:[%s3 + $0x4] sm:$0xf] %v831
    %896 = vst [vmem:[%s3 + $0x8] sm:$0xf] %v832
    %897 = vst [vmem:[%s3 + $0xc] sm:$0xf] %v833
    %898 = vst [vmem:[%s3 + $0x10] sm:$0xf] %v834
    %899 = vst [vmem:[%s3 + $0x14] sm:$0xf] %v835
    %900 = vst [vmem:[%s3 + $0x18] sm:$0xf] %v836
    %901 = vst [vmem:[%s3 + $0x1c] sm:$0xf] %v837
    %902 = vst [vmem:[%s3 + $0x20] sm:$0xf] %v838
    %903 = vst [vmem:[%s3 + $0x24] sm:$0xf] %v839
    %904 = vst [vmem:[%s3 + $0x28] sm:$0xf] %v840
    %905 = vst [vmem:[%s3 + $0x2c] sm:$0xf] %v841
    %906 = vst [vmem:[%s3 + $0x30] sm:$0xf] %v842
    %907 = vst [vmem:[%s3 + $0x34] sm:$0xf] %v843
    %908 = vst [vmem:[%s3 + $0x38] sm:$0xf] %v844
    %909 = vst [vmem:[%s3 + $0x3c] sm:$0xf] %v845
    %910 = vst [vmem:[%s3 + $0x40] sm:$0xf] %v846
    %911 = vst [vmem:[%s3 + $0x44] sm:$0xf] %v847
    %912 = vst [vmem:[%s3 + $0x48] sm:$0xf] %v848
    %913 = vst [vmem:[%s3 + $0x4c] sm:$0xf] %v849
    %914 = vst [vmem:[%s3 + $0x50] sm:$0xf] %v850
    %915 = vst [vmem:[%s3 + $0x54] sm:$0xf] %v851
    %916 = vst [vmem:[%s3 + $0x58] sm:$0xf] %v852
    %917 = vst [vmem:[%s3 + $0x5c] sm:$0xf] %v853
    %918 = vst [vmem:[%s3 + $0x60] sm:$0xf] %v854
    %919 = vst [vmem:[%s3 + $0x64] sm:$0xf] %v855
    %920 = vst [vmem:[%s3 + $0x68] sm:$0xf] %v856
    %921 = vst [vmem:[%s3 + $0x6c] sm:$0xf] %v857
    %922 = vst [vmem:[%s3 + $0x70] sm:$0xf] %v858
    %923 = vst [vmem:[%s3 + $0x74] sm:$0xf] %v859
    %924 = vst [vmem:[%s3 + $0x78] sm:$0xf] %v860
    %925 = vst [vmem:[%s3 + $0x7c] sm:$0xf] %v861
  $region21: #{blip_retrieval_forward.8} parent=0 // pred_fallthru
    _
  // Predicated region
  $region22: #{blip_retrieval_forward.8} parent=0 // pred_check
    _
  $region23: #{blip_retrieval_forward.8} parent=0 // pred_check_branch
    %927 = sbr.rel (0) target = $region25
  $region24: #{blip_retrieval_forward.8} parent=0 // pred_region
    _
  $region25: #{blip_retrieval_forward.8} parent=0 // pred_fallthru
    _
  // Predicated region
  $region26: #{blip_retrieval_forward.8} parent=0 // pred_check
    _
  $region27: #{blip_retrieval_forward.8} parent=0 // pred_check_branch
    %929 = sbr.rel (0) target = $region29
  $region28: #{blip_retrieval_forward.8} parent=0 // pred_region
    _
  $region29: #{blip_retrieval_forward.8} parent=0 // pred_fallthru
    _

// kernel: blip_retrieval_forward.11
$region0: #{blip_retrieval_forward.11}
  #allocation0 [shape = 'u32[]', space=smem, size = 0x4, offset = 0x4, fixed_abs, tag = 'smem constant byte address 0x4 - core index']
  #allocation1 [shape = 'u32[144,128]{1,0:T(1,128)}', space=vmem, size = 0x12000, scoped, tag = 'internal scratch']
  %s0 = inlined_call_operand.vmem [shape: bf16[32,128], index: 0, kind: input, shape index: {}]
  %s1 = inlined_call_operand.vmem [shape: bf16[128,4352], index: 1, kind: input, shape index: {}]
  %s2 = inlined_call_operand.vmem [shape: f32[1,1,4352], index: 2, kind: input, shape index: {}]
  %s3 = inlined_call_operand.vmem [shape: f32[1,1,128], index: 3, kind: input, shape index: {}]
  %s4 = inlined_call_operand.vmem [shape: f32[2,16], index: 4, kind: input, shape index: {}]
  %s5 = inlined_call_operand.vmem [shape: f32[2,128], index: 5, kind: output, shape index: {}]
  %s6 = sld [smem:[#allocation0]]
  $region30: #{blip_retrieval_forward.11} parent=0
    _
  %s8 = ssub.s32 1, %s6
  %s9 = scalar_select 0, %s8, %s6
  // Predicated region
  $region2: #{blip_retrieval_forward.11} parent=0 // pred_check
    _
  $region3: #{blip_retrieval_forward.11} parent=0 // pred_check_branch
    %11 = sbr.rel (0) target = $region5
  $region4: #{blip_retrieval_forward.11} parent=0 // pred_region
    _
  $region5: #{blip_retrieval_forward.11} parent=0 // pred_fallthru
    _
  // Predicated region
  $region6: #{blip_retrieval_forward.11} parent=0 // pred_check
    _
  $region7: #{blip_retrieval_forward.11} parent=0 // pred_check_branch
    %13 = sbr.rel (0) target = $region9
  $region8: #{blip_retrieval_forward.11} parent=0 // pred_region
    _
  $region9: #{blip_retrieval_forward.11} parent=0 // pred_fallthru
    _
  // Predicated region
  $region10: #{blip_retrieval_forward.11} parent=0 // pred_check
    _
  $region11: #{blip_retrieval_forward.11} parent=0 // pred_check_branch
    %15 = sbr.rel (0) target = $region13
  $region12: #{blip_retrieval_forward.11} parent=0 // pred_region
    _
  $region13: #{blip_retrieval_forward.11} parent=0 // pred_fallthru
    _
  // Predicated region
  $region14: #{blip_retrieval_forward.11} parent=0 // pred_check
    _
  $region15: #{blip_retrieval_forward.11} parent=0 // pred_check_branch
    %17 = sbr.rel (0) target = $region17
  $region16: #{blip_retrieval_forward.11} parent=0 // pred_region
    _
  $region17: #{blip_retrieval_forward.11} parent=0 // pred_fallthru
    _
  // Predicated region
  $region18: #{blip_retrieval_forward.11} parent=0 // pred_check
    _
  $region19: #{blip_retrieval_forward.11} parent=0 // pred_check_branch
    %19 = sbr.rel (0) target = $region21
  $region20: #{blip_retrieval_forward.11} parent=0 // pred_region
    _
  $region21: #{blip_retrieval_forward.11} parent=0 // pred_fallthru
    _
  %v21 = vld [vmem:[%s0] sm:$0xf]
  %v22 = vld [vmem:[%s0 + $0x4] sm:$0xf]
  %v23 = vld [vmem:[%s0 + $0x8] sm:$0xf]
  %v24 = vld [vmem:[%s0 + $0xc] sm:$0xf]
  %v25 = vld [vmem:[%s1] sm:$0xff]
  %v26 = vld [vmem:[%s1 + $0x8] sm:$0xff]
  %v27 = vld [vmem:[%s1 + $0x10] sm:$0xff]
  %v28 = vld [vmem:[%s1 + $0x18] sm:$0xff]
  %v29 = vld [vmem:[%s1 + $0x88] sm:$0xff]
  %v30 = vld [vmem:[%s1 + $0x90] sm:$0xff]
  %v31 = vld [vmem:[%s1 + $0x98] sm:$0xff]
  %v32 = vld [vmem:[%s1 + $0xa0] sm:$0xff]
  %v33 = vld [vmem:[%s1 + $0x110] sm:$0xff]
  %v34 = vld [vmem:[%s1 + $0x118] sm:$0xff]
  %v35 = vld [vmem:[%s1 + $0x120] sm:$0xff]
  %v36 = vld [vmem:[%s1 + $0x128] sm:$0xff]
  %v37 = vld [vmem:[%s1 + $0x198] sm:$0xff]
  %v38 = vld [vmem:[%s1 + $0x1a0] sm:$0xff]
  %v39 = vld [vmem:[%s1 + $0x1a8] sm:$0xff]
  %v40 = vld [vmem:[%s1 + $0x1b0] sm:$0xff]
  %v41 = vld [vmem:[%s1 + $0x220] sm:$0xff]
  %v42 = vld [vmem:[%s1 + $0x228] sm:$0xff]
  %v43 = vld [vmem:[%s1 + $0x230] sm:$0xff]
  %v44 = vld [vmem:[%s1 + $0x238] sm:$0xff]
  %v45 = vld [vmem:[%s1 + $0x2a8] sm:$0xff]
  %v46 = vld [vmem:[%s1 + $0x2b0] sm:$0xff]
  %v47 = vld [vmem:[%s1 + $0x2b8] sm:$0xff]
  %v48 = vld [vmem:[%s1 + $0x2c0] sm:$0xff]
  %v49 = vld [vmem:[%s1 + $0x330] sm:$0xff]
  %v50 = vld [vmem:[%s1 + $0x338] sm:$0xff]
  %v51 = vld [vmem:[%s1 + $0x340] sm:$0xff]
  %v52 = vld [vmem:[%s1 + $0x348] sm:$0xff]
  %v53 = vld [vmem:[%s1 + $0x3b8] sm:$0xff]
  %v54 = vld [vmem:[%s1 + $0x3c0] sm:$0xff]
  %v55 = vld [vmem:[%s1 + $0x3c8] sm:$0xff]
  %v56 = vld [vmem:[%s1 + $0x3d0] sm:$0xff]
  %v57 = vld [vmem:[%s1 + $0x440] sm:$0xff]
  %v58 = vld [vmem:[%s1 + $0x448] sm:$0xff]
  %v59 = vld [vmem:[%s1 + $0x450] sm:$0xff]
  %v60 = vld [vmem:[%s1 + $0x458] sm:$0xff]
  %v61 = vld [vmem:[%s1 + $0x4c8] sm:$0xff]
  %v62 = vld [vmem:[%s1 + $0x4d0] sm:$0xff]
  %v63 = vld [vmem:[%s1 + $0x4d8] sm:$0xff]
  %v64 = vld [vmem:[%s1 + $0x4e0] sm:$0xff]
  %v65 = vld [vmem:[%s1 + $0x550] sm:$0xff]
  %v66 = vld [vmem:[%s1 + $0x558] sm:$0xff]
  %v67 = vld [vmem:[%s1 + $0x560] sm:$0xff]
  %v68 = vld [vmem:[%s1 + $0x568] sm:$0xff]
  %v69 = vld [vmem:[%s1 + $0x5d8] sm:$0xff]
  %v70 = vld [vmem:[%s1 + $0x5e0] sm:$0xff]
  %v71 = vld [vmem:[%s1 + $0x5e8] sm:$0xff]
  %v72 = vld [vmem:[%s1 + $0x5f0] sm:$0xff]
  %v73 = vld [vmem:[%s1 + $0x660] sm:$0xff]
  %v74 = vld [vmem:[%s1 + $0x668] sm:$0xff]
  %v75 = vld [vmem:[%s1 + $0x670] sm:$0xff]
  %v76 = vld [vmem:[%s1 + $0x678] sm:$0xff]
  %v77 = vld [vmem:[%s1 + $0x6e8] sm:$0xff]
  %v78 = vld [vmem:[%s1 + $0x6f0] sm:$0xff]
  %v79 = vld [vmem:[%s1 + $0x6f8] sm:$0xff]
  %v80 = vld [vmem:[%s1 + $0x700] sm:$0xff]
  %v81 = vld [vmem:[%s1 + $0x770] sm:$0xff]
  %v82 = vld [vmem:[%s1 + $0x778] sm:$0xff]
  %v83 = vld [vmem:[%s1 + $0x780] sm:$0xff]
  %v84 = vld [vmem:[%s1 + $0x788] sm:$0xff]
  %v85 = vld [vmem:[%s1 + $0x7f8] sm:$0xff]
  %v86 = vld [vmem:[%s1 + $0x800] sm:$0xff]
  %v87 = vld [vmem:[%s1 + $0x808] sm:$0xff]
  %v88 = vld [vmem:[%s1 + $0x810] sm:$0xff]
  %v89 = vld [vmem:[%s2] sm:$0xff]
  %v91 = vlaneseq
  %v92 = vshrl.u32 %v91, 7
  %v93 = vsub.s32 0, %v92
  %v94 = vrot.slane %v89, %v93
  %v95 = vlaneseq
  %v96 = vshrl.u32 %v95, 7
  %v97 = vsub.s32 1, %v96
  %v98 = vrot.slane %v89, %v97
  %v99 = vlaneseq
  %v100 = vshrl.u32 %v99, 7
  %v101 = vsub.s32 2, %v100
  %v102 = vrot.slane %v89, %v101
  %v103 = vlaneseq
  %v104 = vshrl.u32 %v103, 7
  %v105 = vsub.s32 3, %v104
  %v106 = vrot.slane %v89, %v105
  %v107 = vlaneseq
  %v108 = vshrl.u32 %v107, 7
  %v109 = vsub.s32 4, %v108
  %v110 = vrot.slane %v89, %v109
  %v111 = vlaneseq
  %v112 = vshrl.u32 %v111, 7
  %v113 = vsub.s32 5, %v112
  %v114 = vrot.slane %v89, %v113
  %v115 = vlaneseq
  %v116 = vshrl.u32 %v115, 7
  %v117 = vsub.s32 6, %v116
  %v118 = vrot.slane %v89, %v117
  %v119 = vlaneseq
  %v120 = vshrl.u32 %v119, 7
  %v121 = vsub.s32 7, %v120
  %v122 = vrot.slane %v89, %v121
  %v135 = vunpack.c.l.b16 %v21
  %v136 = vunpack.c.l.b16 %v22
  %v137 = vunpack.c.l.b16 %v23
  %v138 = vunpack.c.l.b16 %v24
  %v139 = vpack.c.b16 %v136, %v135
  %v140 = vpack.c.b16 %v138, %v137
  %v207 = vunpack.c.l.b16 %v25
  %v208 = vunpack.c.h.b16 %v25
  %v209 = vunpack.c.l.b16 %v26
  %v210 = vunpack.c.h.b16 %v26
  %v211 = vunpack.c.l.b16 %v27
  %v212 = vunpack.c.h.b16 %v27
  %v213 = vunpack.c.l.b16 %v28
  %v214 = vunpack.c.h.b16 %v28
  %v215 = vunpack.c.l.b16 %v29
  %v216 = vunpack.c.h.b16 %v29
  %v217 = vunpack.c.l.b16 %v30
  %v218 = vunpack.c.h.b16 %v30
  %v219 = vunpack.c.l.b16 %v31
  %v220 = vunpack.c.h.b16 %v31
  %v221 = vunpack.c.l.b16 %v32
  %v222 = vunpack.c.h.b16 %v32
  %v223 = vunpack.c.l.b16 %v33
  %v224 = vunpack.c.h.b16 %v33
  %v225 = vunpack.c.l.b16 %v34
  %v226 = vunpack.c.h.b16 %v34
  %v227 = vunpack.c.l.b16 %v35
  %v228 = vunpack.c.h.b16 %v35
  %v229 = vunpack.c.l.b16 %v36
  %v230 = vunpack.c.h.b16 %v36
  %v231 = vunpack.c.l.b16 %v37
  %v232 = vunpack.c.h.b16 %v37
  %v233 = vunpack.c.l.b16 %v38
  %v234 = vunpack.c.h.b16 %v38
  %v235 = vunpack.c.l.b16 %v39
  %v236 = vunpack.c.h.b16 %v39
  %v237 = vunpack.c.l.b16 %v40
  %v238 = vunpack.c.h.b16 %v40
  %v239 = vunpack.c.l.b16 %v41
  %v240 = vunpack.c.h.b16 %v41
  %v241 = vunpack.c.l.b16 %v42
  %v242 = vunpack.c.h.b16 %v42
  %v243 = vunpack.c.l.b16 %v43
  %v244 = vunpack.c.h.b16 %v43
  %v245 = vunpack.c.l.b16 %v44
  %v246 = vunpack.c.h.b16 %v44
  %v247 = vunpack.c.l.b16 %v45
  %v248 = vunpack.c.h.b16 %v45
  %v249 = vunpack.c.l.b16 %v46
  %v250 = vunpack.c.h.b16 %v46
  %v251 = vunpack.c.l.b16 %v47
  %v252 = vunpack.c.h.b16 %v47
  %v253 = vunpack.c.l.b16 %v48
  %v254 = vunpack.c.h.b16 %v48
  %v255 = vunpack.c.l.b16 %v49
  %v256 = vunpack.c.h.b16 %v49
  %v257 = vunpack.c.l.b16 %v50
  %v258 = vunpack.c.h.b16 %v50
  %v259 = vunpack.c.l.b16 %v51
  %v260 = vunpack.c.h.b16 %v51
  %v261 = vunpack.c.l.b16 %v52
  %v262 = vunpack.c.h.b16 %v52
  %v263 = vunpack.c.l.b16 %v53
  %v264 = vunpack.c.h.b16 %v53
  %v265 = vunpack.c.l.b16 %v54
  %v266 = vunpack.c.h.b16 %v54
  %v267 = vunpack.c.l.b16 %v55
  %v268 = vunpack.c.h.b16 %v55
  %v269 = vunpack.c.l.b16 %v56
  %v270 = vunpack.c.h.b16 %v56
  %v271 = vunpack.c.l.b16 %v57
  %v272 = vunpack.c.h.b16 %v57
  %v273 = vunpack.c.l.b16 %v58
  %v274 = vunpack.c.h.b16 %v58
  %v275 = vunpack.c.l.b16 %v59
  %v276 = vunpack.c.h.b16 %v59
  %v277 = vunpack.c.l.b16 %v60
  %v278 = vunpack.c.h.b16 %v60
  %v279 = vunpack.c.l.b16 %v61
  %v280 = vunpack.c.h.b16 %v61
  %v281 = vunpack.c.l.b16 %v62
  %v282 = vunpack.c.h.b16 %v62
  %v283 = vunpack.c.l.b16 %v63
  %v284 = vunpack.c.h.b16 %v63
  %v285 = vunpack.c.l.b16 %v64
  %v286 = vunpack.c.h.b16 %v64
  %v287 = vunpack.c.l.b16 %v65
  %v288 = vunpack.c.h.b16 %v65
  %v289 = vunpack.c.l.b16 %v66
  %v290 = vunpack.c.h.b16 %v66
  %v291 = vunpack.c.l.b16 %v67
  %v292 = vunpack.c.h.b16 %v67
  %v293 = vunpack.c.l.b16 %v68
  %v294 = vunpack.c.h.b16 %v68
  %v295 = vunpack.c.l.b16 %v69
  %v296 = vunpack.c.h.b16 %v69
  %v297 = vunpack.c.l.b16 %v70
  %v298 = vunpack.c.h.b16 %v70
  %v299 = vunpack.c.l.b16 %v71
  %v300 = vunpack.c.h.b16 %v71
  %v301 = vunpack.c.l.b16 %v72
  %v302 = vunpack.c.h.b16 %v72
  %v303 = vunpack.c.l.b16 %v73
  %v304 = vunpack.c.h.b16 %v73
  %v305 = vunpack.c.l.b16 %v74
  %v306 = vunpack.c.h.b16 %v74
  %v307 = vunpack.c.l.b16 %v75
  %v308 = vunpack.c.h.b16 %v75
  %v309 = vunpack.c.l.b16 %v76
  %v310 = vunpack.c.h.b16 %v76
  %v311 = vunpack.c.l.b16 %v77
  %v312 = vunpack.c.h.b16 %v77
  %v313 = vunpack.c.l.b16 %v78
  %v314 = vunpack.c.h.b16 %v78
  %v315 = vunpack.c.l.b16 %v79
  %v316 = vunpack.c.h.b16 %v79
  %v317 = vunpack.c.l.b16 %v80
  %v318 = vunpack.c.h.b16 %v80
  %v319 = vunpack.c.l.b16 %v81
  %v320 = vunpack.c.h.b16 %v81
  %v321 = vunpack.c.l.b16 %v82
  %v322 = vunpack.c.h.b16 %v82
  %v323 = vunpack.c.l.b16 %v83
  %v324 = vunpack.c.h.b16 %v83
  %v325 = vunpack.c.l.b16 %v84
  %v326 = vunpack.c.h.b16 %v84
  %v327 = vunpack.c.l.b16 %v85
  %v328 = vunpack.c.h.b16 %v85
  %v329 = vunpack.c.l.b16 %v86
  %v330 = vunpack.c.h.b16 %v86
  %v331 = vunpack.c.l.b16 %v87
  %v332 = vunpack.c.h.b16 %v87
  %v333 = vunpack.c.l.b16 %v88
  %v334 = vunpack.c.h.b16 %v88
  %v335 = vpack.c.b16 %v215, %v207
  %v336 = vpack.c.b16 %v216, %v208
  %v337 = vpack.c.b16 %v217, %v209
  %v338 = vpack.c.b16 %v218, %v210
  %v339 = vpack.c.b16 %v219, %v211
  %v340 = vpack.c.b16 %v220, %v212
  %v341 = vpack.c.b16 %v221, %v213
  %v342 = vpack.c.b16 %v222, %v214
  %v343 = vpack.c.b16 %v231, %v223
  %v344 = vpack.c.b16 %v232, %v224
  %v345 = vpack.c.b16 %v233, %v225
  %v346 = vpack.c.b16 %v234, %v226
  %v347 = vpack.c.b16 %v235, %v227
  %v348 = vpack.c.b16 %v236, %v228
  %v349 = vpack.c.b16 %v237, %v229
  %v350 = vpack.c.b16 %v238, %v230
  %v351 = vpack.c.b16 %v247, %v239
  %v352 = vpack.c.b16 %v248, %v240
  %v353 = vpack.c.b16 %v249, %v241
  %v354 = vpack.c.b16 %v250, %v242
  %v355 = vpack.c.b16 %v251, %v243
  %v356 = vpack.c.b16 %v252, %v244
  %v357 = vpack.c.b16 %v253, %v245
  %v358 = vpack.c.b16 %v254, %v246
  %v359 = vpack.c.b16 %v263, %v255
  %v360 = vpack.c.b16 %v264, %v256
  %v361 = vpack.c.b16 %v265, %v257
  %v362 = vpack.c.b16 %v266, %v258
  %v363 = vpack.c.b16 %v267, %v259
  %v364 = vpack.c.b16 %v268, %v260
  %v365 = vpack.c.b16 %v269, %v261
  %v366 = vpack.c.b16 %v270, %v262
  %v367 = vpack.c.b16 %v279, %v271
  %v368 = vpack.c.b16 %v280, %v272
  %v369 = vpack.c.b16 %v281, %v273
  %v370 = vpack.c.b16 %v282, %v274
  %v371 = vpack.c.b16 %v283, %v275
  %v372 = vpack.c.b16 %v284, %v276
  %v373 = vpack.c.b16 %v285, %v277
  %v374 = vpack.c.b16 %v286, %v278
  %v375 = vpack.c.b16 %v295, %v287
  %v376 = vpack.c.b16 %v296, %v288
  %v377 = vpack.c.b16 %v297, %v289
  %v378 = vpack.c.b16 %v298, %v290
  %v379 = vpack.c.b16 %v299, %v291
  %v380 = vpack.c.b16 %v300, %v292
  %v381 = vpack.c.b16 %v301, %v293
  %v382 = vpack.c.b16 %v302, %v294
  %v383 = vpack.c.b16 %v311, %v303
  %v384 = vpack.c.b16 %v312, %v304
  %v385 = vpack.c.b16 %v313, %v305
  %v386 = vpack.c.b16 %v314, %v306
  %v387 = vpack.c.b16 %v315, %v307
  %v388 = vpack.c.b16 %v316, %v308
  %v389 = vpack.c.b16 %v317, %v309
  %v390 = vpack.c.b16 %v318, %v310
  %v391 = vpack.c.b16 %v327, %v319
  %v392 = vpack.c.b16 %v328, %v320
  %v393 = vpack.c.b16 %v329, %v321
  %v394 = vpack.c.b16 %v330, %v322
  %v395 = vpack.c.b16 %v331, %v323
  %v396 = vpack.c.b16 %v332, %v324
  %v397 = vpack.c.b16 %v333, %v325
  %v398 = vpack.c.b16 %v334, %v326
  %463 = vmatprep.subr.bf16.mxu0 %v336
  %464 = vmatpush1.bf16.msra.mxu0 %v335
  %465 = vmatprep.subr.bf16.mxu0 %v344
  %466 = vmatpush1.bf16.msra.mxu0 %v343
  %467 = vmatprep.subr.bf16.mxu0 %v352
  %468 = vmatpush1.bf16.msra.mxu0 %v351
  %469 = vmatprep.subr.bf16.mxu0 %v360
  %470 = vmatpush1.bf16.msra.mxu0 %v359
  %471 = vmatprep.subr.bf16.mxu0 %v368
  %472 = vmatpush1.bf16.msra.mxu0 %v367
  %473 = vmatprep.subr.bf16.mxu0 %v376
  %474 = vmatpush1.bf16.msra.mxu0 %v375
  %475 = vmatprep.subr.bf16.mxu0 %v384
  %476 = vmatpush1.bf16.msra.mxu0 %v383
  %477 = vmatprep.subr.bf16.mxu0 %v392
  %478 = vmatpush1.bf16.msra.mxu0 %v391
  %479 = vmatprep.subr.bf16.mxu0 0
  %480 = vmatpush1.bf16.msra.mxu0 0
  %481 = vmatprep.subr.bf16.mxu0 0
  %482 = vmatpush1.bf16.msra.mxu0 0
  %483 = vmatprep.subr.bf16.mxu0 0
  %484 = vmatpush1.bf16.msra.mxu0 0
  %485 = vmatprep.subr.bf16.mxu0 0
  %486 = vmatpush1.bf16.msra.mxu0 0
  %487 = vmatprep.subr.bf16.mxu0 0
  %488 = vmatpush1.bf16.msra.mxu0 0
  %489 = vmatprep.subr.bf16.mxu0 0
  %490 = vmatpush1.bf16.msra.mxu0 0
  %491 = vmatprep.subr.bf16.mxu0 0
  %492 = vmatpush1.bf16.msra.mxu0 0
  %493 = vmatprep.subr.bf16.mxu0 0
  %494 = vmatpush1.bf16.msra.mxu0 0
  %495 = vmatprep.mubr.bf16.mxu0 0
  %496 = vmatmul.mubr.bf16.gmra.mrb[0].mxu0 %v139
  %v497 = vpop.f32.mrb[0].mxu0
  %v498 = vadd.f32 %v94, %v497
  %v499 = vpop.f32.mrb[0].mxu0
  %v500 = vadd.f32 %v98, %v499
  %v501 = vpop.f32.mrb[0].mxu0
  %v502 = vadd.f32 %v94, %v501
  %v503 = vpop.f32.mrb[0].mxu0
  %v504 = vadd.f32 %v98, %v503
  %505 = vmatprep.mubr.bf16.mxu0 0
  %506 = vmatmul.mubr.bf16.gmra.mrb[0].mxu0 %v140
  %v507 = vpop.f32.mrb[0].mxu0
  %v508 = vadd.f32 %v94, %v507
  %v509 = vpop.f32.mrb[0].mxu0
  %v510 = vadd.f32 %v98, %v509
  %v511 = vpop.f32.mrb[0].mxu0
  %v512 = vadd.f32 %v94, %v511
  %v513 = vpop.f32.mrb[0].mxu0
  %v514 = vadd.f32 %v98, %v513
  %515 = vdwg.mxu0
  %516 = vmatprep.subr.bf16.mxu0 %v338
  %517 = vmatpush1.bf16.msra.mxu0 %v337
  %518 = vmatprep.subr.bf16.mxu0 %v346
  %519 = vmatpush1.bf16.msra.mxu0 %v345
  %520 = vmatprep.subr.bf16.mxu0 %v354
  %521 = vmatpush1.bf16.msra.mxu0 %v353
  %522 = vmatprep.subr.bf16.mxu0 %v362
  %523 = vmatpush1.bf16.msra.mxu0 %v361
  %524 = vmatprep.subr.bf16.mxu0 %v370
  %525 = vmatpush1.bf16.msra.mxu0 %v369
  %526 = vmatprep.subr.bf16.mxu0 %v378
  %527 = vmatpush1.bf16.msra.mxu0 %v377
  %528 = vmatprep.subr.bf16.mxu0 %v386
  %529 = vmatpush1.bf16.msra.mxu0 %v385
  %530 = vmatprep.subr.bf16.mxu0 %v394
  %531 = vmatpush1.bf16.msra.mxu0 %v393
  %532 = vmatprep.subr.bf16.mxu0 0
  %533 = vmatpush1.bf16.msra.mxu0 0
  %534 = vmatprep.subr.bf16.mxu0 0
  %535 = vmatpush1.bf16.msra.mxu0 0
  %536 = vmatprep.subr.bf16.mxu0 0
  %537 = vmatpush1.bf16.msra.mxu0 0
  %538 = vmatprep.subr.bf16.mxu0 0
  %539 = vmatpush1.bf16.msra.mxu0 0
  %540 = vmatprep.subr.bf16.mxu0 0
  %541 = vmatpush1.bf16.msra.mxu0 0
  %542 = vmatprep.subr.bf16.mxu0 0
  %543 = vmatpush1.bf16.msra.mxu0 0
  %544 = vmatprep.subr.bf16.mxu0 0
  %545 = vmatpush1.bf16.msra.mxu0 0
  %546 = vmatprep.subr.bf16.mxu0 0
  %547 = vmatpush1.bf16.msra.mxu0 0
  %548 = vmatprep.mubr.bf16.mxu0 0
  %549 = vmatmul.mubr.bf16.gmra.mrb[0].mxu0 %v139
  %v550 = vpop.f32.mrb[0].mxu0
  %v551 = vadd.f32 %v102, %v550
  %v552 = vpop.f32.mrb[0].mxu0
  %v553 = vadd.f32 %v106, %v552
  %v554 = vpop.f32.mrb[0].mxu0
  %v555 = vadd.f32 %v102, %v554
  %v556 = vpop.f32.mrb[0].mxu0
  %v557 = vadd.f32 %v106, %v556
  %558 = vmatprep.mubr.bf16.mxu0 0
  %559 = vmatmul.mubr.bf16.gmra.mrb[0].mxu0 %v140
  %v560 = vpop.f32.mrb[0].mxu0
  %v561 = vadd.f32 %v102, %v560
  %v562 = vpop.f32.mrb[0].mxu0
  %v563 = vadd.f32 %v106, %v562
  %v564 = vpop.f32.mrb[0].mxu0
  %v565 = vadd.f32 %v102, %v564
  %v566 = vpop.f32.mrb[0].mxu0
  %v567 = vadd.f32 %v106, %v566
  %568 = vdwg.mxu0
  %569 = vmatprep.subr.bf16.mxu0 %v340
  %570 = vmatpush1.bf16.msra.mxu0 %v339
  %571 = vmatprep.subr.bf16.mxu0 %v348
  %572 = vmatpush1.bf16.msra.mxu0 %v347
  %573 = vmatprep.subr.bf16.mxu0 %v356
  %574 = vmatpush1.bf16.msra.mxu0 %v355
  %575 = vmatprep.subr.bf16.mxu0 %v364
  %576 = vmatpush1.bf16.msra.mxu0 %v363
  %577 = vmatprep.subr.bf16.mxu0 %v372
  %578 = vmatpush1.bf16.msra.mxu0 %v371
  %579 = vmatprep.subr.bf16.mxu0 %v380
  %580 = vmatpush1.bf16.msra.mxu0 %v379
  %581 = vmatprep.subr.bf16.mxu0 %v388
  %582 = vmatpush1.bf16.msra.mxu0 %v387
  %583 = vmatprep.subr.bf16.mxu0 %v396
  %584 = vmatpush1.bf16.msra.mxu0 %v395
  %585 = vmatprep.subr.bf16.mxu0 0
  %586 = vmatpush1.bf16.msra.mxu0 0
  %587 = vmatprep.subr.bf16.mxu0 0
  %588 = vmatpush1.bf16.msra.mxu0 0
  %589 = vmatprep.subr.bf16.mxu0 0
  %590 = vmatpush1.bf16.msra.mxu0 0
  %591 = vmatprep.subr.bf16.mxu0 0
  %592 = vmatpush1.bf16.msra.mxu0 0
  %593 = vmatprep.subr.bf16.mxu0 0
  %594 = vmatpush1.bf16.msra.mxu0 0
  %595 = vmatprep.subr.bf16.mxu0 0
  %596 = vmatpush1.bf16.msra.mxu0 0
  %597 = vmatprep.subr.bf16.mxu0 0
  %598 = vmatpush1.bf16.msra.mxu0 0
  %599 = vmatprep.subr.bf16.mxu0 0
  %600 = vmatpush1.bf16.msra.mxu0 0
  %601 = vmatprep.mubr.bf16.mxu0 0
  %602 = vmatmul.mubr.bf16.gmra.mrb[0].mxu0 %v139
  %v603 = vpop.f32.mrb[0].mxu0
  %v604 = vadd.f32 %v110, %v603
  %v605 = vpop.f32.mrb[0].mxu0
  %v606 = vadd.f32 %v114, %v605
  %v607 = vpop.f32.mrb[0].mxu0
  %v608 = vadd.f32 %v110, %v607
  %v609 = vpop.f32.mrb[0].mxu0
  %v610 = vadd.f32 %v114, %v609
  %611 = vmatprep.mubr.bf16.mxu0 0
  %612 = vmatmul.mubr.bf16.gmra.mrb[0].mxu0 %v140
  %v613 = vpop.f32.mrb[0].mxu0
  %v614 = vadd.f32 %v110, %v613
  %v615 = vpop.f32.mrb[0].mxu0
  %v616 = vadd.f32 %v114, %v615
  %v617 = vpop.f32.mrb[0].mxu0
  %v618 = vadd.f32 %v110, %v617
  %v619 = vpop.f32.mrb[0].mxu0
  %v620 = vadd.f32 %v114, %v619
  %621 = vdwg.mxu0
  %622 = vmatprep.subr.bf16.mxu0 %v342
  %623 = vmatpush1.bf16.msra.mxu0 %v341
  %624 = vmatprep.subr.bf16.mxu0 %v350
  %625 = vmatpush1.bf16.msra.mxu0 %v349
  %626 = vmatprep.subr.bf16.mxu0 %v358
  %627 = vmatpush1.bf16.msra.mxu0 %v357
  %628 = vmatprep.subr.bf16.mxu0 %v366
  %629 = vmatpush1.bf16.msra.mxu0 %v365
  %630 = vmatprep.subr.bf16.mxu0 %v374
  %631 = vmatpush1.bf16.msra.mxu0 %v373
  %632 = vmatprep.subr.bf16.mxu0 %v382
  %633 = vmatpush1.bf16.msra.mxu0 %v381
  %634 = vmatprep.subr.bf16.mxu0 %v390
  %635 = vmatpush1.bf16.msra.mxu0 %v389
  %636 = vmatprep.subr.bf16.mxu0 %v398
  %637 = vmatpush1.bf16.msra.mxu0 %v397
  %638 = vmatprep.subr.bf16.mxu0 0
  %639 = vmatpush1.bf16.msra.mxu0 0
  %640 = vmatprep.subr.bf16.mxu0 0
  %641 = vmatpush1.bf16.msra.mxu0 0
  %642 = vmatprep.subr.bf16.mxu0 0
  %643 = vmatpush1.bf16.msra.mxu0 0
  %644 = vmatprep.subr.bf16.mxu0 0
  %645 = vmatpush1.bf16.msra.mxu0 0
  %646 = vmatprep.subr.bf16.mxu0 0
  %647 = vmatpush1.bf16.msra.mxu0 0
  %648 = vmatprep.subr.bf16.mxu0 0
  %649 = vmatpush1.bf16.msra.mxu0 0
  %650 = vmatprep.subr.bf16.mxu0 0
  %651 = vmatpush1.bf16.msra.mxu0 0
  %652 = vmatprep.subr.bf16.mxu0 0
  %653 = vmatpush1.bf16.msra.mxu0 0
  %654 = vmatprep.mubr.bf16.mxu0 0
  %655 = vmatmul.mubr.bf16.gmra.mrb[0].mxu0 %v139
  %v656 = vpop.f32.mrb[0].mxu0
  %v657 = vadd.f32 %v118, %v656
  %v658 = vpop.f32.mrb[0].mxu0
  %v659 = vadd.f32 %v122, %v658
  %v660 = vpop.f32.mrb[0].mxu0
  %v661 = vadd.f32 %v118, %v660
  %v662 = vpop.f32.mrb[0].mxu0
  %v663 = vadd.f32 %v122, %v662
  %664 = vmatprep.mubr.bf16.mxu0 0
  %665 = vmatmul.mubr.bf16.gmra.mrb[0].mxu0 %v140
  %v666 = vpop.f32.mrb[0].mxu0
  %v667 = vadd.f32 %v118, %v666
  %v668 = vpop.f32.mrb[0].mxu0
  %v669 = vadd.f32 %v122, %v668
  %v670 = vpop.f32.mrb[0].mxu0
  %v671 = vadd.f32 %v118, %v670
  %v672 = vpop.f32.mrb[0].mxu0
  %v673 = vadd.f32 %v122, %v672
  %674 = vdwg.mxu0
  %v675 = vmax.f32 %v498, -10.0
  %v676 = vmax.f32 %v502, -10.0
  %v677 = vmax.f32 %v508, -10.0
  %v678 = vmax.f32 %v512, -10.0
  %v679 = vmax.f32 %v675, %v500
  %v680 = vmax.f32 %v676, %v504
  %v681 = vmax.f32 %v677, %v510
  %v682 = vmax.f32 %v678, %v514
  %v683 = vmax.f32 %v679, %v551
  %v684 = vmax.f32 %v680, %v555
  %v685 = vmax.f32 %v681, %v561
  %v686 = vmax.f32 %v682, %v565
  %v687 = vmax.f32 %v683, %v553
  %v688 = vmax.f32 %v684, %v557
  %v689 = vmax.f32 %v685, %v563
  %v690 = vmax.f32 %v686, %v567
  %v691 = vmax.f32 %v687, %v604
  %v692 = vmax.f32 %v688, %v608
  %v693 = vmax.f32 %v689, %v614
  %v694 = vmax.f32 %v690, %v618
  %v695 = vmax.f32 %v691, %v606
  %v696 = vmax.f32 %v692, %v610
  %v697 = vmax.f32 %v693, %v616
  %v698 = vmax.f32 %v694, %v620
  %v699 = vmax.f32 %v695, %v657
  %v700 = vmax.f32 %v696, %v661
  %v701 = vmax.f32 %v697, %v667
  %v702 = vmax.f32 %v698, %v671
  %v703 = vmax.f32 %v699, %v659
  %v704 = vmax.f32 %v700, %v663
  %v705 = vmax.f32 %v701, %v669
  %v706 = vmax.f32 %v702, %v673
  %v707 = vld [vmem:[%s1 + $0x20] sm:$0xff]
  %v708 = vld [vmem:[%s1 + $0x28] sm:$0xff]
  %v709 = vld [vmem:[%s1 + $0x30] sm:$0xff]
  %v710 = vld [vmem:[%s1 + $0x38] sm:$0xff]
  %v711 = vld [vmem:[%s1 + $0xa8] sm:$0xff]
  %v712 = vld [vmem:[%s1 + $0xb0] sm:$0xff]
  %v713 = vld [vmem:[%s1 + $0xb8] sm:$0xff]
  %v714 = vld [vmem:[%s1 + $0xc0] sm:$0xff]
  %v715 = vld [vmem:[%s1 + $0x130] sm:$0xff]
  %v716 = vld [vmem:[%s1 + $0x138] sm:$0xff]
  %v717 = vld [vmem:[%s1 + $0x140] sm:$0xff]
  %v718 = vld [vmem:[%s1 + $0x148] sm:$0xff]
  %v719 = vld [vmem:[%s1 + $0x1b8] sm:$0xff]
  %v720 = vld [vmem:[%s1 + $0x1c0] sm:$0xff]
  %v721 = vld [vmem:[%s1 + $0x1c8] sm:$0xff]
  %v722 = vld [vmem:[%s1 + $0x1d0] sm:$0xff]
  %v723 = vld [vmem:[%s1 + $0x240] sm:$0xff]
  %v724 = vld [vmem:[%s1 + $0x248] sm:$0xff]
  %v725 = vld [vmem:[%s1 + $0x250] sm:$0xff]
  %v726 = vld [vmem:[%s1 + $0x258] sm:$0xff]
  %v727 = vld [vmem:[%s1 + $0x2c8] sm:$0xff]
  %v728 = vld [vmem:[%s1 + $0x2d0] sm:$0xff]
  %v729 = vld [vmem:[%s1 + $0x2d8] sm:$0xff]
  %v730 = vld [vmem:[%s1 + $0x2e0] sm:$0xff]
  %v731 = vld [vmem:[%s1 + $0x350] sm:$0xff]
  %v732 = vld [vmem:[%s1 + $0x358] sm:$0xff]
  %v733 = vld [vmem:[%s1 + $0x360] sm:$0xff]
  %v734 = vld [vmem:[%s1 + $0x368] sm:$0xff]
  %v735 = vld [vmem:[%s1 + $0x3d8] sm:$0xff]
  %v736 = vld [vmem:[%s1 + $0x3e0] sm:$0xff]
  %v737 = vld [vmem:[%s1 + $0x3e8] sm:$0xff]
  %v738 = vld [vmem:[%s1 + $0x3f0] sm:$0xff]
  %v739 = vld [vmem:[%s1 + $0x460] sm:$0xff]
  %v740 = vld [vmem:[%s1 + $0x468] sm:$0xff]
  %v741 = vld [vmem:[%s1 + $0x470] sm:$0xff]
  %v742 = vld [vmem:[%s1 + $0x478] sm:$0xff]
  %v743 = vld [vmem:[%s1 + $0x4e8] sm:$0xff]
  %v744 = vld [vmem:[%s1 + $0x4f0] sm:$0xff]
  %v745 = vld [vmem:[%s1 + $0x4f8] sm:$0xff]
  %v746 = vld [vmem:[%s1 + $0x500] sm:$0xff]
  %v747 = vld [vmem:[%s1 + $0x570] sm:$0xff]
  %v748 = vld [vmem:[%s1 + $0x578] sm:$0xff]
  %v749 = vld [vmem:[%s1 + $0x580] sm:$0xff]
  %v750 = vld [vmem:[%s1 + $0x588] sm:$0xff]
  %v751 = vld [vmem:[%s1 + $0x5f8] sm:$0xff]
  %v752 = vld [vmem:[%s1 + $0x600] sm:$0xff]
  %v753 = vld [vmem:[%s1 + $0x608] sm:$0xff]
  %v754 = vld [vmem:[%s1 + $0x610] sm:$0xff]
  %v755 = vld [vmem:[%s1 + $0x680] sm:$0xff]
  %v756 = vld [vmem:[%s1 + $0x688] sm:$0xff]
  %v757 = vld [vmem:[%s1 + $0x690] sm:$0xff]
  %v758 = vld [vmem:[%s1 + $0x698] sm:$0xff]
  %v759 = vld [vmem:[%s1 + $0x708] sm:$0xff]
  %v760 = vld [vmem:[%s1 + $0x710] sm:$0xff]
  %v761 = vld [vmem:[%s1 + $0x718] sm:$0xff]
  %v762 = vld [vmem:[%s1 + $0x720] sm:$0xff]
  %v763 = vld [vmem:[%s1 + $0x790] sm:$0xff]
  %v764 = vld [vmem:[%s1 + $0x798] sm:$0xff]
  %v765 = vld [vmem:[%s1 + $0x7a0] sm:$0xff]
  %v766 = vld [vmem:[%s1 + $0x7a8] sm:$0xff]
  %v767 = vld [vmem:[%s1 + $0x818] sm:$0xff]
  %v768 = vld [vmem:[%s1 + $0x820] sm:$0xff]
  %v769 = vld [vmem:[%s1 + $0x828] sm:$0xff]
  %v770 = vld [vmem:[%s1 + $0x830] sm:$0xff]
  %v771 = vld [vmem:[%s2 + $0x8] sm:$0xff]
  %v773 = vlaneseq
  %v774 = vshrl.u32 %v773, 7
  %v775 = vsub.s32 0, %v774
  %v776 = vrot.slane %v771, %v775
  %v777 = vlaneseq
  %v778 = vshrl.u32 %v777, 7
  %v779 = vsub.s32 1, %v778
  %v780 = vrot.slane %v771, %v779
  %v781 = vlaneseq
  %v782 = vshrl.u32 %v781, 7
  %v783 = vsub.s32 2, %v782
  %v784 = vrot.slane %v771, %v783
  %v785 = vlaneseq
  %v786 = vshrl.u32 %v785, 7
  %v787 = vsub.s32 3, %v786
  %v788 = vrot.slane %v771, %v787
  %v789 = vlaneseq
  %v790 = vshrl.u32 %v789, 7
  %v791 = vsub.s32 4, %v790
  %v792 = vrot.slane %v771, %v791
  %v793 = vlaneseq
  %v794 = vshrl.u32 %v793, 7
  %v795 = vsub.s32 5, %v794
  %v796 = vrot.slane %v771, %v795
  %v797 = vlaneseq
  %v798 = vshrl.u32 %v797, 7
  %v799 = vsub.s32 6, %v798
  %v800 = vrot.slane %v771, %v799
  %v801 = vlaneseq
  %v802 = vshrl.u32 %v801, 7
  %v803 = vsub.s32 7, %v802
  %v804 = vrot.slane %v771, %v803
  %v877 = vunpack.c.l.b16 %v707
  %v878 = vunpack.c.h.b16 %v707
  %v879 = vunpack.c.l.b16 %v708
  %v880 = vunpack.c.h.b16 %v708
  %v881 = vunpack.c.l.b16 %v709
  %v882 = vunpack.c.h.b16 %v709
  %v883 = vunpack.c.l.b16 %v710
  %v884 = vunpack.c.h.b16 %v710
  %v885 = vunpack.c.l.b16 %v711
  %v886 = vunpack.c.h.b16 %v711
  %v887 = vunpack.c.l.b16 %v712
  %v888 = vunpack.c.h.b16 %v712
  %v889 = vunpack.c.l.b16 %v713
  %v890 = vunpack.c.h.b16 %v713
  %v891 = vunpack.c.l.b16 %v714
  %v892 = vunpack.c.h.b16 %v714
  %v893 = vunpack.c.l.b16 %v715
  %v894 = vunpack.c.h.b16 %v715
  %v895 = vunpack.c.l.b16 %v716
  %v896 = vunpack.c.h.b16 %v716
  %v897 = vunpack.c.l.b16 %v717
  %v898 = vunpack.c.h.b16 %v717
  %v899 = vunpack.c.l.b16 %v718
  %v900 = vunpack.c.h.b16 %v718
  %v901 = vunpack.c.l.b16 %v719
  %v902 = vunpack.c.h.b16 %v719
  %v903 = vunpack.c.l.b16 %v720
  %v904 = vunpack.c.h.b16 %v720
  %v905 = vunpack.c.l.b16 %v721
  %v906 = vunpack.c.h.b16 %v721
  %v907 = vunpack.c.l.b16 %v722
  %v908 = vunpack.c.h.b16 %v722
  %v909 = vunpack.c.l.b16 %v723
  %v910 = vunpack.c.h.b16 %v723
  %v911 = vunpack.c.l.b16 %v724
  %v912 = vunpack.c.h.b16 %v724
  %v913 = vunpack.c.l.b16 %v725
  %v914 = vunpack.c.h.b16 %v725
  %v915 = vunpack.c.l.b16 %v726
  %v916 = vunpack.c.h.b16 %v726
  %v917 = vunpack.c.l.b16 %v727
  %v918 = vunpack.c.h.b16 %v727
  %v919 = vunpack.c.l.b16 %v728
  %v920 = vunpack.c.h.b16 %v728
  %v921 = vunpack.c.l.b16 %v729
  %v922 = vunpack.c.h.b16 %v729
  %v923 = vunpack.c.l.b16 %v730
  %v924 = vunpack.c.h.b16 %v730
  %v925 = vunpack.c.l.b16 %v731
  %v926 = vunpack.c.h.b16 %v731
  %v927 = vunpack.c.l.b16 %v732
  %v928 = vunpack.c.h.b16 %v732
  %v929 = vunpack.c.l.b16 %v733
  %v930 = vunpack.c.h.b16 %v733
  %v931 = vunpack.c.l.b16 %v734
  %v932 = vunpack.c.h.b16 %v734
  %v933 = vunpack.c.l.b16 %v735
  %v934 = vunpack.c.h.b16 %v735
  %v935 = vunpack.c.l.b16 %v736
  %v936 = vunpack.c.h.b16 %v736
  %v937 = vunpack.c.l.b16 %v737
  %v938 = vunpack.c.h.b16 %v737
  %v939 = vunpack.c.l.b16 %v738
  %v940 = vunpack.c.h.b16 %v738
  %v941 = vunpack.c.l.b16 %v739
  %v942 = vunpack.c.h.b16 %v739
  %v943 = vunpack.c.l.b16 %v740
  %v944 = vunpack.c.h.b16 %v740
  %v945 = vunpack.c.l.b16 %v741
  %v946 = vunpack.c.h.b16 %v741
  %v947 = vunpack.c.l.b16 %v742
  %v948 = vunpack.c.h.b16 %v742
  %v949 = vunpack.c.l.b16 %v743
  %v950 = vunpack.c.h.b16 %v743
  %v951 = vunpack.c.l.b16 %v744
  %v952 = vunpack.c.h.b16 %v744
  %v953 = vunpack.c.l.b16 %v745
  %v954 = vunpack.c.h.b16 %v745
  %v955 = vunpack.c.l.b16 %v746
  %v956 = vunpack.c.h.b16 %v746
  %v957 = vunpack.c.l.b16 %v747
  %v958 = vunpack.c.h.b16 %v747
  %v959 = vunpack.c.l.b16 %v748
  %v960 = vunpack.c.h.b16 %v748
  %v961 = vunpack.c.l.b16 %v749
  %v962 = vunpack.c.h.b16 %v749
  %v963 = vunpack.c.l.b16 %v750
  %v964 = vunpack.c.h.b16 %v750
  %v965 = vunpack.c.l.b16 %v751
  %v966 = vunpack.c.h.b16 %v751
  %v967 = vunpack.c.l.b16 %v752
  %v968 = vunpack.c.h.b16 %v752
  %v969 = vunpack.c.l.b16 %v753
  %v970 = vunpack.c.h.b16 %v753
  %v971 = vunpack.c.l.b16 %v754
  %v972 = vunpack.c.h.b16 %v754
  %v973 = vunpack.c.l.b16 %v755
  %v974 = vunpack.c.h.b16 %v755
  %v975 = vunpack.c.l.b16 %v756
  %v976 = vunpack.c.h.b16 %v756
  %v977 = vunpack.c.l.b16 %v757
  %v978 = vunpack.c.h.b16 %v757
  %v979 = vunpack.c.l.b16 %v758
  %v980 = vunpack.c.h.b16 %v758
  %v981 = vunpack.c.l.b16 %v759
  %v982 = vunpack.c.h.b16 %v759
  %v983 = vunpack.c.l.b16 %v760
  %v984 = vunpack.c.h.b16 %v760
  %v985 = vunpack.c.l.b16 %v761
  %v986 = vunpack.c.h.b16 %v761
  %v987 = vunpack.c.l.b16 %v762
  %v988 = vunpack.c.h.b16 %v762
  %v989 = vunpack.c.l.b16 %v763
  %v990 = vunpack.c.h.b16 %v763
  %v991 = vunpack.c.l.b16 %v764
  %v992 = vunpack.c.h.b16 %v764
  %v993 = vunpack.c.l.b16 %v765
  %v994 = vunpack.c.h.b16 %v765
  %v995 = vunpack.c.l.b16 %v766
  %v996 = vunpack.c.h.b16 %v766
  %v997 = vunpack.c.l.b16 %v767
  %v998 = vunpack.c.h.b16 %v767
  %v999 = vunpack.c.l.b16 %v768
  %v1000 = vunpack.c.h.b16 %v768
  %v1001 = vunpack.c.l.b16 %v769
  %v1002 = vunpack.c.h.b16 %v769
  %v1003 = vunpack.c.l.b16 %v770
  %v1004 = vunpack.c.h.b16 %v770
  %v1005 = vpack.c.b16 %v885, %v877
  %v1006 = vpack.c.b16 %v886, %v878
  %v1007 = vpack.c.b16 %v887, %v879
  %v1008 = vpack.c.b16 %v888, %v880
  %v1009 = vpack.c.b16 %v889, %v881
  %v1010 = vpack.c.b16 %v890, %v882
  %v1011 = vpack.c.b16 %v891, %v883
  %v1012 = vpack.c.b16 %v892, %v884
  %v1013 = vpack.c.b16 %v901, %v893
  %v1014 = vpack.c.b16 %v902, %v894
  %v1015 = vpack.c.b16 %v903, %v895
  %v1016 = vpack.c.b16 %v904, %v896
  %v1017 = vpack.c.b16 %v905, %v897
  %v1018 = vpack.c.b16 %v906, %v898
  %v1019 = vpack.c.b16 %v907, %v899
  %v1020 = vpack.c.b16 %v908, %v900
  %v1021 = vpack.c.b16 %v917, %v909
  %v1022 = vpack.c.b16 %v918, %v910
  %v1023 = vpack.c.b16 %v919, %v911
  %v1024 = vpack.c.b16 %v920, %v912
  %v1025 = vpack.c.b16 %v921, %v913
  %v1026 = vpack.c.b16 %v922, %v914
  %v1027 = vpack.c.b16 %v923, %v915
  %v1028 = vpack.c.b16 %v924, %v916
  %v1029 = vpack.c.b16 %v933, %v925
  %v1030 = vpack.c.b16 %v934, %v926
  %v1031 = vpack.c.b16 %v935, %v927
  %v1032 = vpack.c.b16 %v936, %v928
  %v1033 = vpack.c.b16 %v937, %v929
  %v1034 = vpack.c.b16 %v938, %v930
  %v1035 = vpack.c.b16 %v939, %v931
  %v1036 = vpack.c.b16 %v940, %v932
  %v1037 = vpack.c.b16 %v949, %v941
  %v1038 = vpack.c.b16 %v950, %v942
  %v1039 = vpack.c.b16 %v951, %v943
  %v1040 = vpack.c.b16 %v952, %v944
  %v1041 = vpack.c.b16 %v953, %v945
  %v1042 = vpack.c.b16 %v954, %v946
  %v1043 = vpack.c.b16 %v955, %v947
  %v1044 = vpack.c.b16 %v956, %v948
  %v1045 = vpack.c.b16 %v965, %v957
  %v1046 = vpack.c.b16 %v966, %v958
  %v1047 = vpack.c.b16 %v967, %v959
  %v1048 = vpack.c.b16 %v968, %v960
  %v1049 = vpack.c.b16 %v969, %v961
  %v1050 = vpack.c.b16 %v970, %v962
  %v1051 = vpack.c.b16 %v971, %v963
  %v1052 = vpack.c.b16 %v972, %v964
  %v1053 = vpack.c.b16 %v981, %v973
  %v1054 = vpack.c.b16 %v982, %v974
  %v1055 = vpack.c.b16 %v983, %v975
  %v1056 = vpack.c.b16 %v984, %v976
  %v1057 = vpack.c.b16 %v985, %v977
  %v1058 = vpack.c.b16 %v986, %v978
  %v1059 = vpack.c.b16 %v987, %v979
  %v1060 = vpack.c.b16 %v988, %v980
  %v1061 = vpack.c.b16 %v997, %v989
  %v1062 = vpack.c.b16 %v998, %v990
  %v1063 = vpack.c.b16 %v999, %v991
  %v1064 = vpack.c.b16 %v1000, %v992
  %v1065 = vpack.c.b16 %v1001, %v993
  %v1066 = vpack.c.b16 %v1002, %v994
  %v1067 = vpack.c.b16 %v1003, %v995
  %v1068 = vpack.c.b16 %v1004, %v996
  %1133 = vmatprep.subr.bf16.mxu0 %v1006
  %1134 = vmatpush1.bf16.msra.mxu0 %v1005
  %1135 = vmatprep.subr.bf16.mxu0 %v1014
  %1136 = vmatpush1.bf16.msra.mxu0 %v1013
  %1137 = vmatprep.subr.bf16.mxu0 %v1022
  %1138 = vmatpush1.bf16.msra.mxu0 %v1021
  %1139 = vmatprep.subr.bf16.mxu0 %v1030
  %1140 = vmatpush1.bf16.msra.mxu0 %v1029
  %1141 = vmatprep.subr.bf16.mxu0 %v1038
  %1142 = vmatpush1.bf16.msra.mxu0 %v1037
  %1143 = vmatprep.subr.bf16.mxu0 %v1046
  %1144 = vmatpush1.bf16.msra.mxu0 %v1045
  %1145 = vmatprep.subr.bf16.mxu0 %v1054
  %1146 = vmatpush1.bf16.msra.mxu0 %v1053
  %1147 = vmatprep.subr.bf16.mxu0 %v1062
  %1148 = vmatpush1.bf16.msra.mxu0 %v1061
  %1149 = vmatprep.subr.bf16.mxu0 0
  %1150 = vmatpush1.bf16.msra.mxu0 0
  %1151 = vmatprep.subr.bf16.mxu0 0
  %1152 = vmatpush1.bf16.msra.mxu0 0
  %1153 = vmatprep.subr.bf16.mxu0 0
  %1154 = vmatpush1.bf16.msra.mxu0 0
  %1155 = vmatprep.subr.bf16.mxu0 0
  %1156 = vmatpush1.bf16.msra.mxu0 0
  %1157 = vmatprep.subr.bf16.mxu0 0
  %1158 = vmatpush1.bf16.msra.mxu0 0
  %1159 = vmatprep.subr.bf16.mxu0 0
  %1160 = vmatpush1.bf16.msra.mxu0 0
  %1161 = vmatprep.subr.bf16.mxu0 0
  %1162 = vmatpush1.bf16.msra.mxu0 0
  %1163 = vmatprep.subr.bf16.mxu0 0
  %1164 = vmatpush1.bf16.msra.mxu0 0
  %1165 = vmatprep.mubr.bf16.mxu0 0
  %1166 = vmatmul.mubr.bf16.gmra.mrb[0].mxu0 %v139
  %v1167 = vpop.f32.mrb[0].mxu0
  %v1168 = vadd.f32 %v776, %v1167
  %v1169 = vpop.f32.mrb[0].mxu0
  %v1170 = vadd.f32 %v780, %v1169
  %v1171 = vpop.f32.mrb[0].mxu0
  %v1172 = vadd.f32 %v776, %v1171
  %v1173 = vpop.f32.mrb[0].mxu0
  %v1174 = vadd.f32 %v780, %v1173
  %1175 = vmatprep.mubr.bf16.mxu0 0
  %1176 = vmatmul.mubr.bf16.gmra.mrb[0].mxu0 %v140
  %v1177 = vpop.f32.mrb[0].mxu0
  %v1178 = vadd.f32 %v776, %v1177
  %v1179 = vpop.f32.mrb[0].mxu0
  %v1180 = vadd.f32 %v780, %v1179
  %v1181 = vpop.f32.mrb[0].mxu0
  %v1182 = vadd.f32 %v776, %v1181
  %v1183 = vpop.f32.mrb[0].mxu0
  %v1184 = vadd.f32 %v780, %v1183
  %1185 = vdwg.mxu0
  %1186 = vmatprep.subr.bf16.mxu0 %v1008
  %1187 = vmatpush1.bf16.msra.mxu0 %v1007
  %1188 = vmatprep.subr.bf16.mxu0 %v1016
  %1189 = vmatpush1.bf16.msra.mxu0 %v1015
  %1190 = vmatprep.subr.bf16.mxu0 %v1024
  %1191 = vmatpush1.bf16.msra.mxu0 %v1023
  %1192 = vmatprep.subr.bf16.mxu0 %v1032
  %1193 = vmatpush1.bf16.msra.mxu0 %v1031
  %1194 = vmatprep.subr.bf16.mxu0 %v1040
  %1195 = vmatpush1.bf16.msra.mxu0 %v1039
  %1196 = vmatprep.subr.bf16.mxu0 %v1048
  %1197 = vmatpush1.bf16.msra.mxu0 %v1047
  %1198 = vmatprep.subr.bf16.mxu0 %v1056
  %1199 = vmatpush1.bf16.msra.mxu0 %v1055
  %1200 = vmatprep.subr.bf16.mxu0 %v1064
  %1201 = vmatpush1.bf16.msra.mxu0 %v1063
  %1202 = vmatprep.subr.bf16.mxu0 0
  %1203 = vmatpush1.bf16.msra.mxu0 0
  %1204 = vmatprep.subr.bf16.mxu0 0
  %1205 = vmatpush1.bf16.msra.mxu0 0
  %1206 = vmatprep.subr.bf16.mxu0 0
  %1207 = vmatpush1.bf16.msra.mxu0 0
  %1208 = vmatprep.subr.bf16.mxu0 0
  %1209 = vmatpush1.bf16.msra.mxu0 0
  %1210 = vmatprep.subr.bf16.mxu0 0
  %1211 = vmatpush1.bf16.msra.mxu0 0
  %1212 = vmatprep.subr.bf16.mxu0 0
  %1213 = vmatpush1.bf16.msra.mxu0 0
  %1214 = vmatprep.subr.bf16.mxu0 0
  %1215 = vmatpush1.bf16.msra.mxu0 0
  %1216 = vmatprep.subr.bf16.mxu0 0
  %1217 = vmatpush1.bf16.msra.mxu0 0
  %1218 = vmatprep.mubr.bf16.mxu0 0
  %1219 = vmatmul.mubr.bf16.gmra.mrb[0].mxu0 %v139
  %v1220 = vpop.f32.mrb[0].mxu0
  %v1221 = vadd.f32 %v784, %v1220
  %v1222 = vpop.f32.mrb[0].mxu0
  %v1223 = vadd.f32 %v788, %v1222
  %v1224 = vpop.f32.mrb[0].mxu0
  %v1225 = vadd.f32 %v784, %v1224
  %v1226 = vpop.f32.mrb[0].mxu0
  %v1227 = vadd.f32 %v788, %v1226
  %1228 = vmatprep.mubr.bf16.mxu0 0
  %1229 = vmatmul.mubr.bf16.gmra.mrb[0].mxu0 %v140
  %v1230 = vpop.f32.mrb[0].mxu0
  %v1231 = vadd.f32 %v784, %v1230
  %v1232 = vpop.f32.mrb[0].mxu0
  %v1233 = vadd.f32 %v788, %v1232
  %v1234 = vpop.f32.mrb[0].mxu0
  %v1235 = vadd.f32 %v784, %v1234
  %v1236 = vpop.f32.mrb[0].mxu0
  %v1237 = vadd.f32 %v788, %v1236
  %1238 = vdwg.mxu0
  %1239 = vmatprep.subr.bf16.mxu0 %v1010
  %1240 = vmatpush1.bf16.msra.mxu0 %v1009
  %1241 = vmatprep.subr.bf16.mxu0 %v1018
  %1242 = vmatpush1.bf16.msra.mxu0 %v1017
  %1243 = vmatprep.subr.bf16.mxu0 %v1026
  %1244 = vmatpush1.bf16.msra.mxu0 %v1025
  %1245 = vmatprep.subr.bf16.mxu0 %v1034
  %1246 = vmatpush1.bf16.msra.mxu0 %v1033
  %1247 = vmatprep.subr.bf16.mxu0 %v1042
  %1248 = vmatpush1.bf16.msra.mxu0 %v1041
  %1249 = vmatprep.subr.bf16.mxu0 %v1050
  %1250 = vmatpush1.bf16.msra.mxu0 %v1049
  %1251 = vmatprep.subr.bf16.mxu0 %v1058
  %1252 = vmatpush1.bf16.msra.mxu0 %v1057
  %1253 = vmatprep.subr.bf16.mxu0 %v1066
  %1254 = vmatpush1.bf16.msra.mxu0 %v1065
  %1255 = vmatprep.subr.bf16.mxu0 0
  %1256 = vmatpush1.bf16.msra.mxu0 0
  %1257 = vmatprep.subr.bf16.mxu0 0
  %1258 = vmatpush1.bf16.msra.mxu0 0
  %1259 = vmatprep.subr.bf16.mxu0 0
  %1260 = vmatpush1.bf16.msra.mxu0 0
  %1261 = vmatprep.subr.bf16.mxu0 0
  %1262 = vmatpush1.bf16.msra.mxu0 0
  %1263 = vmatprep.subr.bf16.mxu0 0
  %1264 = vmatpush1.bf16.msra.mxu0 0
  %1265 = vmatprep.subr.bf16.mxu0 0
  %1266 = vmatpush1.bf16.msra.mxu0 0
  %1267 = vmatprep.subr.bf16.mxu0 0
  %1268 = vmatpush1.bf16.msra.mxu0 0
  %1269 = vmatprep.subr.bf16.mxu0 0
  %1270 = vmatpush1.bf16.msra.mxu0 0
  %1271 = vmatprep.mubr.bf16.mxu0 0
  %1272 = vmatmul.mubr.bf16.gmra.mrb[0].mxu0 %v139
  %v1273 = vpop.f32.mrb[0].mxu0
  %v1274 = vadd.f32 %v792, %v1273
  %v1275 = vpop.f32.mrb[0].mxu0
  %v1276 = vadd.f32 %v796, %v1275
  %v1277 = vpop.f32.mrb[0].mxu0
  %v1278 = vadd.f32 %v792, %v1277
  %v1279 = vpop.f32.mrb[0].mxu0
  %v1280 = vadd.f32 %v796, %v1279
  %1281 = vmatprep.mubr.bf16.mxu0 0
  %1282 = vmatmul.mubr.bf16.gmra.mrb[0].mxu0 %v140
  %v1283 = vpop.f32.mrb[0].mxu0
  %v1284 = vadd.f32 %v792, %v1283
  %v1285 = vpop.f32.mrb[0].mxu0
  %v1286 = vadd.f32 %v796, %v1285
  %v1287 = vpop.f32.mrb[0].mxu0
  %v1288 = vadd.f32 %v792, %v1287
  %v1289 = vpop.f32.mrb[0].mxu0
  %v1290 = vadd.f32 %v796, %v1289
  %1291 = vdwg.mxu0
  %1292 = vmatprep.subr.bf16.mxu0 %v1012
  %1293 = vmatpush1.bf16.msra.mxu0 %v1011
  %1294 = vmatprep.subr.bf16.mxu0 %v1020
  %1295 = vmatpush1.bf16.msra.mxu0 %v1019
  %1296 = vmatprep.subr.bf16.mxu0 %v1028
  %1297 = vmatpush1.bf16.msra.mxu0 %v1027
  %1298 = vmatprep.subr.bf16.mxu0 %v1036
  %1299 = vmatpush1.bf16.msra.mxu0 %v1035
  %1300 = vmatprep.subr.bf16.mxu0 %v1044
  %1301 = vmatpush1.bf16.msra.mxu0 %v1043
  %1302 = vmatprep.subr.bf16.mxu0 %v1052
  %1303 = vmatpush1.bf16.msra.mxu0 %v1051
  %1304 = vmatprep.subr.bf16.mxu0 %v1060
  %1305 = vmatpush1.bf16.msra.mxu0 %v1059
  %1306 = vmatprep.subr.bf16.mxu0 %v1068
  %1307 = vmatpush1.bf16.msra.mxu0 %v1067
  %1308 = vmatprep.subr.bf16.mxu0 0
  %1309 = vmatpush1.bf16.msra.mxu0 0
  %1310 = vmatprep.subr.bf16.mxu0 0
  %1311 = vmatpush1.bf16.msra.mxu0 0
  %1312 = vmatprep.subr.bf16.mxu0 0
  %1313 = vmatpush1.bf16.msra.mxu0 0
  %1314 = vmatprep.subr.bf16.mxu0 0
  %1315 = vmatpush1.bf16.msra.mxu0 0
  %1316 = vmatprep.subr.bf16.mxu0 0
  %1317 = vmatpush1.bf16.msra.mxu0 0
  %1318 = vmatprep.subr.bf16.mxu0 0
  %1319 = vmatpush1.bf16.msra.mxu0 0
  %1320 = vmatprep.subr.bf16.mxu0 0
  %1321 = vmatpush1.bf16.msra.mxu0 0
  %1322 = vmatprep.subr.bf16.mxu0 0
  %1323 = vmatpush1.bf16.msra.mxu0 0
  %1324 = vmatprep.mubr.bf16.mxu0 0
  %1325 = vmatmul.mubr.bf16.gmra.mrb[0].mxu0 %v139
  %v1326 = vpop.f32.mrb[0].mxu0
  %v1327 = vadd.f32 %v800, %v1326
  %v1328 = vpop.f32.mrb[0].mxu0
  %v1329 = vadd.f32 %v804, %v1328
  %v1330 = vpop.f32.mrb[0].mxu0
  %v1331 = vadd.f32 %v800, %v1330
  %v1332 = vpop.f32.mrb[0].mxu0
  %v1333 = vadd.f32 %v804, %v1332
  %1334 = vmatprep.mubr.bf16.mxu0 0
  %1335 = vmatmul.mubr.bf16.gmra.mrb[0].mxu0 %v140
  %v1336 = vpop.f32.mrb[0].mxu0
  %v1337 = vadd.f32 %v800, %v1336
  %v1338 = vpop.f32.mrb[0].mxu0
  %v1339 = vadd.f32 %v804, %v1338
  %v1340 = vpop.f32.mrb[0].mxu0
  %v1341 = vadd.f32 %v800, %v1340
  %v1342 = vpop.f32.mrb[0].mxu0
  %v1343 = vadd.f32 %v804, %v1342
  %1344 = vdwg.mxu0
  %v1345 = vmax.f32 %v703, %v1168
  %v1346 = vmax.f32 %v704, %v1172
  %v1347 = vmax.f32 %v705, %v1178
  %v1348 = vmax.f32 %v706, %v1182
  %v1349 = vmax.f32 %v1345, %v1170
  %v1350 = vmax.f32 %v1346, %v1174
  %v1351 = vmax.f32 %v1347, %v1180
  %v1352 = vmax.f32 %v1348, %v1184
  %v1353 = vmax.f32 %v1349, %v1221
  %v1354 = vmax.f32 %v1350, %v1225
  %v1355 = vmax.f32 %v1351, %v1231
  %v1356 = vmax.f32 %v1352, %v1235
  %v1357 = vmax.f32 %v1353, %v1223
  %v1358 = vmax.f32 %v1354, %v1227
  %v1359 = vmax.f32 %v1355, %v1233
  %v1360 = vmax.f32 %v1356, %v1237
  %v1361 = vmax.f32 %v1357, %v1274
  %v1362 = vmax.f32 %v1358, %v1278
  %v1363 = vmax.f32 %v1359, %v1284
  %v1364 = vmax.f32 %v1360, %v1288
  %v1365 = vmax.f32 %v1361, %v1276
  %v1366 = vmax.f32 %v1362, %v1280
  %v1367 = vmax.f32 %v1363, %v1286
  %v1368 = vmax.f32 %v1364, %v1290
  %v1369 = vmax.f32 %v1365, %v1327
  %v1370 = vmax.f32 %v1366, %v1331
  %v1371 = vmax.f32 %v1367, %v1337
  %v1372 = vmax.f32 %v1368, %v1341
  %v1373 = vmax.f32 %v1369, %v1329
  %v1374 = vmax.f32 %v1370, %v1333
  %v1375 = vmax.f32 %v1371, %v1339
  %v1376 = vmax.f32 %v1372, %v1343
  %v1377 = vld [vmem:[%s1 + $0x40] sm:$0xff]
  %v1378 = vld [vmem:[%s1 + $0x48] sm:$0xff]
  %v1379 = vld [vmem:[%s1 + $0x50] sm:$0xff]
  %v1380 = vld [vmem:[%s1 + $0x58] sm:$0xff]
  %v1381 = vld [vmem:[%s1 + $0xc8] sm:$0xff]
  %v1382 = vld [vmem:[%s1 + $0xd0] sm:$0xff]
  %v1383 = vld [vmem:[%s1 + $0xd8] sm:$0xff]
  %v1384 = vld [vmem:[%s1 + $0xe0] sm:$0xff]
  %v1385 = vld [vmem:[%s1 + $0x150] sm:$0xff]
  %v1386 = vld [vmem:[%s1 + $0x158] sm:$0xff]
  %v1387 = vld [vmem:[%s1 + $0x160] sm:$0xff]
  %v1388 = vld [vmem:[%s1 + $0x168] sm:$0xff]
  %v1389 = vld [vmem:[%s1 + $0x1d8] sm:$0xff]
  %v1390 = vld [vmem:[%s1 + $0x1e0] sm:$0xff]
  %v1391 = vld [vmem:[%s1 + $0x1e8] sm:$0xff]
  %v1392 = vld [vmem:[%s1 + $0x1f0] sm:$0xff]
  %v1393 = vld [vmem:[%s1 + $0x260] sm:$0xff]
  %v1394 = vld [vmem:[%s1 + $0x268] sm:$0xff]
  %v1395 = vld [vmem:[%s1 + $0x270] sm:$0xff]
  %v1396 = vld [vmem:[%s1 + $0x278] sm:$0xff]
  %v1397 = vld [vmem:[%s1 + $0x2e8] sm:$0xff]
  %v1398 = vld [vmem:[%s1 + $0x2f0] sm:$0xff]
  %v1399 = vld [vmem:[%s1 + $0x2f8] sm:$0xff]
  %v1400 = vld [vmem:[%s1 + $0x300] sm:$0xff]
  %v1401 = vld [vmem:[%s1 + $0x370] sm:$0xff]
  %v1402 = vld [vmem:[%s1 + $0x378] sm:$0xff]
  %v1403 = vld [vmem:[%s1 + $0x380] sm:$0xff]
  %v1404 = vld [vmem:[%s1 + $0x388] sm:$0xff]
  %v1405 = vld [vmem:[%s1 + $0x3f8] sm:$0xff]
  %v1406 = vld [vmem:[%s1 + $0x400] sm:$0xff]
  %v1407 = vld [vmem:[%s1 + $0x408] sm:$0xff]
  %v1408 = vld [vmem:[%s1 + $0x410] sm:$0xff]
  %v1409 = vld [vmem:[%s1 + $0x480] sm:$0xff]
  %v1410 = vld [vmem:[%s1 + $0x488] sm:$0xff]
  %v1411 = vld [vmem:[%s1 + $0x490] sm:$0xff]
  %v1412 = vld [vmem:[%s1 + $0x498] sm:$0xff]
  %v1413 = vld [vmem:[%s1 + $0x508] sm:$0xff]
  %v1414 = vld [vmem:[%s1 + $0x510] sm:$0xff]
  %v1415 = vld [vmem:[%s1 + $0x518] sm:$0xff]
  %v1416 = vld [vmem:[%s1 + $0x520] sm:$0xff]
  %v1417 = vld [vmem:[%s1 + $0x590] sm:$0xff]
  %v1418 = vld [vmem:[%s1 + $0x598] sm:$0xff]
  %v1419 = vld [vmem:[%s1 + $0x5a0] sm:$0xff]
  %v1420 = vld [vmem:[%s1 + $0x5a8] sm:$0xff]
  %v1421 = vld [vmem:[%s1 + $0x618] sm:$0xff]
  %v1422 = vld [vmem:[%s1 + $0x620] sm:$0xff]
  %v1423 = vld [vmem:[%s1 + $0x628] sm:$0xff]
  %v1424 = vld [vmem:[%s1 + $0x630] sm:$0xff]
  %v1425 = vld [vmem:[%s1 + $0x6a0] sm:$0xff]
  %v1426 = vld [vmem:[%s1 + $0x6a8] sm:$0xff]
  %v1427 = vld [vmem:[%s1 + $0x6b0] sm:$0xff]
  %v1428 = vld [vmem:[%s1 + $0x6b8] sm:$0xff]
  %v1429 = vld [vmem:[%s1 + $0x728] sm:$0xff]
  %v1430 = vld [vmem:[%s1 + $0x730] sm:$0xff]
  %v1431 = vld [vmem:[%s1 + $0x738] sm:$0xff]
  %v1432 = vld [vmem:[%s1 + $0x740] sm:$0xff]
  %v1433 = vld [vmem:[%s1 + $0x7b0] sm:$0xff]
  %v1434 = vld [vmem:[%s1 + $0x7b8] sm:$0xff]
  %v1435 = vld [vmem:[%s1 + $0x7c0] sm:$0xff]
  %v1436 = vld [vmem:[%s1 + $0x7c8] sm:$0xff]
  %v1437 = vld [vmem:[%s1 + $0x838] sm:$0xff]
  %v1438 = vld [vmem:[%s1 + $0x840] sm:$0xff]
  %v1439 = vld [vmem:[%s1 + $0x848] sm:$0xff]
  %v1440 = vld [vmem:[%s1 + $0x850] sm:$0xff]
  %v1441 = vld [vmem:[%s2 + $0x10] sm:$0xff]
  %v1443 = vlaneseq
  %v1444 = vshrl.u32 %v1443, 7
  %v1445 = vsub.s32 0, %v1444
  %v1446 = vrot.slane %v1441, %v1445
  %v1447 = vlaneseq
  %v1448 = vshrl.u32 %v1447, 7
  %v1449 = vsub.s32 1, %v1448
  %v1450 = vrot.slane %v1441, %v1449
  %v1451 = vlaneseq
  %v1452 = vshrl.u32 %v1451, 7
  %v1453 = vsub.s32 2, %v1452
  %v1454 = vrot.slane %v1441, %v1453
  %v1455 = vlaneseq
  %v1456 = vshrl.u32 %v1455, 7
  %v1457 = vsub.s32 3, %v1456
  %v1458 = vrot.slane %v1441, %v1457
  %v1459 = vlaneseq
  %v1460 = vshrl.u32 %v1459, 7
  %v1461 = vsub.s32 4, %v1460
  %v1462 = vrot.slane %v1441, %v1461
  %v1463 = vlaneseq
  %v1464 = vshrl.u32 %v1463, 7
  %v1465 = vsub.s32 5, %v1464
  %v1466 = vrot.slane %v1441, %v1465
  %v1467 = vlaneseq
  %v1468 = vshrl.u32 %v1467, 7
  %v1469 = vsub.s32 6, %v1468
  %v1470 = vrot.slane %v1441, %v1469
  %v1471 = vlaneseq
  %v1472 = vshrl.u32 %v1471, 7
  %v1473 = vsub.s32 7, %v1472
  %v1474 = vrot.slane %v1441, %v1473
  %v1547 = vunpack.c.l.b16 %v1377
  %v1548 = vunpack.c.h.b16 %v1377
  %v1549 = vunpack.c.l.b16 %v1378
  %v1550 = vunpack.c.h.b16 %v1378
  %v1551 = vunpack.c.l.b16 %v1379
  %v1552 = vunpack.c.h.b16 %v1379
  %v1553 = vunpack.c.l.b16 %v1380
  %v1554 = vunpack.c.h.b16 %v1380
  %v1555 = vunpack.c.l.b16 %v1381
  %v1556 = vunpack.c.h.b16 %v1381
  %v1557 = vunpack.c.l.b16 %v1382
  %v1558 = vunpack.c.h.b16 %v1382
  %v1559 = vunpack.c.l.b16 %v1383
  %v1560 = vunpack.c.h.b16 %v1383
  %v1561 = vunpack.c.l.b16 %v1384
  %v1562 = vunpack.c.h.b16 %v1384
  %v1563 = vunpack.c.l.b16 %v1385
  %v1564 = vunpack.c.h.b16 %v1385
  %v1565 = vunpack.c.l.b16 %v1386
  %v1566 = vunpack.c.h.b16 %v1386
  %v1567 = vunpack.c.l.b16 %v1387
  %v1568 = vunpack.c.h.b16 %v1387
  %v1569 = vunpack.c.l.b16 %v1388
  %v1570 = vunpack.c.h.b16 %v1388
  %v1571 = vunpack.c.l.b16 %v1389
  %v1572 = vunpack.c.h.b16 %v1389
  %v1573 = vunpack.c.l.b16 %v1390
  %v1574 = vunpack.c.h.b16 %v1390
  %v1575 = vunpack.c.l.b16 %v1391
  %v1576 = vunpack.c.h.b16 %v1391
  %v1577 = vunpack.c.l.b16 %v1392
  %v1578 = vunpack.c.h.b16 %v1392
  %v1579 = vunpack.c.l.b16 %v1393
  %v1580 = vunpack.c.h.b16 %v1393
  %v1581 = vunpack.c.l.b16 %v1394
  %v1582 = vunpack.c.h.b16 %v1394
  %v1583 = vunpack.c.l.b16 %v1395
  %v1584 = vunpack.c.h.b16 %v1395
  %v1585 = vunpack.c.l.b16 %v1396
  %v1586 = vunpack.c.h.b16 %v1396
  %v1587 = vunpack.c.l.b16 %v1397
  %v1588 = vunpack.c.h.b16 %v1397
  %v1589 = vunpack.c.l.b16 %v1398
  %v1590 = vunpack.c.h.b16 %v1398
  %v1591 = vunpack.c.l.b16 %v1399
  %v1592 = vunpack.c.h.b16 %v1399
  %v1593 = vunpack.c.l.b16 %v1400
  %v1594 = vunpack.c.h.b16 %v1400
  %v1595 = vunpack.c.l.b16 %v1401
  %v1596 = vunpack.c.h.b16 %v1401
  %v1597 = vunpack.c.l.b16 %v1402
  %v1598 = vunpack.c.h.b16 %v1402
  %v1599 = vunpack.c.l.b16 %v1403
  %v1600 = vunpack.c.h.b16 %v1403
  %v1601 = vunpack.c.l.b16 %v1404
  %v1602 = vunpack.c.h.b16 %v1404
  %v1603 = vunpack.c.l.b16 %v1405
  %v1604 = vunpack.c.h.b16 %v1405
  %v1605 = vunpack.c.l.b16 %v1406
  %v1606 = vunpack.c.h.b16 %v1406
  %v1607 = vunpack.c.l.b16 %v1407
  %v1608 = vunpack.c.h.b16 %v1407
  %v1609 = vunpack.c.l.b16 %v1408
  %v1610 = vunpack.c.h.b16 %v1408
  %v1611 = vunpack.c.l.b16 %v1409
  %v1612 = vunpack.c.h.b16 %v1409
  %v1613 = vunpack.c.l.b16 %v1410
  %v1614 = vunpack.c.h.b16 %v1410
  %v1615 = vunpack.c.l.b16 %v1411
  %v1616 = vunpack.c.h.b16 %v1411
  %v1617 = vunpack.c.l.b16 %v1412
  %v1618 = vunpack.c.h.b16 %v1412
  %v1619 = vunpack.c.l.b16 %v1413
  %v1620 = vunpack.c.h.b16 %v1413
  %v1621 = vunpack.c.l.b16 %v1414
  %v1622 = vunpack.c.h.b16 %v1414
  %v1623 = vunpack.c.l.b16 %v1415
  %v1624 = vunpack.c.h.b16 %v1415
  %v1625 = vunpack.c.l.b16 %v1416
  %v1626 = vunpack.c.h.b16 %v1416
  %v1627 = vunpack.c.l.b16 %v1417
  %v1628 = vunpack.c.h.b16 %v1417
  %v1629 = vunpack.c.l.b16 %v1418
  %v1630 = vunpack.c.h.b16 %v1418
  %v1631 = vunpack.c.l.b16 %v1419
  %v1632 = vunpack.c.h.b16 %v1419
  %v1633 = vunpack.c.l.b16 %v1420
  %v1634 = vunpack.c.h.b16 %v1420
  %v1635 = vunpack.c.l.b16 %v1421
  %v1636 = vunpack.c.h.b16 %v1421
  %v1637 = vunpack.c.l.b16 %v1422
  %v1638 = vunpack.c.h.b16 %v1422
  %v1639 = vunpack.c.l.b16 %v1423
  %v1640 = vunpack.c.h.b16 %v1423
  %v1641 = vunpack.c.l.b16 %v1424
  %v1642 = vunpack.c.h.b16 %v1424
  %v1643 = vunpack.c.l.b16 %v1425
  %v1644 = vunpack.c.h.b16 %v1425
  %v1645 = vunpack.c.l.b16 %v1426
  %v1646 = vunpack.c.h.b16 %v1426
  %v1647 = vunpack.c.l.b16 %v1427
  %v1648 = vunpack.c.h.b16 %v1427
  %v1649 = vunpack.c.l.b16 %v1428
  %v1650 = vunpack.c.h.b16 %v1428
  %v1651 = vunpack.c.l.b16 %v1429
  %v1652 = vunpack.c.h.b16 %v1429
  %v1653 = vunpack.c.l.b16 %v1430
  %v1654 = vunpack.c.h.b16 %v1430
  %v1655 = vunpack.c.l.b16 %v1431
  %v1656 = vunpack.c.h.b16 %v1431
  %v1657 = vunpack.c.l.b16 %v1432
  %v1658 = vunpack.c.h.b16 %v1432
  %v1659 = vunpack.c.l.b16 %v1433
  %v1660 = vunpack.c.h.b16 %v1433
  %v1661 = vunpack.c.l.b16 %v1434
  %v1662 = vunpack.c.h.b16 %v1434
  %v1663 = vunpack.c.l.b16 %v1435
  %v1664 = vunpack.c.h.b16 %v1435
  %v1665 = vunpack.c.l.b16 %v1436
  %v1666 = vunpack.c.h.b16 %v1436
  %v1667 = vunpack.c.l.b16 %v1437
  %v1668 = vunpack.c.h.b16 %v1437
  %v1669 = vunpack.c.l.b16 %v1438
  %v1670 = vunpack.c.h.b16 %v1438
  %v1671 = vunpack.c.l.b16 %v1439
  %v1672 = vunpack.c.h.b16 %v1439
  %v1673 = vunpack.c.l.b16 %v1440
  %v1674 = vunpack.c.h.b16 %v1440
  %v1675 = vpack.c.b16 %v1555, %v1547
  %v1676 = vpack.c.b16 %v1556, %v1548
  %v1677 = vpack.c.b16 %v1557, %v1549
  %v1678 = vpack.c.b16 %v1558, %v1550
  %v1679 = vpack.c.b16 %v1559, %v1551
  %v1680 = vpack.c.b16 %v1560, %v1552
  %v1681 = vpack.c.b16 %v1561, %v1553
  %v1682 = vpack.c.b16 %v1562, %v1554
  %v1683 = vpack.c.b16 %v1571, %v1563
  %v1684 = vpack.c.b16 %v1572, %v1564
  %v1685 = vpack.c.b16 %v1573, %v1565
  %v1686 = vpack.c.b16 %v1574, %v1566
  %v1687 = vpack.c.b16 %v1575, %v1567
  %v1688 = vpack.c.b16 %v1576, %v1568
  %v1689 = vpack.c.b16 %v1577, %v1569
  %v1690 = vpack.c.b16 %v1578, %v1570
  %v1691 = vpack.c.b16 %v1587, %v1579
  %v1692 = vpack.c.b16 %v1588, %v1580
  %v1693 = vpack.c.b16 %v1589, %v1581
  %v1694 = vpack.c.b16 %v1590, %v1582
  %v1695 = vpack.c.b16 %v1591, %v1583
  %v1696 = vpack.c.b16 %v1592, %v1584
  %v1697 = vpack.c.b16 %v1593, %v1585
  %v1698 = vpack.c.b16 %v1594, %v1586
  %v1699 = vpack.c.b16 %v1603, %v1595
  %v1700 = vpack.c.b16 %v1604, %v1596
  %v1701 = vpack.c.b16 %v1605, %v1597
  %v1702 = vpack.c.b16 %v1606, %v1598
  %v1703 = vpack.c.b16 %v1607, %v1599
  %v1704 = vpack.c.b16 %v1608, %v1600
  %v1705 = vpack.c.b16 %v1609, %v1601
  %v1706 = vpack.c.b16 %v1610, %v1602
  %v1707 = vpack.c.b16 %v1619, %v1611
  %v1708 = vpack.c.b16 %v1620, %v1612
  %v1709 = vpack.c.b16 %v1621, %v1613
  %v1710 = vpack.c.b16 %v1622, %v1614
  %v1711 = vpack.c.b16 %v1623, %v1615
  %v1712 = vpack.c.b16 %v1624, %v1616
  %v1713 = vpack.c.b16 %v1625, %v1617
  %v1714 = vpack.c.b16 %v1626, %v1618
  %v1715 = vpack.c.b16 %v1635, %v1627
  %v1716 = vpack.c.b16 %v1636, %v1628
  %v1717 = vpack.c.b16 %v1637, %v1629
  %v1718 = vpack.c.b16 %v1638, %v1630
  %v1719 = vpack.c.b16 %v1639, %v1631
  %v1720 = vpack.c.b16 %v1640, %v1632
  %v1721 = vpack.c.b16 %v1641, %v1633
  %v1722 = vpack.c.b16 %v1642, %v1634
  %v1723 = vpack.c.b16 %v1651, %v1643
  %v1724 = vpack.c.b16 %v1652, %v1644
  %v1725 = vpack.c.b16 %v1653, %v1645
  %v1726 = vpack.c.b16 %v1654, %v1646
  %v1727 = vpack.c.b16 %v1655, %v1647
  %v1728 = vpack.c.b16 %v1656, %v1648
  %v1729 = vpack.c.b16 %v1657, %v1649
  %v1730 = vpack.c.b16 %v1658, %v1650
  %v1731 = vpack.c.b16 %v1667, %v1659
  %v1732 = vpack.c.b16 %v1668, %v1660
  %v1733 = vpack.c.b16 %v1669, %v1661
  %v1734 = vpack.c.b16 %v1670, %v1662
  %v1735 = vpack.c.b16 %v1671, %v1663
  %v1736 = vpack.c.b16 %v1672, %v1664
  %v1737 = vpack.c.b16 %v1673, %v1665
  %v1738 = vpack.c.b16 %v1674, %v1666
  %1803 = vmatprep.subr.bf16.mxu0 %v1676
  %1804 = vmatpush1.bf16.msra.mxu0 %v1675
  %1805 = vmatprep.subr.bf16.mxu0 %v1684
  %1806 = vmatpush1.bf16.msra.mxu0 %v1683
  %1807 = vmatprep.subr.bf16.mxu0 %v1692
  %1808 = vmatpush1.bf16.msra.mxu0 %v1691
  %1809 = vmatprep.subr.bf16.mxu0 %v1700
  %1810 = vmatpush1.bf16.msra.mxu0 %v1699
  %1811 = vmatprep.subr.bf16.mxu0 %v1708
  %1812 = vmatpush1.bf16.msra.mxu0 %v1707
  %1813 = vmatprep.subr.bf16.mxu0 %v1716
  %1814 = vmatpush1.bf16.msra.mxu0 %v1715
  %1815 = vmatprep.subr.bf16.mxu0 %v1724
  %1816 = vmatpush1.bf16.msra.mxu0 %v1723
  %1817 = vmatprep.subr.bf16.mxu0 %v1732
  %1818 = vmatpush1.bf16.msra.mxu0 %v1731
  %1819 = vmatprep.subr.bf16.mxu0 0
  %1820 = vmatpush1.bf16.msra.mxu0 0
  %1821 = vmatprep.subr.bf16.mxu0 0
  %1822 = vmatpush1.bf16.msra.mxu0 0
  %1823 = vmatprep.subr.bf16.mxu0 0
  %1824 = vmatpush1.bf16.msra.mxu0 0
  %1825 = vmatprep.subr.bf16.mxu0 0
  %1826 = vmatpush1.bf16.msra.mxu0 0
  %1827 = vmatprep.subr.bf16.mxu0 0
  %1828 = vmatpush1.bf16.msra.mxu0 0
  %1829 = vmatprep.subr.bf16.mxu0 0
  %1830 = vmatpush1.bf16.msra.mxu0 0
  %1831 = vmatprep.subr.bf16.mxu0 0
  %1832 = vmatpush1.bf16.msra.mxu0 0
  %1833 = vmatprep.subr.bf16.mxu0 0
  %1834 = vmatpush1.bf16.msra.mxu0 0
  %1835 = vmatprep.mubr.bf16.mxu0 0
  %1836 = vmatmul.mubr.bf16.gmra.mrb[0].mxu0 %v139
  %v1837 = vpop.f32.mrb[0].mxu0
  %v1838 = vadd.f32 %v1446, %v1837
  %v1839 = vpop.f32.mrb[0].mxu0
  %v1840 = vadd.f32 %v1450, %v1839
  %v1841 = vpop.f32.mrb[0].mxu0
  %v1842 = vadd.f32 %v1446, %v1841
  %v1843 = vpop.f32.mrb[0].mxu0
  %v1844 = vadd.f32 %v1450, %v1843
  %1845 = vmatprep.mubr.bf16.mxu0 0
  %1846 = vmatmul.mubr.bf16.gmra.mrb[0].mxu0 %v140
  %v1847 = vpop.f32.mrb[0].mxu0
  %v1848 = vadd.f32 %v1446, %v1847
  %v1849 = vpop.f32.mrb[0].mxu0
  %v1850 = vadd.f32 %v1450, %v1849
  %v1851 = vpop.f32.mrb[0].mxu0
  %v1852 = vadd.f32 %v1446, %v1851
  %v1853 = vpop.f32.mrb[0].mxu0
  %v1854 = vadd.f32 %v1450, %v1853
  %1855 = vdwg.mxu0
  %1856 = vmatprep.subr.bf16.mxu0 %v1678
  %1857 = vmatpush1.bf16.msra.mxu0 %v1677
  %1858 = vmatprep.subr.bf16.mxu0 %v1686
  %1859 = vmatpush1.bf16.msra.mxu0 %v1685
  %1860 = vmatprep.subr.bf16.mxu0 %v1694
  %1861 = vmatpush1.bf16.msra.mxu0 %v1693
  %1862 = vmatprep.subr.bf16.mxu0 %v1702
  %1863 = vmatpush1.bf16.msra.mxu0 %v1701
  %1864 = vmatprep.subr.bf16.mxu0 %v1710
  %1865 = vmatpush1.bf16.msra.mxu0 %v1709
  %1866 = vmatprep.subr.bf16.mxu0 %v1718
  %1867 = vmatpush1.bf16.msra.mxu0 %v1717
  %1868 = vmatprep.subr.bf16.mxu0 %v1726
  %1869 = vmatpush1.bf16.msra.mxu0 %v1725
  %1870 = vmatprep.subr.bf16.mxu0 %v1734
  %1871 = vmatpush1.bf16.msra.mxu0 %v1733
  %1872 = vmatprep.subr.bf16.mxu0 0
  %1873 = vmatpush1.bf16.msra.mxu0 0
  %1874 = vmatprep.subr.bf16.mxu0 0
  %1875 = vmatpush1.bf16.msra.mxu0 0
  %1876 = vmatprep.subr.bf16.mxu0 0
  %1877 = vmatpush1.bf16.msra.mxu0 0
  %1878 = vmatprep.subr.bf16.mxu0 0
  %1879 = vmatpush1.bf16.msra.mxu0 0
  %1880 = vmatprep.subr.bf16.mxu0 0
  %1881 = vmatpush1.bf16.msra.mxu0 0
  %1882 = vmatprep.subr.bf16.mxu0 0
  %1883 = vmatpush1.bf16.msra.mxu0 0
  %1884 = vmatprep.subr.bf16.mxu0 0
  %1885 = vmatpush1.bf16.msra.mxu0 0
  %1886 = vmatprep.subr.bf16.mxu0 0
  %1887 = vmatpush1.bf16.msra.mxu0 0
  %1888 = vmatprep.mubr.bf16.mxu0 0
  %1889 = vmatmul.mubr.bf16.gmra.mrb[0].mxu0 %v139
  %v1890 = vpop.f32.mrb[0].mxu0
  %v1891 = vadd.f32 %v1454, %v1890
  %v1892 = vpop.f32.mrb[0].mxu0
  %v1893 = vadd.f32 %v1458, %v1892
  %v1894 = vpop.f32.mrb[0].mxu0
  %v1895 = vadd.f32 %v1454, %v1894
  %v1896 = vpop.f32.mrb[0].mxu0
  %v1897 = vadd.f32 %v1458, %v1896
  %1898 = vmatprep.mubr.bf16.mxu0 0
  %1899 = vmatmul.mubr.bf16.gmra.mrb[0].mxu0 %v140
  %v1900 = vpop.f32.mrb[0].mxu0
  %v1901 = vadd.f32 %v1454, %v1900
  %v1902 = vpop.f32.mrb[0].mxu0
  %v1903 = vadd.f32 %v1458, %v1902
  %v1904 = vpop.f32.mrb[0].mxu0
  %v1905 = vadd.f32 %v1454, %v1904
  %v1906 = vpop.f32.mrb[0].mxu0
  %v1907 = vadd.f32 %v1458, %v1906
  %1908 = vdwg.mxu0
  %1909 = vmatprep.subr.bf16.mxu0 %v1680
  %1910 = vmatpush1.bf16.msra.mxu0 %v1679
  %1911 = vmatprep.subr.bf16.mxu0 %v1688
  %1912 = vmatpush1.bf16.msra.mxu0 %v1687
  %1913 = vmatprep.subr.bf16.mxu0 %v1696
  %1914 = vmatpush1.bf16.msra.mxu0 %v1695
  %1915 = vmatprep.subr.bf16.mxu0 %v1704
  %1916 = vmatpush1.bf16.msra.mxu0 %v1703
  %1917 = vmatprep.subr.bf16.mxu0 %v1712
  %1918 = vmatpush1.bf16.msra.mxu0 %v1711
  %1919 = vmatprep.subr.bf16.mxu0 %v1720
  %1920 = vmatpush1.bf16.msra.mxu0 %v1719
  %1921 = vmatprep.subr.bf16.mxu0 %v1728
  %1922 = vmatpush1.bf16.msra.mxu0 %v1727
  %1923 = vmatprep.subr.bf16.mxu0 %v1736
  %1924 = vmatpush1.bf16.msra.mxu0 %v1735
  %1925 = vmatprep.subr.bf16.mxu0 0
  %1926 = vmatpush1.bf16.msra.mxu0 0
  %1927 = vmatprep.subr.bf16.mxu0 0
  %1928 = vmatpush1.bf16.msra.mxu0 0
  %1929 = vmatprep.subr.bf16.mxu0 0
  %1930 = vmatpush1.bf16.msra.mxu0 0
  %1931 = vmatprep.subr.bf16.mxu0 0
  %1932 = vmatpush1.bf16.msra.mxu0 0
  %1933 = vmatprep.subr.bf16.mxu0 0
  %1934 = vmatpush1.bf16.msra.mxu0 0
  %1935 = vmatprep.subr.bf16.mxu0 0
  %1936 = vmatpush1.bf16.msra.mxu0 0
  %1937 = vmatprep.subr.bf16.mxu0 0
  %1938 = vmatpush1.bf16.msra.mxu0 0
  %1939 = vmatprep.subr.bf16.mxu0 0
  %1940 = vmatpush1.bf16.msra.mxu0 0
  %1941 = vmatprep.mubr.bf16.mxu0 0
  %1942 = vmatmul.mubr.bf16.gmra.mrb[0].mxu0 %v139
  %v1943 = vpop.f32.mrb[0].mxu0
  %v1944 = vadd.f32 %v1462, %v1943
  %v1945 = vpop.f32.mrb[0].mxu0
  %v1946 = vadd.f32 %v1466, %v1945
  %v1947 = vpop.f32.mrb[0].mxu0
  %v1948 = vadd.f32 %v1462, %v1947
  %v1949 = vpop.f32.mrb[0].mxu0
  %v1950 = vadd.f32 %v1466, %v1949
  %1951 = vmatprep.mubr.bf16.mxu0 0
  %1952 = vmatmul.mubr.bf16.gmra.mrb[0].mxu0 %v140
  %v1953 = vpop.f32.mrb[0].mxu0
  %v1954 = vadd.f32 %v1462, %v1953
  %v1955 = vpop.f32.mrb[0].mxu0
  %v1956 = vadd.f32 %v1466, %v1955
  %v1957 = vpop.f32.mrb[0].mxu0
  %v1958 = vadd.f32 %v1462, %v1957
  %v1959 = vpop.f32.mrb[0].mxu0
  %v1960 = vadd.f32 %v1466, %v1959
  %1961 = vdwg.mxu0
  %1962 = vmatprep.subr.bf16.mxu0 %v1682
  %1963 = vmatpush1.bf16.msra.mxu0 %v1681
  %1964 = vmatprep.subr.bf16.mxu0 %v1690
  %1965 = vmatpush1.bf16.msra.mxu0 %v1689
  %1966 = vmatprep.subr.bf16.mxu0 %v1698
  %1967 = vmatpush1.bf16.msra.mxu0 %v1697
  %1968 = vmatprep.subr.bf16.mxu0 %v1706
  %1969 = vmatpush1.bf16.msra.mxu0 %v1705
  %1970 = vmatprep.subr.bf16.mxu0 %v1714
  %1971 = vmatpush1.bf16.msra.mxu0 %v1713
  %1972 = vmatprep.subr.bf16.mxu0 %v1722
  %1973 = vmatpush1.bf16.msra.mxu0 %v1721
  %1974 = vmatprep.subr.bf16.mxu0 %v1730
  %1975 = vmatpush1.bf16.msra.mxu0 %v1729
  %1976 = vmatprep.subr.bf16.mxu0 %v1738
  %1977 = vmatpush1.bf16.msra.mxu0 %v1737
  %1978 = vmatprep.subr.bf16.mxu0 0
  %1979 = vmatpush1.bf16.msra.mxu0 0
  %1980 = vmatprep.subr.bf16.mxu0 0
  %1981 = vmatpush1.bf16.msra.mxu0 0
  %1982 = vmatprep.subr.bf16.mxu0 0
  %1983 = vmatpush1.bf16.msra.mxu0 0
  %1984 = vmatprep.subr.bf16.mxu0 0
  %1985 = vmatpush1.bf16.msra.mxu0 0
  %1986 = vmatprep.subr.bf16.mxu0 0
  %1987 = vmatpush1.bf16.msra.mxu0 0
  %1988 = vmatprep.subr.bf16.mxu0 0
  %1989 = vmatpush1.bf16.msra.mxu0 0
  %1990 = vmatprep.subr.bf16.mxu0 0
  %1991 = vmatpush1.bf16.msra.mxu0 0
  %1992 = vmatprep.subr.bf16.mxu0 0
  %1993 = vmatpush1.bf16.msra.mxu0 0
  %1994 = vmatprep.mubr.bf16.mxu0 0
  %1995 = vmatmul.mubr.bf16.gmra.mrb[0].mxu0 %v139
  %v1996 = vpop.f32.mrb[0].mxu0
  %v1997 = vadd.f32 %v1470, %v1996
  %v1998 = vpop.f32.mrb[0].mxu0
  %v1999 = vadd.f32 %v1474, %v1998
  %v2000 = vpop.f32.mrb[0].mxu0
  %v2001 = vadd.f32 %v1470, %v2000
  %v2002 = vpop.f32.mrb[0].mxu0
  %v2003 = vadd.f32 %v1474, %v2002
  %2004 = vmatprep.mubr.bf16.mxu0 0
  %2005 = vmatmul.mubr.bf16.gmra.mrb[0].mxu0 %v140
  %v2006 = vpop.f32.mrb[0].mxu0
  %v2007 = vadd.f32 %v1470, %v2006
  %v2008 = vpop.f32.mrb[0].mxu0
  %v2009 = vadd.f32 %v1474, %v2008
  %v2010 = vpop.f32.mrb[0].mxu0
  %v2011 = vadd.f32 %v1470, %v2010
  %v2012 = vpop.f32.mrb[0].mxu0
  %v2013 = vadd.f32 %v1474, %v2012
  %2014 = vdwg.mxu0
  %v2015 = vmax.f32 %v1373, %v1838
  %v2016 = vmax.f32 %v1374, %v1842
  %v2017 = vmax.f32 %v1375, %v1848
  %v2018 = vmax.f32 %v1376, %v1852
  %v2019 = vmax.f32 %v2015, %v1840
  %v2020 = vmax.f32 %v2016, %v1844
  %v2021 = vmax.f32 %v2017, %v1850
  %v2022 = vmax.f32 %v2018, %v1854
  %v2023 = vmax.f32 %v2019, %v1891
  %v2024 = vmax.f32 %v2020, %v1895
  %v2025 = vmax.f32 %v2021, %v1901
  %v2026 = vmax.f32 %v2022, %v1905
  %v2027 = vmax.f32 %v2023, %v1893
  %v2028 = vmax.f32 %v2024, %v1897
  %v2029 = vmax.f32 %v2025, %v1903
  %v2030 = vmax.f32 %v2026, %v1907
  %v2031 = vmax.f32 %v2027, %v1944
  %v2032 = vmax.f32 %v2028, %v1948
  %v2033 = vmax.f32 %v2029, %v1954
  %v2034 = vmax.f32 %v2030, %v1958
  %v2035 = vmax.f32 %v2031, %v1946
  %v2036 = vmax.f32 %v2032, %v1950
  %v2037 = vmax.f32 %v2033, %v1956
  %v2038 = vmax.f32 %v2034, %v1960
  %v2039 = vmax.f32 %v2035, %v1997
  %v2040 = vmax.f32 %v2036, %v2001
  %v2041 = vmax.f32 %v2037, %v2007
  %v2042 = vmax.f32 %v2038, %v2011
  %v2043 = vmax.f32 %v2039, %v1999
  %v2044 = vmax.f32 %v2040, %v2003
  %v2045 = vmax.f32 %v2041, %v2009
  %v2046 = vmax.f32 %v2042, %v2013
  %v2047 = vld [vmem:[%s1 + $0x60] sm:$0xff]
  %v2048 = vld [vmem:[%s1 + $0x68] sm:$0xff]
  %v2049 = vld [vmem:[%s1 + $0x70] sm:$0xff]
  %v2050 = vld [vmem:[%s1 + $0x78] sm:$0xff]
  %v2051 = vld [vmem:[%s1 + $0xe8] sm:$0xff]
  %v2052 = vld [vmem:[%s1 + $0xf0] sm:$0xff]
  %v2053 = vld [vmem:[%s1 + $0xf8] sm:$0xff]
  %v2054 = vld [vmem:[%s1 + $0x100] sm:$0xff]
  %v2055 = vld [vmem:[%s1 + $0x170] sm:$0xff]
  %v2056 = vld [vmem:[%s1 + $0x178] sm:$0xff]
  %v2057 = vld [vmem:[%s1 + $0x180] sm:$0xff]
  %v2058 = vld [vmem:[%s1 + $0x188] sm:$0xff]
  %v2059 = vld [vmem:[%s1 + $0x1f8] sm:$0xff]
  %v2060 = vld [vmem:[%s1 + $0x200] sm:$0xff]
  %v2061 = vld [vmem:[%s1 + $0x208] sm:$0xff]
  %v2062 = vld [vmem:[%s1 + $0x210] sm:$0xff]
  %v2063 = vld [vmem:[%s1 + $0x280] sm:$0xff]
  %v2064 = vld [vmem:[%s1 + $0x288] sm:$0xff]
  %v2065 = vld [vmem:[%s1 + $0x290] sm:$0xff]
  %v2066 = vld [vmem:[%s1 + $0x298] sm:$0xff]
  %v2067 = vld [vmem:[%s1 + $0x308] sm:$0xff]
  %v2068 = vld [vmem:[%s1 + $0x310] sm:$0xff]
  %v2069 = vld [vmem:[%s1 + $0x318] sm:$0xff]
  %v2070 = vld [vmem:[%s1 + $0x320] sm:$0xff]
  %v2071 = vld [vmem:[%s1 + $0x390] sm:$0xff]
  %v2072 = vld [vmem:[%s1 + $0x398] sm:$0xff]
  %v2073 = vld [vmem:[%s1 + $0x3a0] sm:$0xff]
  %v2074 = vld [vmem:[%s1 + $0x3a8] sm:$0xff]
  %v2075 = vld [vmem:[%s1 + $0x418] sm:$0xff]
  %v2076 = vld [vmem:[%s1 + $0x420] sm:$0xff]
  %v2077 = vld [vmem:[%s1 + $0x428] sm:$0xff]
  %v2078 = vld [vmem:[%s1 + $0x430] sm:$0xff]
  %v2079 = vld [vmem:[%s1 + $0x4a0] sm:$0xff]
  %v2080 = vld [vmem:[%s1 + $0x4a8] sm:$0xff]
  %v2081 = vld [vmem:[%s1 + $0x4b0] sm:$0xff]
  %v2082 = vld [vmem:[%s1 + $0x4b8] sm:$0xff]
  %v2083 = vld [vmem:[%s1 + $0x528] sm:$0xff]
  %v2084 = vld [vmem:[%s1 + $0x530] sm:$0xff]
  %v2085 = vld [vmem:[%s1 + $0x538] sm:$0xff]
  %v2086 = vld [vmem:[%s1 + $0x540] sm:$0xff]
  %v2087 = vld [vmem:[%s1 + $0x5b0] sm:$0xff]
  %v2088 = vld [vmem:[%s1 + $0x5b8] sm:$0xff]
  %v2089 = vld [vmem:[%s1 + $0x5c0] sm:$0xff]
  %v2090 = vld [vmem:[%s1 + $0x5c8] sm:$0xff]
  %v2091 = vld [vmem:[%s1 + $0x638] sm:$0xff]
  %v2092 = vld [vmem:[%s1 + $0x640] sm:$0xff]
  %v2093 = vld [vmem:[%s1 + $0x648] sm:$0xff]
  %v2094 = vld [vmem:[%s1 + $0x650] sm:$0xff]
  %v2095 = vld [vmem:[%s1 + $0x6c0] sm:$0xff]
  %v2096 = vld [vmem:[%s1 + $0x6c8] sm:$0xff]
  %v2097 = vld [vmem:[%s1 + $0x6d0] sm:$0xff]
  %v2098 = vld [vmem:[%s1 + $0x6d8] sm:$0xff]
  %v2099 = vld [vmem:[%s1 + $0x748] sm:$0xff]
  %v2100 = vld [vmem:[%s1 + $0x750] sm:$0xff]
  %v2101 = vld [vmem:[%s1 + $0x758] sm:$0xff]
  %v2102 = vld [vmem:[%s1 + $0x760] sm:$0xff]
  %v2103 = vld [vmem:[%s1 + $0x7d0] sm:$0xff]
  %v2104 = vld [vmem:[%s1 + $0x7d8] sm:$0xff]
  %v2105 = vld [vmem:[%s1 + $0x7e0] sm:$0xff]
  %v2106 = vld [vmem:[%s1 + $0x7e8] sm:$0xff]
  %v2107 = vld [vmem:[%s1 + $0x858] sm:$0xff]
  %v2108 = vld [vmem:[%s1 + $0x860] sm:$0xff]
  %v2109 = vld [vmem:[%s1 + $0x868] sm:$0xff]
  %v2110 = vld [vmem:[%s1 + $0x870] sm:$0xff]
  %v2111 = vld [vmem:[%s2 + $0x18] sm:$0xff]
  %v2113 = vlaneseq
  %v2114 = vshrl.u32 %v2113, 7
  %v2115 = vsub.s32 0, %v2114
  %v2116 = vrot.slane %v2111, %v2115
  %v2117 = vlaneseq
  %v2118 = vshrl.u32 %v2117, 7
  %v2119 = vsub.s32 1, %v2118
  %v2120 = vrot.slane %v2111, %v2119
  %v2121 = vlaneseq
  %v2122 = vshrl.u32 %v2121, 7
  %v2123 = vsub.s32 2, %v2122
  %v2124 = vrot.slane %v2111, %v2123
  %v2125 = vlaneseq
  %v2126 = vshrl.u32 %v2125, 7
  %v2127 = vsub.s32 3, %v2126
  %v2128 = vrot.slane %v2111, %v2127
  %v2129 = vlaneseq
  %v2130 = vshrl.u32 %v2129, 7
  %v2131 = vsub.s32 4, %v2130
  %v2132 = vrot.slane %v2111, %v2131
  %v2133 = vlaneseq
  %v2134 = vshrl.u32 %v2133, 7
  %v2135 = vsub.s32 5, %v2134
  %v2136 = vrot.slane %v2111, %v2135
  %v2137 = vlaneseq
  %v2138 = vshrl.u32 %v2137, 7
  %v2139 = vsub.s32 6, %v2138
  %v2140 = vrot.slane %v2111, %v2139
  %v2141 = vlaneseq
  %v2142 = vshrl.u32 %v2141, 7
  %v2143 = vsub.s32 7, %v2142
  %v2144 = vrot.slane %v2111, %v2143
  %v2217 = vunpack.c.l.b16 %v2047
  %v2218 = vunpack.c.h.b16 %v2047
  %v2219 = vunpack.c.l.b16 %v2048
  %v2220 = vunpack.c.h.b16 %v2048
  %v2221 = vunpack.c.l.b16 %v2049
  %v2222 = vunpack.c.h.b16 %v2049
  %v2223 = vunpack.c.l.b16 %v2050
  %v2224 = vunpack.c.h.b16 %v2050
  %v2225 = vunpack.c.l.b16 %v2051
  %v2226 = vunpack.c.h.b16 %v2051
  %v2227 = vunpack.c.l.b16 %v2052
  %v2228 = vunpack.c.h.b16 %v2052
  %v2229 = vunpack.c.l.b16 %v2053
  %v2230 = vunpack.c.h.b16 %v2053
  %v2231 = vunpack.c.l.b16 %v2054
  %v2232 = vunpack.c.h.b16 %v2054
  %v2233 = vunpack.c.l.b16 %v2055
  %v2234 = vunpack.c.h.b16 %v2055
  %v2235 = vunpack.c.l.b16 %v2056
  %v2236 = vunpack.c.h.b16 %v2056
  %v2237 = vunpack.c.l.b16 %v2057
  %v2238 = vunpack.c.h.b16 %v2057
  %v2239 = vunpack.c.l.b16 %v2058
  %v2240 = vunpack.c.h.b16 %v2058
  %v2241 = vunpack.c.l.b16 %v2059
  %v2242 = vunpack.c.h.b16 %v2059
  %v2243 = vunpack.c.l.b16 %v2060
  %v2244 = vunpack.c.h.b16 %v2060
  %v2245 = vunpack.c.l.b16 %v2061
  %v2246 = vunpack.c.h.b16 %v2061
  %v2247 = vunpack.c.l.b16 %v2062
  %v2248 = vunpack.c.h.b16 %v2062
  %v2249 = vunpack.c.l.b16 %v2063
  %v2250 = vunpack.c.h.b16 %v2063
  %v2251 = vunpack.c.l.b16 %v2064
  %v2252 = vunpack.c.h.b16 %v2064
  %v2253 = vunpack.c.l.b16 %v2065
  %v2254 = vunpack.c.h.b16 %v2065
  %v2255 = vunpack.c.l.b16 %v2066
  %v2256 = vunpack.c.h.b16 %v2066
  %v2257 = vunpack.c.l.b16 %v2067
  %v2258 = vunpack.c.h.b16 %v2067
  %v2259 = vunpack.c.l.b16 %v2068
  %v2260 = vunpack.c.h.b16 %v2068
  %v2261 = vunpack.c.l.b16 %v2069
  %v2262 = vunpack.c.h.b16 %v2069
  %v2263 = vunpack.c.l.b16 %v2070
  %v2264 = vunpack.c.h.b16 %v2070
  %v2265 = vunpack.c.l.b16 %v2071
  %v2266 = vunpack.c.h.b16 %v2071
  %v2267 = vunpack.c.l.b16 %v2072
  %v2268 = vunpack.c.h.b16 %v2072
  %v2269 = vunpack.c.l.b16 %v2073
  %v2270 = vunpack.c.h.b16 %v2073
  %v2271 = vunpack.c.l.b16 %v2074
  %v2272 = vunpack.c.h.b16 %v2074
  %v2273 = vunpack.c.l.b16 %v2075
  %v2274 = vunpack.c.h.b16 %v2075
  %v2275 = vunpack.c.l.b16 %v2076
  %v2276 = vunpack.c.h.b16 %v2076
  %v2277 = vunpack.c.l.b16 %v2077
  %v2278 = vunpack.c.h.b16 %v2077
  %v2279 = vunpack.c.l.b16 %v2078
  %v2280 = vunpack.c.h.b16 %v2078
  %v2281 = vunpack.c.l.b16 %v2079
  %v2282 = vunpack.c.h.b16 %v2079
  %v2283 = vunpack.c.l.b16 %v2080
  %v2284 = vunpack.c.h.b16 %v2080
  %v2285 = vunpack.c.l.b16 %v2081
  %v2286 = vunpack.c.h.b16 %v2081
  %v2287 = vunpack.c.l.b16 %v2082
  %v2288 = vunpack.c.h.b16 %v2082
  %v2289 = vunpack.c.l.b16 %v2083
  %v2290 = vunpack.c.h.b16 %v2083
  %v2291 = vunpack.c.l.b16 %v2084
  %v2292 = vunpack.c.h.b16 %v2084
  %v2293 = vunpack.c.l.b16 %v2085
  %v2294 = vunpack.c.h.b16 %v2085
  %v2295 = vunpack.c.l.b16 %v2086
  %v2296 = vunpack.c.h.b16 %v2086
  %v2297 = vunpack.c.l.b16 %v2087
  %v2298 = vunpack.c.h.b16 %v2087
  %v2299 = vunpack.c.l.b16 %v2088
  %v2300 = vunpack.c.h.b16 %v2088
  %v2301 = vunpack.c.l.b16 %v2089
  %v2302 = vunpack.c.h.b16 %v2089
  %v2303 = vunpack.c.l.b16 %v2090
  %v2304 = vunpack.c.h.b16 %v2090
  %v2305 = vunpack.c.l.b16 %v2091
  %v2306 = vunpack.c.h.b16 %v2091
  %v2307 = vunpack.c.l.b16 %v2092
  %v2308 = vunpack.c.h.b16 %v2092
  %v2309 = vunpack.c.l.b16 %v2093
  %v2310 = vunpack.c.h.b16 %v2093
  %v2311 = vunpack.c.l.b16 %v2094
  %v2312 = vunpack.c.h.b16 %v2094
  %v2313 = vunpack.c.l.b16 %v2095
  %v2314 = vunpack.c.h.b16 %v2095
  %v2315 = vunpack.c.l.b16 %v2096
  %v2316 = vunpack.c.h.b16 %v2096
  %v2317 = vunpack.c.l.b16 %v2097
  %v2318 = vunpack.c.h.b16 %v2097
  %v2319 = vunpack.c.l.b16 %v2098
  %v2320 = vunpack.c.h.b16 %v2098
  %v2321 = vunpack.c.l.b16 %v2099
  %v2322 = vunpack.c.h.b16 %v2099
  %v2323 = vunpack.c.l.b16 %v2100
  %v2324 = vunpack.c.h.b16 %v2100
  %v2325 = vunpack.c.l.b16 %v2101
  %v2326 = vunpack.c.h.b16 %v2101
  %v2327 = vunpack.c.l.b16 %v2102
  %v2328 = vunpack.c.h.b16 %v2102
  %v2329 = vunpack.c.l.b16 %v2103
  %v2330 = vunpack.c.h.b16 %v2103
  %v2331 = vunpack.c.l.b16 %v2104
  %v2332 = vunpack.c.h.b16 %v2104
  %v2333 = vunpack.c.l.b16 %v2105
  %v2334 = vunpack.c.h.b16 %v2105
  %v2335 = vunpack.c.l.b16 %v2106
  %v2336 = vunpack.c.h.b16 %v2106
  %v2337 = vunpack.c.l.b16 %v2107
  %v2338 = vunpack.c.h.b16 %v2107
  %v2339 = vunpack.c.l.b16 %v2108
  %v2340 = vunpack.c.h.b16 %v2108
  %v2341 = vunpack.c.l.b16 %v2109
  %v2342 = vunpack.c.h.b16 %v2109
  %v2343 = vunpack.c.l.b16 %v2110
  %v2344 = vunpack.c.h.b16 %v2110
  %v2345 = vpack.c.b16 %v2225, %v2217
  %v2346 = vpack.c.b16 %v2226, %v2218
  %v2347 = vpack.c.b16 %v2227, %v2219
  %v2348 = vpack.c.b16 %v2228, %v2220
  %v2349 = vpack.c.b16 %v2229, %v2221
  %v2350 = vpack.c.b16 %v2230, %v2222
  %v2351 = vpack.c.b16 %v2231, %v2223
  %v2352 = vpack.c.b16 %v2232, %v2224
  %v2353 = vpack.c.b16 %v2241, %v2233
  %v2354 = vpack.c.b16 %v2242, %v2234
  %v2355 = vpack.c.b16 %v2243, %v2235
  %v2356 = vpack.c.b16 %v2244, %v2236
  %v2357 = vpack.c.b16 %v2245, %v2237
  %v2358 = vpack.c.b16 %v2246, %v2238
  %v2359 = vpack.c.b16 %v2247, %v2239
  %v2360 = vpack.c.b16 %v2248, %v2240
  %v2361 = vpack.c.b16 %v2257, %v2249
  %v2362 = vpack.c.b16 %v2258, %v2250
  %v2363 = vpack.c.b16 %v2259, %v2251
  %v2364 = vpack.c.b16 %v2260, %v2252
  %v2365 = vpack.c.b16 %v2261, %v2253
  %v2366 = vpack.c.b16 %v2262, %v2254
  %v2367 = vpack.c.b16 %v2263, %v2255
  %v2368 = vpack.c.b16 %v2264, %v2256
  %v2369 = vpack.c.b16 %v2273, %v2265
  %v2370 = vpack.c.b16 %v2274, %v2266
  %v2371 = vpack.c.b16 %v2275, %v2267
  %v2372 = vpack.c.b16 %v2276, %v2268
  %v2373 = vpack.c.b16 %v2277, %v2269
  %v2374 = vpack.c.b16 %v2278, %v2270
  %v2375 = vpack.c.b16 %v2279, %v2271
  %v2376 = vpack.c.b16 %v2280, %v2272
  %v2377 = vpack.c.b16 %v2289, %v2281
  %v2378 = vpack.c.b16 %v2290, %v2282
  %v2379 = vpack.c.b16 %v2291, %v2283
  %v2380 = vpack.c.b16 %v2292, %v2284
  %v2381 = vpack.c.b16 %v2293, %v2285
  %v2382 = vpack.c.b16 %v2294, %v2286
  %v2383 = vpack.c.b16 %v2295, %v2287
  %v2384 = vpack.c.b16 %v2296, %v2288
  %v2385 = vpack.c.b16 %v2305, %v2297
  %v2386 = vpack.c.b16 %v2306, %v2298
  %v2387 = vpack.c.b16 %v2307, %v2299
  %v2388 = vpack.c.b16 %v2308, %v2300
  %v2389 = vpack.c.b16 %v2309, %v2301
  %v2390 = vpack.c.b16 %v2310, %v2302
  %v2391 = vpack.c.b16 %v2311, %v2303
  %v2392 = vpack.c.b16 %v2312, %v2304
  %v2393 = vpack.c.b16 %v2321, %v2313
  %v2394 = vpack.c.b16 %v2322, %v2314
  %v2395 = vpack.c.b16 %v2323, %v2315
  %v2396 = vpack.c.b16 %v2324, %v2316
  %v2397 = vpack.c.b16 %v2325, %v2317
  %v2398 = vpack.c.b16 %v2326, %v2318
  %v2399 = vpack.c.b16 %v2327, %v2319
  %v2400 = vpack.c.b16 %v2328, %v2320
  %v2401 = vpack.c.b16 %v2337, %v2329
  %v2402 = vpack.c.b16 %v2338, %v2330
  %v2403 = vpack.c.b16 %v2339, %v2331
  %v2404 = vpack.c.b16 %v2340, %v2332
  %v2405 = vpack.c.b16 %v2341, %v2333
  %v2406 = vpack.c.b16 %v2342, %v2334
  %v2407 = vpack.c.b16 %v2343, %v2335
  %v2408 = vpack.c.b16 %v2344, %v2336
  %2473 = vmatprep.subr.bf16.mxu0 %v2346
  %2474 = vmatpush1.bf16.msra.mxu0 %v2345
  %2475 = vmatprep.subr.bf16.mxu0 %v2354
  %2476 = vmatpush1.bf16.msra.mxu0 %v2353
  %2477 = vmatprep.subr.bf16.mxu0 %v2362
  %2478 = vmatpush1.bf16.msra.mxu0 %v2361
  %2479 = vmatprep.subr.bf16.mxu0 %v2370
  %2480 = vmatpush1.bf16.msra.mxu0 %v2369
  %2481 = vmatprep.subr.bf16.mxu0 %v2378
  %2482 = vmatpush1.bf16.msra.mxu0 %v2377
  %2483 = vmatprep.subr.bf16.mxu0 %v2386
  %2484 = vmatpush1.bf16.msra.mxu0 %v2385
  %2485 = vmatprep.subr.bf16.mxu0 %v2394
  %2486 = vmatpush1.bf16.msra.mxu0 %v2393
  %2487 = vmatprep.subr.bf16.mxu0 %v2402
  %2488 = vmatpush1.bf16.msra.mxu0 %v2401
  %2489 = vmatprep.subr.bf16.mxu0 0
  %2490 = vmatpush1.bf16.msra.mxu0 0
  %2491 = vmatprep.subr.bf16.mxu0 0
  %2492 = vmatpush1.bf16.msra.mxu0 0
  %2493 = vmatprep.subr.bf16.mxu0 0
  %2494 = vmatpush1.bf16.msra.mxu0 0
  %2495 = vmatprep.subr.bf16.mxu0 0
  %2496 = vmatpush1.bf16.msra.mxu0 0
  %2497 = vmatprep.subr.bf16.mxu0 0
  %2498 = vmatpush1.bf16.msra.mxu0 0
  %2499 = vmatprep.subr.bf16.mxu0 0
  %2500 = vmatpush1.bf16.msra.mxu0 0
  %2501 = vmatprep.subr.bf16.mxu0 0
  %2502 = vmatpush1.bf16.msra.mxu0 0
  %2503 = vmatprep.subr.bf16.mxu0 0
  %2504 = vmatpush1.bf16.msra.mxu0 0
  %2505 = vmatprep.mubr.bf16.mxu0 0
  %2506 = vmatmul.mubr.bf16.gmra.mrb[0].mxu0 %v139
  %v2507 = vpop.f32.mrb[0].mxu0
  %v2508 = vadd.f32 %v2116, %v2507
  %v2509 = vpop.f32.mrb[0].mxu0
  %v2510 = vadd.f32 %v2120, %v2509
  %v2511 = vpop.f32.mrb[0].mxu0
  %v2512 = vadd.f32 %v2116, %v2511
  %v2513 = vpop.f32.mrb[0].mxu0
  %v2514 = vadd.f32 %v2120, %v2513
  %2515 = vmatprep.mubr.bf16.mxu0 0
  %2516 = vmatmul.mubr.bf16.gmra.mrb[0].mxu0 %v140
  %v2517 = vpop.f32.mrb[0].mxu0
  %v2518 = vadd.f32 %v2116, %v2517
  %v2519 = vpop.f32.mrb[0].mxu0
  %v2520 = vadd.f32 %v2120, %v2519
  %v2521 = vpop.f32.mrb[0].mxu0
  %v2522 = vadd.f32 %v2116, %v2521
  %v2523 = vpop.f32.mrb[0].mxu0
  %v2524 = vadd.f32 %v2120, %v2523
  %2525 = vdwg.mxu0
  %2526 = vmatprep.subr.bf16.mxu0 %v2348
  %2527 = vmatpush1.bf16.msra.mxu0 %v2347
  %2528 = vmatprep.subr.bf16.mxu0 %v2356
  %2529 = vmatpush1.bf16.msra.mxu0 %v2355
  %2530 = vmatprep.subr.bf16.mxu0 %v2364
  %2531 = vmatpush1.bf16.msra.mxu0 %v2363
  %2532 = vmatprep.subr.bf16.mxu0 %v2372
  %2533 = vmatpush1.bf16.msra.mxu0 %v2371
  %2534 = vmatprep.subr.bf16.mxu0 %v2380
  %2535 = vmatpush1.bf16.msra.mxu0 %v2379
  %2536 = vmatprep.subr.bf16.mxu0 %v2388
  %2537 = vmatpush1.bf16.msra.mxu0 %v2387
  %2538 = vmatprep.subr.bf16.mxu0 %v2396
  %2539 = vmatpush1.bf16.msra.mxu0 %v2395
  %2540 = vmatprep.subr.bf16.mxu0 %v2404
  %2541 = vmatpush1.bf16.msra.mxu0 %v2403
  %2542 = vmatprep.subr.bf16.mxu0 0
  %2543 = vmatpush1.bf16.msra.mxu0 0
  %2544 = vmatprep.subr.bf16.mxu0 0
  %2545 = vmatpush1.bf16.msra.mxu0 0
  %2546 = vmatprep.subr.bf16.mxu0 0
  %2547 = vmatpush1.bf16.msra.mxu0 0
  %2548 = vmatprep.subr.bf16.mxu0 0
  %2549 = vmatpush1.bf16.msra.mxu0 0
  %2550 = vmatprep.subr.bf16.mxu0 0
  %2551 = vmatpush1.bf16.msra.mxu0 0
  %2552 = vmatprep.subr.bf16.mxu0 0
  %2553 = vmatpush1.bf16.msra.mxu0 0
  %2554 = vmatprep.subr.bf16.mxu0 0
  %2555 = vmatpush1.bf16.msra.mxu0 0
  %2556 = vmatprep.subr.bf16.mxu0 0
  %2557 = vmatpush1.bf16.msra.mxu0 0
  %2558 = vmatprep.mubr.bf16.mxu0 0
  %2559 = vmatmul.mubr.bf16.gmra.mrb[0].mxu0 %v139
  %v2560 = vpop.f32.mrb[0].mxu0
  %v2561 = vadd.f32 %v2124, %v2560
  %v2562 = vpop.f32.mrb[0].mxu0
  %v2563 = vadd.f32 %v2128, %v2562
  %v2564 = vpop.f32.mrb[0].mxu0
  %v2565 = vadd.f32 %v2124, %v2564
  %v2566 = vpop.f32.mrb[0].mxu0
  %v2567 = vadd.f32 %v2128, %v2566
  %2568 = vmatprep.mubr.bf16.mxu0 0
  %2569 = vmatmul.mubr.bf16.gmra.mrb[0].mxu0 %v140
  %v2570 = vpop.f32.mrb[0].mxu0
  %v2571 = vadd.f32 %v2124, %v2570
  %v2572 = vpop.f32.mrb[0].mxu0
  %v2573 = vadd.f32 %v2128, %v2572
  %v2574 = vpop.f32.mrb[0].mxu0
  %v2575 = vadd.f32 %v2124, %v2574
  %v2576 = vpop.f32.mrb[0].mxu0
  %v2577 = vadd.f32 %v2128, %v2576
  %2578 = vdwg.mxu0
  %2579 = vmatprep.subr.bf16.mxu0 %v2350
  %2580 = vmatpush1.bf16.msra.mxu0 %v2349
  %2581 = vmatprep.subr.bf16.mxu0 %v2358
  %2582 = vmatpush1.bf16.msra.mxu0 %v2357
  %2583 = vmatprep.subr.bf16.mxu0 %v2366
  %2584 = vmatpush1.bf16.msra.mxu0 %v2365
  %2585 = vmatprep.subr.bf16.mxu0 %v2374
  %2586 = vmatpush1.bf16.msra.mxu0 %v2373
  %2587 = vmatprep.subr.bf16.mxu0 %v2382
  %2588 = vmatpush1.bf16.msra.mxu0 %v2381
  %2589 = vmatprep.subr.bf16.mxu0 %v2390
  %2590 = vmatpush1.bf16.msra.mxu0 %v2389
  %2591 = vmatprep.subr.bf16.mxu0 %v2398
  %2592 = vmatpush1.bf16.msra.mxu0 %v2397
  %2593 = vmatprep.subr.bf16.mxu0 %v2406
  %2594 = vmatpush1.bf16.msra.mxu0 %v2405
  %2595 = vmatprep.subr.bf16.mxu0 0
  %2596 = vmatpush1.bf16.msra.mxu0 0
  %2597 = vmatprep.subr.bf16.mxu0 0
  %2598 = vmatpush1.bf16.msra.mxu0 0
  %2599 = vmatprep.subr.bf16.mxu0 0
  %2600 = vmatpush1.bf16.msra.mxu0 0
  %2601 = vmatprep.subr.bf16.mxu0 0
  %2602 = vmatpush1.bf16.msra.mxu0 0
  %2603 = vmatprep.subr.bf16.mxu0 0
  %2604 = vmatpush1.bf16.msra.mxu0 0
  %2605 = vmatprep.subr.bf16.mxu0 0
  %2606 = vmatpush1.bf16.msra.mxu0 0
  %2607 = vmatprep.subr.bf16.mxu0 0
  %2608 = vmatpush1.bf16.msra.mxu0 0
  %2609 = vmatprep.subr.bf16.mxu0 0
  %2610 = vmatpush1.bf16.msra.mxu0 0
  %2611 = vmatprep.mubr.bf16.mxu0 0
  %2612 = vmatmul.mubr.bf16.gmra.mrb[0].mxu0 %v139
  %v2613 = vpop.f32.mrb[0].mxu0
  %v2614 = vadd.f32 %v2132, %v2613
  %v2615 = vpop.f32.mrb[0].mxu0
  %v2616 = vadd.f32 %v2136, %v2615
  %v2617 = vpop.f32.mrb[0].mxu0
  %v2618 = vadd.f32 %v2132, %v2617
  %v2619 = vpop.f32.mrb[0].mxu0
  %v2620 = vadd.f32 %v2136, %v2619
  %2621 = vmatprep.mubr.bf16.mxu0 0
  %2622 = vmatmul.mubr.bf16.gmra.mrb[0].mxu0 %v140
  %v2623 = vpop.f32.mrb[0].mxu0
  %v2624 = vadd.f32 %v2132, %v2623
  %v2625 = vpop.f32.mrb[0].mxu0
  %v2626 = vadd.f32 %v2136, %v2625
  %v2627 = vpop.f32.mrb[0].mxu0
  %v2628 = vadd.f32 %v2132, %v2627
  %v2629 = vpop.f32.mrb[0].mxu0
  %v2630 = vadd.f32 %v2136, %v2629
  %2631 = vdwg.mxu0
  %2632 = vmatprep.subr.bf16.mxu0 %v2352
  %2633 = vmatpush1.bf16.msra.mxu0 %v2351
  %2634 = vmatprep.subr.bf16.mxu0 %v2360
  %2635 = vmatpush1.bf16.msra.mxu0 %v2359
  %2636 = vmatprep.subr.bf16.mxu0 %v2368
  %2637 = vmatpush1.bf16.msra.mxu0 %v2367
  %2638 = vmatprep.subr.bf16.mxu0 %v2376
  %2639 = vmatpush1.bf16.msra.mxu0 %v2375
  %2640 = vmatprep.subr.bf16.mxu0 %v2384
  %2641 = vmatpush1.bf16.msra.mxu0 %v2383
  %2642 = vmatprep.subr.bf16.mxu0 %v2392
  %2643 = vmatpush1.bf16.msra.mxu0 %v2391
  %2644 = vmatprep.subr.bf16.mxu0 %v2400
  %2645 = vmatpush1.bf16.msra.mxu0 %v2399
  %2646 = vmatprep.subr.bf16.mxu0 %v2408
  %2647 = vmatpush1.bf16.msra.mxu0 %v2407
  %2648 = vmatprep.subr.bf16.mxu0 0
  %2649 = vmatpush1.bf16.msra.mxu0 0
  %2650 = vmatprep.subr.bf16.mxu0 0
  %2651 = vmatpush1.bf16.msra.mxu0 0
  %2652 = vmatprep.subr.bf16.mxu0 0
  %2653 = vmatpush1.bf16.msra.mxu0 0
  %2654 = vmatprep.subr.bf16.mxu0 0
  %2655 = vmatpush1.bf16.msra.mxu0 0
  %2656 = vmatprep.subr.bf16.mxu0 0
  %2657 = vmatpush1.bf16.msra.mxu0 0
  %2658 = vmatprep.subr.bf16.mxu0 0
  %2659 = vmatpush1.bf16.msra.mxu0 0
  %2660 = vmatprep.subr.bf16.mxu0 0
  %2661 = vmatpush1.bf16.msra.mxu0 0
  %2662 = vmatprep.subr.bf16.mxu0 0
  %2663 = vmatpush1.bf16.msra.mxu0 0
  %2664 = vmatprep.mubr.bf16.mxu0 0
  %2665 = vmatmul.mubr.bf16.gmra.mrb[0].mxu0 %v139
  %v2666 = vpop.f32.mrb[0].mxu0
  %v2667 = vadd.f32 %v2140, %v2666
  %v2668 = vpop.f32.mrb[0].mxu0
  %v2669 = vadd.f32 %v2144, %v2668
  %v2670 = vpop.f32.mrb[0].mxu0
  %v2671 = vadd.f32 %v2140, %v2670
  %v2672 = vpop.f32.mrb[0].mxu0
  %v2673 = vadd.f32 %v2144, %v2672
  %2674 = vmatprep.mubr.bf16.mxu0 0
  %2675 = vmatmul.mubr.bf16.gmra.mrb[0].mxu0 %v140
  %v2676 = vpop.f32.mrb[0].mxu0
  %v2677 = vadd.f32 %v2140, %v2676
  %v2678 = vpop.f32.mrb[0].mxu0
  %v2679 = vadd.f32 %v2144, %v2678
  %v2680 = vpop.f32.mrb[0].mxu0
  %v2681 = vadd.f32 %v2140, %v2680
  %v2682 = vpop.f32.mrb[0].mxu0
  %v2683 = vadd.f32 %v2144, %v2682
  %2684 = vdwg.mxu0
  %v2685 = vmax.f32 %v2043, %v2508
  %v2686 = vmax.f32 %v2044, %v2512
  %v2687 = vmax.f32 %v2045, %v2518
  %v2688 = vmax.f32 %v2046, %v2522
  %v2689 = vmax.f32 %v2685, %v2510
  %v2690 = vmax.f32 %v2686, %v2514
  %v2691 = vmax.f32 %v2687, %v2520
  %v2692 = vmax.f32 %v2688, %v2524
  %v2693 = vmax.f32 %v2689, %v2561
  %v2694 = vmax.f32 %v2690, %v2565
  %v2695 = vmax.f32 %v2691, %v2571
  %v2696 = vmax.f32 %v2692, %v2575
  %v2697 = vmax.f32 %v2693, %v2563
  %v2698 = vmax.f32 %v2694, %v2567
  %v2699 = vmax.f32 %v2695, %v2573
  %v2700 = vmax.f32 %v2696, %v2577
  %v2701 = vmax.f32 %v2697, %v2614
  %v2702 = vmax.f32 %v2698, %v2618
  %v2703 = vmax.f32 %v2699, %v2624
  %v2704 = vmax.f32 %v2700, %v2628
  %v2705 = vmax.f32 %v2701, %v2616
  %v2706 = vmax.f32 %v2702, %v2620
  %v2707 = vmax.f32 %v2703, %v2626
  %v2708 = vmax.f32 %v2704, %v2630
  %v2709 = vmax.f32 %v2705, %v2667
  %v2710 = vmax.f32 %v2706, %v2671
  %v2711 = vmax.f32 %v2707, %v2677
  %v2712 = vmax.f32 %v2708, %v2681
  %v2713 = vmax.f32 %v2709, %v2669
  %v2714 = vmax.f32 %v2710, %v2673
  %v2715 = vmax.f32 %v2711, %v2679
  %v2716 = vmax.f32 %v2712, %v2683
  %v2717 = vld [vmem:[%s1 + $0x80] sm:$0xff]
  %v2718 = vld [vmem:[%s1 + $0x108] sm:$0xff]
  %v2719 = vld [vmem:[%s1 + $0x190] sm:$0xff]
  %v2720 = vld [vmem:[%s1 + $0x218] sm:$0xff]
  %v2721 = vld [vmem:[%s1 + $0x2a0] sm:$0xff]
  %v2722 = vld [vmem:[%s1 + $0x328] sm:$0xff]
  %v2723 = vld [vmem:[%s1 + $0x3b0] sm:$0xff]
  %v2724 = vld [vmem:[%s1 + $0x438] sm:$0xff]
  %v2725 = vld [vmem:[%s1 + $0x4c0] sm:$0xff]
  %v2726 = vld [vmem:[%s1 + $0x548] sm:$0xff]
  %v2727 = vld [vmem:[%s1 + $0x5d0] sm:$0xff]
  %v2728 = vld [vmem:[%s1 + $0x658] sm:$0xff]
  %v2729 = vld [vmem:[%s1 + $0x6e0] sm:$0xff]
  %v2730 = vld [vmem:[%s1 + $0x768] sm:$0xff]
  %v2731 = vld [vmem:[%s1 + $0x7f0] sm:$0xff]
  %v2732 = vld [vmem:[%s1 + $0x878] sm:$0xff]
  %v2733 = vld [vmem:[%s2 + $0x20] sm:$0x3]
  %v2735 = vlaneseq
  %v2736 = vshrl.u32 %v2735, 7
  %v2737 = vsub.s32 0, %v2736
  %v2738 = vrot.slane %v2733, %v2737
  %v2739 = vlaneseq
  %v2740 = vshrl.u32 %v2739, 7
  %v2741 = vsub.s32 1, %v2740
  %v2742 = vrot.slane %v2733, %v2741
  %v2761 = vunpack.c.l.b16 %v2717
  %v2762 = vunpack.c.h.b16 %v2717
  %v2763 = vunpack.c.l.b16 %v2718
  %v2764 = vunpack.c.h.b16 %v2718
  %v2765 = vunpack.c.l.b16 %v2719
  %v2766 = vunpack.c.h.b16 %v2719
  %v2767 = vunpack.c.l.b16 %v2720
  %v2768 = vunpack.c.h.b16 %v2720
  %v2769 = vunpack.c.l.b16 %v2721
  %v2770 = vunpack.c.h.b16 %v2721
  %v2771 = vunpack.c.l.b16 %v2722
  %v2772 = vunpack.c.h.b16 %v2722
  %v2773 = vunpack.c.l.b16 %v2723
  %v2774 = vunpack.c.h.b16 %v2723
  %v2775 = vunpack.c.l.b16 %v2724
  %v2776 = vunpack.c.h.b16 %v2724
  %v2777 = vunpack.c.l.b16 %v2725
  %v2778 = vunpack.c.h.b16 %v2725
  %v2779 = vunpack.c.l.b16 %v2726
  %v2780 = vunpack.c.h.b16 %v2726
  %v2781 = vunpack.c.l.b16 %v2727
  %v2782 = vunpack.c.h.b16 %v2727
  %v2783 = vunpack.c.l.b16 %v2728
  %v2784 = vunpack.c.h.b16 %v2728
  %v2785 = vunpack.c.l.b16 %v2729
  %v2786 = vunpack.c.h.b16 %v2729
  %v2787 = vunpack.c.l.b16 %v2730
  %v2788 = vunpack.c.h.b16 %v2730
  %v2789 = vunpack.c.l.b16 %v2731
  %v2790 = vunpack.c.h.b16 %v2731
  %v2791 = vunpack.c.l.b16 %v2732
  %v2792 = vunpack.c.h.b16 %v2732
  %v2793 = vpack.c.b16 %v2763, %v2761
  %v2794 = vpack.c.b16 %v2764, %v2762
  %v2795 = vpack.c.b16 %v2767, %v2765
  %v2796 = vpack.c.b16 %v2768, %v2766
  %v2797 = vpack.c.b16 %v2771, %v2769
  %v2798 = vpack.c.b16 %v2772, %v2770
  %v2799 = vpack.c.b16 %v2775, %v2773
  %v2800 = vpack.c.b16 %v2776, %v2774
  %v2801 = vpack.c.b16 %v2779, %v2777
  %v2802 = vpack.c.b16 %v2780, %v2778
  %v2803 = vpack.c.b16 %v2783, %v2781
  %v2804 = vpack.c.b16 %v2784, %v2782
  %v2805 = vpack.c.b16 %v2787, %v2785
  %v2806 = vpack.c.b16 %v2788, %v2786
  %v2807 = vpack.c.b16 %v2791, %v2789
  %v2808 = vpack.c.b16 %v2792, %v2790
  %2825 = vmatprep.subr.bf16.mxu0 %v2794
  %2826 = vmatpush1.bf16.msra.mxu0 %v2793
  %2827 = vmatprep.subr.bf16.mxu0 %v2796
  %2828 = vmatpush1.bf16.msra.mxu0 %v2795
  %2829 = vmatprep.subr.bf16.mxu0 %v2798
  %2830 = vmatpush1.bf16.msra.mxu0 %v2797
  %2831 = vmatprep.subr.bf16.mxu0 %v2800
  %2832 = vmatpush1.bf16.msra.mxu0 %v2799
  %2833 = vmatprep.subr.bf16.mxu0 %v2802
  %2834 = vmatpush1.bf16.msra.mxu0 %v2801
  %2835 = vmatprep.subr.bf16.mxu0 %v2804
  %2836 = vmatpush1.bf16.msra.mxu0 %v2803
  %2837 = vmatprep.subr.bf16.mxu0 %v2806
  %2838 = vmatpush1.bf16.msra.mxu0 %v2805
  %2839 = vmatprep.subr.bf16.mxu0 %v2808
  %2840 = vmatpush1.bf16.msra.mxu0 %v2807
  %2841 = vmatprep.subr.bf16.mxu0 0
  %2842 = vmatpush1.bf16.msra.mxu0 0
  %2843 = vmatprep.subr.bf16.mxu0 0
  %2844 = vmatpush1.bf16.msra.mxu0 0
  %2845 = vmatprep.subr.bf16.mxu0 0
  %2846 = vmatpush1.bf16.msra.mxu0 0
  %2847 = vmatprep.subr.bf16.mxu0 0
  %2848 = vmatpush1.bf16.msra.mxu0 0
  %2849 = vmatprep.subr.bf16.mxu0 0
  %2850 = vmatpush1.bf16.msra.mxu0 0
  %2851 = vmatprep.subr.bf16.mxu0 0
  %2852 = vmatpush1.bf16.msra.mxu0 0
  %2853 = vmatprep.subr.bf16.mxu0 0
  %2854 = vmatpush1.bf16.msra.mxu0 0
  %2855 = vmatprep.subr.bf16.mxu0 0
  %2856 = vmatpush1.bf16.msra.mxu0 0
  %2857 = vmatprep.mubr.bf16.mxu0 0
  %2858 = vmatmul.mubr.bf16.gmra.mrb[0].mxu0 %v139
  %v2859 = vpop.f32.mrb[0].mxu0
  %v2860 = vadd.f32 %v2738, %v2859
  %v2861 = vpop.f32.mrb[0].mxu0
  %v2862 = vadd.f32 %v2742, %v2861
  %v2863 = vpop.f32.mrb[0].mxu0
  %v2864 = vadd.f32 %v2738, %v2863
  %v2865 = vpop.f32.mrb[0].mxu0
  %v2866 = vadd.f32 %v2742, %v2865
  %2867 = vmatprep.mubr.bf16.mxu0 0
  %2868 = vmatmul.mubr.bf16.gmra.mrb[0].mxu0 %v140
  %v2869 = vpop.f32.mrb[0].mxu0
  %v2870 = vadd.f32 %v2738, %v2869
  %v2871 = vpop.f32.mrb[0].mxu0
  %v2872 = vadd.f32 %v2742, %v2871
  %v2873 = vpop.f32.mrb[0].mxu0
  %v2874 = vadd.f32 %v2738, %v2873
  %v2875 = vpop.f32.mrb[0].mxu0
  %v2876 = vadd.f32 %v2742, %v2875
  %2877 = vdwg.mxu0
  %v2878 = vmax.f32 %v2713, %v2860
  %v2879 = vmax.f32 %v2714, %v2864
  %v2880 = vmax.f32 %v2715, %v2870
  %v2881 = vmax.f32 %v2716, %v2874
  %v2882 = vmax.f32 %v2878, %v2862
  %v2883 = vmax.f32 %v2879, %v2866
  %v2884 = vmax.f32 %v2880, %v2872
  %v2885 = vmax.f32 %v2881, %v2876
  %v2886 = vld [vmem:[%s4] sm:$0x3]
  %v2887 = vlaneseq
  %v2888 = vshrl.u32 %v2887, 7
  %v2889 = vsub.s32 0, %v2888
  %v2890 = vrot.slane %v2886, %v2889
  %2892 = vbcast.lane.b32.xlu0 %v2890, 256
  %v2893 = vpop.permute.xlu0 %2892
  %s2895 = sor.u32 256, 8
  %2896 = vbcast.lane.b32.xlu0 %v2890, %s2895
  %v2897 = vpop.permute.xlu0 %2896
  %v2898 = vlaneseq
  %v2899 = vshrl.u32 %v2898, 7
  %v2900 = vsub.s32 1, %v2899
  %v2901 = vrot.slane %v2886, %v2900
  %2903 = vbcast.lane.b32.xlu0 %v2901, 256
  %v2904 = vpop.permute.xlu0 %2903
  %s2906 = sor.u32 256, 8
  %2907 = vbcast.lane.b32.xlu0 %v2901, %s2906
  %v2908 = vpop.permute.xlu0 %2907
  %vm2909 = vcmp.gt.f32.partialorder %v2893, 0.5
  %vm2910 = vcmp.gt.f32.partialorder %v2897, 0.5
  %vm2911 = vcmp.gt.f32.partialorder %v2904, 0.5
  %vm2912 = vcmp.gt.f32.partialorder %v2908, 0.5
  %v2913 = vld [vmem:[%s3] sm:$0x1]
  %vm2914 = vcmp.gt.f32.partialorder %v2913, 0.5
  %v2915 = vsel %vm2909, 1, 0
  %v2916 = vsel %vm2910, 1, 0
  %v2917 = vsel %vm2911, 1, 0
  %v2918 = vsel %vm2912, 1, 0
  %vm2919 = vcmp.eq.s32.totalorder %v2915, 1
  %vm2920 = vcmp.eq.s32.totalorder %v2916, 1
  %vm2921 = vcmp.eq.s32.totalorder %v2917, 1
  %vm2922 = vcmp.eq.s32.totalorder %v2918, 1
  %v2923 = vsel %vm2914, 1, 0
  %v2924 = vlaneseq
  %v2925 = vshrl.u32 %v2924, 7
  %v2926 = vsub.s32 0, %v2925
  %v2927 = vrot.slane %v2923, %v2926
  %vm2928 = vcmp.eq.s32.totalorder %v2927, 1
  %vm2929 = vmand %vm2919, %vm2928
  %vm2930 = vmand %vm2920, %vm2928
  %vm2931 = vmand %vm2921, %vm2928
  %vm2932 = vmand %vm2922, %vm2928
  %v2933 = vsel %vm2929, %v2882, -inf
  %v2934 = vsel %vm2930, %v2883, -inf
  %v2935 = vsel %vm2931, %v2884, -inf
  %v2936 = vsel %vm2932, %v2885, -inf
  %v2937 = vmax.f32 %v2933, %v2934
  %v2938 = vrot.slane %v2937, 4
  %v2939 = vmax.f32 %v2937, %v2938
  %v2940 = vrot.slane %v2939, 2
  %v2941 = vmax.f32 %v2939, %v2940
  %v2942 = vrot.slane %v2941, 1
  %v2943 = vmax.f32 %v2941, %v2942
  %v2944 = vmax.f32 %v2935, %v2936
  %v2945 = vrot.slane %v2944, 4
  %v2946 = vmax.f32 %v2944, %v2945
  %v2947 = vrot.slane %v2946, 2
  %v2948 = vmax.f32 %v2946, %v2947
  %v2949 = vrot.slane %v2948, 1
  %v2950 = vmax.f32 %v2948, %v2949
  %v2951 = vsub.f32 %v2882, %v2943
  %v2952 = vsub.f32 %v2883, %v2943
  %v2953 = vsub.f32 %v2884, %v2950
  %v2954 = vsub.f32 %v2885, %v2950
  %v2955 = vmul.f32 %v2951, 10.0
  %v2956 = vmul.f32 %v2952, 10.0
  %v2957 = vmul.f32 %v2953, 10.0
  %v2958 = vmul.f32 %v2954, 10.0
  %v2959 = vmul.f32 %v2955, 1.442695
  %v2960 = vpow.pop %v2959
  %v2961 = vmul.f32 %v2956, 1.442695
  %v2962 = vpow.pop %v2961
  %v2963 = vmul.f32 %v2957, 1.442695
  %v2964 = vpow.pop %v2963
  %v2965 = vmul.f32 %v2958, 1.442695
  %v2966 = vpow.pop %v2965
  %v2967 = vsel %vm2929, %v2960, 0.0
  %v2968 = vsel %vm2930, %v2962, 0.0
  %v2969 = vsel %vm2931, %v2964, 0.0
  %v2970 = vsel %vm2932, %v2966, 0.0
  %v2971 = vadd.f32 %v2967, %v2968
  %v2972 = vrot.slane %v2971, 4
  %v2973 = vadd.f32 %v2971, %v2972
  %v2974 = vrot.slane %v2973, 2
  %v2975 = vadd.f32 %v2973, %v2974
  %v2976 = vrot.slane %v2975, 1
  %v2977 = vadd.f32 %v2975, %v2976
  %v2978 = vadd.f32 %v2969, %v2970
  %v2979 = vrot.slane %v2978, 4
  %v2980 = vadd.f32 %v2978, %v2979
  %v2981 = vrot.slane %v2980, 2
  %v2982 = vadd.f32 %v2980, %v2981
  %v2983 = vrot.slane %v2982, 1
  %v2984 = vadd.f32 %v2982, %v2983
  %v2985 = vlog2.pop %v2977
  %v2986 = vmul.f32 %v2985, 0.6931472
  %v2987 = vlog2.pop %v2984
  %v2988 = vmul.f32 %v2987, 0.6931472
  %v2989 = vmul.f32 %v2986, 0.1
  %v2990 = vmul.f32 %v2988, 0.1
  %v2991 = vadd.f32 %v2943, %v2989
  %v2992 = vadd.f32 %v2950, %v2990
  %v2993 = vmax.f32 %v2991, -1e+30
  %v2994 = vmax.f32 %v2992, -1e+30
  %vm2997 = vcmask 1041409
  %v2998 = vsel %vm2997, %v2994, %v2993
  %3000 = vst [vmem:[%s5] sm:$0x3] %v2998
  // Predicated region
  $region22: #{blip_retrieval_forward.11} parent=0 // pred_check
    _
  $region23: #{blip_retrieval_forward.11} parent=0 // pred_check_branch
    %3002 = sbr.rel (0) target = $region25
  $region24: #{blip_retrieval_forward.11} parent=0 // pred_region
    _
  $region25: #{blip_retrieval_forward.11} parent=0 // pred_fallthru
    _
  // Predicated region
  $region26: #{blip_retrieval_forward.11} parent=0 // pred_check
    _
  $region27: #{blip_retrieval_forward.11} parent=0 // pred_check_branch
    %3004 = sbr.rel (0) target = $region29
  $region28: #{blip_retrieval_forward.11} parent=0 // pred_region
    _
  $region29: #{blip_retrieval_forward.11} parent=0 // pred_fallthru
    _

// kernel: blip_retrieval_forward.12
$region0: #{blip_retrieval_forward.12}
  #allocation0 [shape = 'u32[]', space=smem, size = 0x4, offset = 0x4, fixed_abs, tag = 'smem constant byte address 0x4 - core index']
  #allocation1 [shape = 'u32[144,128]{1,0:T(1,128)}', space=vmem, size = 0x12000, scoped, tag = 'internal scratch']
  %s0 = inlined_call_operand.vmem [shape: bf16[80,128], index: 0, kind: input, shape index: {}]
  %s1 = inlined_call_operand.vmem [shape: bf16[128,2048], index: 1, kind: input, shape index: {}]
  %s2 = inlined_call_operand.vmem [shape: f32[1,1,2048], index: 2, kind: input, shape index: {}]
  %s3 = inlined_call_operand.vmem [shape: f32[1,1,128], index: 3, kind: input, shape index: {}]
  %s4 = inlined_call_operand.vmem [shape: f32[2,40], index: 4, kind: input, shape index: {}]
  %s5 = inlined_call_operand.vmem [shape: f32[2,128], index: 5, kind: output, shape index: {}]
  %s6 = sld [smem:[#allocation0]]
  $region30: #{blip_retrieval_forward.12} parent=0
    _
  %s8 = ssub.s32 1, %s6
  %s9 = scalar_select 0, %s8, %s6
  // Predicated region
  $region2: #{blip_retrieval_forward.12} parent=0 // pred_check
    _
  $region3: #{blip_retrieval_forward.12} parent=0 // pred_check_branch
    %11 = sbr.rel (0) target = $region5
  $region4: #{blip_retrieval_forward.12} parent=0 // pred_region
    _
  $region5: #{blip_retrieval_forward.12} parent=0 // pred_fallthru
    _
  // Predicated region
  $region6: #{blip_retrieval_forward.12} parent=0 // pred_check
    _
  $region7: #{blip_retrieval_forward.12} parent=0 // pred_check_branch
    %13 = sbr.rel (0) target = $region9
  $region8: #{blip_retrieval_forward.12} parent=0 // pred_region
    _
  $region9: #{blip_retrieval_forward.12} parent=0 // pred_fallthru
    _
  // Predicated region
  $region10: #{blip_retrieval_forward.12} parent=0 // pred_check
    _
  $region11: #{blip_retrieval_forward.12} parent=0 // pred_check_branch
    %15 = sbr.rel (0) target = $region13
  $region12: #{blip_retrieval_forward.12} parent=0 // pred_region
    _
  $region13: #{blip_retrieval_forward.12} parent=0 // pred_fallthru
    _
  // Predicated region
  $region14: #{blip_retrieval_forward.12} parent=0 // pred_check
    _
  $region15: #{blip_retrieval_forward.12} parent=0 // pred_check_branch
    %17 = sbr.rel (0) target = $region17
  $region16: #{blip_retrieval_forward.12} parent=0 // pred_region
    _
  $region17: #{blip_retrieval_forward.12} parent=0 // pred_fallthru
    _
  // Predicated region
  $region18: #{blip_retrieval_forward.12} parent=0 // pred_check
    _
  $region19: #{blip_retrieval_forward.12} parent=0 // pred_check_branch
    %19 = sbr.rel (0) target = $region21
  $region20: #{blip_retrieval_forward.12} parent=0 // pred_region
    _
  $region21: #{blip_retrieval_forward.12} parent=0 // pred_fallthru
    _
  %v21 = vld [vmem:[%s0] sm:$0xf]
  %v22 = vld [vmem:[%s0 + $0x4] sm:$0xf]
  %v23 = vld [vmem:[%s0 + $0x8] sm:$0xf]
  %v24 = vld [vmem:[%s0 + $0xc] sm:$0xf]
  %v25 = vld [vmem:[%s0 + $0x10] sm:$0xf]
  %v26 = vld [vmem:[%s0 + $0x14] sm:$0xf]
  %v27 = vld [vmem:[%s0 + $0x18] sm:$0xf]
  %v28 = vld [vmem:[%s0 + $0x1c] sm:$0xf]
  %v29 = vld [vmem:[%s0 + $0x20] sm:$0xf]
  %v30 = vld [vmem:[%s0 + $0x24] sm:$0xf]
  %v31 = vld [vmem:[%s1] sm:$0xff]
  %v32 = vld [vmem:[%s1 + $0x8] sm:$0xff]
  %v33 = vld [vmem:[%s1 + $0x10] sm:$0xff]
  %v34 = vld [vmem:[%s1 + $0x18] sm:$0xff]
  %v35 = vld [vmem:[%s1 + $0x40] sm:$0xff]
  %v36 = vld [vmem:[%s1 + $0x48] sm:$0xff]
  %v37 = vld [vmem:[%s1 + $0x50] sm:$0xff]
  %v38 = vld [vmem:[%s1 + $0x58] sm:$0xff]
  %v39 = vld [vmem:[%s1 + $0x80] sm:$0xff]
  %v40 = vld [vmem:[%s1 + $0x88] sm:$0xff]
  %v41 = vld [vmem:[%s1 + $0x90] sm:$0xff]
  %v42 = vld [vmem:[%s1 + $0x98] sm:$0xff]
  %v43 = vld [vmem:[%s1 + $0xc0] sm:$0xff]
  %v44 = vld [vmem:[%s1 + $0xc8] sm:$0xff]
  %v45 = vld [vmem:[%s1 + $0xd0] sm:$0xff]
  %v46 = vld [vmem:[%s1 + $0xd8] sm:$0xff]
  %v47 = vld [vmem:[%s1 + $0x100] sm:$0xff]
  %v48 = vld [vmem:[%s1 + $0x108] sm:$0xff]
  %v49 = vld [vmem:[%s1 + $0x110] sm:$0xff]
  %v50 = vld [vmem:[%s1 + $0x118] sm:$0xff]
  %v51 = vld [vmem:[%s1 + $0x140] sm:$0xff]
  %v52 = vld [vmem:[%s1 + $0x148] sm:$0xff]
  %v53 = vld [vmem:[%s1 + $0x150] sm:$0xff]
  %v54 = vld [vmem:[%s1 + $0x158] sm:$0xff]
  %v55 = vld [vmem:[%s1 + $0x180] sm:$0xff]
  %v56 = vld [vmem:[%s1 + $0x188] sm:$0xff]
  %v57 = vld [vmem:[%s1 + $0x190] sm:$0xff]
  %v58 = vld [vmem:[%s1 + $0x198] sm:$0xff]
  %v59 = vld [vmem:[%s1 + $0x1c0] sm:$0xff]
  %v60 = vld [vmem:[%s1 + $0x1c8] sm:$0xff]
  %v61 = vld [vmem:[%s1 + $0x1d0] sm:$0xff]
  %v62 = vld [vmem:[%s1 + $0x1d8] sm:$0xff]
  %v63 = vld [vmem:[%s1 + $0x200] sm:$0xff]
  %v64 = vld [vmem:[%s1 + $0x208] sm:$0xff]
  %v65 = vld [vmem:[%s1 + $0x210] sm:$0xff]
  %v66 = vld [vmem:[%s1 + $0x218] sm:$0xff]
  %v67 = vld [vmem:[%s1 + $0x240] sm:$0xff]
  %v68 = vld [vmem:[%s1 + $0x248] sm:$0xff]
  %v69 = vld [vmem:[%s1 + $0x250] sm:$0xff]
  %v70 = vld [vmem:[%s1 + $0x258] sm:$0xff]
  %v71 = vld [vmem:[%s1 + $0x280] sm:$0xff]
  %v72 = vld [vmem:[%s1 + $0x288] sm:$0xff]
  %v73 = vld [vmem:[%s1 + $0x290] sm:$0xff]
  %v74 = vld [vmem:[%s1 + $0x298] sm:$0xff]
  %v75 = vld [vmem:[%s1 + $0x2c0] sm:$0xff]
  %v76 = vld [vmem:[%s1 + $0x2c8] sm:$0xff]
  %v77 = vld [vmem:[%s1 + $0x2d0] sm:$0xff]
  %v78 = vld [vmem:[%s1 + $0x2d8] sm:$0xff]
  %v79 = vld [vmem:[%s1 + $0x300] sm:$0xff]
  %v80 = vld [vmem:[%s1 + $0x308] sm:$0xff]
  %v81 = vld [vmem:[%s1 + $0x310] sm:$0xff]
  %v82 = vld [vmem:[%s1 + $0x318] sm:$0xff]
  %v83 = vld [vmem:[%s1 + $0x340] sm:$0xff]
  %v84 = vld [vmem:[%s1 + $0x348] sm:$0xff]
  %v85 = vld [vmem:[%s1 + $0x350] sm:$0xff]
  %v86 = vld [vmem:[%s1 + $0x358] sm:$0xff]
  %v87 = vld [vmem:[%s1 + $0x380] sm:$0xff]
  %v88 = vld [vmem:[%s1 + $0x388] sm:$0xff]
  %v89 = vld [vmem:[%s1 + $0x390] sm:$0xff]
  %v90 = vld [vmem:[%s1 + $0x398] sm:$0xff]
  %v91 = vld [vmem:[%s1 + $0x3c0] sm:$0xff]
  %v92 = vld [vmem:[%s1 + $0x3c8] sm:$0xff]
  %v93 = vld [vmem:[%s1 + $0x3d0] sm:$0xff]
  %v94 = vld [vmem:[%s1 + $0x3d8] sm:$0xff]
  %v95 = vld [vmem:[%s2] sm:$0xff]
  %v97 = vlaneseq
  %v98 = vshrl.u32 %v97, 7
  %v99 = vsub.s32 0, %v98
  %v100 = vrot.slane %v95, %v99
  %v101 = vlaneseq
  %v102 = vshrl.u32 %v101, 7
  %v103 = vsub.s32 1, %v102
  %v104 = vrot.slane %v95, %v103
  %v105 = vlaneseq
  %v106 = vshrl.u32 %v105, 7
  %v107 = vsub.s32 2, %v106
  %v108 = vrot.slane %v95, %v107
  %v109 = vlaneseq
  %v110 = vshrl.u32 %v109, 7
  %v111 = vsub.s32 3, %v110
  %v112 = vrot.slane %v95, %v111
  %v113 = vlaneseq
  %v114 = vshrl.u32 %v113, 7
  %v115 = vsub.s32 4, %v114
  %v116 = vrot.slane %v95, %v115
  %v117 = vlaneseq
  %v118 = vshrl.u32 %v117, 7
  %v119 = vsub.s32 5, %v118
  %v120 = vrot.slane %v95, %v119
  %v121 = vlaneseq
  %v122 = vshrl.u32 %v121, 7
  %v123 = vsub.s32 6, %v122
  %v124 = vrot.slane %v95, %v123
  %v125 = vlaneseq
  %v126 = vshrl.u32 %v125, 7
  %v127 = vsub.s32 7, %v126
  %v128 = vrot.slane %v95, %v127
  %v147 = vunpack.c.l.b16 %v21
  %v148 = vunpack.c.l.b16 %v22
  %v149 = vunpack.c.l.b16 %v23
  %v150 = vunpack.c.l.b16 %v24
  %v151 = vunpack.c.l.b16 %v25
  %v152 = vunpack.c.l.b16 %v26
  %v153 = vunpack.c.l.b16 %v27
  %v154 = vunpack.c.l.b16 %v28
  %v155 = vunpack.c.l.b16 %v29
  %v156 = vunpack.c.l.b16 %v30
  %v157 = vpack.c.b16 %v148, %v147
  %v158 = vpack.c.b16 %v150, %v149
  %v159 = vpack.c.b16 %v152, %v151
  %v160 = vpack.c.b16 %v154, %v153
  %v161 = vpack.c.b16 %v156, %v155
  %v231 = vunpack.c.l.b16 %v31
  %v232 = vunpack.c.h.b16 %v31
  %v233 = vunpack.c.l.b16 %v32
  %v234 = vunpack.c.h.b16 %v32
  %v235 = vunpack.c.l.b16 %v33
  %v236 = vunpack.c.h.b16 %v33
  %v237 = vunpack.c.l.b16 %v34
  %v238 = vunpack.c.h.b16 %v34
  %v239 = vunpack.c.l.b16 %v35
  %v240 = vunpack.c.h.b16 %v35
  %v241 = vunpack.c.l.b16 %v36
  %v242 = vunpack.c.h.b16 %v36
  %v243 = vunpack.c.l.b16 %v37
  %v244 = vunpack.c.h.b16 %v37
  %v245 = vunpack.c.l.b16 %v38
  %v246 = vunpack.c.h.b16 %v38
  %v247 = vunpack.c.l.b16 %v39
  %v248 = vunpack.c.h.b16 %v39
  %v249 = vunpack.c.l.b16 %v40
  %v250 = vunpack.c.h.b16 %v40
  %v251 = vunpack.c.l.b16 %v41
  %v252 = vunpack.c.h.b16 %v41
  %v253 = vunpack.c.l.b16 %v42
  %v254 = vunpack.c.h.b16 %v42
  %v255 = vunpack.c.l.b16 %v43
  %v256 = vunpack.c.h.b16 %v43
  %v257 = vunpack.c.l.b16 %v44
  %v258 = vunpack.c.h.b16 %v44
  %v259 = vunpack.c.l.b16 %v45
  %v260 = vunpack.c.h.b16 %v45
  %v261 = vunpack.c.l.b16 %v46
  %v262 = vunpack.c.h.b16 %v46
  %v263 = vunpack.c.l.b16 %v47
  %v264 = vunpack.c.h.b16 %v47
  %v265 = vunpack.c.l.b16 %v48
  %v266 = vunpack.c.h.b16 %v48
  %v267 = vunpack.c.l.b16 %v49
  %v268 = vunpack.c.h.b16 %v49
  %v269 = vunpack.c.l.b16 %v50
  %v270 = vunpack.c.h.b16 %v50
  %v271 = vunpack.c.l.b16 %v51
  %v272 = vunpack.c.h.b16 %v51
  %v273 = vunpack.c.l.b16 %v52
  %v274 = vunpack.c.h.b16 %v52
  %v275 = vunpack.c.l.b16 %v53
  %v276 = vunpack.c.h.b16 %v53
  %v277 = vunpack.c.l.b16 %v54
  %v278 = vunpack.c.h.b16 %v54
  %v279 = vunpack.c.l.b16 %v55
  %v280 = vunpack.c.h.b16 %v55
  %v281 = vunpack.c.l.b16 %v56
  %v282 = vunpack.c.h.b16 %v56
  %v283 = vunpack.c.l.b16 %v57
  %v284 = vunpack.c.h.b16 %v57
  %v285 = vunpack.c.l.b16 %v58
  %v286 = vunpack.c.h.b16 %v58
  %v287 = vunpack.c.l.b16 %v59
  %v288 = vunpack.c.h.b16 %v59
  %v289 = vunpack.c.l.b16 %v60
  %v290 = vunpack.c.h.b16 %v60
  %v291 = vunpack.c.l.b16 %v61
  %v292 = vunpack.c.h.b16 %v61
  %v293 = vunpack.c.l.b16 %v62
  %v294 = vunpack.c.h.b16 %v62
  %v295 = vunpack.c.l.b16 %v63
  %v296 = vunpack.c.h.b16 %v63
  %v297 = vunpack.c.l.b16 %v64
  %v298 = vunpack.c.h.b16 %v64
  %v299 = vunpack.c.l.b16 %v65
  %v300 = vunpack.c.h.b16 %v65
  %v301 = vunpack.c.l.b16 %v66
  %v302 = vunpack.c.h.b16 %v66
  %v303 = vunpack.c.l.b16 %v67
  %v304 = vunpack.c.h.b16 %v67
  %v305 = vunpack.c.l.b16 %v68
  %v306 = vunpack.c.h.b16 %v68
  %v307 = vunpack.c.l.b16 %v69
  %v308 = vunpack.c.h.b16 %v69
  %v309 = vunpack.c.l.b16 %v70
  %v310 = vunpack.c.h.b16 %v70
  %v311 = vunpack.c.l.b16 %v71
  %v312 = vunpack.c.h.b16 %v71
  %v313 = vunpack.c.l.b16 %v72
  %v314 = vunpack.c.h.b16 %v72
  %v315 = vunpack.c.l.b16 %v73
  %v316 = vunpack.c.h.b16 %v73
  %v317 = vunpack.c.l.b16 %v74
  %v318 = vunpack.c.h.b16 %v74
  %v319 = vunpack.c.l.b16 %v75
  %v320 = vunpack.c.h.b16 %v75
  %v321 = vunpack.c.l.b16 %v76
  %v322 = vunpack.c.h.b16 %v76
  %v323 = vunpack.c.l.b16 %v77
  %v324 = vunpack.c.h.b16 %v77
  %v325 = vunpack.c.l.b16 %v78
  %v326 = vunpack.c.h.b16 %v78
  %v327 = vunpack.c.l.b16 %v79
  %v328 = vunpack.c.h.b16 %v79
  %v329 = vunpack.c.l.b16 %v80
  %v330 = vunpack.c.h.b16 %v80
  %v331 = vunpack.c.l.b16 %v81
  %v332 = vunpack.c.h.b16 %v81
  %v333 = vunpack.c.l.b16 %v82
  %v334 = vunpack.c.h.b16 %v82
  %v335 = vunpack.c.l.b16 %v83
  %v336 = vunpack.c.h.b16 %v83
  %v337 = vunpack.c.l.b16 %v84
  %v338 = vunpack.c.h.b16 %v84
  %v339 = vunpack.c.l.b16 %v85
  %v340 = vunpack.c.h.b16 %v85
  %v341 = vunpack.c.l.b16 %v86
  %v342 = vunpack.c.h.b16 %v86
  %v343 = vunpack.c.l.b16 %v87
  %v344 = vunpack.c.h.b16 %v87
  %v345 = vunpack.c.l.b16 %v88
  %v346 = vunpack.c.h.b16 %v88
  %v347 = vunpack.c.l.b16 %v89
  %v348 = vunpack.c.h.b16 %v89
  %v349 = vunpack.c.l.b16 %v90
  %v350 = vunpack.c.h.b16 %v90
  %v351 = vunpack.c.l.b16 %v91
  %v352 = vunpack.c.h.b16 %v91
  %v353 = vunpack.c.l.b16 %v92
  %v354 = vunpack.c.h.b16 %v92
  %v355 = vunpack.c.l.b16 %v93
  %v356 = vunpack.c.h.b16 %v93
  %v357 = vunpack.c.l.b16 %v94
  %v358 = vunpack.c.h.b16 %v94
  %v359 = vpack.c.b16 %v239, %v231
  %v360 = vpack.c.b16 %v240, %v232
  %v361 = vpack.c.b16 %v241, %v233
  %v362 = vpack.c.b16 %v242, %v234
  %v363 = vpack.c.b16 %v243, %v235
  %v364 = vpack.c.b16 %v244, %v236
  %v365 = vpack.c.b16 %v245, %v237
  %v366 = vpack.c.b16 %v246, %v238
  %v367 = vpack.c.b16 %v255, %v247
  %v368 = vpack.c.b16 %v256, %v248
  %v369 = vpack.c.b16 %v257, %v249
  %v370 = vpack.c.b16 %v258, %v250
  %v371 = vpack.c.b16 %v259, %v251
  %v372 = vpack.c.b16 %v260, %v252
  %v373 = vpack.c.b16 %v261, %v253
  %v374 = vpack.c.b16 %v262, %v254
  %v375 = vpack.c.b16 %v271, %v263
  %v376 = vpack.c.b16 %v272, %v264
  %v377 = vpack.c.b16 %v273, %v265
  %v378 = vpack.c.b16 %v274, %v266
  %v379 = vpack.c.b16 %v275, %v267
  %v380 = vpack.c.b16 %v276, %v268
  %v381 = vpack.c.b16 %v277, %v269
  %v382 = vpack.c.b16 %v278, %v270
  %v383 = vpack.c.b16 %v287, %v279
  %v384 = vpack.c.b16 %v288, %v280
  %v385 = vpack.c.b16 %v289, %v281
  %v386 = vpack.c.b16 %v290, %v282
  %v387 = vpack.c.b16 %v291, %v283
  %v388 = vpack.c.b16 %v292, %v284
  %v389 = vpack.c.b16 %v293, %v285
  %v390 = vpack.c.b16 %v294, %v286
  %v391 = vpack.c.b16 %v303, %v295
  %v392 = vpack.c.b16 %v304, %v296
  %v393 = vpack.c.b16 %v305, %v297
  %v394 = vpack.c.b16 %v306, %v298
  %v395 = vpack.c.b16 %v307, %v299
  %v396 = vpack.c.b16 %v308, %v300
  %v397 = vpack.c.b16 %v309, %v301
  %v398 = vpack.c.b16 %v310, %v302
  %v399 = vpack.c.b16 %v319, %v311
  %v400 = vpack.c.b16 %v320, %v312
  %v401 = vpack.c.b16 %v321, %v313
  %v402 = vpack.c.b16 %v322, %v314
  %v403 = vpack.c.b16 %v323, %v315
  %v404 = vpack.c.b16 %v324, %v316
  %v405 = vpack.c.b16 %v325, %v317
  %v406 = vpack.c.b16 %v326, %v318
  %v407 = vpack.c.b16 %v335, %v327
  %v408 = vpack.c.b16 %v336, %v328
  %v409 = vpack.c.b16 %v337, %v329
  %v410 = vpack.c.b16 %v338, %v330
  %v411 = vpack.c.b16 %v339, %v331
  %v412 = vpack.c.b16 %v340, %v332
  %v413 = vpack.c.b16 %v341, %v333
  %v414 = vpack.c.b16 %v342, %v334
  %v415 = vpack.c.b16 %v351, %v343
  %v416 = vpack.c.b16 %v352, %v344
  %v417 = vpack.c.b16 %v353, %v345
  %v418 = vpack.c.b16 %v354, %v346
  %v419 = vpack.c.b16 %v355, %v347
  %v420 = vpack.c.b16 %v356, %v348
  %v421 = vpack.c.b16 %v357, %v349
  %v422 = vpack.c.b16 %v358, %v350
  %487 = vmatprep.subr.bf16.mxu0 %v360
  %488 = vmatpush1.bf16.msra.mxu0 %v359
  %489 = vmatprep.subr.bf16.mxu0 %v368
  %490 = vmatpush1.bf16.msra.mxu0 %v367
  %491 = vmatprep.subr.bf16.mxu0 %v376
  %492 = vmatpush1.bf16.msra.mxu0 %v375
  %493 = vmatprep.subr.bf16.mxu0 %v384
  %494 = vmatpush1.bf16.msra.mxu0 %v383
  %495 = vmatprep.subr.bf16.mxu0 %v392
  %496 = vmatpush1.bf16.msra.mxu0 %v391
  %497 = vmatprep.subr.bf16.mxu0 %v400
  %498 = vmatpush1.bf16.msra.mxu0 %v399
  %499 = vmatprep.subr.bf16.mxu0 %v408
  %500 = vmatpush1.bf16.msra.mxu0 %v407
  %501 = vmatprep.subr.bf16.mxu0 %v416
  %502 = vmatpush1.bf16.msra.mxu0 %v415
  %503 = vmatprep.subr.bf16.mxu0 0
  %504 = vmatpush1.bf16.msra.mxu0 0
  %505 = vmatprep.subr.bf16.mxu0 0
  %506 = vmatpush1.bf16.msra.mxu0 0
  %507 = vmatprep.subr.bf16.mxu0 0
  %508 = vmatpush1.bf16.msra.mxu0 0
  %509 = vmatprep.subr.bf16.mxu0 0
  %510 = vmatpush1.bf16.msra.mxu0 0
  %511 = vmatprep.subr.bf16.mxu0 0
  %512 = vmatpush1.bf16.msra.mxu0 0
  %513 = vmatprep.subr.bf16.mxu0 0
  %514 = vmatpush1.bf16.msra.mxu0 0
  %515 = vmatprep.subr.bf16.mxu0 0
  %516 = vmatpush1.bf16.msra.mxu0 0
  %517 = vmatprep.subr.bf16.mxu0 0
  %518 = vmatpush1.bf16.msra.mxu0 0
  %519 = vmatprep.mubr.bf16.mxu0 0
  %520 = vmatmul.mubr.bf16.gmra.mrb[0].mxu0 %v157
  %v521 = vpop.f32.mrb[0].mxu0
  %v522 = vadd.f32 %v100, %v521
  %v523 = vpop.f32.mrb[0].mxu0
  %v524 = vadd.f32 %v104, %v523
  %v525 = vpop.f32.mrb[0].mxu0
  %v526 = vadd.f32 %v100, %v525
  %v527 = vpop.f32.mrb[0].mxu0
  %v528 = vadd.f32 %v104, %v527
  %529 = vmatprep.mubr.bf16.mxu0 0
  %530 = vmatmul.mubr.bf16.gmra.mrb[0].mxu0 %v158
  %v531 = vpop.f32.mrb[0].mxu0
  %v532 = vadd.f32 %v100, %v531
  %v533 = vpop.f32.mrb[0].mxu0
  %v534 = vadd.f32 %v104, %v533
  %v535 = vpop.f32.mrb[0].mxu0
  %v536 = vadd.f32 %v100, %v535
  %v537 = vpop.f32.mrb[0].mxu0
  %v538 = vadd.f32 %v104, %v537
  %539 = vmatprep.mubr.bf16.mxu0 0
  %540 = vmatmul.mubr.bf16.gmra.mrb[0].mxu0 %v159
  %v541 = vpop.f32.mrb[0].mxu0
  %v542 = vadd.f32 %v100, %v541
  %v543 = vpop.f32.mrb[0].mxu0
  %v544 = vadd.f32 %v104, %v543
  %v545 = vpop.f32.mrb[0].mxu0
  %v546 = vadd.f32 %v100, %v545
  %v547 = vpop.f32.mrb[0].mxu0
  %v548 = vadd.f32 %v104, %v547
  %549 = vmatprep.mubr.bf16.mxu0 0
  %550 = vmatmul.mubr.bf16.gmra.mrb[0].mxu0 %v160
  %v551 = vpop.f32.mrb[0].mxu0
  %v552 = vadd.f32 %v100, %v551
  %v553 = vpop.f32.mrb[0].mxu0
  %v554 = vadd.f32 %v104, %v553
  %v555 = vpop.f32.mrb[0].mxu0
  %v556 = vadd.f32 %v100, %v555
  %v557 = vpop.f32.mrb[0].mxu0
  %v558 = vadd.f32 %v104, %v557
  %559 = vmatprep.mubr.bf16.mxu0 0
  %560 = vmatmul.mubr.bf16.gmra.mrb[0].mxu0 %v161
  %v561 = vpop.f32.mrb[0].mxu0
  %v562 = vadd.f32 %v100, %v561
  %v563 = vpop.f32.mrb[0].mxu0
  %v564 = vadd.f32 %v104, %v563
  %v565 = vpop.f32.mrb[0].mxu0
  %v566 = vadd.f32 %v100, %v565
  %v567 = vpop.f32.mrb[0].mxu0
  %v568 = vadd.f32 %v104, %v567
  %569 = vdwg.mxu0
  %570 = vmatprep.subr.bf16.mxu0 %v362
  %571 = vmatpush1.bf16.msra.mxu0 %v361
  %572 = vmatprep.subr.bf16.mxu0 %v370
  %573 = vmatpush1.bf16.msra.mxu0 %v369
  %574 = vmatprep.subr.bf16.mxu0 %v378
  %575 = vmatpush1.bf16.msra.mxu0 %v377
  %576 = vmatprep.subr.bf16.mxu0 %v386
  %577 = vmatpush1.bf16.msra.mxu0 %v385
  %578 = vmatprep.subr.bf16.mxu0 %v394
  %579 = vmatpush1.bf16.msra.mxu0 %v393
  %580 = vmatprep.subr.bf16.mxu0 %v402
  %581 = vmatpush1.bf16.msra.mxu0 %v401
  %582 = vmatprep.subr.bf16.mxu0 %v410
  %583 = vmatpush1.bf16.msra.mxu0 %v409
  %584 = vmatprep.subr.bf16.mxu0 %v418
  %585 = vmatpush1.bf16.msra.mxu0 %v417
  %586 = vmatprep.subr.bf16.mxu0 0
  %587 = vmatpush1.bf16.msra.mxu0 0
  %588 = vmatprep.subr.bf16.mxu0 0
  %589 = vmatpush1.bf16.msra.mxu0 0
  %590 = vmatprep.subr.bf16.mxu0 0
  %591 = vmatpush1.bf16.msra.mxu0 0
  %592 = vmatprep.subr.bf16.mxu0 0
  %593 = vmatpush1.bf16.msra.mxu0 0
  %594 = vmatprep.subr.bf16.mxu0 0
  %595 = vmatpush1.bf16.msra.mxu0 0
  %596 = vmatprep.subr.bf16.mxu0 0
  %597 = vmatpush1.bf16.msra.mxu0 0
  %598 = vmatprep.subr.bf16.mxu0 0
  %599 = vmatpush1.bf16.msra.mxu0 0
  %600 = vmatprep.subr.bf16.mxu0 0
  %601 = vmatpush1.bf16.msra.mxu0 0
  %602 = vmatprep.mubr.bf16.mxu0 0
  %603 = vmatmul.mubr.bf16.gmra.mrb[0].mxu0 %v157
  %v604 = vpop.f32.mrb[0].mxu0
  %v605 = vadd.f32 %v108, %v604
  %v606 = vpop.f32.mrb[0].mxu0
  %v607 = vadd.f32 %v112, %v606
  %v608 = vpop.f32.mrb[0].mxu0
  %v609 = vadd.f32 %v108, %v608
  %v610 = vpop.f32.mrb[0].mxu0
  %v611 = vadd.f32 %v112, %v610
  %612 = vmatprep.mubr.bf16.mxu0 0
  %613 = vmatmul.mubr.bf16.gmra.mrb[0].mxu0 %v158
  %v614 = vpop.f32.mrb[0].mxu0
  %v615 = vadd.f32 %v108, %v614
  %v616 = vpop.f32.mrb[0].mxu0
  %v617 = vadd.f32 %v112, %v616
  %v618 = vpop.f32.mrb[0].mxu0
  %v619 = vadd.f32 %v108, %v618
  %v620 = vpop.f32.mrb[0].mxu0
  %v621 = vadd.f32 %v112, %v620
  %622 = vmatprep.mubr.bf16.mxu0 0
  %623 = vmatmul.mubr.bf16.gmra.mrb[0].mxu0 %v159
  %v624 = vpop.f32.mrb[0].mxu0
  %v625 = vadd.f32 %v108, %v624
  %v626 = vpop.f32.mrb[0].mxu0
  %v627 = vadd.f32 %v112, %v626
  %v628 = vpop.f32.mrb[0].mxu0
  %v629 = vadd.f32 %v108, %v628
  %v630 = vpop.f32.mrb[0].mxu0
  %v631 = vadd.f32 %v112, %v630
  %632 = vmatprep.mubr.bf16.mxu0 0
  %633 = vmatmul.mubr.bf16.gmra.mrb[0].mxu0 %v160
  %v634 = vpop.f32.mrb[0].mxu0
  %v635 = vadd.f32 %v108, %v634
  %v636 = vpop.f32.mrb[0].mxu0
  %v637 = vadd.f32 %v112, %v636
  %v638 = vpop.f32.mrb[0].mxu0
  %v639 = vadd.f32 %v108, %v638
  %v640 = vpop.f32.mrb[0].mxu0
  %v641 = vadd.f32 %v112, %v640
  %642 = vmatprep.mubr.bf16.mxu0 0
  %643 = vmatmul.mubr.bf16.gmra.mrb[0].mxu0 %v161
  %v644 = vpop.f32.mrb[0].mxu0
  %v645 = vadd.f32 %v108, %v644
  %v646 = vpop.f32.mrb[0].mxu0
  %v647 = vadd.f32 %v112, %v646
  %v648 = vpop.f32.mrb[0].mxu0
  %v649 = vadd.f32 %v108, %v648
  %v650 = vpop.f32.mrb[0].mxu0
  %v651 = vadd.f32 %v112, %v650
  %652 = vdwg.mxu0
  %653 = vmatprep.subr.bf16.mxu0 %v364
  %654 = vmatpush1.bf16.msra.mxu0 %v363
  %655 = vmatprep.subr.bf16.mxu0 %v372
  %656 = vmatpush1.bf16.msra.mxu0 %v371
  %657 = vmatprep.subr.bf16.mxu0 %v380
  %658 = vmatpush1.bf16.msra.mxu0 %v379
  %659 = vmatprep.subr.bf16.mxu0 %v388
  %660 = vmatpush1.bf16.msra.mxu0 %v387
  %661 = vmatprep.subr.bf16.mxu0 %v396
  %662 = vmatpush1.bf16.msra.mxu0 %v395
  %663 = vmatprep.subr.bf16.mxu0 %v404
  %664 = vmatpush1.bf16.msra.mxu0 %v403
  %665 = vmatprep.subr.bf16.mxu0 %v412
  %666 = vmatpush1.bf16.msra.mxu0 %v411
  %667 = vmatprep.subr.bf16.mxu0 %v420
  %668 = vmatpush1.bf16.msra.mxu0 %v419
  %669 = vmatprep.subr.bf16.mxu0 0
  %670 = vmatpush1.bf16.msra.mxu0 0
  %671 = vmatprep.subr.bf16.mxu0 0
  %672 = vmatpush1.bf16.msra.mxu0 0
  %673 = vmatprep.subr.bf16.mxu0 0
  %674 = vmatpush1.bf16.msra.mxu0 0
  %675 = vmatprep.subr.bf16.mxu0 0
  %676 = vmatpush1.bf16.msra.mxu0 0
  %677 = vmatprep.subr.bf16.mxu0 0
  %678 = vmatpush1.bf16.msra.mxu0 0
  %679 = vmatprep.subr.bf16.mxu0 0
  %680 = vmatpush1.bf16.msra.mxu0 0
  %681 = vmatprep.subr.bf16.mxu0 0
  %682 = vmatpush1.bf16.msra.mxu0 0
  %683 = vmatprep.subr.bf16.mxu0 0
  %684 = vmatpush1.bf16.msra.mxu0 0
  %685 = vmatprep.mubr.bf16.mxu0 0
  %686 = vmatmul.mubr.bf16.gmra.mrb[0].mxu0 %v157
  %v687 = vpop.f32.mrb[0].mxu0
  %v688 = vadd.f32 %v116, %v687
  %v689 = vpop.f32.mrb[0].mxu0
  %v690 = vadd.f32 %v120, %v689
  %v691 = vpop.f32.mrb[0].mxu0
  %v692 = vadd.f32 %v116, %v691
  %v693 = vpop.f32.mrb[0].mxu0
  %v694 = vadd.f32 %v120, %v693
  %695 = vmatprep.mubr.bf16.mxu0 0
  %696 = vmatmul.mubr.bf16.gmra.mrb[0].mxu0 %v158
  %v697 = vpop.f32.mrb[0].mxu0
  %v698 = vadd.f32 %v116, %v697
  %v699 = vpop.f32.mrb[0].mxu0
  %v700 = vadd.f32 %v120, %v699
  %v701 = vpop.f32.mrb[0].mxu0
  %v702 = vadd.f32 %v116, %v701
  %v703 = vpop.f32.mrb[0].mxu0
  %v704 = vadd.f32 %v120, %v703
  %705 = vmatprep.mubr.bf16.mxu0 0
  %706 = vmatmul.mubr.bf16.gmra.mrb[0].mxu0 %v159
  %v707 = vpop.f32.mrb[0].mxu0
  %v708 = vadd.f32 %v116, %v707
  %v709 = vpop.f32.mrb[0].mxu0
  %v710 = vadd.f32 %v120, %v709
  %v711 = vpop.f32.mrb[0].mxu0
  %v712 = vadd.f32 %v116, %v711
  %v713 = vpop.f32.mrb[0].mxu0
  %v714 = vadd.f32 %v120, %v713
  %715 = vmatprep.mubr.bf16.mxu0 0
  %716 = vmatmul.mubr.bf16.gmra.mrb[0].mxu0 %v160
  %v717 = vpop.f32.mrb[0].mxu0
  %v718 = vadd.f32 %v116, %v717
  %v719 = vpop.f32.mrb[0].mxu0
  %v720 = vadd.f32 %v120, %v719
  %v721 = vpop.f32.mrb[0].mxu0
  %v722 = vadd.f32 %v116, %v721
  %v723 = vpop.f32.mrb[0].mxu0
  %v724 = vadd.f32 %v120, %v723
  %725 = vmatprep.mubr.bf16.mxu0 0
  %726 = vmatmul.mubr.bf16.gmra.mrb[0].mxu0 %v161
  %v727 = vpop.f32.mrb[0].mxu0
  %v728 = vadd.f32 %v116, %v727
  %v729 = vpop.f32.mrb[0].mxu0
  %v730 = vadd.f32 %v120, %v729
  %v731 = vpop.f32.mrb[0].mxu0
  %v732 = vadd.f32 %v116, %v731
  %v733 = vpop.f32.mrb[0].mxu0
  %v734 = vadd.f32 %v120, %v733
  %735 = vdwg.mxu0
  %736 = vmatprep.subr.bf16.mxu0 %v366
  %737 = vmatpush1.bf16.msra.mxu0 %v365
  %738 = vmatprep.subr.bf16.mxu0 %v374
  %739 = vmatpush1.bf16.msra.mxu0 %v373
  %740 = vmatprep.subr.bf16.mxu0 %v382
  %741 = vmatpush1.bf16.msra.mxu0 %v381
  %742 = vmatprep.subr.bf16.mxu0 %v390
  %743 = vmatpush1.bf16.msra.mxu0 %v389
  %744 = vmatprep.subr.bf16.mxu0 %v398
  %745 = vmatpush1.bf16.msra.mxu0 %v397
  %746 = vmatprep.subr.bf16.mxu0 %v406
  %747 = vmatpush1.bf16.msra.mxu0 %v405
  %748 = vmatprep.subr.bf16.mxu0 %v414
  %749 = vmatpush1.bf16.msra.mxu0 %v413
  %750 = vmatprep.subr.bf16.mxu0 %v422
  %751 = vmatpush1.bf16.msra.mxu0 %v421
  %752 = vmatprep.subr.bf16.mxu0 0
  %753 = vmatpush1.bf16.msra.mxu0 0
  %754 = vmatprep.subr.bf16.mxu0 0
  %755 = vmatpush1.bf16.msra.mxu0 0
  %756 = vmatprep.subr.bf16.mxu0 0
  %757 = vmatpush1.bf16.msra.mxu0 0
  %758 = vmatprep.subr.bf16.mxu0 0
  %759 = vmatpush1.bf16.msra.mxu0 0
  %760 = vmatprep.subr.bf16.mxu0 0
  %761 = vmatpush1.bf16.msra.mxu0 0
  %762 = vmatprep.subr.bf16.mxu0 0
  %763 = vmatpush1.bf16.msra.mxu0 0
  %764 = vmatprep.subr.bf16.mxu0 0
  %765 = vmatpush1.bf16.msra.mxu0 0
  %766 = vmatprep.subr.bf16.mxu0 0
  %767 = vmatpush1.bf16.msra.mxu0 0
  %768 = vmatprep.mubr.bf16.mxu0 0
  %769 = vmatmul.mubr.bf16.gmra.mrb[0].mxu0 %v157
  %v770 = vpop.f32.mrb[0].mxu0
  %v771 = vadd.f32 %v124, %v770
  %v772 = vpop.f32.mrb[0].mxu0
  %v773 = vadd.f32 %v128, %v772
  %v774 = vpop.f32.mrb[0].mxu0
  %v775 = vadd.f32 %v124, %v774
  %v776 = vpop.f32.mrb[0].mxu0
  %v777 = vadd.f32 %v128, %v776
  %778 = vmatprep.mubr.bf16.mxu0 0
  %779 = vmatmul.mubr.bf16.gmra.mrb[0].mxu0 %v158
  %v780 = vpop.f32.mrb[0].mxu0
  %v781 = vadd.f32 %v124, %v780
  %v782 = vpop.f32.mrb[0].mxu0
  %v783 = vadd.f32 %v128, %v782
  %v784 = vpop.f32.mrb[0].mxu0
  %v785 = vadd.f32 %v124, %v784
  %v786 = vpop.f32.mrb[0].mxu0
  %v787 = vadd.f32 %v128, %v786
  %788 = vmatprep.mubr.bf16.mxu0 0
  %789 = vmatmul.mubr.bf16.gmra.mrb[0].mxu0 %v159
  %v790 = vpop.f32.mrb[0].mxu0
  %v791 = vadd.f32 %v124, %v790
  %v792 = vpop.f32.mrb[0].mxu0
  %v793 = vadd.f32 %v128, %v792
  %v794 = vpop.f32.mrb[0].mxu0
  %v795 = vadd.f32 %v124, %v794
  %v796 = vpop.f32.mrb[0].mxu0
  %v797 = vadd.f32 %v128, %v796
  %798 = vmatprep.mubr.bf16.mxu0 0
  %799 = vmatmul.mubr.bf16.gmra.mrb[0].mxu0 %v160
  %v800 = vpop.f32.mrb[0].mxu0
  %v801 = vadd.f32 %v124, %v800
  %v802 = vpop.f32.mrb[0].mxu0
  %v803 = vadd.f32 %v128, %v802
  %v804 = vpop.f32.mrb[0].mxu0
  %v805 = vadd.f32 %v124, %v804
  %v806 = vpop.f32.mrb[0].mxu0
  %v807 = vadd.f32 %v128, %v806
  %808 = vmatprep.mubr.bf16.mxu0 0
  %809 = vmatmul.mubr.bf16.gmra.mrb[0].mxu0 %v161
  %v810 = vpop.f32.mrb[0].mxu0
  %v811 = vadd.f32 %v124, %v810
  %v812 = vpop.f32.mrb[0].mxu0
  %v813 = vadd.f32 %v128, %v812
  %v814 = vpop.f32.mrb[0].mxu0
  %v815 = vadd.f32 %v124, %v814
  %v816 = vpop.f32.mrb[0].mxu0
  %v817 = vadd.f32 %v128, %v816
  %818 = vdwg.mxu0
  %v819 = vmax.f32 %v522, -10.0
  %v820 = vmax.f32 %v526, -10.0
  %v821 = vmax.f32 %v532, -10.0
  %v822 = vmax.f32 %v536, -10.0
  %v823 = vmax.f32 %v542, -10.0
  %v824 = vmax.f32 %v546, -10.0
  %v825 = vmax.f32 %v552, -10.0
  %v826 = vmax.f32 %v556, -10.0
  %v827 = vmax.f32 %v562, -10.0
  %v828 = vmax.f32 %v566, -10.0
  %v829 = vmax.f32 %v819, %v524
  %v830 = vmax.f32 %v820, %v528
  %v831 = vmax.f32 %v821, %v534
  %v832 = vmax.f32 %v822, %v538
  %v833 = vmax.f32 %v823, %v544
  %v834 = vmax.f32 %v824, %v548
  %v835 = vmax.f32 %v825, %v554
  %v836 = vmax.f32 %v826, %v558
  %v837 = vmax.f32 %v827, %v564
  %v838 = vmax.f32 %v828, %v568
  %v839 = vmax.f32 %v829, %v605
  %v840 = vmax.f32 %v830, %v609
  %v841 = vmax.f32 %v831, %v615
  %v842 = vmax.f32 %v832, %v619
  %v843 = vmax.f32 %v833, %v625
  %v844 = vmax.f32 %v834, %v629
  %v845 = vmax.f32 %v835, %v635
  %v846 = vmax.f32 %v836, %v639
  %v847 = vmax.f32 %v837, %v645
  %v848 = vmax.f32 %v838, %v649
  %v849 = vmax.f32 %v839, %v607
  %v850 = vmax.f32 %v840, %v611
  %v851 = vmax.f32 %v841, %v617
  %v852 = vmax.f32 %v842, %v621
  %v853 = vmax.f32 %v843, %v627
  %v854 = vmax.f32 %v844, %v631
  %v855 = vmax.f32 %v845, %v637
  %v856 = vmax.f32 %v846, %v641
  %v857 = vmax.f32 %v847, %v647
  %v858 = vmax.f32 %v848, %v651
  %v859 = vmax.f32 %v849, %v688
  %v860 = vmax.f32 %v850, %v692
  %v861 = vmax.f32 %v851, %v698
  %v862 = vmax.f32 %v852, %v702
  %v863 = vmax.f32 %v853, %v708
  %v864 = vmax.f32 %v854, %v712
  %v865 = vmax.f32 %v855, %v718
  %v866 = vmax.f32 %v856, %v722
  %v867 = vmax.f32 %v857, %v728
  %v868 = vmax.f32 %v858, %v732
  %v869 = vmax.f32 %v859, %v690
  %v870 = vmax.f32 %v860, %v694
  %v871 = vmax.f32 %v861, %v700
  %v872 = vmax.f32 %v862, %v704
  %v873 = vmax.f32 %v863, %v710
  %v874 = vmax.f32 %v864, %v714
  %v875 = vmax.f32 %v865, %v720
  %v876 = vmax.f32 %v866, %v724
  %v877 = vmax.f32 %v867, %v730
  %v878 = vmax.f32 %v868, %v734
  %v879 = vmax.f32 %v869, %v771
  %v880 = vmax.f32 %v870, %v775
  %v881 = vmax.f32 %v871, %v781
  %v882 = vmax.f32 %v872, %v785
  %v883 = vmax.f32 %v873, %v791
  %v884 = vmax.f32 %v874, %v795
  %v885 = vmax.f32 %v875, %v801
  %v886 = vmax.f32 %v876, %v805
  %v887 = vmax.f32 %v877, %v811
  %v888 = vmax.f32 %v878, %v815
  %v889 = vmax.f32 %v879, %v773
  %v890 = vmax.f32 %v880, %v777
  %v891 = vmax.f32 %v881, %v783
  %v892 = vmax.f32 %v882, %v787
  %v893 = vmax.f32 %v883, %v793
  %v894 = vmax.f32 %v884, %v797
  %v895 = vmax.f32 %v885, %v803
  %v896 = vmax.f32 %v886, %v807
  %v897 = vmax.f32 %v887, %v813
  %v898 = vmax.f32 %v888, %v817
  %v899 = vld [vmem:[%s1 + $0x20] sm:$0xff]
  %v900 = vld [vmem:[%s1 + $0x28] sm:$0xff]
  %v901 = vld [vmem:[%s1 + $0x30] sm:$0xff]
  %v902 = vld [vmem:[%s1 + $0x38] sm:$0xff]
  %v903 = vld [vmem:[%s1 + $0x60] sm:$0xff]
  %v904 = vld [vmem:[%s1 + $0x68] sm:$0xff]
  %v905 = vld [vmem:[%s1 + $0x70] sm:$0xff]
  %v906 = vld [vmem:[%s1 + $0x78] sm:$0xff]
  %v907 = vld [vmem:[%s1 + $0xa0] sm:$0xff]
  %v908 = vld [vmem:[%s1 + $0xa8] sm:$0xff]
  %v909 = vld [vmem:[%s1 + $0xb0] sm:$0xff]
  %v910 = vld [vmem:[%s1 + $0xb8] sm:$0xff]
  %v911 = vld [vmem:[%s1 + $0xe0] sm:$0xff]
  %v912 = vld [vmem:[%s1 + $0xe8] sm:$0xff]
  %v913 = vld [vmem:[%s1 + $0xf0] sm:$0xff]
  %v914 = vld [vmem:[%s1 + $0xf8] sm:$0xff]
  %v915 = vld [vmem:[%s1 + $0x120] sm:$0xff]
  %v916 = vld [vmem:[%s1 + $0x128] sm:$0xff]
  %v917 = vld [vmem:[%s1 + $0x130] sm:$0xff]
  %v918 = vld [vmem:[%s1 + $0x138] sm:$0xff]
  %v919 = vld [vmem:[%s1 + $0x160] sm:$0xff]
  %v920 = vld [vmem:[%s1 + $0x168] sm:$0xff]
  %v921 = vld [vmem:[%s1 + $0x170] sm:$0xff]
  %v922 = vld [vmem:[%s1 + $0x178] sm:$0xff]
  %v923 = vld [vmem:[%s1 + $0x1a0] sm:$0xff]
  %v924 = vld [vmem:[%s1 + $0x1a8] sm:$0xff]
  %v925 = vld [vmem:[%s1 + $0x1b0] sm:$0xff]
  %v926 = vld [vmem:[%s1 + $0x1b8] sm:$0xff]
  %v927 = vld [vmem:[%s1 + $0x1e0] sm:$0xff]
  %v928 = vld [vmem:[%s1 + $0x1e8] sm:$0xff]
  %v929 = vld [vmem:[%s1 + $0x1f0] sm:$0xff]
  %v930 = vld [vmem:[%s1 + $0x1f8] sm:$0xff]
  %v931 = vld [vmem:[%s1 + $0x220] sm:$0xff]
  %v932 = vld [vmem:[%s1 + $0x228] sm:$0xff]
  %v933 = vld [vmem:[%s1 + $0x230] sm:$0xff]
  %v934 = vld [vmem:[%s1 + $0x238] sm:$0xff]
  %v935 = vld [vmem:[%s1 + $0x260] sm:$0xff]
  %v936 = vld [vmem:[%s1 + $0x268] sm:$0xff]
  %v937 = vld [vmem:[%s1 + $0x270] sm:$0xff]
  %v938 = vld [vmem:[%s1 + $0x278] sm:$0xff]
  %v939 = vld [vmem:[%s1 + $0x2a0] sm:$0xff]
  %v940 = vld [vmem:[%s1 + $0x2a8] sm:$0xff]
  %v941 = vld [vmem:[%s1 + $0x2b0] sm:$0xff]
  %v942 = vld [vmem:[%s1 + $0x2b8] sm:$0xff]
  %v943 = vld [vmem:[%s1 + $0x2e0] sm:$0xff]
  %v944 = vld [vmem:[%s1 + $0x2e8] sm:$0xff]
  %v945 = vld [vmem:[%s1 + $0x2f0] sm:$0xff]
  %v946 = vld [vmem:[%s1 + $0x2f8] sm:$0xff]
  %v947 = vld [vmem:[%s1 + $0x320] sm:$0xff]
  %v948 = vld [vmem:[%s1 + $0x328] sm:$0xff]
  %v949 = vld [vmem:[%s1 + $0x330] sm:$0xff]
  %v950 = vld [vmem:[%s1 + $0x338] sm:$0xff]
  %v951 = vld [vmem:[%s1 + $0x360] sm:$0xff]
  %v952 = vld [vmem:[%s1 + $0x368] sm:$0xff]
  %v953 = vld [vmem:[%s1 + $0x370] sm:$0xff]
  %v954 = vld [vmem:[%s1 + $0x378] sm:$0xff]
  %v955 = vld [vmem:[%s1 + $0x3a0] sm:$0xff]
  %v956 = vld [vmem:[%s1 + $0x3a8] sm:$0xff]
  %v957 = vld [vmem:[%s1 + $0x3b0] sm:$0xff]
  %v958 = vld [vmem:[%s1 + $0x3b8] sm:$0xff]
  %v959 = vld [vmem:[%s1 + $0x3e0] sm:$0xff]
  %v960 = vld [vmem:[%s1 + $0x3e8] sm:$0xff]
  %v961 = vld [vmem:[%s1 + $0x3f0] sm:$0xff]
  %v962 = vld [vmem:[%s1 + $0x3f8] sm:$0xff]
  %v963 = vld [vmem:[%s2 + $0x8] sm:$0xff]
  %v965 = vlaneseq
  %v966 = vshrl.u32 %v965, 7
  %v967 = vsub.s32 0, %v966
  %v968 = vrot.slane %v963, %v967
  %v969 = vlaneseq
  %v970 = vshrl.u32 %v969, 7
  %v971 = vsub.s32 1, %v970
  %v972 = vrot.slane %v963, %v971
  %v973 = vlaneseq
  %v974 = vshrl.u32 %v973, 7
  %v975 = vsub.s32 2, %v974
  %v976 = vrot.slane %v963, %v975
  %v977 = vlaneseq
  %v978 = vshrl.u32 %v977, 7
  %v979 = vsub.s32 3, %v978
  %v980 = vrot.slane %v963, %v979
  %v981 = vlaneseq
  %v982 = vshrl.u32 %v981, 7
  %v983 = vsub.s32 4, %v982
  %v984 = vrot.slane %v963, %v983
  %v985 = vlaneseq
  %v986 = vshrl.u32 %v985, 7
  %v987 = vsub.s32 5, %v986
  %v988 = vrot.slane %v963, %v987
  %v989 = vlaneseq
  %v990 = vshrl.u32 %v989, 7
  %v991 = vsub.s32 6, %v990
  %v992 = vrot.slane %v963, %v991
  %v993 = vlaneseq
  %v994 = vshrl.u32 %v993, 7
  %v995 = vsub.s32 7, %v994
  %v996 = vrot.slane %v963, %v995
  %v1069 = vunpack.c.l.b16 %v899
  %v1070 = vunpack.c.h.b16 %v899
  %v1071 = vunpack.c.l.b16 %v900
  %v1072 = vunpack.c.h.b16 %v900
  %v1073 = vunpack.c.l.b16 %v901
  %v1074 = vunpack.c.h.b16 %v901
  %v1075 = vunpack.c.l.b16 %v902
  %v1076 = vunpack.c.h.b16 %v902
  %v1077 = vunpack.c.l.b16 %v903
  %v1078 = vunpack.c.h.b16 %v903
  %v1079 = vunpack.c.l.b16 %v904
  %v1080 = vunpack.c.h.b16 %v904
  %v1081 = vunpack.c.l.b16 %v905
  %v1082 = vunpack.c.h.b16 %v905
  %v1083 = vunpack.c.l.b16 %v906
  %v1084 = vunpack.c.h.b16 %v906
  %v1085 = vunpack.c.l.b16 %v907
  %v1086 = vunpack.c.h.b16 %v907
  %v1087 = vunpack.c.l.b16 %v908
  %v1088 = vunpack.c.h.b16 %v908
  %v1089 = vunpack.c.l.b16 %v909
  %v1090 = vunpack.c.h.b16 %v909
  %v1091 = vunpack.c.l.b16 %v910
  %v1092 = vunpack.c.h.b16 %v910
  %v1093 = vunpack.c.l.b16 %v911
  %v1094 = vunpack.c.h.b16 %v911
  %v1095 = vunpack.c.l.b16 %v912
  %v1096 = vunpack.c.h.b16 %v912
  %v1097 = vunpack.c.l.b16 %v913
  %v1098 = vunpack.c.h.b16 %v913
  %v1099 = vunpack.c.l.b16 %v914
  %v1100 = vunpack.c.h.b16 %v914
  %v1101 = vunpack.c.l.b16 %v915
  %v1102 = vunpack.c.h.b16 %v915
  %v1103 = vunpack.c.l.b16 %v916
  %v1104 = vunpack.c.h.b16 %v916
  %v1105 = vunpack.c.l.b16 %v917
  %v1106 = vunpack.c.h.b16 %v917
  %v1107 = vunpack.c.l.b16 %v918
  %v1108 = vunpack.c.h.b16 %v918
  %v1109 = vunpack.c.l.b16 %v919
  %v1110 = vunpack.c.h.b16 %v919
  %v1111 = vunpack.c.l.b16 %v920
  %v1112 = vunpack.c.h.b16 %v920
  %v1113 = vunpack.c.l.b16 %v921
  %v1114 = vunpack.c.h.b16 %v921
  %v1115 = vunpack.c.l.b16 %v922
  %v1116 = vunpack.c.h.b16 %v922
  %v1117 = vunpack.c.l.b16 %v923
  %v1118 = vunpack.c.h.b16 %v923
  %v1119 = vunpack.c.l.b16 %v924
  %v1120 = vunpack.c.h.b16 %v924
  %v1121 = vunpack.c.l.b16 %v925
  %v1122 = vunpack.c.h.b16 %v925
  %v1123 = vunpack.c.l.b16 %v926
  %v1124 = vunpack.c.h.b16 %v926
  %v1125 = vunpack.c.l.b16 %v927
  %v1126 = vunpack.c.h.b16 %v927
  %v1127 = vunpack.c.l.b16 %v928
  %v1128 = vunpack.c.h.b16 %v928
  %v1129 = vunpack.c.l.b16 %v929
  %v1130 = vunpack.c.h.b16 %v929
  %v1131 = vunpack.c.l.b16 %v930
  %v1132 = vunpack.c.h.b16 %v930
  %v1133 = vunpack.c.l.b16 %v931
  %v1134 = vunpack.c.h.b16 %v931
  %v1135 = vunpack.c.l.b16 %v932
  %v1136 = vunpack.c.h.b16 %v932
  %v1137 = vunpack.c.l.b16 %v933
  %v1138 = vunpack.c.h.b16 %v933
  %v1139 = vunpack.c.l.b16 %v934
  %v1140 = vunpack.c.h.b16 %v934
  %v1141 = vunpack.c.l.b16 %v935
  %v1142 = vunpack.c.h.b16 %v935
  %v1143 = vunpack.c.l.b16 %v936
  %v1144 = vunpack.c.h.b16 %v936
  %v1145 = vunpack.c.l.b16 %v937
  %v1146 = vunpack.c.h.b16 %v937
  %v1147 = vunpack.c.l.b16 %v938
  %v1148 = vunpack.c.h.b16 %v938
  %v1149 = vunpack.c.l.b16 %v939
  %v1150 = vunpack.c.h.b16 %v939
  %v1151 = vunpack.c.l.b16 %v940
  %v1152 = vunpack.c.h.b16 %v940
  %v1153 = vunpack.c.l.b16 %v941
  %v1154 = vunpack.c.h.b16 %v941
  %v1155 = vunpack.c.l.b16 %v942
  %v1156 = vunpack.c.h.b16 %v942
  %v1157 = vunpack.c.l.b16 %v943
  %v1158 = vunpack.c.h.b16 %v943
  %v1159 = vunpack.c.l.b16 %v944
  %v1160 = vunpack.c.h.b16 %v944
  %v1161 = vunpack.c.l.b16 %v945
  %v1162 = vunpack.c.h.b16 %v945
  %v1163 = vunpack.c.l.b16 %v946
  %v1164 = vunpack.c.h.b16 %v946
  %v1165 = vunpack.c.l.b16 %v947
  %v1166 = vunpack.c.h.b16 %v947
  %v1167 = vunpack.c.l.b16 %v948
  %v1168 = vunpack.c.h.b16 %v948
  %v1169 = vunpack.c.l.b16 %v949
  %v1170 = vunpack.c.h.b16 %v949
  %v1171 = vunpack.c.l.b16 %v950
  %v1172 = vunpack.c.h.b16 %v950
  %v1173 = vunpack.c.l.b16 %v951
  %v1174 = vunpack.c.h.b16 %v951
  %v1175 = vunpack.c.l.b16 %v952
  %v1176 = vunpack.c.h.b16 %v952
  %v1177 = vunpack.c.l.b16 %v953
  %v1178 = vunpack.c.h.b16 %v953
  %v1179 = vunpack.c.l.b16 %v954
  %v1180 = vunpack.c.h.b16 %v954
  %v1181 = vunpack.c.l.b16 %v955
  %v1182 = vunpack.c.h.b16 %v955
  %v1183 = vunpack.c.l.b16 %v956
  %v1184 = vunpack.c.h.b16 %v956
  %v1185 = vunpack.c.l.b16 %v957
  %v1186 = vunpack.c.h.b16 %v957
  %v1187 = vunpack.c.l.b16 %v958
  %v1188 = vunpack.c.h.b16 %v958
  %v1189 = vunpack.c.l.b16 %v959
  %v1190 = vunpack.c.h.b16 %v959
  %v1191 = vunpack.c.l.b16 %v960
  %v1192 = vunpack.c.h.b16 %v960
  %v1193 = vunpack.c.l.b16 %v961
  %v1194 = vunpack.c.h.b16 %v961
  %v1195 = vunpack.c.l.b16 %v962
  %v1196 = vunpack.c.h.b16 %v962
  %v1197 = vpack.c.b16 %v1077, %v1069
  %v1198 = vpack.c.b16 %v1078, %v1070
  %v1199 = vpack.c.b16 %v1079, %v1071
  %v1200 = vpack.c.b16 %v1080, %v1072
  %v1201 = vpack.c.b16 %v1081, %v1073
  %v1202 = vpack.c.b16 %v1082, %v1074
  %v1203 = vpack.c.b16 %v1083, %v1075
  %v1204 = vpack.c.b16 %v1084, %v1076
  %v1205 = vpack.c.b16 %v1093, %v1085
  %v1206 = vpack.c.b16 %v1094, %v1086
  %v1207 = vpack.c.b16 %v1095, %v1087
  %v1208 = vpack.c.b16 %v1096, %v1088
  %v1209 = vpack.c.b16 %v1097, %v1089
  %v1210 = vpack.c.b16 %v1098, %v1090
  %v1211 = vpack.c.b16 %v1099, %v1091
  %v1212 = vpack.c.b16 %v1100, %v1092
  %v1213 = vpack.c.b16 %v1109, %v1101
  %v1214 = vpack.c.b16 %v1110, %v1102
  %v1215 = vpack.c.b16 %v1111, %v1103
  %v1216 = vpack.c.b16 %v1112, %v1104
  %v1217 = vpack.c.b16 %v1113, %v1105
  %v1218 = vpack.c.b16 %v1114, %v1106
  %v1219 = vpack.c.b16 %v1115, %v1107
  %v1220 = vpack.c.b16 %v1116, %v1108
  %v1221 = vpack.c.b16 %v1125, %v1117
  %v1222 = vpack.c.b16 %v1126, %v1118
  %v1223 = vpack.c.b16 %v1127, %v1119
  %v1224 = vpack.c.b16 %v1128, %v1120
  %v1225 = vpack.c.b16 %v1129, %v1121
  %v1226 = vpack.c.b16 %v1130, %v1122
  %v1227 = vpack.c.b16 %v1131, %v1123
  %v1228 = vpack.c.b16 %v1132, %v1124
  %v1229 = vpack.c.b16 %v1141, %v1133
  %v1230 = vpack.c.b16 %v1142, %v1134
  %v1231 = vpack.c.b16 %v1143, %v1135
  %v1232 = vpack.c.b16 %v1144, %v1136
  %v1233 = vpack.c.b16 %v1145, %v1137
  %v1234 = vpack.c.b16 %v1146, %v1138
  %v1235 = vpack.c.b16 %v1147, %v1139
  %v1236 = vpack.c.b16 %v1148, %v1140
  %v1237 = vpack.c.b16 %v1157, %v1149
  %v1238 = vpack.c.b16 %v1158, %v1150
  %v1239 = vpack.c.b16 %v1159, %v1151
  %v1240 = vpack.c.b16 %v1160, %v1152
  %v1241 = vpack.c.b16 %v1161, %v1153
  %v1242 = vpack.c.b16 %v1162, %v1154
  %v1243 = vpack.c.b16 %v1163, %v1155
  %v1244 = vpack.c.b16 %v1164, %v1156
  %v1245 = vpack.c.b16 %v1173, %v1165
  %v1246 = vpack.c.b16 %v1174, %v1166
  %v1247 = vpack.c.b16 %v1175, %v1167
  %v1248 = vpack.c.b16 %v1176, %v1168
  %v1249 = vpack.c.b16 %v1177, %v1169
  %v1250 = vpack.c.b16 %v1178, %v1170
  %v1251 = vpack.c.b16 %v1179, %v1171
  %v1252 = vpack.c.b16 %v1180, %v1172
  %v1253 = vpack.c.b16 %v1189, %v1181
  %v1254 = vpack.c.b16 %v1190, %v1182
  %v1255 = vpack.c.b16 %v1191, %v1183
  %v1256 = vpack.c.b16 %v1192, %v1184
  %v1257 = vpack.c.b16 %v1193, %v1185
  %v1258 = vpack.c.b16 %v1194, %v1186
  %v1259 = vpack.c.b16 %v1195, %v1187
  %v1260 = vpack.c.b16 %v1196, %v1188
  %1325 = vmatprep.subr.bf16.mxu0 %v1198
  %1326 = vmatpush1.bf16.msra.mxu0 %v1197
  %1327 = vmatprep.subr.bf16.mxu0 %v1206
  %1328 = vmatpush1.bf16.msra.mxu0 %v1205
  %1329 = vmatprep.subr.bf16.mxu0 %v1214
  %1330 = vmatpush1.bf16.msra.mxu0 %v1213
  %1331 = vmatprep.subr.bf16.mxu0 %v1222
  %1332 = vmatpush1.bf16.msra.mxu0 %v1221
  %1333 = vmatprep.subr.bf16.mxu0 %v1230
  %1334 = vmatpush1.bf16.msra.mxu0 %v1229
  %1335 = vmatprep.subr.bf16.mxu0 %v1238
  %1336 = vmatpush1.bf16.msra.mxu0 %v1237
  %1337 = vmatprep.subr.bf16.mxu0 %v1246
  %1338 = vmatpush1.bf16.msra.mxu0 %v1245
  %1339 = vmatprep.subr.bf16.mxu0 %v1254
  %1340 = vmatpush1.bf16.msra.mxu0 %v1253
  %1341 = vmatprep.subr.bf16.mxu0 0
  %1342 = vmatpush1.bf16.msra.mxu0 0
  %1343 = vmatprep.subr.bf16.mxu0 0
  %1344 = vmatpush1.bf16.msra.mxu0 0
  %1345 = vmatprep.subr.bf16.mxu0 0
  %1346 = vmatpush1.bf16.msra.mxu0 0
  %1347 = vmatprep.subr.bf16.mxu0 0
  %1348 = vmatpush1.bf16.msra.mxu0 0
  %1349 = vmatprep.subr.bf16.mxu0 0
  %1350 = vmatpush1.bf16.msra.mxu0 0
  %1351 = vmatprep.subr.bf16.mxu0 0
  %1352 = vmatpush1.bf16.msra.mxu0 0
  %1353 = vmatprep.subr.bf16.mxu0 0
  %1354 = vmatpush1.bf16.msra.mxu0 0
  %1355 = vmatprep.subr.bf16.mxu0 0
  %1356 = vmatpush1.bf16.msra.mxu0 0
  %1357 = vmatprep.mubr.bf16.mxu0 0
  %1358 = vmatmul.mubr.bf16.gmra.mrb[0].mxu0 %v157
  %v1359 = vpop.f32.mrb[0].mxu0
  %v1360 = vadd.f32 %v968, %v1359
  %v1361 = vpop.f32.mrb[0].mxu0
  %v1362 = vadd.f32 %v972, %v1361
  %v1363 = vpop.f32.mrb[0].mxu0
  %v1364 = vadd.f32 %v968, %v1363
  %v1365 = vpop.f32.mrb[0].mxu0
  %v1366 = vadd.f32 %v972, %v1365
  %1367 = vmatprep.mubr.bf16.mxu0 0
  %1368 = vmatmul.mubr.bf16.gmra.mrb[0].mxu0 %v158
  %v1369 = vpop.f32.mrb[0].mxu0
  %v1370 = vadd.f32 %v968, %v1369
  %v1371 = vpop.f32.mrb[0].mxu0
  %v1372 = vadd.f32 %v972, %v1371
  %v1373 = vpop.f32.mrb[0].mxu0
  %v1374 = vadd.f32 %v968, %v1373
  %v1375 = vpop.f32.mrb[0].mxu0
  %v1376 = vadd.f32 %v972, %v1375
  %1377 = vmatprep.mubr.bf16.mxu0 0
  %1378 = vmatmul.mubr.bf16.gmra.mrb[0].mxu0 %v159
  %v1379 = vpop.f32.mrb[0].mxu0
  %v1380 = vadd.f32 %v968, %v1379
  %v1381 = vpop.f32.mrb[0].mxu0
  %v1382 = vadd.f32 %v972, %v1381
  %v1383 = vpop.f32.mrb[0].mxu0
  %v1384 = vadd.f32 %v968, %v1383
  %v1385 = vpop.f32.mrb[0].mxu0
  %v1386 = vadd.f32 %v972, %v1385
  %1387 = vmatprep.mubr.bf16.mxu0 0
  %1388 = vmatmul.mubr.bf16.gmra.mrb[0].mxu0 %v160
  %v1389 = vpop.f32.mrb[0].mxu0
  %v1390 = vadd.f32 %v968, %v1389
  %v1391 = vpop.f32.mrb[0].mxu0
  %v1392 = vadd.f32 %v972, %v1391
  %v1393 = vpop.f32.mrb[0].mxu0
  %v1394 = vadd.f32 %v968, %v1393
  %v1395 = vpop.f32.mrb[0].mxu0
  %v1396 = vadd.f32 %v972, %v1395
  %1397 = vmatprep.mubr.bf16.mxu0 0
  %1398 = vmatmul.mubr.bf16.gmra.mrb[0].mxu0 %v161
  %v1399 = vpop.f32.mrb[0].mxu0
  %v1400 = vadd.f32 %v968, %v1399
  %v1401 = vpop.f32.mrb[0].mxu0
  %v1402 = vadd.f32 %v972, %v1401
  %v1403 = vpop.f32.mrb[0].mxu0
  %v1404 = vadd.f32 %v968, %v1403
  %v1405 = vpop.f32.mrb[0].mxu0
  %v1406 = vadd.f32 %v972, %v1405
  %1407 = vdwg.mxu0
  %1408 = vmatprep.subr.bf16.mxu0 %v1200
  %1409 = vmatpush1.bf16.msra.mxu0 %v1199
  %1410 = vmatprep.subr.bf16.mxu0 %v1208
  %1411 = vmatpush1.bf16.msra.mxu0 %v1207
  %1412 = vmatprep.subr.bf16.mxu0 %v1216
  %1413 = vmatpush1.bf16.msra.mxu0 %v1215
  %1414 = vmatprep.subr.bf16.mxu0 %v1224
  %1415 = vmatpush1.bf16.msra.mxu0 %v1223
  %1416 = vmatprep.subr.bf16.mxu0 %v1232
  %1417 = vmatpush1.bf16.msra.mxu0 %v1231
  %1418 = vmatprep.subr.bf16.mxu0 %v1240
  %1419 = vmatpush1.bf16.msra.mxu0 %v1239
  %1420 = vmatprep.subr.bf16.mxu0 %v1248
  %1421 = vmatpush1.bf16.msra.mxu0 %v1247
  %1422 = vmatprep.subr.bf16.mxu0 %v1256
  %1423 = vmatpush1.bf16.msra.mxu0 %v1255
  %1424 = vmatprep.subr.bf16.mxu0 0
  %1425 = vmatpush1.bf16.msra.mxu0 0
  %1426 = vmatprep.subr.bf16.mxu0 0
  %1427 = vmatpush1.bf16.msra.mxu0 0
  %1428 = vmatprep.subr.bf16.mxu0 0
  %1429 = vmatpush1.bf16.msra.mxu0 0
  %1430 = vmatprep.subr.bf16.mxu0 0
  %1431 = vmatpush1.bf16.msra.mxu0 0
  %1432 = vmatprep.subr.bf16.mxu0 0
  %1433 = vmatpush1.bf16.msra.mxu0 0
  %1434 = vmatprep.subr.bf16.mxu0 0
  %1435 = vmatpush1.bf16.msra.mxu0 0
  %1436 = vmatprep.subr.bf16.mxu0 0
  %1437 = vmatpush1.bf16.msra.mxu0 0
  %1438 = vmatprep.subr.bf16.mxu0 0
  %1439 = vmatpush1.bf16.msra.mxu0 0
  %1440 = vmatprep.mubr.bf16.mxu0 0
  %1441 = vmatmul.mubr.bf16.gmra.mrb[0].mxu0 %v157
  %v1442 = vpop.f32.mrb[0].mxu0
  %v1443 = vadd.f32 %v976, %v1442
  %v1444 = vpop.f32.mrb[0].mxu0
  %v1445 = vadd.f32 %v980, %v1444
  %v1446 = vpop.f32.mrb[0].mxu0
  %v1447 = vadd.f32 %v976, %v1446
  %v1448 = vpop.f32.mrb[0].mxu0
  %v1449 = vadd.f32 %v980, %v1448
  %1450 = vmatprep.mubr.bf16.mxu0 0
  %1451 = vmatmul.mubr.bf16.gmra.mrb[0].mxu0 %v158
  %v1452 = vpop.f32.mrb[0].mxu0
  %v1453 = vadd.f32 %v976, %v1452
  %v1454 = vpop.f32.mrb[0].mxu0
  %v1455 = vadd.f32 %v980, %v1454
  %v1456 = vpop.f32.mrb[0].mxu0
  %v1457 = vadd.f32 %v976, %v1456
  %v1458 = vpop.f32.mrb[0].mxu0
  %v1459 = vadd.f32 %v980, %v1458
  %1460 = vmatprep.mubr.bf16.mxu0 0
  %1461 = vmatmul.mubr.bf16.gmra.mrb[0].mxu0 %v159
  %v1462 = vpop.f32.mrb[0].mxu0
  %v1463 = vadd.f32 %v976, %v1462
  %v1464 = vpop.f32.mrb[0].mxu0
  %v1465 = vadd.f32 %v980, %v1464
  %v1466 = vpop.f32.mrb[0].mxu0
  %v1467 = vadd.f32 %v976, %v1466
  %v1468 = vpop.f32.mrb[0].mxu0
  %v1469 = vadd.f32 %v980, %v1468
  %1470 = vmatprep.mubr.bf16.mxu0 0
  %1471 = vmatmul.mubr.bf16.gmra.mrb[0].mxu0 %v160
  %v1472 = vpop.f32.mrb[0].mxu0
  %v1473 = vadd.f32 %v976, %v1472
  %v1474 = vpop.f32.mrb[0].mxu0
  %v1475 = vadd.f32 %v980, %v1474
  %v1476 = vpop.f32.mrb[0].mxu0
  %v1477 = vadd.f32 %v976, %v1476
  %v1478 = vpop.f32.mrb[0].mxu0
  %v1479 = vadd.f32 %v980, %v1478
  %1480 = vmatprep.mubr.bf16.mxu0 0
  %1481 = vmatmul.mubr.bf16.gmra.mrb[0].mxu0 %v161
  %v1482 = vpop.f32.mrb[0].mxu0
  %v1483 = vadd.f32 %v976, %v1482
  %v1484 = vpop.f32.mrb[0].mxu0
  %v1485 = vadd.f32 %v980, %v1484
  %v1486 = vpop.f32.mrb[0].mxu0
  %v1487 = vadd.f32 %v976, %v1486
  %v1488 = vpop.f32.mrb[0].mxu0
  %v1489 = vadd.f32 %v980, %v1488
  %1490 = vdwg.mxu0
  %1491 = vmatprep.subr.bf16.mxu0 %v1202
  %1492 = vmatpush1.bf16.msra.mxu0 %v1201
  %1493 = vmatprep.subr.bf16.mxu0 %v1210
  %1494 = vmatpush1.bf16.msra.mxu0 %v1209
  %1495 = vmatprep.subr.bf16.mxu0 %v1218
  %1496 = vmatpush1.bf16.msra.mxu0 %v1217
  %1497 = vmatprep.subr.bf16.mxu0 %v1226
  %1498 = vmatpush1.bf16.msra.mxu0 %v1225
  %1499 = vmatprep.subr.bf16.mxu0 %v1234
  %1500 = vmatpush1.bf16.msra.mxu0 %v1233
  %1501 = vmatprep.subr.bf16.mxu0 %v1242
  %1502 = vmatpush1.bf16.msra.mxu0 %v1241
  %1503 = vmatprep.subr.bf16.mxu0 %v1250
  %1504 = vmatpush1.bf16.msra.mxu0 %v1249
  %1505 = vmatprep.subr.bf16.mxu0 %v1258
  %1506 = vmatpush1.bf16.msra.mxu0 %v1257
  %1507 = vmatprep.subr.bf16.mxu0 0
  %1508 = vmatpush1.bf16.msra.mxu0 0
  %1509 = vmatprep.subr.bf16.mxu0 0
  %1510 = vmatpush1.bf16.msra.mxu0 0
  %1511 = vmatprep.subr.bf16.mxu0 0
  %1512 = vmatpush1.bf16.msra.mxu0 0
  %1513 = vmatprep.subr.bf16.mxu0 0
  %1514 = vmatpush1.bf16.msra.mxu0 0
  %1515 = vmatprep.subr.bf16.mxu0 0
  %1516 = vmatpush1.bf16.msra.mxu0 0
  %1517 = vmatprep.subr.bf16.mxu0 0
  %1518 = vmatpush1.bf16.msra.mxu0 0
  %1519 = vmatprep.subr.bf16.mxu0 0
  %1520 = vmatpush1.bf16.msra.mxu0 0
  %1521 = vmatprep.subr.bf16.mxu0 0
  %1522 = vmatpush1.bf16.msra.mxu0 0
  %1523 = vmatprep.mubr.bf16.mxu0 0
  %1524 = vmatmul.mubr.bf16.gmra.mrb[0].mxu0 %v157
  %v1525 = vpop.f32.mrb[0].mxu0
  %v1526 = vadd.f32 %v984, %v1525
  %v1527 = vpop.f32.mrb[0].mxu0
  %v1528 = vadd.f32 %v988, %v1527
  %v1529 = vpop.f32.mrb[0].mxu0
  %v1530 = vadd.f32 %v984, %v1529
  %v1531 = vpop.f32.mrb[0].mxu0
  %v1532 = vadd.f32 %v988, %v1531
  %1533 = vmatprep.mubr.bf16.mxu0 0
  %1534 = vmatmul.mubr.bf16.gmra.mrb[0].mxu0 %v158
  %v1535 = vpop.f32.mrb[0].mxu0
  %v1536 = vadd.f32 %v984, %v1535
  %v1537 = vpop.f32.mrb[0].mxu0
  %v1538 = vadd.f32 %v988, %v1537
  %v1539 = vpop.f32.mrb[0].mxu0
  %v1540 = vadd.f32 %v984, %v1539
  %v1541 = vpop.f32.mrb[0].mxu0
  %v1542 = vadd.f32 %v988, %v1541
  %1543 = vmatprep.mubr.bf16.mxu0 0
  %1544 = vmatmul.mubr.bf16.gmra.mrb[0].mxu0 %v159
  %v1545 = vpop.f32.mrb[0].mxu0
  %v1546 = vadd.f32 %v984, %v1545
  %v1547 = vpop.f32.mrb[0].mxu0
  %v1548 = vadd.f32 %v988, %v1547
  %v1549 = vpop.f32.mrb[0].mxu0
  %v1550 = vadd.f32 %v984, %v1549
  %v1551 = vpop.f32.mrb[0].mxu0
  %v1552 = vadd.f32 %v988, %v1551
  %1553 = vmatprep.mubr.bf16.mxu0 0
  %1554 = vmatmul.mubr.bf16.gmra.mrb[0].mxu0 %v160
  %v1555 = vpop.f32.mrb[0].mxu0
  %v1556 = vadd.f32 %v984, %v1555
  %v1557 = vpop.f32.mrb[0].mxu0
  %v1558 = vadd.f32 %v988, %v1557
  %v1559 = vpop.f32.mrb[0].mxu0
  %v1560 = vadd.f32 %v984, %v1559
  %v1561 = vpop.f32.mrb[0].mxu0
  %v1562 = vadd.f32 %v988, %v1561
  %1563 = vmatprep.mubr.bf16.mxu0 0
  %1564 = vmatmul.mubr.bf16.gmra.mrb[0].mxu0 %v161
  %v1565 = vpop.f32.mrb[0].mxu0
  %v1566 = vadd.f32 %v984, %v1565
  %v1567 = vpop.f32.mrb[0].mxu0
  %v1568 = vadd.f32 %v988, %v1567
  %v1569 = vpop.f32.mrb[0].mxu0
  %v1570 = vadd.f32 %v984, %v1569
  %v1571 = vpop.f32.mrb[0].mxu0
  %v1572 = vadd.f32 %v988, %v1571
  %1573 = vdwg.mxu0
  %1574 = vmatprep.subr.bf16.mxu0 %v1204
  %1575 = vmatpush1.bf16.msra.mxu0 %v1203
  %1576 = vmatprep.subr.bf16.mxu0 %v1212
  %1577 = vmatpush1.bf16.msra.mxu0 %v1211
  %1578 = vmatprep.subr.bf16.mxu0 %v1220
  %1579 = vmatpush1.bf16.msra.mxu0 %v1219
  %1580 = vmatprep.subr.bf16.mxu0 %v1228
  %1581 = vmatpush1.bf16.msra.mxu0 %v1227
  %1582 = vmatprep.subr.bf16.mxu0 %v1236
  %1583 = vmatpush1.bf16.msra.mxu0 %v1235
  %1584 = vmatprep.subr.bf16.mxu0 %v1244
  %1585 = vmatpush1.bf16.msra.mxu0 %v1243
  %1586 = vmatprep.subr.bf16.mxu0 %v1252
  %1587 = vmatpush1.bf16.msra.mxu0 %v1251
  %1588 = vmatprep.subr.bf16.mxu0 %v1260
  %1589 = vmatpush1.bf16.msra.mxu0 %v1259
  %1590 = vmatprep.subr.bf16.mxu0 0
  %1591 = vmatpush1.bf16.msra.mxu0 0
  %1592 = vmatprep.subr.bf16.mxu0 0
  %1593 = vmatpush1.bf16.msra.mxu0 0
  %1594 = vmatprep.subr.bf16.mxu0 0
  %1595 = vmatpush1.bf16.msra.mxu0 0
  %1596 = vmatprep.subr.bf16.mxu0 0
  %1597 = vmatpush1.bf16.msra.mxu0 0
  %1598 = vmatprep.subr.bf16.mxu0 0
  %1599 = vmatpush1.bf16.msra.mxu0 0
  %1600 = vmatprep.subr.bf16.mxu0 0
  %1601 = vmatpush1.bf16.msra.mxu0 0
  %1602 = vmatprep.subr.bf16.mxu0 0
  %1603 = vmatpush1.bf16.msra.mxu0 0
  %1604 = vmatprep.subr.bf16.mxu0 0
  %1605 = vmatpush1.bf16.msra.mxu0 0
  %1606 = vmatprep.mubr.bf16.mxu0 0
  %1607 = vmatmul.mubr.bf16.gmra.mrb[0].mxu0 %v157
  %v1608 = vpop.f32.mrb[0].mxu0
  %v1609 = vadd.f32 %v992, %v1608
  %v1610 = vpop.f32.mrb[0].mxu0
  %v1611 = vadd.f32 %v996, %v1610
  %v1612 = vpop.f32.mrb[0].mxu0
  %v1613 = vadd.f32 %v992, %v1612
  %v1614 = vpop.f32.mrb[0].mxu0
  %v1615 = vadd.f32 %v996, %v1614
  %1616 = vmatprep.mubr.bf16.mxu0 0
  %1617 = vmatmul.mubr.bf16.gmra.mrb[0].mxu0 %v158
  %v1618 = vpop.f32.mrb[0].mxu0
  %v1619 = vadd.f32 %v992, %v1618
  %v1620 = vpop.f32.mrb[0].mxu0
  %v1621 = vadd.f32 %v996, %v1620
  %v1622 = vpop.f32.mrb[0].mxu0
  %v1623 = vadd.f32 %v992, %v1622
  %v1624 = vpop.f32.mrb[0].mxu0
  %v1625 = vadd.f32 %v996, %v1624
  %1626 = vmatprep.mubr.bf16.mxu0 0
  %1627 = vmatmul.mubr.bf16.gmra.mrb[0].mxu0 %v159
  %v1628 = vpop.f32.mrb[0].mxu0
  %v1629 = vadd.f32 %v992, %v1628
  %v1630 = vpop.f32.mrb[0].mxu0
  %v1631 = vadd.f32 %v996, %v1630
  %v1632 = vpop.f32.mrb[0].mxu0
  %v1633 = vadd.f32 %v992, %v1632
  %v1634 = vpop.f32.mrb[0].mxu0
  %v1635 = vadd.f32 %v996, %v1634
  %1636 = vmatprep.mubr.bf16.mxu0 0
  %1637 = vmatmul.mubr.bf16.gmra.mrb[0].mxu0 %v160
  %v1638 = vpop.f32.mrb[0].mxu0
  %v1639 = vadd.f32 %v992, %v1638
  %v1640 = vpop.f32.mrb[0].mxu0
  %v1641 = vadd.f32 %v996, %v1640
  %v1642 = vpop.f32.mrb[0].mxu0
  %v1643 = vadd.f32 %v992, %v1642
  %v1644 = vpop.f32.mrb[0].mxu0
  %v1645 = vadd.f32 %v996, %v1644
  %1646 = vmatprep.mubr.bf16.mxu0 0
  %1647 = vmatmul.mubr.bf16.gmra.mrb[0].mxu0 %v161
  %v1648 = vpop.f32.mrb[0].mxu0
  %v1649 = vadd.f32 %v992, %v1648
  %v1650 = vpop.f32.mrb[0].mxu0
  %v1651 = vadd.f32 %v996, %v1650
  %v1652 = vpop.f32.mrb[0].mxu0
  %v1653 = vadd.f32 %v992, %v1652
  %v1654 = vpop.f32.mrb[0].mxu0
  %v1655 = vadd.f32 %v996, %v1654
  %1656 = vdwg.mxu0
  %v1657 = vmax.f32 %v889, %v1360
  %v1658 = vmax.f32 %v890, %v1364
  %v1659 = vmax.f32 %v891, %v1370
  %v1660 = vmax.f32 %v892, %v1374
  %v1661 = vmax.f32 %v893, %v1380
  %v1662 = vmax.f32 %v894, %v1384
  %v1663 = vmax.f32 %v895, %v1390
  %v1664 = vmax.f32 %v896, %v1394
  %v1665 = vmax.f32 %v897, %v1400
  %v1666 = vmax.f32 %v898, %v1404
  %v1667 = vmax.f32 %v1657, %v1362
  %v1668 = vmax.f32 %v1658, %v1366
  %v1669 = vmax.f32 %v1659, %v1372
  %v1670 = vmax.f32 %v1660, %v1376
  %v1671 = vmax.f32 %v1661, %v1382
  %v1672 = vmax.f32 %v1662, %v1386
  %v1673 = vmax.f32 %v1663, %v1392
  %v1674 = vmax.f32 %v1664, %v1396
  %v1675 = vmax.f32 %v1665, %v1402
  %v1676 = vmax.f32 %v1666, %v1406
  %v1677 = vmax.f32 %v1667, %v1443
  %v1678 = vmax.f32 %v1668, %v1447
  %v1679 = vmax.f32 %v1669, %v1453
  %v1680 = vmax.f32 %v1670, %v1457
  %v1681 = vmax.f32 %v1671, %v1463
  %v1682 = vmax.f32 %v1672, %v1467
  %v1683 = vmax.f32 %v1673, %v1473
  %v1684 = vmax.f32 %v1674, %v1477
  %v1685 = vmax.f32 %v1675, %v1483
  %v1686 = vmax.f32 %v1676, %v1487
  %v1687 = vmax.f32 %v1677, %v1445
  %v1688 = vmax.f32 %v1678, %v1449
  %v1689 = vmax.f32 %v1679, %v1455
  %v1690 = vmax.f32 %v1680, %v1459
  %v1691 = vmax.f32 %v1681, %v1465
  %v1692 = vmax.f32 %v1682, %v1469
  %v1693 = vmax.f32 %v1683, %v1475
  %v1694 = vmax.f32 %v1684, %v1479
  %v1695 = vmax.f32 %v1685, %v1485
  %v1696 = vmax.f32 %v1686, %v1489
  %v1697 = vmax.f32 %v1687, %v1526
  %v1698 = vmax.f32 %v1688, %v1530
  %v1699 = vmax.f32 %v1689, %v1536
  %v1700 = vmax.f32 %v1690, %v1540
  %v1701 = vmax.f32 %v1691, %v1546
  %v1702 = vmax.f32 %v1692, %v1550
  %v1703 = vmax.f32 %v1693, %v1556
  %v1704 = vmax.f32 %v1694, %v1560
  %v1705 = vmax.f32 %v1695, %v1566
  %v1706 = vmax.f32 %v1696, %v1570
  %v1707 = vmax.f32 %v1697, %v1528
  %v1708 = vmax.f32 %v1698, %v1532
  %v1709 = vmax.f32 %v1699, %v1538
  %v1710 = vmax.f32 %v1700, %v1542
  %v1711 = vmax.f32 %v1701, %v1548
  %v1712 = vmax.f32 %v1702, %v1552
  %v1713 = vmax.f32 %v1703, %v1558
  %v1714 = vmax.f32 %v1704, %v1562
  %v1715 = vmax.f32 %v1705, %v1568
  %v1716 = vmax.f32 %v1706, %v1572
  %v1717 = vmax.f32 %v1707, %v1609
  %v1718 = vmax.f32 %v1708, %v1613
  %v1719 = vmax.f32 %v1709, %v1619
  %v1720 = vmax.f32 %v1710, %v1623
  %v1721 = vmax.f32 %v1711, %v1629
  %v1722 = vmax.f32 %v1712, %v1633
  %v1723 = vmax.f32 %v1713, %v1639
  %v1724 = vmax.f32 %v1714, %v1643
  %v1725 = vmax.f32 %v1715, %v1649
  %v1726 = vmax.f32 %v1716, %v1653
  %v1727 = vmax.f32 %v1717, %v1611
  %v1728 = vmax.f32 %v1718, %v1615
  %v1729 = vmax.f32 %v1719, %v1621
  %v1730 = vmax.f32 %v1720, %v1625
  %v1731 = vmax.f32 %v1721, %v1631
  %v1732 = vmax.f32 %v1722, %v1635
  %v1733 = vmax.f32 %v1723, %v1641
  %v1734 = vmax.f32 %v1724, %v1645
  %v1735 = vmax.f32 %v1725, %v1651
  %v1736 = vmax.f32 %v1726, %v1655
  %v1737 = vld [vmem:[%s4] sm:$0x3]
  %v1738 = vlaneseq
  %v1739 = vshrl.u32 %v1738, 7
  %v1740 = vsub.s32 0, %v1739
  %v1741 = vrot.slane %v1737, %v1740
  %1743 = vbcast.lane.b32.xlu0 %v1741, 256
  %v1744 = vpop.permute.xlu0 %1743
  %s1746 = sor.u32 256, 8
  %1747 = vbcast.lane.b32.xlu0 %v1741, %s1746
  %v1748 = vpop.permute.xlu0 %1747
  %s1750 = sor.u32 256, 16
  %1751 = vbcast.lane.b32.xlu0 %v1741, %s1750
  %v1752 = vpop.permute.xlu0 %1751
  %s1754 = sor.u32 256, 24
  %1755 = vbcast.lane.b32.xlu0 %v1741, %s1754
  %v1756 = vpop.permute.xlu0 %1755
  %s1758 = sor.u32 256, 32
  %1759 = vbcast.lane.b32.xlu0 %v1741, %s1758
  %v1760 = vpop.permute.xlu0 %1759
  %v1761 = vlaneseq
  %v1762 = vshrl.u32 %v1761, 7
  %v1763 = vsub.s32 1, %v1762
  %v1764 = vrot.slane %v1737, %v1763
  %1766 = vbcast.lane.b32.xlu0 %v1764, 256
  %v1767 = vpop.permute.xlu0 %1766
  %s1769 = sor.u32 256, 8
  %1770 = vbcast.lane.b32.xlu0 %v1764, %s1769
  %v1771 = vpop.permute.xlu0 %1770
  %s1773 = sor.u32 256, 16
  %1774 = vbcast.lane.b32.xlu0 %v1764, %s1773
  %v1775 = vpop.permute.xlu0 %1774
  %s1777 = sor.u32 256, 24
  %1778 = vbcast.lane.b32.xlu0 %v1764, %s1777
  %v1779 = vpop.permute.xlu0 %1778
  %s1781 = sor.u32 256, 32
  %1782 = vbcast.lane.b32.xlu0 %v1764, %s1781
  %v1783 = vpop.permute.xlu0 %1782
  %vm1784 = vcmp.gt.f32.partialorder %v1744, 0.5
  %vm1785 = vcmp.gt.f32.partialorder %v1748, 0.5
  %vm1786 = vcmp.gt.f32.partialorder %v1752, 0.5
  %vm1787 = vcmp.gt.f32.partialorder %v1756, 0.5
  %vm1788 = vcmp.gt.f32.partialorder %v1760, 0.5
  %vm1789 = vcmp.gt.f32.partialorder %v1767, 0.5
  %vm1790 = vcmp.gt.f32.partialorder %v1771, 0.5
  %vm1791 = vcmp.gt.f32.partialorder %v1775, 0.5
  %vm1792 = vcmp.gt.f32.partialorder %v1779, 0.5
  %vm1793 = vcmp.gt.f32.partialorder %v1783, 0.5
  %v1794 = vld [vmem:[%s3] sm:$0x1]
  %vm1795 = vcmp.gt.f32.partialorder %v1794, 0.5
  %v1796 = vsel %vm1784, 1, 0
  %v1797 = vsel %vm1785, 1, 0
  %v1798 = vsel %vm1786, 1, 0
  %v1799 = vsel %vm1787, 1, 0
  %v1800 = vsel %vm1788, 1, 0
  %v1801 = vsel %vm1789, 1, 0
  %v1802 = vsel %vm1790, 1, 0
  %v1803 = vsel %vm1791, 1, 0
  %v1804 = vsel %vm1792, 1, 0
  %v1805 = vsel %vm1793, 1, 0
  %vm1806 = vcmp.eq.s32.totalorder %v1796, 1
  %vm1807 = vcmp.eq.s32.totalorder %v1797, 1
  %vm1808 = vcmp.eq.s32.totalorder %v1798, 1
  %vm1809 = vcmp.eq.s32.totalorder %v1799, 1
  %vm1810 = vcmp.eq.s32.totalorder %v1800, 1
  %vm1811 = vcmp.eq.s32.totalorder %v1801, 1
  %vm1812 = vcmp.eq.s32.totalorder %v1802, 1
  %vm1813 = vcmp.eq.s32.totalorder %v1803, 1
  %vm1814 = vcmp.eq.s32.totalorder %v1804, 1
  %vm1815 = vcmp.eq.s32.totalorder %v1805, 1
  %v1816 = vsel %vm1795, 1, 0
  %v1817 = vlaneseq
  %v1818 = vshrl.u32 %v1817, 7
  %v1819 = vsub.s32 0, %v1818
  %v1820 = vrot.slane %v1816, %v1819
  %vm1821 = vcmp.eq.s32.totalorder %v1820, 1
  %vm1822 = vmand %vm1806, %vm1821
  %vm1823 = vmand %vm1807, %vm1821
  %vm1824 = vmand %vm1808, %vm1821
  %vm1825 = vmand %vm1809, %vm1821
  %vm1826 = vmand %vm1810, %vm1821
  %vm1827 = vmand %vm1811, %vm1821
  %vm1828 = vmand %vm1812, %vm1821
  %vm1829 = vmand %vm1813, %vm1821
  %vm1830 = vmand %vm1814, %vm1821
  %vm1831 = vmand %vm1815, %vm1821
  %v1832 = vsel %vm1822, %v1727, -inf
  %v1833 = vsel %vm1823, %v1728, -inf
  %v1834 = vsel %vm1824, %v1729, -inf
  %v1835 = vsel %vm1825, %v1730, -inf
  %v1836 = vsel %vm1826, %v1731, -inf
  %v1837 = vsel %vm1827, %v1732, -inf
  %v1838 = vsel %vm1828, %v1733, -inf
  %v1839 = vsel %vm1829, %v1734, -inf
  %v1840 = vsel %vm1830, %v1735, -inf
  %v1841 = vsel %vm1831, %v1736, -inf
  %v1842 = vmax.f32 %v1832, %v1834
  %v1843 = vmax.f32 %v1833, %v1835
  %v1844 = vmax.f32 %v1842, %v1836
  %v1845 = vmax.f32 %v1844, %v1843
  %v1846 = vrot.slane %v1845, 4
  %v1847 = vmax.f32 %v1845, %v1846
  %v1848 = vrot.slane %v1847, 2
  %v1849 = vmax.f32 %v1847, %v1848
  %v1850 = vrot.slane %v1849, 1
  %v1851 = vmax.f32 %v1849, %v1850
  %v1852 = vmax.f32 %v1837, %v1839
  %v1853 = vmax.f32 %v1838, %v1840
  %v1854 = vmax.f32 %v1852, %v1841
  %v1855 = vmax.f32 %v1854, %v1853
  %v1856 = vrot.slane %v1855, 4
  %v1857 = vmax.f32 %v1855, %v1856
  %v1858 = vrot.slane %v1857, 2
  %v1859 = vmax.f32 %v1857, %v1858
  %v1860 = vrot.slane %v1859, 1
  %v1861 = vmax.f32 %v1859, %v1860
  %v1862 = vsub.f32 %v1727, %v1851
  %v1863 = vsub.f32 %v1728, %v1851
  %v1864 = vsub.f32 %v1729, %v1851
  %v1865 = vsub.f32 %v1730, %v1851
  %v1866 = vsub.f32 %v1731, %v1851
  %v1867 = vsub.f32 %v1732, %v1861
  %v1868 = vsub.f32 %v1733, %v1861
  %v1869 = vsub.f32 %v1734, %v1861
  %v1870 = vsub.f32 %v1735, %v1861
  %v1871 = vsub.f32 %v1736, %v1861
  %v1872 = vmul.f32 %v1862, 10.0
  %v1873 = vmul.f32 %v1863, 10.0
  %v1874 = vmul.f32 %v1864, 10.0
  %v1875 = vmul.f32 %v1865, 10.0
  %v1876 = vmul.f32 %v1866, 10.0
  %v1877 = vmul.f32 %v1867, 10.0
  %v1878 = vmul.f32 %v1868, 10.0
  %v1879 = vmul.f32 %v1869, 10.0
  %v1880 = vmul.f32 %v1870, 10.0
  %v1881 = vmul.f32 %v1871, 10.0
  %v1882 = vmul.f32 %v1872, 1.442695
  %v1883 = vpow.pop %v1882
  %v1884 = vmul.f32 %v1873, 1.442695
  %v1885 = vpow.pop %v1884
  %v1886 = vmul.f32 %v1874, 1.442695
  %v1887 = vpow.pop %v1886
  %v1888 = vmul.f32 %v1875, 1.442695
  %v1889 = vpow.pop %v1888
  %v1890 = vmul.f32 %v1876, 1.442695
  %v1891 = vpow.pop %v1890
  %v1892 = vmul.f32 %v1877, 1.442695
  %v1893 = vpow.pop %v1892
  %v1894 = vmul.f32 %v1878, 1.442695
  %v1895 = vpow.pop %v1894
  %v1896 = vmul.f32 %v1879, 1.442695
  %v1897 = vpow.pop %v1896
  %v1898 = vmul.f32 %v1880, 1.442695
  %v1899 = vpow.pop %v1898
  %v1900 = vmul.f32 %v1881, 1.442695
  %v1901 = vpow.pop %v1900
  %v1902 = vsel %vm1822, %v1883, 0.0
  %v1903 = vsel %vm1823, %v1885, 0.0
  %v1904 = vsel %vm1824, %v1887, 0.0
  %v1905 = vsel %vm1825, %v1889, 0.0
  %v1906 = vsel %vm1826, %v1891, 0.0
  %v1907 = vsel %vm1827, %v1893, 0.0
  %v1908 = vsel %vm1828, %v1895, 0.0
  %v1909 = vsel %vm1829, %v1897, 0.0
  %v1910 = vsel %vm1830, %v1899, 0.0
  %v1911 = vsel %vm1831, %v1901, 0.0
  %v1912 = vadd.f32 %v1902, %v1903
  %v1913 = vadd.f32 %v1912, %v1904
  %v1914 = vadd.f32 %v1913, %v1905
  %v1915 = vadd.f32 %v1914, %v1906
  %v1916 = vrot.slane %v1915, 4
  %v1917 = vadd.f32 %v1915, %v1916
  %v1918 = vrot.slane %v1917, 2
  %v1919 = vadd.f32 %v1917, %v1918
  %v1920 = vrot.slane %v1919, 1
  %v1921 = vadd.f32 %v1919, %v1920
  %v1922 = vadd.f32 %v1907, %v1908
  %v1923 = vadd.f32 %v1922, %v1909
  %v1924 = vadd.f32 %v1923, %v1910
  %v1925 = vadd.f32 %v1924, %v1911
  %v1926 = vrot.slane %v1925, 4
  %v1927 = vadd.f32 %v1925, %v1926
  %v1928 = vrot.slane %v1927, 2
  %v1929 = vadd.f32 %v1927, %v1928
  %v1930 = vrot.slane %v1929, 1
  %v1931 = vadd.f32 %v1929, %v1930
  %v1932 = vlog2.pop %v1921
  %v1933 = vmul.f32 %v1932, 0.6931472
  %v1934 = vlog2.pop %v1931
  %v1935 = vmul.f32 %v1934, 0.6931472
  %v1936 = vmul.f32 %v1933, 0.1
  %v1937 = vmul.f32 %v1935, 0.1
  %v1938 = vadd.f32 %v1851, %v1936
  %v1939 = vadd.f32 %v1861, %v1937
  %v1940 = vmax.f32 %v1938, -1e+30
  %v1941 = vmax.f32 %v1939, -1e+30
  %vm1944 = vcmask 1041409
  %v1945 = vsel %vm1944, %v1941, %v1940
  %1947 = vst [vmem:[%s5] sm:$0x3] %v1945
  // Predicated region
  $region22: #{blip_retrieval_forward.12} parent=0 // pred_check
    _
  $region23: #{blip_retrieval_forward.12} parent=0 // pred_check_branch
    %1949 = sbr.rel (0) target = $region25
  $region24: #{blip_retrieval_forward.12} parent=0 // pred_region
    _
  $region25: #{blip_retrieval_forward.12} parent=0 // pred_fallthru
    _
  // Predicated region
  $region26: #{blip_retrieval_forward.12} parent=0 // pred_check
    _
  $region27: #{blip_retrieval_forward.12} parent=0 // pred_check_branch
    %1951 = sbr.rel (0) target = $region29
  $region28: #{blip_retrieval_forward.12} parent=0 // pred_region
    _
  $region29: #{blip_retrieval_forward.12} parent=0 // pred_fallthru
    _

</llo_original>
